<compile_context>
chip_gen: v7x
topology: tpu7x:2x2x1
jax: 0.10.0
libtpu: 0.0.40
codegen_flags: <defaults>
</compile_context>

<pallas_src>
import functools

import jax
import jax.numpy as jnp
from jax import lax
from jax.experimental import pallas as pl
from jax.experimental.pallas import tpu as pltpu

_VMEM_LIMIT = 48 * 1024 * 1024   # <= ~48 MiB: safe headroom on v7x (64 MiB phys/TC)
_FC_TK_CAP = 12288               # bf16 w1 block = cap*256*2 ~ 6.3 MB (12.6 MB dbl-buffered)


def _round_up(x, m):
    return (x + m - 1) // m * m


def _largest_tile(n, target):
    """Largest divisor of n that is <= target."""
    t = min(n, target)
    while n % t:
        t -= 1
    return t


def _fc_tile_k(f, cap=_FC_TK_CAP):
    """K tile for the big Linear, sized from a VMEM budget (not a hard divisor)."""
    f256 = _round_up(f, 256)
    if f256 <= cap:
        return f256
    for tk in range(cap, cap // 2, -256):      # prefer a divisor of f (no padding)
        if f % tk == 0:
            return tk
    return cap                                  # callers zero-pad K to a multiple of tk


# ----------------------------------------------------------------------------
# Fused block A: Conv(1->32,k3,p1)+ReLU -> Conv(32->64,k3,p1)+ReLU -> MaxPool(2,2)
# Grid = (batch, pooled-row tiles).  The doubly-padded input image stays VMEM
# resident per batch element; conv1's output (incl. conv2's zero halo) lives
# only in a VMEM scratch slab.  All accumulation is register-tiled (2 rows).
# ----------------------------------------------------------------------------
def _conv_block_a_kernel(x_ref, w1_ref, b1_ref, w2_ref, b2_ref, o_ref, a1_ref, *,
                         tho, h, wp, valid_w):
    # x_ref : [h+4, wp+4, 1] bf16 (input padded by 2; resident across row tiles)
    # a1_ref: [2*tho+2, wp+2, 32] bf16 scratch — conv1 slab incl. conv2 zero halo
    # o_ref : [tho, wp//2, 64]
    hi = pl.program_id(1)
    r2 = hi * (2 * tho)          # first conv2 output row of this tile
    r1 = r2 - 1                  # first conv1 row held in a1 (-1 == halo row)
    wq = wp + 2                  # conv1 computed at extended cols -1 .. wp
    TR1 = 2

    def conv1_body(j, carry):
        # Cin == 1: 9 broadcast VPU FMAs (a K=1 MXU matmul would waste the MXU).
        row0 = r1 + j * TR1
        acc = jnp.zeros((TR1, wq, 32), jnp.float32)
        for ky in range(3):
            for kx in range(3):
                xs = x_ref[pl.ds(row0 + ky + 1, TR1), pl.ds(kx, wq), :]
                acc = acc + xs.astype(jnp.float32) * w1_ref[ky, kx].astype(jnp.float32)
        acc = jnp.maximum(acc + b1_ref[...], 0.0)
        # Zero everything torch never computes (halo rows -1/h, halo and
        # width-alignment columns) so a1 is exactly conv2's zero-padded input.
        rowi = row0 + lax.broadcasted_iota(jnp.int32, acc.shape, 0)
        cole = lax.broadcasted_iota(jnp.int32, acc.shape, 1)
        ok = (rowi >= 0) & (rowi < h) & (cole >= 1) & (cole <= valid_w)
        a1_ref[pl.ds(j * TR1, TR1), :, :] = jnp.where(ok, acc, 0.0).astype(a1_ref.dtype)
        return carry

    lax.fori_loop(0, tho + 1, conv1_body, 0)

    def conv2_body(j, carry):
        # One pooled output row per iteration: 9 MXU dots, acc stays in vregs.
        acc = jnp.zeros((2 * wp, 64), jnp.float32)
        for ky in range(3):
            for kx in range(3):
                xs = a1_ref[pl.ds(2 * j + ky, 2), pl.ds(kx, wp), :]     # (2, wp, 32)
                acc = acc + jnp.dot(xs.reshape(2 * wp, 32), w2_ref[ky, kx],
                                    preferred_element_type=jnp.float32)
        acc = jnp.maximum(acc.reshape(2, wp, 64) + b2_ref[...], 0.0)
        y = jnp.max(acc, axis=0)                             # pool row pair
        y = jnp.max(y.reshape(wp // 2, 2, 64), axis=1)       # pool col pairs
        col = lax.broadcasted_iota(jnp.int32, y.shape, 0)
        y = jnp.where(col < valid_w // 2, y, 0.0)            # keep alignment cols zero
        o_ref[pl.ds(j, 1), :, :] = y[None].astype(o_ref.dtype)
        return carry

    lax.fori_loop(0, tho, conv2_body, 0)


def conv_block_a(x, w1, b1, w2, b2, *, h, wp, valid_w):
    # x: [B, h+4, wp+4, 1] bf16 (zero-padded by 2 in both spatial dims)
    B = x.shape[0]
    h2, wp2 = h // 2, wp // 2
    tho = _largest_tile(h2, 32)
    kern = functools.partial(_conv_block_a_kernel, tho=tho, h=h, wp=wp, valid_w=valid_w)
    return pl.pallas_call(
        kern,
        out_shape=jax.ShapeDtypeStruct((B, h2, wp2, 64), jnp.bfloat16),
        grid=(B, h2 // tho),
        in_specs=[
            # Full padded image per batch element; same block index across the
            # row-tile axis => stays resident in VMEM (no re-DMA per row tile).
            pl.BlockSpec((pl.Squeezed(), h + 4, wp + 4, 1), lambda bi, hi: (bi, 0, 0, 0)),
            pl.BlockSpec((3, 3, 1, 32), lambda bi, hi: (0, 0, 0, 0)),
            pl.BlockSpec((1, 1, 32), lambda bi, hi: (0, 0, 0)),
            pl.BlockSpec((3, 3, 32, 64), lambda bi, hi: (0, 0, 0, 0)),
            pl.BlockSpec((1, 1, 64), lambda bi, hi: (0, 0, 0)),
        ],
        out_specs=pl.BlockSpec((pl.Squeezed(), tho, wp2, 64), lambda bi, hi: (bi, hi, 0, 0)),
        scratch_shapes=[pltpu.VMEM((2 * tho + 2, wp + 2, 32), jnp.bfloat16)],
        compiler_params=pltpu.CompilerParams(
            dimension_semantics=("parallel", "parallel"),
            vmem_limit_bytes=_VMEM_LIMIT),
    )(x, w1, b1, w2, b2)


# ----------------------------------------------------------------------------
# Fused block B: Conv(64->128,k3,p1)+ReLU -> Conv(128->128,k3,p1) -> MaxPool -> ReLU
# The unpadded input image is resident per batch element and copied once (at
# row-tile 0) into a zero-bordered VMEM scratch (sublane-aligned left pad of 8),
# so no inter-layer jnp.pad is needed.  conv3's slab lives only in VMEM.
# ----------------------------------------------------------------------------
def _conv_block_b_kernel(x_ref, w3_ref, b3_ref, w4_ref, b4_ref, o_ref,
                         xpad_ref, a3_ref, *, tho, h2, wp2, wq, valid_w2, valid_w4):
    # x_ref   : [h2, wp2, 64] bf16 (unpadded, resident across row tiles)
    # xpad_ref: [h2+4, wq+8, 64] bf16 — zero-bordered copy, built once per batch elem
    # a3_ref  : [2*tho+2, wq, 128] bf16 — conv3 slab incl. conv4 zero halo
    # o_ref   : [tho, wp2//2, 128]
    hi = pl.program_id(1)

    @pl.when(hi == 0)
    def _():
        xpad_ref[...] = jnp.zeros_like(xpad_ref)
        xpad_ref[2:h2 + 2, 8:wp2 + 8, :] = x_ref[...]   # sublane-aligned interior copy

    r4 = hi * (2 * tho)
    r3 = r4 - 1
    TR3 = 2

    def conv3_body(j, carry):
        row0 = r3 + j * TR3
        acc = jnp.zeros((TR3 * wq, 128), jnp.float32)
        for ky in range(3):
            for kx in range(3):
                # xpad col = (extended out col e) + kx + 6  (data starts at col 8)
                xs = xpad_ref[pl.ds(row0 + ky + 1, TR3), pl.ds(kx + 6, wq), :]
                acc = acc + jnp.dot(xs.reshape(TR3 * wq, 64), w3_ref[ky, kx],
                                    preferred_element_type=jnp.float32)
        acc = jnp.maximum(acc.reshape(TR3, wq, 128) + b3_ref[...], 0.0)
        rowi = row0 + lax.broadcasted_iota(jnp.int32, acc.shape, 0)
        cole = lax.broadcasted_iota(jnp.int32, acc.shape, 1)
        ok = (rowi >= 0) & (rowi < h2) & (cole >= 1) & (cole <= valid_w2)
        a3_ref[pl.ds(j * TR3, TR3), :, :] = jnp.where(ok, acc, 0.0).astype(a3_ref.dtype)
        return carry

    lax.fori_loop(0, tho + 1, conv3_body, 0)

    def conv4_body(j, carry):
        acc = jnp.zeros((2 * wp2, 128), jnp.float32)
        for ky in range(3):
            for kx in range(3):
                xs = a3_ref[pl.ds(2 * j + ky, 2), pl.ds(kx, wp2), :]    # (2, wp2, 128)
                acc = acc + jnp.dot(xs.reshape(2 * wp2, 128), w4_ref[ky, kx],
                                    preferred_element_type=jnp.float32)
        acc = acc.reshape(2, wp2, 128) + b4_ref[...]
        y = jnp.max(acc, axis=0)                              # pool row pair
        y = jnp.max(y.reshape(wp2 // 2, 2, 128), axis=1)      # pool col pairs
        y = jnp.maximum(y, 0.0)                               # torch: pool then ReLU
        col = lax.broadcasted_iota(jnp.int32, y.shape, 0)
        y = jnp.where(col < valid_w4, y, 0.0)
        o_ref[pl.ds(j, 1), :, :] = y[None].astype(o_ref.dtype)
        return carry

    lax.fori_loop(0, tho, conv4_body, 0)


def conv_block_b(x, w3, b3, w4, b4, *, valid_w2, valid_w4):
    # x: [B, h2, wp2, 64] bf16 (unpadded block-A output)
    B, h2, wp2, _ = x.shape
    h4, wp4 = h2 // 2, wp2 // 2
    tho = _largest_tile(h4, 32)
    wq = _round_up(wp2 + 2, 8)        # conv3 extended width, kept MXU-layout friendly
    kern = functools.partial(_conv_block_b_kernel, tho=tho, h2=h2, wp2=wp2, wq=wq,
                             valid_w2=valid_w2, valid_w4=valid_w4)
    return pl.pallas_call(
        kern,
        out_shape=jax.ShapeDtypeStruct((B, h4, wp4, 128), jnp.bfloat16),
        grid=(B, h4 // tho),
        in_specs=[
            pl.BlockSpec((pl.Squeezed(), h2, wp2, 64), lambda bi, hi: (bi, 0, 0, 0)),
            pl.BlockSpec((3, 3, 64, 128), lambda bi, hi: (0, 0, 0, 0)),
            pl.BlockSpec((1, 1, 128), lambda bi, hi: (0, 0, 0)),
            pl.BlockSpec((3, 3, 128, 128), lambda bi, hi: (0, 0, 0, 0)),
            pl.BlockSpec((1, 1, 128), lambda bi, hi: (0, 0, 0)),
        ],
        out_specs=pl.BlockSpec((pl.Squeezed(), tho, wp4, 128), lambda bi, hi: (bi, hi, 0, 0)),
        scratch_shapes=[pltpu.VMEM((h2 + 4, wq + 8, 64), jnp.bfloat16),
                        pltpu.VMEM((2 * tho + 2, wq, 128), jnp.bfloat16)],
        compiler_params=pltpu.CompilerParams(
            # Row axis stays "arbitrary": xpad_ref is filled at hi==0 and reused.
            dimension_semantics=("parallel", "arbitrary"),
            vmem_limit_bytes=_VMEM_LIMIT),
    )(x, w3, b3, w4, b4)


# ----------------------------------------------------------------------------
# K-tiled Linear(feat, 256)+ReLU with the f32 Linear(256, num_classes) head
# fused into the finalize step.  The big bf16 weight is streamed in large
# (~6 MB) K tiles; K is zero-padded to a multiple of the tile offline.
# ----------------------------------------------------------------------------
def _fused_linear_kernel(x_ref, w1_ref, b1_ref, w2_ref, b2_ref, o_ref, acc_ref):
    k = pl.program_id(0)

    @pl.when(k == 0)
    def _():
        acc_ref[...] = jnp.zeros_like(acc_ref)

    acc_ref[...] += jnp.dot(x_ref[...], w1_ref[...],
                            preferred_element_type=jnp.float32)

    @pl.when(k == pl.num_programs(0) - 1)
    def _():
        h = jnp.maximum(acc_ref[...] + b1_ref[...], 0.0)          # [B, 256] f32
        y = jnp.dot(h, w2_ref[...],                                # f32 head (tiny)
                    preferred_element_type=jnp.float32) + b2_ref[...]
        o_ref[...] = y.astype(o_ref.dtype)


def fused_linear(x, w1, b1, w2, b2, *, tk):
    B, Fp = x.shape
    assert w1.shape[0] == Fp and Fp % tk == 0, (w1.shape, Fp, tk)
    fo = w1.shape[1]
    nc = w2.shape[1]
    nk = Fp // tk
    return pl.pallas_call(
        _fused_linear_kernel,
        out_shape=jax.ShapeDtypeStruct((B, nc), jnp.float32),
        grid=(nk,),
        in_specs=[
            pl.BlockSpec((B, tk), lambda k: (0, k)),
            pl.BlockSpec((tk, fo), lambda k: (k, 0)),
            pl.BlockSpec((1, fo), lambda k: (0, 0)),
            pl.BlockSpec((fo, nc), lambda k: (0, 0)),
            pl.BlockSpec((1, nc), lambda k: (0, 0)),
        ],
        out_specs=pl.BlockSpec((B, nc), lambda k: (0, 0)),
        scratch_shapes=[pltpu.VMEM((B, fo), jnp.float32)],
        compiler_params=pltpu.CompilerParams(
            dimension_semantics=("arbitrary",),
            vmem_limit_bytes=_VMEM_LIMIT),
    )(x, w1, b1, w2, b2)


# ----------------------------------------------------------------------------
# Full MusiClass forward (post-spectrogram).
# ----------------------------------------------------------------------------
@jax.jit
def musiclass_forward(spec, params):
    # spec: [B, n_mels, n_frames] precomputed log-mel spectrogram (float32).
    B, H, W = spec.shape
    assert H % 4 == 0 and W % 4 == 0, (H, W)
    Wp = _round_up(W, 8)                        # e.g. 156 -> 160 at real shape
    x = spec.astype(jnp.bfloat16)
    x = jnp.pad(x, ((0, 0), (2, 2), (2, 2 + Wp - W)))[..., None]   # [B, H+4, Wp+4, 1]

    a = conv_block_a(x, params["w1"], params["b1"], params["w2"], params["b2"],
                     h=H, wp=Wp, valid_w=W)                         # [B, H/2, Wp/2, 64]
    b = conv_block_b(a, params["w3"], params["b3"], params["w4"], params["b4"],
                     valid_w2=W // 2, valid_w4=W // 4)              # [B, H/4, Wp/4, 128]

    w4v = W // 4
    if w4v < b.shape[2]:
        b = b[:, :, :w4v, :]                    # drop width-alignment padding columns
    xf = b.reshape(B, -1)                       # NHWC flatten (wf rows pre-permuted)

    F = xf.shape[1]
    tk = _fc_tile_k(F)
    Fp = _round_up(F, tk)
    if Fp > F:
        xf = jnp.pad(xf, ((0, 0), (0, Fp - F)))
    return fused_linear(xf, params["wf"], params["bf"],
                        params["wl"], params["bl"], tk=tk)


# ----------------------------------------------------------------------------
# Parameter construction (torch-equivalent init; conv/FC weights bf16,
# biases and the small head in f32).
# ----------------------------------------------------------------------------
def _fc_rows_nchw_to_nhwc(w, c, ho, wo):
    # torch flattens NCHW (c, h, w); our activations flatten NHWC (h, w, c).
    fo = w.shape[1]
    return w.reshape(c, ho, wo, fo).transpose(1, 2, 0, 3).reshape(c * ho * wo, fo)


def init_params(key, n_mels, n_frames, num_classes):
    ks = jax.random.split(key, 12)

    def conv_init(kw, kb, cin, cout):
        s = 1.0 / (cin * 9) ** 0.5
        w = jax.random.uniform(kw, (3, 3, cin, cout), jnp.float32, -s, s)
        b = jax.random.uniform(kb, (1, 1, cout), jnp.float32, -s, s)
        return w.astype(jnp.bfloat16), b

    def lin_init(kw, kb, fin, fout):
        s = 1.0 / fin ** 0.5
        w = jax.random.uniform(kw, (fin, fout), jnp.float32, -s, s)
        b = jax.random.uniform(kb, (1, fout), jnp.float32, -s, s)
        return w, b

    p = {}
    p["w1"], p["b1"] = conv_init(ks[0], ks[1], 1, 32)
    p["w2"], p["b2"] = conv_init(ks[2], ks[3], 32, 64)
    p["w3"], p["b3"] = conv_init(ks[4], ks[5], 64, 128)
    p["w4"], p["b4"] = conv_init(ks[6], ks[7], 128, 128)

    c, ho, wo = 128, n_mels // 4, n_frames // 4
    feat = c * ho * wo
    wf, bf = lin_init(ks[8], ks[9], feat, 256)
    # Fold the torch NCHW flatten order into the weight rows once, offline,
    # and zero-pad the K (rows) dim to a multiple of the streaming tile.
    wf = _fc_rows_nchw_to_nhwc(wf, c, ho, wo)
    tk = _fc_tile_k(feat)
    feat_pad = _round_up(feat, tk)
    if feat_pad > feat:
        wf = jnp.pad(wf, ((0, feat_pad - feat), (0, 0)))
    p["wf"] = wf.astype(jnp.bfloat16)
    p["bf"] = bf
    p["wl"], p["bl"] = lin_init(ks[10], ks[11], 256, num_classes)   # f32 head
    return p


if __name__ == "__main__":
    # Small shapes consistent with the module: B=2, 16 mel bins x 16 frames
    # (real model: 128 x 156; all tiling / K-streaming logic scales to that).
    B, N_MELS, N_FRAMES, NUM_CLASSES = 2, 16, 16, 18
    key = jax.random.PRNGKey(0)
    k_spec, k_par = jax.random.split(key)

    spec = jax.random.normal(k_spec, (B, N_MELS, N_FRAMES), jnp.float32)
    params = init_params(k_par, N_MELS, N_FRAMES, NUM_CLASSES)

    logits = musiclass_forward(spec, params)
    jax.block_until_ready(logits)
    assert logits.shape == (B, NUM_CLASSES), logits.shape
    assert bool(jnp.all(jnp.isfinite(logits)))
    print("KERNEL_OK")
</pallas_src>

<mosaic_0001>
module attributes {stable_mosaic.version = 11 : i64} {
  func.func @_conv_block_a_kernel(%arg0: i32, %arg1: i32, %arg2: memref<1x20x20x1xbf16, #tpu.memory_space<vmem>>, %arg3: memref<3x3x1x32xbf16, #tpu.memory_space<vmem>>, %arg4: memref<1x1x32xf32, #tpu.memory_space<vmem>>, %arg5: memref<3x3x32x64xbf16, #tpu.memory_space<vmem>>, %arg6: memref<1x1x64xf32, #tpu.memory_space<vmem>>, %arg7: memref<1x8x8x64xbf16, #tpu.memory_space<vmem>>, %arg8: memref<18x18x32xbf16, #tpu.memory_space<vmem>>) attributes {dimension_semantics = [#tpu.dimension_semantics<parallel>, #tpu.dimension_semantics<parallel>], iteration_bounds = array<i64: 2, 1>, scalar_prefetch = 0 : i64, scratch_operands = 1 : i64, tpu.core_type = #tpu.core_type<tc>, window_params = [{transform_indices = @transform_0, window_bounds = array<i64: 1, 20, 20, 1>}, {pipeline_mode = #tpu.pipeline_mode<synchronous>, transform_indices = @transform_1, window_bounds = array<i64: 3, 3, 1, 32>}, {pipeline_mode = #tpu.pipeline_mode<synchronous>, transform_indices = @transform_2, window_bounds = array<i64: 1, 1, 32>}, {pipeline_mode = #tpu.pipeline_mode<synchronous>, transform_indices = @transform_3, window_bounds = array<i64: 3, 3, 32, 64>}, {pipeline_mode = #tpu.pipeline_mode<synchronous>, transform_indices = @transform_4, window_bounds = array<i64: 1, 1, 64>}, {transform_indices = @transform_5, window_bounds = array<i64: 1, 8, 8, 64>}]} {
    %c16_i32 = arith.constant 16 : i32
    %0 = arith.muli %arg1, %c16_i32 : i32
    %c1_i32 = arith.constant 1 : i32
    %1 = arith.subi %0, %c1_i32 : i32
    %c0_i32 = arith.constant 0 : i32
    %c9_i32 = arith.constant 9 : i32
    %2 = arith.addi %c0_i32, %c9_i32 : i32
    %c1_i32_0 = arith.constant 1 : i32
    scf.for %arg9 = %c0_i32 to %2 step %c1_i32_0  : i32 {
      %c2_i32 = arith.constant 2 : i32
      %4 = arith.muli %arg9, %c2_i32 : i32
      %5 = arith.addi %1, %4 : i32
      %cst = arith.constant 0.000000e+00 : f32
      %6 = vector.broadcast %cst : f32 to vector<2x18x32xf32>
      %c0_i32_5 = arith.constant 0 : i32
      %7 = arith.addi %5, %c0_i32_5 : i32
      %c1_i32_6 = arith.constant 1 : i32
      %8 = arith.addi %7, %c1_i32_6 : i32
      %c0 = arith.constant 0 : index
      %9 = arith.index_cast %8 : i32 to index
      %c0_7 = arith.constant 0 : index
      %c0_8 = arith.constant 0 : index
      %10 = vector.load %arg2[%c0, %9, %c0_7, %c0_8] : memref<1x20x20x1xbf16, #tpu.memory_space<vmem>>, vector<1x2x18x1xbf16>
      %11 = vector.shape_cast %10 : vector<1x2x18x1xbf16> to vector<2x18x1xbf16>
      %12 = arith.extf %11 : vector<2x18x1xbf16> to vector<2x18x1xf32>
      %c0_9 = arith.constant 0 : index
      %c0_10 = arith.constant 0 : index
      %c0_11 = arith.constant 0 : index
      %c0_12 = arith.constant 0 : index
      %13 = vector.load %arg3[%c0_9, %c0_10, %c0_11, %c0_12] : memref<3x3x1x32xbf16, #tpu.memory_space<vmem>>, vector<1x1x1x32xbf16>
      %14 = vector.shape_cast %13 : vector<1x1x1x32xbf16> to vector<1x32xbf16>
      %15 = arith.extf %14 : vector<1x32xbf16> to vector<1x32xf32>
      %16 = vector.shape_cast %15 : vector<1x32xf32> to vector<1x1x32xf32>
      %17 = vector.broadcast %12 : vector<2x18x1xf32> to vector<2x18x32xf32>
      %18 = vector.broadcast %16 : vector<1x1x32xf32> to vector<2x18x32xf32>
      %19 = arith.mulf %17, %18 : vector<2x18x32xf32>
      %20 = arith.addf %6, %19 : vector<2x18x32xf32>
      %c0_i32_13 = arith.constant 0 : i32
      %21 = arith.addi %5, %c0_i32_13 : i32
      %c1_i32_14 = arith.constant 1 : i32
      %22 = arith.addi %21, %c1_i32_14 : i32
      %c0_15 = arith.constant 0 : index
      %23 = arith.index_cast %22 : i32 to index
      %c1 = arith.constant 1 : index
      %c0_16 = arith.constant 0 : index
      %24 = vector.load %arg2[%c0_15, %23, %c1, %c0_16] : memref<1x20x20x1xbf16, #tpu.memory_space<vmem>>, vector<1x2x18x1xbf16>
      %25 = vector.shape_cast %24 : vector<1x2x18x1xbf16> to vector<2x18x1xbf16>
      %26 = arith.extf %25 : vector<2x18x1xbf16> to vector<2x18x1xf32>
      %c0_17 = arith.constant 0 : index
      %c1_18 = arith.constant 1 : index
      %c0_19 = arith.constant 0 : index
      %c0_20 = arith.constant 0 : index
      %27 = vector.load %arg3[%c0_17, %c1_18, %c0_19, %c0_20] : memref<3x3x1x32xbf16, #tpu.memory_space<vmem>>, vector<1x1x1x32xbf16>
      %28 = vector.shape_cast %27 : vector<1x1x1x32xbf16> to vector<1x32xbf16>
      %29 = arith.extf %28 : vector<1x32xbf16> to vector<1x32xf32>
      %30 = vector.shape_cast %29 : vector<1x32xf32> to vector<1x1x32xf32>
      %31 = vector.broadcast %26 : vector<2x18x1xf32> to vector<2x18x32xf32>
      %32 = vector.broadcast %30 : vector<1x1x32xf32> to vector<2x18x32xf32>
      %33 = arith.mulf %31, %32 : vector<2x18x32xf32>
      %34 = arith.addf %20, %33 : vector<2x18x32xf32>
      %c0_i32_21 = arith.constant 0 : i32
      %35 = arith.addi %5, %c0_i32_21 : i32
      %c1_i32_22 = arith.constant 1 : i32
      %36 = arith.addi %35, %c1_i32_22 : i32
      %c0_23 = arith.constant 0 : index
      %37 = arith.index_cast %36 : i32 to index
      %c2 = arith.constant 2 : index
      %c0_24 = arith.constant 0 : index
      %38 = vector.load %arg2[%c0_23, %37, %c2, %c0_24] : memref<1x20x20x1xbf16, #tpu.memory_space<vmem>>, vector<1x2x18x1xbf16>
      %39 = vector.shape_cast %38 : vector<1x2x18x1xbf16> to vector<2x18x1xbf16>
      %40 = arith.extf %39 : vector<2x18x1xbf16> to vector<2x18x1xf32>
      %c0_25 = arith.constant 0 : index
      %c2_26 = arith.constant 2 : index
      %c0_27 = arith.constant 0 : index
      %c0_28 = arith.constant 0 : index
      %41 = vector.load %arg3[%c0_25, %c2_26, %c0_27, %c0_28] : memref<3x3x1x32xbf16, #tpu.memory_space<vmem>>, vector<1x1x1x32xbf16>
      %42 = vector.shape_cast %41 : vector<1x1x1x32xbf16> to vector<1x32xbf16>
      %43 = arith.extf %42 : vector<1x32xbf16> to vector<1x32xf32>
      %44 = vector.shape_cast %43 : vector<1x32xf32> to vector<1x1x32xf32>
      %45 = vector.broadcast %40 : vector<2x18x1xf32> to vector<2x18x32xf32>
      %46 = vector.broadcast %44 : vector<1x1x32xf32> to vector<2x18x32xf32>
      %47 = arith.mulf %45, %46 : vector<2x18x32xf32>
      %48 = arith.addf %34, %47 : vector<2x18x32xf32>
      %c1_i32_29 = arith.constant 1 : i32
      %49 = arith.addi %5, %c1_i32_29 : i32
      %c1_i32_30 = arith.constant 1 : i32
      %50 = arith.addi %49, %c1_i32_30 : i32
      %c0_31 = arith.constant 0 : index
      %51 = arith.index_cast %50 : i32 to index
      %c0_32 = arith.constant 0 : index
      %c0_33 = arith.constant 0 : index
      %52 = vector.load %arg2[%c0_31, %51, %c0_32, %c0_33] : memref<1x20x20x1xbf16, #tpu.memory_space<vmem>>, vector<1x2x18x1xbf16>
      %53 = vector.shape_cast %52 : vector<1x2x18x1xbf16> to vector<2x18x1xbf16>
      %54 = arith.extf %53 : vector<2x18x1xbf16> to vector<2x18x1xf32>
      %c1_34 = arith.constant 1 : index
      %c0_35 = arith.constant 0 : index
      %c0_36 = arith.constant 0 : index
      %c0_37 = arith.constant 0 : index
      %55 = vector.load %arg3[%c1_34, %c0_35, %c0_36, %c0_37] : memref<3x3x1x32xbf16, #tpu.memory_space<vmem>>, vector<1x1x1x32xbf16>
      %56 = vector.shape_cast %55 : vector<1x1x1x32xbf16> to vector<1x32xbf16>
      %57 = arith.extf %56 : vector<1x32xbf16> to vector<1x32xf32>
      %58 = vector.shape_cast %57 : vector<1x32xf32> to vector<1x1x32xf32>
      %59 = vector.broadcast %54 : vector<2x18x1xf32> to vector<2x18x32xf32>
      %60 = vector.broadcast %58 : vector<1x1x32xf32> to vector<2x18x32xf32>
      %61 = arith.mulf %59, %60 : vector<2x18x32xf32>
      %62 = arith.addf %48, %61 : vector<2x18x32xf32>
      %c1_i32_38 = arith.constant 1 : i32
      %63 = arith.addi %5, %c1_i32_38 : i32
      %c1_i32_39 = arith.constant 1 : i32
      %64 = arith.addi %63, %c1_i32_39 : i32
      %c0_40 = arith.constant 0 : index
      %65 = arith.index_cast %64 : i32 to index
      %c1_41 = arith.constant 1 : index
      %c0_42 = arith.constant 0 : index
      %66 = vector.load %arg2[%c0_40, %65, %c1_41, %c0_42] : memref<1x20x20x1xbf16, #tpu.memory_space<vmem>>, vector<1x2x18x1xbf16>
      %67 = vector.shape_cast %66 : vector<1x2x18x1xbf16> to vector<2x18x1xbf16>
      %68 = arith.extf %67 : vector<2x18x1xbf16> to vector<2x18x1xf32>
      %c1_43 = arith.constant 1 : index
      %c1_44 = arith.constant 1 : index
      %c0_45 = arith.constant 0 : index
      %c0_46 = arith.constant 0 : index
      %69 = vector.load %arg3[%c1_43, %c1_44, %c0_45, %c0_46] : memref<3x3x1x32xbf16, #tpu.memory_space<vmem>>, vector<1x1x1x32xbf16>
      %70 = vector.shape_cast %69 : vector<1x1x1x32xbf16> to vector<1x32xbf16>
      %71 = arith.extf %70 : vector<1x32xbf16> to vector<1x32xf32>
      %72 = vector.shape_cast %71 : vector<1x32xf32> to vector<1x1x32xf32>
      %73 = vector.broadcast %68 : vector<2x18x1xf32> to vector<2x18x32xf32>
      %74 = vector.broadcast %72 : vector<1x1x32xf32> to vector<2x18x32xf32>
      %75 = arith.mulf %73, %74 : vector<2x18x32xf32>
      %76 = arith.addf %62, %75 : vector<2x18x32xf32>
      %c1_i32_47 = arith.constant 1 : i32
      %77 = arith.addi %5, %c1_i32_47 : i32
      %c1_i32_48 = arith.constant 1 : i32
      %78 = arith.addi %77, %c1_i32_48 : i32
      %c0_49 = arith.constant 0 : index
      %79 = arith.index_cast %78 : i32 to index
      %c2_50 = arith.constant 2 : index
      %c0_51 = arith.constant 0 : index
      %80 = vector.load %arg2[%c0_49, %79, %c2_50, %c0_51] : memref<1x20x20x1xbf16, #tpu.memory_space<vmem>>, vector<1x2x18x1xbf16>
      %81 = vector.shape_cast %80 : vector<1x2x18x1xbf16> to vector<2x18x1xbf16>
      %82 = arith.extf %81 : vector<2x18x1xbf16> to vector<2x18x1xf32>
      %c1_52 = arith.constant 1 : index
      %c2_53 = arith.constant 2 : index
      %c0_54 = arith.constant 0 : index
      %c0_55 = arith.constant 0 : index
      %83 = vector.load %arg3[%c1_52, %c2_53, %c0_54, %c0_55] : memref<3x3x1x32xbf16, #tpu.memory_space<vmem>>, vector<1x1x1x32xbf16>
      %84 = vector.shape_cast %83 : vector<1x1x1x32xbf16> to vector<1x32xbf16>
      %85 = arith.extf %84 : vector<1x32xbf16> to vector<1x32xf32>
      %86 = vector.shape_cast %85 : vector<1x32xf32> to vector<1x1x32xf32>
      %87 = vector.broadcast %82 : vector<2x18x1xf32> to vector<2x18x32xf32>
      %88 = vector.broadcast %86 : vector<1x1x32xf32> to vector<2x18x32xf32>
      %89 = arith.mulf %87, %88 : vector<2x18x32xf32>
      %90 = arith.addf %76, %89 : vector<2x18x32xf32>
      %c2_i32_56 = arith.constant 2 : i32
      %91 = arith.addi %5, %c2_i32_56 : i32
      %c1_i32_57 = arith.constant 1 : i32
      %92 = arith.addi %91, %c1_i32_57 : i32
      %c0_58 = arith.constant 0 : index
      %93 = arith.index_cast %92 : i32 to index
      %c0_59 = arith.constant 0 : index
      %c0_60 = arith.constant 0 : index
      %94 = vector.load %arg2[%c0_58, %93, %c0_59, %c0_60] : memref<1x20x20x1xbf16, #tpu.memory_space<vmem>>, vector<1x2x18x1xbf16>
      %95 = vector.shape_cast %94 : vector<1x2x18x1xbf16> to vector<2x18x1xbf16>
      %96 = arith.extf %95 : vector<2x18x1xbf16> to vector<2x18x1xf32>
      %c2_61 = arith.constant 2 : index
      %c0_62 = arith.constant 0 : index
      %c0_63 = arith.constant 0 : index
      %c0_64 = arith.constant 0 : index
      %97 = vector.load %arg3[%c2_61, %c0_62, %c0_63, %c0_64] : memref<3x3x1x32xbf16, #tpu.memory_space<vmem>>, vector<1x1x1x32xbf16>
      %98 = vector.shape_cast %97 : vector<1x1x1x32xbf16> to vector<1x32xbf16>
      %99 = arith.extf %98 : vector<1x32xbf16> to vector<1x32xf32>
      %100 = vector.shape_cast %99 : vector<1x32xf32> to vector<1x1x32xf32>
      %101 = vector.broadcast %96 : vector<2x18x1xf32> to vector<2x18x32xf32>
      %102 = vector.broadcast %100 : vector<1x1x32xf32> to vector<2x18x32xf32>
      %103 = arith.mulf %101, %102 : vector<2x18x32xf32>
      %104 = arith.addf %90, %103 : vector<2x18x32xf32>
      %c2_i32_65 = arith.constant 2 : i32
      %105 = arith.addi %5, %c2_i32_65 : i32
      %c1_i32_66 = arith.constant 1 : i32
      %106 = arith.addi %105, %c1_i32_66 : i32
      %c0_67 = arith.constant 0 : index
      %107 = arith.index_cast %106 : i32 to index
      %c1_68 = arith.constant 1 : index
      %c0_69 = arith.constant 0 : index
      %108 = vector.load %arg2[%c0_67, %107, %c1_68, %c0_69] : memref<1x20x20x1xbf16, #tpu.memory_space<vmem>>, vector<1x2x18x1xbf16>
      %109 = vector.shape_cast %108 : vector<1x2x18x1xbf16> to vector<2x18x1xbf16>
      %110 = arith.extf %109 : vector<2x18x1xbf16> to vector<2x18x1xf32>
      %c2_70 = arith.constant 2 : index
      %c1_71 = arith.constant 1 : index
      %c0_72 = arith.constant 0 : index
      %c0_73 = arith.constant 0 : index
      %111 = vector.load %arg3[%c2_70, %c1_71, %c0_72, %c0_73] : memref<3x3x1x32xbf16, #tpu.memory_space<vmem>>, vector<1x1x1x32xbf16>
      %112 = vector.shape_cast %111 : vector<1x1x1x32xbf16> to vector<1x32xbf16>
      %113 = arith.extf %112 : vector<1x32xbf16> to vector<1x32xf32>
      %114 = vector.shape_cast %113 : vector<1x32xf32> to vector<1x1x32xf32>
      %115 = vector.broadcast %110 : vector<2x18x1xf32> to vector<2x18x32xf32>
      %116 = vector.broadcast %114 : vector<1x1x32xf32> to vector<2x18x32xf32>
      %117 = arith.mulf %115, %116 : vector<2x18x32xf32>
      %118 = arith.addf %104, %117 : vector<2x18x32xf32>
      %c2_i32_74 = arith.constant 2 : i32
      %119 = arith.addi %5, %c2_i32_74 : i32
      %c1_i32_75 = arith.constant 1 : i32
      %120 = arith.addi %119, %c1_i32_75 : i32
      %c0_76 = arith.constant 0 : index
      %121 = arith.index_cast %120 : i32 to index
      %c2_77 = arith.constant 2 : index
      %c0_78 = arith.constant 0 : index
      %122 = vector.load %arg2[%c0_76, %121, %c2_77, %c0_78] : memref<1x20x20x1xbf16, #tpu.memory_space<vmem>>, vector<1x2x18x1xbf16>
      %123 = vector.shape_cast %122 : vector<1x2x18x1xbf16> to vector<2x18x1xbf16>
      %124 = arith.extf %123 : vector<2x18x1xbf16> to vector<2x18x1xf32>
      %c2_79 = arith.constant 2 : index
      %c2_80 = arith.constant 2 : index
      %c0_81 = arith.constant 0 : index
      %c0_82 = arith.constant 0 : index
      %125 = vector.load %arg3[%c2_79, %c2_80, %c0_81, %c0_82] : memref<3x3x1x32xbf16, #tpu.memory_space<vmem>>, vector<1x1x1x32xbf16>
      %126 = vector.shape_cast %125 : vector<1x1x1x32xbf16> to vector<1x32xbf16>
      %127 = arith.extf %126 : vector<1x32xbf16> to vector<1x32xf32>
      %128 = vector.shape_cast %127 : vector<1x32xf32> to vector<1x1x32xf32>
      %129 = vector.broadcast %124 : vector<2x18x1xf32> to vector<2x18x32xf32>
      %130 = vector.broadcast %128 : vector<1x1x32xf32> to vector<2x18x32xf32>
      %131 = arith.mulf %129, %130 : vector<2x18x32xf32>
      %132 = arith.addf %118, %131 : vector<2x18x32xf32>
      %c0_83 = arith.constant 0 : index
      %c0_84 = arith.constant 0 : index
      %c0_85 = arith.constant 0 : index
      %133 = vector.load %arg4[%c0_83, %c0_84, %c0_85] : memref<1x1x32xf32, #tpu.memory_space<vmem>>, vector<1x1x32xf32>
      %134 = vector.broadcast %133 : vector<1x1x32xf32> to vector<2x18x32xf32>
      %135 = arith.addf %132, %134 : vector<2x18x32xf32>
      %cst_86 = arith.constant 0.000000e+00 : f32
      %136 = vector.broadcast %cst_86 : f32 to vector<2x18x32xf32>
      %137 = arith.maximumf %135, %136 : vector<2x18x32xf32>
      %138 = tpu.iota {dimensions = array<i32: 0>} : vector<2x18x32xi32>
      %139 = vector.broadcast %5 : i32 to vector<2x18x32xi32>
      %140 = arith.addi %139, %138 : vector<2x18x32xi32>
      %141 = tpu.iota {dimensions = array<i32: 1>} : vector<2x18x32xi32>
      %c0_i32_87 = arith.constant 0 : i32
      %142 = vector.broadcast %c0_i32_87 : i32 to vector<2x18x32xi32>
      %143 = arith.cmpi sge, %140, %142 : vector<2x18x32xi32>
      %c16_i32_88 = arith.constant 16 : i32
      %144 = vector.broadcast %c16_i32_88 : i32 to vector<2x18x32xi32>
      %145 = arith.cmpi slt, %140, %144 : vector<2x18x32xi32>
      %146 = arith.andi %143, %145 : vector<2x18x32xi1>
      %c1_i32_89 = arith.constant 1 : i32
      %147 = vector.broadcast %c1_i32_89 : i32 to vector<2x18x32xi32>
      %148 = arith.cmpi sge, %141, %147 : vector<2x18x32xi32>
      %149 = arith.andi %146, %148 : vector<2x18x32xi1>
      %c16_i32_90 = arith.constant 16 : i32
      %150 = vector.broadcast %c16_i32_90 : i32 to vector<2x18x32xi32>
      %151 = arith.cmpi sle, %141, %150 : vector<2x18x32xi32>
      %152 = arith.andi %149, %151 : vector<2x18x32xi1>
      %cst_91 = arith.constant 0.000000e+00 : f32
      %153 = vector.broadcast %cst_91 : f32 to vector<2x18x32xf32>
      %154 = arith.select %152, %137, %153 : vector<2x18x32xi1>, vector<2x18x32xf32>
      %155 = arith.truncf %154 : vector<2x18x32xf32> to vector<2x18x32xbf16>
      %c2_i32_92 = arith.constant 2 : i32
      %156 = arith.muli %arg9, %c2_i32_92 : i32
      %157 = arith.index_cast %156 : i32 to index
      %c0_93 = arith.constant 0 : index
      %c0_94 = arith.constant 0 : index
      %158 = vector.load %arg8[%157, %c0_93, %c0_94] : memref<18x18x32xbf16, #tpu.memory_space<vmem>>, vector<2x18x32xbf16>
      tpu.vector_store %arg8[%157, %c0_93, %c0_94], %155 {strides = array<i32>} : memref<18x18x32xbf16, #tpu.memory_space<vmem>>, vector<2x18x32xbf16>,
    }
    %c9_i32_1 = arith.constant 9 : i32
    %c0_i32_2 = arith.constant 0 : i32
    %c8_i32 = arith.constant 8 : i32
    %3 = arith.addi %c0_i32_2, %c8_i32 : i32
    %c1_i32_3 = arith.constant 1 : i32
    scf.for %arg9 = %c0_i32_2 to %3 step %c1_i32_3  : i32 {
      %cst = arith.constant 0.000000e+00 : f32
      %4 = vector.broadcast %cst : f32 to vector<32x64xf32>
      %c2_i32 = arith.constant 2 : i32
      %5 = arith.muli %c2_i32, %arg9 : i32
      %c0_i32_5 = arith.constant 0 : i32
      %6 = arith.addi %5, %c0_i32_5 : i32
      %7 = arith.index_cast %6 : i32 to index
      %c0 = arith.constant 0 : index
      %c0_6 = arith.constant 0 : index
      %8 = vector.load %arg8[%7, %c0, %c0_6] : memref<18x18x32xbf16, #tpu.memory_space<vmem>>, vector<2x16x32xbf16>
      %9 = vector.shape_cast %8 : vector<2x16x32xbf16> to vector<32x32xbf16>
      %c0_7 = arith.constant 0 : index
      %c0_8 = arith.constant 0 : index
      %c0_9 = arith.constant 0 : index
      %c0_10 = arith.constant 0 : index
      %10 = vector.load %arg5[%c0_7, %c0_8, %c0_9, %c0_10] : memref<3x3x32x64xbf16, #tpu.memory_space<vmem>>, vector<1x1x32x64xbf16>
      %11 = vector.shape_cast %10 : vector<1x1x32x64xbf16> to vector<32x64xbf16>
      %cst_11 = arith.constant dense<0.000000e+00> : vector<32x64xf32>
      %12 = tpu.matmul %9, %11, %cst_11 {dimension_numbers = #tpu.dot_dimension_numbers<[1], [0], [0], [1], [0, 0, 1, 1], [], []>} : vector<32x32xbf16>, vector<32x64xbf16>, vector<32x64xf32> -> vector<32x64xf32>
      %13 = arith.addf %4, %12 : vector<32x64xf32>
      %c2_i32_12 = arith.constant 2 : i32
      %14 = arith.muli %c2_i32_12, %arg9 : i32
      %c0_i32_13 = arith.constant 0 : i32
      %15 = arith.addi %14, %c0_i32_13 : i32
      %16 = arith.index_cast %15 : i32 to index
      %c1 = arith.constant 1 : index
      %c0_14 = arith.constant 0 : index
      %17 = vector.load %arg8[%16, %c1, %c0_14] : memref<18x18x32xbf16, #tpu.memory_space<vmem>>, vector<2x16x32xbf16>
      %18 = vector.shape_cast %17 : vector<2x16x32xbf16> to vector<32x32xbf16>
      %c0_15 = arith.constant 0 : index
      %c1_16 = arith.constant 1 : index
      %c0_17 = arith.constant 0 : index
      %c0_18 = arith.constant 0 : index
      %19 = vector.load %arg5[%c0_15, %c1_16, %c0_17, %c0_18] : memref<3x3x32x64xbf16, #tpu.memory_space<vmem>>, vector<1x1x32x64xbf16>
      %20 = vector.shape_cast %19 : vector<1x1x32x64xbf16> to vector<32x64xbf16>
      %cst_19 = arith.constant dense<0.000000e+00> : vector<32x64xf32>
      %21 = tpu.matmul %18, %20, %cst_19 {dimension_numbers = #tpu.dot_dimension_numbers<[1], [0], [0], [1], [0, 0, 1, 1], [], []>} : vector<32x32xbf16>, vector<32x64xbf16>, vector<32x64xf32> -> vector<32x64xf32>
      %22 = arith.addf %13, %21 : vector<32x64xf32>
      %c2_i32_20 = arith.constant 2 : i32
      %23 = arith.muli %c2_i32_20, %arg9 : i32
      %c0_i32_21 = arith.constant 0 : i32
      %24 = arith.addi %23, %c0_i32_21 : i32
      %25 = arith.index_cast %24 : i32 to index
      %c2 = arith.constant 2 : index
      %c0_22 = arith.constant 0 : index
      %26 = vector.load %arg8[%25, %c2, %c0_22] : memref<18x18x32xbf16, #tpu.memory_space<vmem>>, vector<2x16x32xbf16>
      %27 = vector.shape_cast %26 : vector<2x16x32xbf16> to vector<32x32xbf16>
      %c0_23 = arith.constant 0 : index
      %c2_24 = arith.constant 2 : index
      %c0_25 = arith.constant 0 : index
      %c0_26 = arith.constant 0 : index
      %28 = vector.load %arg5[%c0_23, %c2_24, %c0_25, %c0_26] : memref<3x3x32x64xbf16, #tpu.memory_space<vmem>>, vector<1x1x32x64xbf16>
      %29 = vector.shape_cast %28 : vector<1x1x32x64xbf16> to vector<32x64xbf16>
      %cst_27 = arith.constant dense<0.000000e+00> : vector<32x64xf32>
      %30 = tpu.matmul %27, %29, %cst_27 {dimension_numbers = #tpu.dot_dimension_numbers<[1], [0], [0], [1], [0, 0, 1, 1], [], []>} : vector<32x32xbf16>, vector<32x64xbf16>, vector<32x64xf32> -> vector<32x64xf32>
      %31 = arith.addf %22, %30 : vector<32x64xf32>
      %c2_i32_28 = arith.constant 2 : i32
      %32 = arith.muli %c2_i32_28, %arg9 : i32
      %c1_i32_29 = arith.constant 1 : i32
      %33 = arith.addi %32, %c1_i32_29 : i32
      %34 = arith.index_cast %33 : i32 to index
      %c0_30 = arith.constant 0 : index
      %c0_31 = arith.constant 0 : index
      %35 = vector.load %arg8[%34, %c0_30, %c0_31] : memref<18x18x32xbf16, #tpu.memory_space<vmem>>, vector<2x16x32xbf16>
      %36 = vector.shape_cast %35 : vector<2x16x32xbf16> to vector<32x32xbf16>
      %c1_32 = arith.constant 1 : index
      %c0_33 = arith.constant 0 : index
      %c0_34 = arith.constant 0 : index
      %c0_35 = arith.constant 0 : index
      %37 = vector.load %arg5[%c1_32, %c0_33, %c0_34, %c0_35] : memref<3x3x32x64xbf16, #tpu.memory_space<vmem>>, vector<1x1x32x64xbf16>
      %38 = vector.shape_cast %37 : vector<1x1x32x64xbf16> to vector<32x64xbf16>
      %cst_36 = arith.constant dense<0.000000e+00> : vector<32x64xf32>
      %39 = tpu.matmul %36, %38, %cst_36 {dimension_numbers = #tpu.dot_dimension_numbers<[1], [0], [0], [1], [0, 0, 1, 1], [], []>} : vector<32x32xbf16>, vector<32x64xbf16>, vector<32x64xf32> -> vector<32x64xf32>
      %40 = arith.addf %31, %39 : vector<32x64xf32>
      %c2_i32_37 = arith.constant 2 : i32
      %41 = arith.muli %c2_i32_37, %arg9 : i32
      %c1_i32_38 = arith.constant 1 : i32
      %42 = arith.addi %41, %c1_i32_38 : i32
      %43 = arith.index_cast %42 : i32 to index
      %c1_39 = arith.constant 1 : index
      %c0_40 = arith.constant 0 : index
      %44 = vector.load %arg8[%43, %c1_39, %c0_40] : memref<18x18x32xbf16, #tpu.memory_space<vmem>>, vector<2x16x32xbf16>
      %45 = vector.shape_cast %44 : vector<2x16x32xbf16> to vector<32x32xbf16>
      %c1_41 = arith.constant 1 : index
      %c1_42 = arith.constant 1 : index
      %c0_43 = arith.constant 0 : index
      %c0_44 = arith.constant 0 : index
      %46 = vector.load %arg5[%c1_41, %c1_42, %c0_43, %c0_44] : memref<3x3x32x64xbf16, #tpu.memory_space<vmem>>, vector<1x1x32x64xbf16>
      %47 = vector.shape_cast %46 : vector<1x1x32x64xbf16> to vector<32x64xbf16>
      %cst_45 = arith.constant dense<0.000000e+00> : vector<32x64xf32>
      %48 = tpu.matmul %45, %47, %cst_45 {dimension_numbers = #tpu.dot_dimension_numbers<[1], [0], [0], [1], [0, 0, 1, 1], [], []>} : vector<32x32xbf16>, vector<32x64xbf16>, vector<32x64xf32> -> vector<32x64xf32>
      %49 = arith.addf %40, %48 : vector<32x64xf32>
      %c2_i32_46 = arith.constant 2 : i32
      %50 = arith.muli %c2_i32_46, %arg9 : i32
      %c1_i32_47 = arith.constant 1 : i32
      %51 = arith.addi %50, %c1_i32_47 : i32
      %52 = arith.index_cast %51 : i32 to index
      %c2_48 = arith.constant 2 : index
      %c0_49 = arith.constant 0 : index
      %53 = vector.load %arg8[%52, %c2_48, %c0_49] : memref<18x18x32xbf16, #tpu.memory_space<vmem>>, vector<2x16x32xbf16>
      %54 = vector.shape_cast %53 : vector<2x16x32xbf16> to vector<32x32xbf16>
      %c1_50 = arith.constant 1 : index
      %c2_51 = arith.constant 2 : index
      %c0_52 = arith.constant 0 : index
      %c0_53 = arith.constant 0 : index
      %55 = vector.load %arg5[%c1_50, %c2_51, %c0_52, %c0_53] : memref<3x3x32x64xbf16, #tpu.memory_space<vmem>>, vector<1x1x32x64xbf16>
      %56 = vector.shape_cast %55 : vector<1x1x32x64xbf16> to vector<32x64xbf16>
      %cst_54 = arith.constant dense<0.000000e+00> : vector<32x64xf32>
      %57 = tpu.matmul %54, %56, %cst_54 {dimension_numbers = #tpu.dot_dimension_numbers<[1], [0], [0], [1], [0, 0, 1, 1], [], []>} : vector<32x32xbf16>, vector<32x64xbf16>, vector<32x64xf32> -> vector<32x64xf32>
      %58 = arith.addf %49, %57 : vector<32x64xf32>
      %c2_i32_55 = arith.constant 2 : i32
      %59 = arith.muli %c2_i32_55, %arg9 : i32
      %c2_i32_56 = arith.constant 2 : i32
      %60 = arith.addi %59, %c2_i32_56 : i32
      %61 = arith.index_cast %60 : i32 to index
      %c0_57 = arith.constant 0 : index
      %c0_58 = arith.constant 0 : index
      %62 = vector.load %arg8[%61, %c0_57, %c0_58] : memref<18x18x32xbf16, #tpu.memory_space<vmem>>, vector<2x16x32xbf16>
      %63 = vector.shape_cast %62 : vector<2x16x32xbf16> to vector<32x32xbf16>
      %c2_59 = arith.constant 2 : index
      %c0_60 = arith.constant 0 : index
      %c0_61 = arith.constant 0 : index
      %c0_62 = arith.constant 0 : index
      %64 = vector.load %arg5[%c2_59, %c0_60, %c0_61, %c0_62] : memref<3x3x32x64xbf16, #tpu.memory_space<vmem>>, vector<1x1x32x64xbf16>
      %65 = vector.shape_cast %64 : vector<1x1x32x64xbf16> to vector<32x64xbf16>
      %cst_63 = arith.constant dense<0.000000e+00> : vector<32x64xf32>
      %66 = tpu.matmul %63, %65, %cst_63 {dimension_numbers = #tpu.dot_dimension_numbers<[1], [0], [0], [1], [0, 0, 1, 1], [], []>} : vector<32x32xbf16>, vector<32x64xbf16>, vector<32x64xf32> -> vector<32x64xf32>
      %67 = arith.addf %58, %66 : vector<32x64xf32>
      %c2_i32_64 = arith.constant 2 : i32
      %68 = arith.muli %c2_i32_64, %arg9 : i32
      %c2_i32_65 = arith.constant 2 : i32
      %69 = arith.addi %68, %c2_i32_65 : i32
      %70 = arith.index_cast %69 : i32 to index
      %c1_66 = arith.constant 1 : index
      %c0_67 = arith.constant 0 : index
      %71 = vector.load %arg8[%70, %c1_66, %c0_67] : memref<18x18x32xbf16, #tpu.memory_space<vmem>>, vector<2x16x32xbf16>
      %72 = vector.shape_cast %71 : vector<2x16x32xbf16> to vector<32x32xbf16>
      %c2_68 = arith.constant 2 : index
      %c1_69 = arith.constant 1 : index
      %c0_70 = arith.constant 0 : index
      %c0_71 = arith.constant 0 : index
      %73 = vector.load %arg5[%c2_68, %c1_69, %c0_70, %c0_71] : memref<3x3x32x64xbf16, #tpu.memory_space<vmem>>, vector<1x1x32x64xbf16>
      %74 = vector.shape_cast %73 : vector<1x1x32x64xbf16> to vector<32x64xbf16>
      %cst_72 = arith.constant dense<0.000000e+00> : vector<32x64xf32>
      %75 = tpu.matmul %72, %74, %cst_72 {dimension_numbers = #tpu.dot_dimension_numbers<[1], [0], [0], [1], [0, 0, 1, 1], [], []>} : vector<32x32xbf16>, vector<32x64xbf16>, vector<32x64xf32> -> vector<32x64xf32>
      %76 = arith.addf %67, %75 : vector<32x64xf32>
      %c2_i32_73 = arith.constant 2 : i32
      %77 = arith.muli %c2_i32_73, %arg9 : i32
      %c2_i32_74 = arith.constant 2 : i32
      %78 = arith.addi %77, %c2_i32_74 : i32
      %79 = arith.index_cast %78 : i32 to index
      %c2_75 = arith.constant 2 : index
      %c0_76 = arith.constant 0 : index
      %80 = vector.load %arg8[%79, %c2_75, %c0_76] : memref<18x18x32xbf16, #tpu.memory_space<vmem>>, vector<2x16x32xbf16>
      %81 = vector.shape_cast %80 : vector<2x16x32xbf16> to vector<32x32xbf16>
      %c2_77 = arith.constant 2 : index
      %c2_78 = arith.constant 2 : index
      %c0_79 = arith.constant 0 : index
      %c0_80 = arith.constant 0 : index
      %82 = vector.load %arg5[%c2_77, %c2_78, %c0_79, %c0_80] : memref<3x3x32x64xbf16, #tpu.memory_space<vmem>>, vector<1x1x32x64xbf16>
      %83 = vector.shape_cast %82 : vector<1x1x32x64xbf16> to vector<32x64xbf16>
      %cst_81 = arith.constant dense<0.000000e+00> : vector<32x64xf32>
      %84 = tpu.matmul %81, %83, %cst_81 {dimension_numbers = #tpu.dot_dimension_numbers<[1], [0], [0], [1], [0, 0, 1, 1], [], []>} : vector<32x32xbf16>, vector<32x64xbf16>, vector<32x64xf32> -> vector<32x64xf32>
      %85 = arith.addf %76, %84 : vector<32x64xf32>
      %86 = vector.shape_cast %85 : vector<32x64xf32> to vector<2x16x64xf32>
      %c0_82 = arith.constant 0 : index
      %c0_83 = arith.constant 0 : index
      %c0_84 = arith.constant 0 : index
      %87 = vector.load %arg6[%c0_82, %c0_83, %c0_84] : memref<1x1x64xf32, #tpu.memory_space<vmem>>, vector<1x1x64xf32>
      %88 = vector.broadcast %87 : vector<1x1x64xf32> to vector<2x16x64xf32>
      %89 = arith.addf %86, %88 : vector<2x16x64xf32>
      %cst_85 = arith.constant 0.000000e+00 : f32
      %90 = vector.broadcast %cst_85 : f32 to vector<2x16x64xf32>
      %91 = arith.maximumf %89, %90 : vector<2x16x64xf32>
      %cst_86 = arith.constant dense<0xFF800000> : vector<16x64xf32>
      %92 = vector.multi_reduction <maximumf>, %91, %cst_86 [0] : vector<2x16x64xf32> to vector<16x64xf32>
      %93 = vector.shape_cast %92 : vector<16x64xf32> to vector<8x2x64xf32>
      %cst_87 = arith.constant dense<0xFF800000> : vector<8x64xf32>
      %94 = vector.multi_reduction <maximumf>, %93, %cst_87 [1] : vector<8x2x64xf32> to vector<8x64xf32>
      %95 = tpu.iota {dimensions = array<i32: 0>} : vector<8x64xi32>
      %c8_i32_88 = arith.constant 8 : i32
      %96 = vector.broadcast %c8_i32_88 : i32 to vector<8x64xi32>
      %97 = arith.cmpi slt, %95, %96 : vector<8x64xi32>
      %cst_89 = arith.constant 0.000000e+00 : f32
      %98 = vector.broadcast %cst_89 : f32 to vector<8x64xf32>
      %99 = arith.select %97, %94, %98 : vector<8x64xi1>, vector<8x64xf32>
      %100 = vector.shape_cast %99 : vector<8x64xf32> to vector<1x8x64xf32>
      %101 = arith.truncf %100 : vector<1x8x64xf32> to vector<1x8x64xbf16>
      %c0_90 = arith.constant 0 : index
      %102 = arith.index_cast %arg9 : i32 to index
      %c0_91 = arith.constant 0 : index
      %c0_92 = arith.constant 0 : index
      %103 = vector.load %arg7[%c0_90, %102, %c0_91, %c0_92] : memref<1x8x8x64xbf16, #tpu.memory_space<vmem>>, vector<1x1x8x64xbf16>
      %104 = vector.shape_cast %103 : vector<1x1x8x64xbf16> to vector<1x8x64xbf16>
      %105 = vector.shape_cast %101 : vector<1x8x64xbf16> to vector<1x1x8x64xbf16>
      tpu.vector_store %arg7[%c0_90, %102, %c0_91, %c0_92], %105 {strides = array<i32>} : memref<1x8x8x64xbf16, #tpu.memory_space<vmem>>, vector<1x1x8x64xbf16>,
    }
    %c8_i32_4 = arith.constant 8 : i32
    return
  }
  func.func @transform_0(%arg0: i32, %arg1: i32) -> (i32, i32, i32, i32) {
    %c0_i32 = arith.constant 0 : i32
    %c0_i32_0 = arith.constant 0 : i32
    %c0_i32_1 = arith.constant 0 : i32
    %c0_i32_2 = arith.constant 0 : i32
    return %arg0, %c0_i32, %c0_i32_0, %c0_i32_1 : i32, i32, i32, i32
  }
  func.func @transform_1(%arg0: i32, %arg1: i32) -> (i32, i32, i32, i32) {
    %c0_i32 = arith.constant 0 : i32
    %c0_i32_0 = arith.constant 0 : i32
    %c0_i32_1 = arith.constant 0 : i32
    %c0_i32_2 = arith.constant 0 : i32
    %c0_i32_3 = arith.constant 0 : i32
    return %c0_i32, %c0_i32_0, %c0_i32_1, %c0_i32_2 : i32, i32, i32, i32
  }
  func.func @transform_2(%arg0: i32, %arg1: i32) -> (i32, i32, i32) {
    %c0_i32 = arith.constant 0 : i32
    %c0_i32_0 = arith.constant 0 : i32
    %c0_i32_1 = arith.constant 0 : i32
    %c0_i32_2 = arith.constant 0 : i32
    return %c0_i32, %c0_i32_0, %c0_i32_1 : i32, i32, i32
  }
  func.func @transform_3(%arg0: i32, %arg1: i32) -> (i32, i32, i32, i32) {
    %c0_i32 = arith.constant 0 : i32
    %c0_i32_0 = arith.constant 0 : i32
    %c0_i32_1 = arith.constant 0 : i32
    %c0_i32_2 = arith.constant 0 : i32
    %c0_i32_3 = arith.constant 0 : i32
    return %c0_i32, %c0_i32_0, %c0_i32_1, %c0_i32_2 : i32, i32, i32, i32
  }
  func.func @transform_4(%arg0: i32, %arg1: i32) -> (i32, i32, i32) {
    %c0_i32 = arith.constant 0 : i32
    %c0_i32_0 = arith.constant 0 : i32
    %c0_i32_1 = arith.constant 0 : i32
    %c0_i32_2 = arith.constant 0 : i32
    return %c0_i32, %c0_i32_0, %c0_i32_1 : i32, i32, i32
  }
  func.func @transform_5(%arg0: i32, %arg1: i32) -> (i32, i32, i32, i32) {
    %c0_i32 = arith.constant 0 : i32
    %c0_i32_0 = arith.constant 0 : i32
    %c0_i32_1 = arith.constant 0 : i32
    return %arg0, %arg1, %c0_i32, %c0_i32_0 : i32, i32, i32, i32
  }
}

module attributes {stable_mosaic.version = 11 : i64} {
  func.func @_conv_block_b_kernel(%arg0: i32, %arg1: i32, %arg2: memref<1x8x8x64xbf16, #tpu.memory_space<vmem>>, %arg3: memref<3x3x64x128xbf16, #tpu.memory_space<vmem>>, %arg4: memref<1x1x128xf32, #tpu.memory_space<vmem>>, %arg5: memref<3x3x128x128xbf16, #tpu.memory_space<vmem>>, %arg6: memref<1x1x128xf32, #tpu.memory_space<vmem>>, %arg7: memref<1x4x4x128xbf16, #tpu.memory_space<vmem>>, %arg8: memref<12x24x64xbf16, #tpu.memory_space<vmem>>, %arg9: memref<10x16x128xbf16, #tpu.memory_space<vmem>>) attributes {dimension_semantics = [#tpu.dimension_semantics<parallel>, #tpu.dimension_semantics<arbitrary>], iteration_bounds = array<i64: 2, 1>, scalar_prefetch = 0 : i64, scratch_operands = 2 : i64, tpu.core_type = #tpu.core_type<tc>, window_params = [{transform_indices = @transform_0, window_bounds = array<i64: 1, 8, 8, 64>}, {pipeline_mode = #tpu.pipeline_mode<synchronous>, transform_indices = @transform_1, window_bounds = array<i64: 3, 3, 64, 128>}, {pipeline_mode = #tpu.pipeline_mode<synchronous>, transform_indices = @transform_2, window_bounds = array<i64: 1, 1, 128>}, {pipeline_mode = #tpu.pipeline_mode<synchronous>, transform_indices = @transform_3, window_bounds = array<i64: 3, 3, 128, 128>}, {pipeline_mode = #tpu.pipeline_mode<synchronous>, transform_indices = @transform_4, window_bounds = array<i64: 1, 1, 128>}, {transform_indices = @transform_5, window_bounds = array<i64: 1, 4, 4, 128>}]} {
    %c0_i32 = arith.constant 0 : i32
    %0 = arith.cmpi eq, %arg1, %c0_i32 : i32
    %1 = arith.extui %0 : i1 to i32
    %c0_i32_0 = arith.constant 0 : i32
    %2 = arith.cmpi ne, %1, %c0_i32_0 : i32
    scf.if %2 {
      %cst = arith.constant 0.000000e+00 : bf16
      %7 = vector.broadcast %cst : bf16 to vector<12x24x64xbf16>
      %c0 = arith.constant 0 : index
      %c0_7 = arith.constant 0 : index
      %c0_8 = arith.constant 0 : index
      %8 = vector.load %arg8[%c0, %c0_7, %c0_8] : memref<12x24x64xbf16, #tpu.memory_space<vmem>>, vector<12x24x64xbf16>
      tpu.vector_store %arg8[%c0, %c0_7, %c0_8], %7 {strides = array<i32>} : memref<12x24x64xbf16, #tpu.memory_space<vmem>>, vector<12x24x64xbf16>,
      %c0_9 = arith.constant 0 : index
      %c0_10 = arith.constant 0 : index
      %c0_11 = arith.constant 0 : index
      %c0_12 = arith.constant 0 : index
      %9 = vector.load %arg2[%c0_9, %c0_10, %c0_11, %c0_12] : memref<1x8x8x64xbf16, #tpu.memory_space<vmem>>, vector<1x8x8x64xbf16>
      %10 = vector.shape_cast %9 : vector<1x8x8x64xbf16> to vector<8x8x64xbf16>
      %c2 = arith.constant 2 : index
      %c8 = arith.constant 8 : index
      %c0_13 = arith.constant 0 : index
      %11 = vector.load %arg8[%c2, %c8, %c0_13] : memref<12x24x64xbf16, #tpu.memory_space<vmem>>, vector<8x8x64xbf16>
      tpu.vector_store %arg8[%c2, %c8, %c0_13], %10 {strides = array<i32>} : memref<12x24x64xbf16, #tpu.memory_space<vmem>>, vector<8x8x64xbf16>,
    } else {
    }
    %c8_i32 = arith.constant 8 : i32
    %3 = arith.muli %arg1, %c8_i32 : i32
    %c1_i32 = arith.constant 1 : i32
    %4 = arith.subi %3, %c1_i32 : i32
    %c0_i32_1 = arith.constant 0 : i32
    %c5_i32 = arith.constant 5 : i32
    %5 = arith.addi %c0_i32_1, %c5_i32 : i32
    %c1_i32_2 = arith.constant 1 : i32
    scf.for %arg10 = %c0_i32_1 to %5 step %c1_i32_2  : i32 {
      %c2_i32 = arith.constant 2 : i32
      %7 = arith.muli %arg10, %c2_i32 : i32
      %8 = arith.addi %4, %7 : i32
      %cst = arith.constant 0.000000e+00 : f32
      %9 = vector.broadcast %cst : f32 to vector<32x128xf32>
      %c0_i32_7 = arith.constant 0 : i32
      %10 = arith.addi %8, %c0_i32_7 : i32
      %c1_i32_8 = arith.constant 1 : i32
      %11 = arith.addi %10, %c1_i32_8 : i32
      %12 = arith.index_cast %11 : i32 to index
      %c6 = arith.constant 6 : index
      %c0 = arith.constant 0 : index
      %13 = vector.load %arg8[%12, %c6, %c0] : memref<12x24x64xbf16, #tpu.memory_space<vmem>>, vector<2x16x64xbf16>
      %14 = vector.shape_cast %13 : vector<2x16x64xbf16> to vector<32x64xbf16>
      %c0_9 = arith.constant 0 : index
      %c0_10 = arith.constant 0 : index
      %c0_11 = arith.constant 0 : index
      %c0_12 = arith.constant 0 : index
      %15 = vector.load %arg3[%c0_9, %c0_10, %c0_11, %c0_12] : memref<3x3x64x128xbf16, #tpu.memory_space<vmem>>, vector<1x1x64x128xbf16>
      %16 = vector.shape_cast %15 : vector<1x1x64x128xbf16> to vector<64x128xbf16>
      %cst_13 = arith.constant dense<0.000000e+00> : vector<32x128xf32>
      %17 = tpu.matmul %14, %16, %cst_13 {dimension_numbers = #tpu.dot_dimension_numbers<[1], [0], [0], [1], [0, 0, 1, 1], [], []>} : vector<32x64xbf16>, vector<64x128xbf16>, vector<32x128xf32> -> vector<32x128xf32>
      %18 = arith.addf %9, %17 : vector<32x128xf32>
      %c0_i32_14 = arith.constant 0 : i32
      %19 = arith.addi %8, %c0_i32_14 : i32
      %c1_i32_15 = arith.constant 1 : i32
      %20 = arith.addi %19, %c1_i32_15 : i32
      %21 = arith.index_cast %20 : i32 to index
      %c7 = arith.constant 7 : index
      %c0_16 = arith.constant 0 : index
      %22 = vector.load %arg8[%21, %c7, %c0_16] : memref<12x24x64xbf16, #tpu.memory_space<vmem>>, vector<2x16x64xbf16>
      %23 = vector.shape_cast %22 : vector<2x16x64xbf16> to vector<32x64xbf16>
      %c0_17 = arith.constant 0 : index
      %c1 = arith.constant 1 : index
      %c0_18 = arith.constant 0 : index
      %c0_19 = arith.constant 0 : index
      %24 = vector.load %arg3[%c0_17, %c1, %c0_18, %c0_19] : memref<3x3x64x128xbf16, #tpu.memory_space<vmem>>, vector<1x1x64x128xbf16>
      %25 = vector.shape_cast %24 : vector<1x1x64x128xbf16> to vector<64x128xbf16>
      %cst_20 = arith.constant dense<0.000000e+00> : vector<32x128xf32>
      %26 = tpu.matmul %23, %25, %cst_20 {dimension_numbers = #tpu.dot_dimension_numbers<[1], [0], [0], [1], [0, 0, 1, 1], [], []>} : vector<32x64xbf16>, vector<64x128xbf16>, vector<32x128xf32> -> vector<32x128xf32>
      %27 = arith.addf %18, %26 : vector<32x128xf32>
      %c0_i32_21 = arith.constant 0 : i32
      %28 = arith.addi %8, %c0_i32_21 : i32
      %c1_i32_22 = arith.constant 1 : i32
      %29 = arith.addi %28, %c1_i32_22 : i32
      %30 = arith.index_cast %29 : i32 to index
      %c8 = arith.constant 8 : index
      %c0_23 = arith.constant 0 : index
      %31 = vector.load %arg8[%30, %c8, %c0_23] : memref<12x24x64xbf16, #tpu.memory_space<vmem>>, vector<2x16x64xbf16>
      %32 = vector.shape_cast %31 : vector<2x16x64xbf16> to vector<32x64xbf16>
      %c0_24 = arith.constant 0 : index
      %c2 = arith.constant 2 : index
      %c0_25 = arith.constant 0 : index
      %c0_26 = arith.constant 0 : index
      %33 = vector.load %arg3[%c0_24, %c2, %c0_25, %c0_26] : memref<3x3x64x128xbf16, #tpu.memory_space<vmem>>, vector<1x1x64x128xbf16>
      %34 = vector.shape_cast %33 : vector<1x1x64x128xbf16> to vector<64x128xbf16>
      %cst_27 = arith.constant dense<0.000000e+00> : vector<32x128xf32>
      %35 = tpu.matmul %32, %34, %cst_27 {dimension_numbers = #tpu.dot_dimension_numbers<[1], [0], [0], [1], [0, 0, 1, 1], [], []>} : vector<32x64xbf16>, vector<64x128xbf16>, vector<32x128xf32> -> vector<32x128xf32>
      %36 = arith.addf %27, %35 : vector<32x128xf32>
      %c1_i32_28 = arith.constant 1 : i32
      %37 = arith.addi %8, %c1_i32_28 : i32
      %c1_i32_29 = arith.constant 1 : i32
      %38 = arith.addi %37, %c1_i32_29 : i32
      %39 = arith.index_cast %38 : i32 to index
      %c6_30 = arith.constant 6 : index
      %c0_31 = arith.constant 0 : index
      %40 = vector.load %arg8[%39, %c6_30, %c0_31] : memref<12x24x64xbf16, #tpu.memory_space<vmem>>, vector<2x16x64xbf16>
      %41 = vector.shape_cast %40 : vector<2x16x64xbf16> to vector<32x64xbf16>
      %c1_32 = arith.constant 1 : index
      %c0_33 = arith.constant 0 : index
      %c0_34 = arith.constant 0 : index
      %c0_35 = arith.constant 0 : index
      %42 = vector.load %arg3[%c1_32, %c0_33, %c0_34, %c0_35] : memref<3x3x64x128xbf16, #tpu.memory_space<vmem>>, vector<1x1x64x128xbf16>
      %43 = vector.shape_cast %42 : vector<1x1x64x128xbf16> to vector<64x128xbf16>
      %cst_36 = arith.constant dense<0.000000e+00> : vector<32x128xf32>
      %44 = tpu.matmul %41, %43, %cst_36 {dimension_numbers = #tpu.dot_dimension_numbers<[1], [0], [0], [1], [0, 0, 1, 1], [], []>} : vector<32x64xbf16>, vector<64x128xbf16>, vector<32x128xf32> -> vector<32x128xf32>
      %45 = arith.addf %36, %44 : vector<32x128xf32>
      %c1_i32_37 = arith.constant 1 : i32
      %46 = arith.addi %8, %c1_i32_37 : i32
      %c1_i32_38 = arith.constant 1 : i32
      %47 = arith.addi %46, %c1_i32_38 : i32
      %48 = arith.index_cast %47 : i32 to index
      %c7_39 = arith.constant 7 : index
      %c0_40 = arith.constant 0 : index
      %49 = vector.load %arg8[%48, %c7_39, %c0_40] : memref<12x24x64xbf16, #tpu.memory_space<vmem>>, vector<2x16x64xbf16>
      %50 = vector.shape_cast %49 : vector<2x16x64xbf16> to vector<32x64xbf16>
      %c1_41 = arith.constant 1 : index
      %c1_42 = arith.constant 1 : index
      %c0_43 = arith.constant 0 : index
      %c0_44 = arith.constant 0 : index
      %51 = vector.load %arg3[%c1_41, %c1_42, %c0_43, %c0_44] : memref<3x3x64x128xbf16, #tpu.memory_space<vmem>>, vector<1x1x64x128xbf16>
      %52 = vector.shape_cast %51 : vector<1x1x64x128xbf16> to vector<64x128xbf16>
      %cst_45 = arith.constant dense<0.000000e+00> : vector<32x128xf32>
      %53 = tpu.matmul %50, %52, %cst_45 {dimension_numbers = #tpu.dot_dimension_numbers<[1], [0], [0], [1], [0, 0, 1, 1], [], []>} : vector<32x64xbf16>, vector<64x128xbf16>, vector<32x128xf32> -> vector<32x128xf32>
      %54 = arith.addf %45, %53 : vector<32x128xf32>
      %c1_i32_46 = arith.constant 1 : i32
      %55 = arith.addi %8, %c1_i32_46 : i32
      %c1_i32_47 = arith.constant 1 : i32
      %56 = arith.addi %55, %c1_i32_47 : i32
      %57 = arith.index_cast %56 : i32 to index
      %c8_48 = arith.constant 8 : index
      %c0_49 = arith.constant 0 : index
      %58 = vector.load %arg8[%57, %c8_48, %c0_49] : memref<12x24x64xbf16, #tpu.memory_space<vmem>>, vector<2x16x64xbf16>
      %59 = vector.shape_cast %58 : vector<2x16x64xbf16> to vector<32x64xbf16>
      %c1_50 = arith.constant 1 : index
      %c2_51 = arith.constant 2 : index
      %c0_52 = arith.constant 0 : index
      %c0_53 = arith.constant 0 : index
      %60 = vector.load %arg3[%c1_50, %c2_51, %c0_52, %c0_53] : memref<3x3x64x128xbf16, #tpu.memory_space<vmem>>, vector<1x1x64x128xbf16>
      %61 = vector.shape_cast %60 : vector<1x1x64x128xbf16> to vector<64x128xbf16>
      %cst_54 = arith.constant dense<0.000000e+00> : vector<32x128xf32>
      %62 = tpu.matmul %59, %61, %cst_54 {dimension_numbers = #tpu.dot_dimension_numbers<[1], [0], [0], [1], [0, 0, 1, 1], [], []>} : vector<32x64xbf16>, vector<64x128xbf16>, vector<32x128xf32> -> vector<32x128xf32>
      %63 = arith.addf %54, %62 : vector<32x128xf32>
      %c2_i32_55 = arith.constant 2 : i32
      %64 = arith.addi %8, %c2_i32_55 : i32
      %c1_i32_56 = arith.constant 1 : i32
      %65 = arith.addi %64, %c1_i32_56 : i32
      %66 = arith.index_cast %65 : i32 to index
      %c6_57 = arith.constant 6 : index
      %c0_58 = arith.constant 0 : index
      %67 = vector.load %arg8[%66, %c6_57, %c0_58] : memref<12x24x64xbf16, #tpu.memory_space<vmem>>, vector<2x16x64xbf16>
      %68 = vector.shape_cast %67 : vector<2x16x64xbf16> to vector<32x64xbf16>
      %c2_59 = arith.constant 2 : index
      %c0_60 = arith.constant 0 : index
      %c0_61 = arith.constant 0 : index
      %c0_62 = arith.constant 0 : index
      %69 = vector.load %arg3[%c2_59, %c0_60, %c0_61, %c0_62] : memref<3x3x64x128xbf16, #tpu.memory_space<vmem>>, vector<1x1x64x128xbf16>
      %70 = vector.shape_cast %69 : vector<1x1x64x128xbf16> to vector<64x128xbf16>
      %cst_63 = arith.constant dense<0.000000e+00> : vector<32x128xf32>
      %71 = tpu.matmul %68, %70, %cst_63 {dimension_numbers = #tpu.dot_dimension_numbers<[1], [0], [0], [1], [0, 0, 1, 1], [], []>} : vector<32x64xbf16>, vector<64x128xbf16>, vector<32x128xf32> -> vector<32x128xf32>
      %72 = arith.addf %63, %71 : vector<32x128xf32>
      %c2_i32_64 = arith.constant 2 : i32
      %73 = arith.addi %8, %c2_i32_64 : i32
      %c1_i32_65 = arith.constant 1 : i32
      %74 = arith.addi %73, %c1_i32_65 : i32
      %75 = arith.index_cast %74 : i32 to index
      %c7_66 = arith.constant 7 : index
      %c0_67 = arith.constant 0 : index
      %76 = vector.load %arg8[%75, %c7_66, %c0_67] : memref<12x24x64xbf16, #tpu.memory_space<vmem>>, vector<2x16x64xbf16>
      %77 = vector.shape_cast %76 : vector<2x16x64xbf16> to vector<32x64xbf16>
      %c2_68 = arith.constant 2 : index
      %c1_69 = arith.constant 1 : index
      %c0_70 = arith.constant 0 : index
      %c0_71 = arith.constant 0 : index
      %78 = vector.load %arg3[%c2_68, %c1_69, %c0_70, %c0_71] : memref<3x3x64x128xbf16, #tpu.memory_space<vmem>>, vector<1x1x64x128xbf16>
      %79 = vector.shape_cast %78 : vector<1x1x64x128xbf16> to vector<64x128xbf16>
      %cst_72 = arith.constant dense<0.000000e+00> : vector<32x128xf32>
      %80 = tpu.matmul %77, %79, %cst_72 {dimension_numbers = #tpu.dot_dimension_numbers<[1], [0], [0], [1], [0, 0, 1, 1], [], []>} : vector<32x64xbf16>, vector<64x128xbf16>, vector<32x128xf32> -> vector<32x128xf32>
      %81 = arith.addf %72, %80 : vector<32x128xf32>
      %c2_i32_73 = arith.constant 2 : i32
      %82 = arith.addi %8, %c2_i32_73 : i32
      %c1_i32_74 = arith.constant 1 : i32
      %83 = arith.addi %82, %c1_i32_74 : i32
      %84 = arith.index_cast %83 : i32 to index
      %c8_75 = arith.constant 8 : index
      %c0_76 = arith.constant 0 : index
      %85 = vector.load %arg8[%84, %c8_75, %c0_76] : memref<12x24x64xbf16, #tpu.memory_space<vmem>>, vector<2x16x64xbf16>
      %86 = vector.shape_cast %85 : vector<2x16x64xbf16> to vector<32x64xbf16>
      %c2_77 = arith.constant 2 : index
      %c2_78 = arith.constant 2 : index
      %c0_79 = arith.constant 0 : index
      %c0_80 = arith.constant 0 : index
      %87 = vector.load %arg3[%c2_77, %c2_78, %c0_79, %c0_80] : memref<3x3x64x128xbf16, #tpu.memory_space<vmem>>, vector<1x1x64x128xbf16>
      %88 = vector.shape_cast %87 : vector<1x1x64x128xbf16> to vector<64x128xbf16>
      %cst_81 = arith.constant dense<0.000000e+00> : vector<32x128xf32>
      %89 = tpu.matmul %86, %88, %cst_81 {dimension_numbers = #tpu.dot_dimension_numbers<[1], [0], [0], [1], [0, 0, 1, 1], [], []>} : vector<32x64xbf16>, vector<64x128xbf16>, vector<32x128xf32> -> vector<32x128xf32>
      %90 = arith.addf %81, %89 : vector<32x128xf32>
      %91 = vector.shape_cast %90 : vector<32x128xf32> to vector<2x16x128xf32>
      %c0_82 = arith.constant 0 : index
      %c0_83 = arith.constant 0 : index
      %c0_84 = arith.constant 0 : index
      %92 = vector.load %arg4[%c0_82, %c0_83, %c0_84] : memref<1x1x128xf32, #tpu.memory_space<vmem>>, vector<1x1x128xf32>
      %93 = vector.broadcast %92 : vector<1x1x128xf32> to vector<2x16x128xf32>
      %94 = arith.addf %91, %93 : vector<2x16x128xf32>
      %cst_85 = arith.constant 0.000000e+00 : f32
      %95 = vector.broadcast %cst_85 : f32 to vector<2x16x128xf32>
      %96 = arith.maximumf %94, %95 : vector<2x16x128xf32>
      %97 = tpu.iota {dimensions = array<i32: 0>} : vector<2x16x128xi32>
      %98 = vector.broadcast %8 : i32 to vector<2x16x128xi32>
      %99 = arith.addi %98, %97 : vector<2x16x128xi32>
      %100 = tpu.iota {dimensions = array<i32: 1>} : vector<2x16x128xi32>
      %c0_i32_86 = arith.constant 0 : i32
      %101 = vector.broadcast %c0_i32_86 : i32 to vector<2x16x128xi32>
      %102 = arith.cmpi sge, %99, %101 : vector<2x16x128xi32>
      %c8_i32_87 = arith.constant 8 : i32
      %103 = vector.broadcast %c8_i32_87 : i32 to vector<2x16x128xi32>
      %104 = arith.cmpi slt, %99, %103 : vector<2x16x128xi32>
      %105 = arith.andi %102, %104 : vector<2x16x128xi1>
      %c1_i32_88 = arith.constant 1 : i32
      %106 = vector.broadcast %c1_i32_88 : i32 to vector<2x16x128xi32>
      %107 = arith.cmpi sge, %100, %106 : vector<2x16x128xi32>
      %108 = arith.andi %105, %107 : vector<2x16x128xi1>
      %c8_i32_89 = arith.constant 8 : i32
      %109 = vector.broadcast %c8_i32_89 : i32 to vector<2x16x128xi32>
      %110 = arith.cmpi sle, %100, %109 : vector<2x16x128xi32>
      %111 = arith.andi %108, %110 : vector<2x16x128xi1>
      %cst_90 = arith.constant 0.000000e+00 : f32
      %112 = vector.broadcast %cst_90 : f32 to vector<2x16x128xf32>
      %113 = arith.select %111, %96, %112 : vector<2x16x128xi1>, vector<2x16x128xf32>
      %114 = arith.truncf %113 : vector<2x16x128xf32> to vector<2x16x128xbf16>
      %c2_i32_91 = arith.constant 2 : i32
      %115 = arith.muli %arg10, %c2_i32_91 : i32
      %116 = arith.index_cast %115 : i32 to index
      %c0_92 = arith.constant 0 : index
      %c0_93 = arith.constant 0 : index
      %117 = vector.load %arg9[%116, %c0_92, %c0_93] : memref<10x16x128xbf16, #tpu.memory_space<vmem>>, vector<2x16x128xbf16>
      tpu.vector_store %arg9[%116, %c0_92, %c0_93], %114 {strides = array<i32>} : memref<10x16x128xbf16, #tpu.memory_space<vmem>>, vector<2x16x128xbf16>,
    }
    %c5_i32_3 = arith.constant 5 : i32
    %c0_i32_4 = arith.constant 0 : i32
    %c4_i32 = arith.constant 4 : i32
    %6 = arith.addi %c0_i32_4, %c4_i32 : i32
    %c1_i32_5 = arith.constant 1 : i32
    scf.for %arg10 = %c0_i32_4 to %6 step %c1_i32_5  : i32 {
      %cst = arith.constant 0.000000e+00 : f32
      %7 = vector.broadcast %cst : f32 to vector<16x128xf32>
      %c2_i32 = arith.constant 2 : i32
      %8 = arith.muli %c2_i32, %arg10 : i32
      %c0_i32_7 = arith.constant 0 : i32
      %9 = arith.addi %8, %c0_i32_7 : i32
      %10 = arith.index_cast %9 : i32 to index
      %c0 = arith.constant 0 : index
      %c0_8 = arith.constant 0 : index
      %11 = vector.load %arg9[%10, %c0, %c0_8] : memref<10x16x128xbf16, #tpu.memory_space<vmem>>, vector<2x8x128xbf16>
      %12 = vector.shape_cast %11 : vector<2x8x128xbf16> to vector<16x128xbf16>
      %c0_9 = arith.constant 0 : index
      %c0_10 = arith.constant 0 : index
      %c0_11 = arith.constant 0 : index
      %c0_12 = arith.constant 0 : index
      %13 = vector.load %arg5[%c0_9, %c0_10, %c0_11, %c0_12] : memref<3x3x128x128xbf16, #tpu.memory_space<vmem>>, vector<1x1x128x128xbf16>
      %14 = vector.shape_cast %13 : vector<1x1x128x128xbf16> to vector<128x128xbf16>
      %cst_13 = arith.constant dense<0.000000e+00> : vector<16x128xf32>
      %15 = tpu.matmul %12, %14, %cst_13 {dimension_numbers = #tpu.dot_dimension_numbers<[1], [0], [0], [1], [0, 0, 1, 1], [], []>} : vector<16x128xbf16>, vector<128x128xbf16>, vector<16x128xf32> -> vector<16x128xf32>
      %16 = arith.addf %7, %15 : vector<16x128xf32>
      %c2_i32_14 = arith.constant 2 : i32
      %17 = arith.muli %c2_i32_14, %arg10 : i32
      %c0_i32_15 = arith.constant 0 : i32
      %18 = arith.addi %17, %c0_i32_15 : i32
      %19 = arith.index_cast %18 : i32 to index
      %c1 = arith.constant 1 : index
      %c0_16 = arith.constant 0 : index
      %20 = vector.load %arg9[%19, %c1, %c0_16] : memref<10x16x128xbf16, #tpu.memory_space<vmem>>, vector<2x8x128xbf16>
      %21 = vector.shape_cast %20 : vector<2x8x128xbf16> to vector<16x128xbf16>
      %c0_17 = arith.constant 0 : index
      %c1_18 = arith.constant 1 : index
      %c0_19 = arith.constant 0 : index
      %c0_20 = arith.constant 0 : index
      %22 = vector.load %arg5[%c0_17, %c1_18, %c0_19, %c0_20] : memref<3x3x128x128xbf16, #tpu.memory_space<vmem>>, vector<1x1x128x128xbf16>
      %23 = vector.shape_cast %22 : vector<1x1x128x128xbf16> to vector<128x128xbf16>
      %cst_21 = arith.constant dense<0.000000e+00> : vector<16x128xf32>
      %24 = tpu.matmul %21, %23, %cst_21 {dimension_numbers = #tpu.dot_dimension_numbers<[1], [0], [0], [1], [0, 0, 1, 1], [], []>} : vector<16x128xbf16>, vector<128x128xbf16>, vector<16x128xf32> -> vector<16x128xf32>
      %25 = arith.addf %16, %24 : vector<16x128xf32>
      %c2_i32_22 = arith.constant 2 : i32
      %26 = arith.muli %c2_i32_22, %arg10 : i32
      %c0_i32_23 = arith.constant 0 : i32
      %27 = arith.addi %26, %c0_i32_23 : i32
      %28 = arith.index_cast %27 : i32 to index
      %c2 = arith.constant 2 : index
      %c0_24 = arith.constant 0 : index
      %29 = vector.load %arg9[%28, %c2, %c0_24] : memref<10x16x128xbf16, #tpu.memory_space<vmem>>, vector<2x8x128xbf16>
      %30 = vector.shape_cast %29 : vector<2x8x128xbf16> to vector<16x128xbf16>
      %c0_25 = arith.constant 0 : index
      %c2_26 = arith.constant 2 : index
      %c0_27 = arith.constant 0 : index
      %c0_28 = arith.constant 0 : index
      %31 = vector.load %arg5[%c0_25, %c2_26, %c0_27, %c0_28] : memref<3x3x128x128xbf16, #tpu.memory_space<vmem>>, vector<1x1x128x128xbf16>
      %32 = vector.shape_cast %31 : vector<1x1x128x128xbf16> to vector<128x128xbf16>
      %cst_29 = arith.constant dense<0.000000e+00> : vector<16x128xf32>
      %33 = tpu.matmul %30, %32, %cst_29 {dimension_numbers = #tpu.dot_dimension_numbers<[1], [0], [0], [1], [0, 0, 1, 1], [], []>} : vector<16x128xbf16>, vector<128x128xbf16>, vector<16x128xf32> -> vector<16x128xf32>
      %34 = arith.addf %25, %33 : vector<16x128xf32>
      %c2_i32_30 = arith.constant 2 : i32
      %35 = arith.muli %c2_i32_30, %arg10 : i32
      %c1_i32_31 = arith.constant 1 : i32
      %36 = arith.addi %35, %c1_i32_31 : i32
      %37 = arith.index_cast %36 : i32 to index
      %c0_32 = arith.constant 0 : index
      %c0_33 = arith.constant 0 : index
      %38 = vector.load %arg9[%37, %c0_32, %c0_33] : memref<10x16x128xbf16, #tpu.memory_space<vmem>>, vector<2x8x128xbf16>
      %39 = vector.shape_cast %38 : vector<2x8x128xbf16> to vector<16x128xbf16>
      %c1_34 = arith.constant 1 : index
      %c0_35 = arith.constant 0 : index
      %c0_36 = arith.constant 0 : index
      %c0_37 = arith.constant 0 : index
      %40 = vector.load %arg5[%c1_34, %c0_35, %c0_36, %c0_37] : memref<3x3x128x128xbf16, #tpu.memory_space<vmem>>, vector<1x1x128x128xbf16>
      %41 = vector.shape_cast %40 : vector<1x1x128x128xbf16> to vector<128x128xbf16>
      %cst_38 = arith.constant dense<0.000000e+00> : vector<16x128xf32>
      %42 = tpu.matmul %39, %41, %cst_38 {dimension_numbers = #tpu.dot_dimension_numbers<[1], [0], [0], [1], [0, 0, 1, 1], [], []>} : vector<16x128xbf16>, vector<128x128xbf16>, vector<16x128xf32> -> vector<16x128xf32>
      %43 = arith.addf %34, %42 : vector<16x128xf32>
      %c2_i32_39 = arith.constant 2 : i32
      %44 = arith.muli %c2_i32_39, %arg10 : i32
      %c1_i32_40 = arith.constant 1 : i32
      %45 = arith.addi %44, %c1_i32_40 : i32
      %46 = arith.index_cast %45 : i32 to index
      %c1_41 = arith.constant 1 : index
      %c0_42 = arith.constant 0 : index
      %47 = vector.load %arg9[%46, %c1_41, %c0_42] : memref<10x16x128xbf16, #tpu.memory_space<vmem>>, vector<2x8x128xbf16>
      %48 = vector.shape_cast %47 : vector<2x8x128xbf16> to vector<16x128xbf16>
      %c1_43 = arith.constant 1 : index
      %c1_44 = arith.constant 1 : index
      %c0_45 = arith.constant 0 : index
      %c0_46 = arith.constant 0 : index
      %49 = vector.load %arg5[%c1_43, %c1_44, %c0_45, %c0_46] : memref<3x3x128x128xbf16, #tpu.memory_space<vmem>>, vector<1x1x128x128xbf16>
      %50 = vector.shape_cast %49 : vector<1x1x128x128xbf16> to vector<128x128xbf16>
      %cst_47 = arith.constant dense<0.000000e+00> : vector<16x128xf32>
      %51 = tpu.matmul %48, %50, %cst_47 {dimension_numbers = #tpu.dot_dimension_numbers<[1], [0], [0], [1], [0, 0, 1, 1], [], []>} : vector<16x128xbf16>, vector<128x128xbf16>, vector<16x128xf32> -> vector<16x128xf32>
      %52 = arith.addf %43, %51 : vector<16x128xf32>
      %c2_i32_48 = arith.constant 2 : i32
      %53 = arith.muli %c2_i32_48, %arg10 : i32
      %c1_i32_49 = arith.constant 1 : i32
      %54 = arith.addi %53, %c1_i32_49 : i32
      %55 = arith.index_cast %54 : i32 to index
      %c2_50 = arith.constant 2 : index
      %c0_51 = arith.constant 0 : index
      %56 = vector.load %arg9[%55, %c2_50, %c0_51] : memref<10x16x128xbf16, #tpu.memory_space<vmem>>, vector<2x8x128xbf16>
      %57 = vector.shape_cast %56 : vector<2x8x128xbf16> to vector<16x128xbf16>
      %c1_52 = arith.constant 1 : index
      %c2_53 = arith.constant 2 : index
      %c0_54 = arith.constant 0 : index
      %c0_55 = arith.constant 0 : index
      %58 = vector.load %arg5[%c1_52, %c2_53, %c0_54, %c0_55] : memref<3x3x128x128xbf16, #tpu.memory_space<vmem>>, vector<1x1x128x128xbf16>
      %59 = vector.shape_cast %58 : vector<1x1x128x128xbf16> to vector<128x128xbf16>
      %cst_56 = arith.constant dense<0.000000e+00> : vector<16x128xf32>
      %60 = tpu.matmul %57, %59, %cst_56 {dimension_numbers = #tpu.dot_dimension_numbers<[1], [0], [0], [1], [0, 0, 1, 1], [], []>} : vector<16x128xbf16>, vector<128x128xbf16>, vector<16x128xf32> -> vector<16x128xf32>
      %61 = arith.addf %52, %60 : vector<16x128xf32>
      %c2_i32_57 = arith.constant 2 : i32
      %62 = arith.muli %c2_i32_57, %arg10 : i32
      %c2_i32_58 = arith.constant 2 : i32
      %63 = arith.addi %62, %c2_i32_58 : i32
      %64 = arith.index_cast %63 : i32 to index
      %c0_59 = arith.constant 0 : index
      %c0_60 = arith.constant 0 : index
      %65 = vector.load %arg9[%64, %c0_59, %c0_60] : memref<10x16x128xbf16, #tpu.memory_space<vmem>>, vector<2x8x128xbf16>
      %66 = vector.shape_cast %65 : vector<2x8x128xbf16> to vector<16x128xbf16>
      %c2_61 = arith.constant 2 : index
      %c0_62 = arith.constant 0 : index
      %c0_63 = arith.constant 0 : index
      %c0_64 = arith.constant 0 : index
      %67 = vector.load %arg5[%c2_61, %c0_62, %c0_63, %c0_64] : memref<3x3x128x128xbf16, #tpu.memory_space<vmem>>, vector<1x1x128x128xbf16>
      %68 = vector.shape_cast %67 : vector<1x1x128x128xbf16> to vector<128x128xbf16>
      %cst_65 = arith.constant dense<0.000000e+00> : vector<16x128xf32>
      %69 = tpu.matmul %66, %68, %cst_65 {dimension_numbers = #tpu.dot_dimension_numbers<[1], [0], [0], [1], [0, 0, 1, 1], [], []>} : vector<16x128xbf16>, vector<128x128xbf16>, vector<16x128xf32> -> vector<16x128xf32>
      %70 = arith.addf %61, %69 : vector<16x128xf32>
      %c2_i32_66 = arith.constant 2 : i32
      %71 = arith.muli %c2_i32_66, %arg10 : i32
      %c2_i32_67 = arith.constant 2 : i32
      %72 = arith.addi %71, %c2_i32_67 : i32
      %73 = arith.index_cast %72 : i32 to index
      %c1_68 = arith.constant 1 : index
      %c0_69 = arith.constant 0 : index
      %74 = vector.load %arg9[%73, %c1_68, %c0_69] : memref<10x16x128xbf16, #tpu.memory_space<vmem>>, vector<2x8x128xbf16>
      %75 = vector.shape_cast %74 : vector<2x8x128xbf16> to vector<16x128xbf16>
      %c2_70 = arith.constant 2 : index
      %c1_71 = arith.constant 1 : index
      %c0_72 = arith.constant 0 : index
      %c0_73 = arith.constant 0 : index
      %76 = vector.load %arg5[%c2_70, %c1_71, %c0_72, %c0_73] : memref<3x3x128x128xbf16, #tpu.memory_space<vmem>>, vector<1x1x128x128xbf16>
      %77 = vector.shape_cast %76 : vector<1x1x128x128xbf16> to vector<128x128xbf16>
      %cst_74 = arith.constant dense<0.000000e+00> : vector<16x128xf32>
      %78 = tpu.matmul %75, %77, %cst_74 {dimension_numbers = #tpu.dot_dimension_numbers<[1], [0], [0], [1], [0, 0, 1, 1], [], []>} : vector<16x128xbf16>, vector<128x128xbf16>, vector<16x128xf32> -> vector<16x128xf32>
      %79 = arith.addf %70, %78 : vector<16x128xf32>
      %c2_i32_75 = arith.constant 2 : i32
      %80 = arith.muli %c2_i32_75, %arg10 : i32
      %c2_i32_76 = arith.constant 2 : i32
      %81 = arith.addi %80, %c2_i32_76 : i32
      %82 = arith.index_cast %81 : i32 to index
      %c2_77 = arith.constant 2 : index
      %c0_78 = arith.constant 0 : index
      %83 = vector.load %arg9[%82, %c2_77, %c0_78] : memref<10x16x128xbf16, #tpu.memory_space<vmem>>, vector<2x8x128xbf16>
      %84 = vector.shape_cast %83 : vector<2x8x128xbf16> to vector<16x128xbf16>
      %c2_79 = arith.constant 2 : index
      %c2_80 = arith.constant 2 : index
      %c0_81 = arith.constant 0 : index
      %c0_82 = arith.constant 0 : index
      %85 = vector.load %arg5[%c2_79, %c2_80, %c0_81, %c0_82] : memref<3x3x128x128xbf16, #tpu.memory_space<vmem>>, vector<1x1x128x128xbf16>
      %86 = vector.shape_cast %85 : vector<1x1x128x128xbf16> to vector<128x128xbf16>
      %cst_83 = arith.constant dense<0.000000e+00> : vector<16x128xf32>
      %87 = tpu.matmul %84, %86, %cst_83 {dimension_numbers = #tpu.dot_dimension_numbers<[1], [0], [0], [1], [0, 0, 1, 1], [], []>} : vector<16x128xbf16>, vector<128x128xbf16>, vector<16x128xf32> -> vector<16x128xf32>
      %88 = arith.addf %79, %87 : vector<16x128xf32>
      %89 = vector.shape_cast %88 : vector<16x128xf32> to vector<2x8x128xf32>
      %c0_84 = arith.constant 0 : index
      %c0_85 = arith.constant 0 : index
      %c0_86 = arith.constant 0 : index
      %90 = vector.load %arg6[%c0_84, %c0_85, %c0_86] : memref<1x1x128xf32, #tpu.memory_space<vmem>>, vector<1x1x128xf32>
      %91 = vector.broadcast %90 : vector<1x1x128xf32> to vector<2x8x128xf32>
      %92 = arith.addf %89, %91 : vector<2x8x128xf32>
      %cst_87 = arith.constant dense<0xFF800000> : vector<8x128xf32>
      %93 = vector.multi_reduction <maximumf>, %92, %cst_87 [0] : vector<2x8x128xf32> to vector<8x128xf32>
      %94 = vector.shape_cast %93 : vector<8x128xf32> to vector<4x2x128xf32>
      %cst_88 = arith.constant dense<0xFF800000> : vector<4x128xf32>
      %95 = vector.multi_reduction <maximumf>, %94, %cst_88 [1] : vector<4x2x128xf32> to vector<4x128xf32>
      %cst_89 = arith.constant 0.000000e+00 : f32
      %96 = vector.broadcast %cst_89 : f32 to vector<4x128xf32>
      %97 = arith.maximumf %95, %96 : vector<4x128xf32>
      %98 = tpu.iota {dimensions = array<i32: 0>} : vector<4x128xi32>
      %c4_i32_90 = arith.constant 4 : i32
      %99 = vector.broadcast %c4_i32_90 : i32 to vector<4x128xi32>
      %100 = arith.cmpi slt, %98, %99 : vector<4x128xi32>
      %cst_91 = arith.constant 0.000000e+00 : f32
      %101 = vector.broadcast %cst_91 : f32 to vector<4x128xf32>
      %102 = arith.select %100, %97, %101 : vector<4x128xi1>, vector<4x128xf32>
      %103 = vector.shape_cast %102 : vector<4x128xf32> to vector<1x4x128xf32>
      %104 = arith.truncf %103 : vector<1x4x128xf32> to vector<1x4x128xbf16>
      %c0_92 = arith.constant 0 : index
      %105 = arith.index_cast %arg10 : i32 to index
      %c0_93 = arith.constant 0 : index
      %c0_94 = arith.constant 0 : index
      %106 = vector.load %arg7[%c0_92, %105, %c0_93, %c0_94] : memref<1x4x4x128xbf16, #tpu.memory_space<vmem>>, vector<1x1x4x128xbf16>
      %107 = vector.shape_cast %106 : vector<1x1x4x128xbf16> to vector<1x4x128xbf16>
      %108 = vector.shape_cast %104 : vector<1x4x128xbf16> to vector<1x1x4x128xbf16>
      tpu.vector_store %arg7[%c0_92, %105, %c0_93, %c0_94], %108 {strides = array<i32>} : memref<1x4x4x128xbf16, #tpu.memory_space<vmem>>, vector<1x1x4x128xbf16>,
    }
    %c4_i32_6 = arith.constant 4 : i32
    return
  }
  func.func @transform_0(%arg0: i32, %arg1: i32) -> (i32, i32, i32, i32) {
    %c0_i32 = arith.constant 0 : i32
    %c0_i32_0 = arith.constant 0 : i32
    %c0_i32_1 = arith.constant 0 : i32
    %c0_i32_2 = arith.constant 0 : i32
    return %arg0, %c0_i32, %c0_i32_0, %c0_i32_1 : i32, i32, i32, i32
  }
  func.func @transform_1(%arg0: i32, %arg1: i32) -> (i32, i32, i32, i32) {
    %c0_i32 = arith.constant 0 : i32
    %c0_i32_0 = arith.constant 0 : i32
    %c0_i32_1 = arith.constant 0 : i32
    %c0_i32_2 = arith.constant 0 : i32
    %c0_i32_3 = arith.constant 0 : i32
    return %c0_i32, %c0_i32_0, %c0_i32_1, %c0_i32_2 : i32, i32, i32, i32
  }
  func.func @transform_2(%arg0: i32, %arg1: i32) -> (i32, i32, i32) {
    %c0_i32 = arith.constant 0 : i32
    %c0_i32_0 = arith.constant 0 : i32
    %c0_i32_1 = arith.constant 0 : i32
    %c0_i32_2 = arith.constant 0 : i32
    return %c0_i32, %c0_i32_0, %c0_i32_1 : i32, i32, i32
  }
  func.func @transform_3(%arg0: i32, %arg1: i32) -> (i32, i32, i32, i32) {
    %c0_i32 = arith.constant 0 : i32
    %c0_i32_0 = arith.constant 0 : i32
    %c0_i32_1 = arith.constant 0 : i32
    %c0_i32_2 = arith.constant 0 : i32
    %c0_i32_3 = arith.constant 0 : i32
    return %c0_i32, %c0_i32_0, %c0_i32_1, %c0_i32_2 : i32, i32, i32, i32
  }
  func.func @transform_4(%arg0: i32, %arg1: i32) -> (i32, i32, i32) {
    %c0_i32 = arith.constant 0 : i32
    %c0_i32_0 = arith.constant 0 : i32
    %c0_i32_1 = arith.constant 0 : i32
    %c0_i32_2 = arith.constant 0 : i32
    return %c0_i32, %c0_i32_0, %c0_i32_1 : i32, i32, i32
  }
  func.func @transform_5(%arg0: i32, %arg1: i32) -> (i32, i32, i32, i32) {
    %c0_i32 = arith.constant 0 : i32
    %c0_i32_0 = arith.constant 0 : i32
    %c0_i32_1 = arith.constant 0 : i32
    return %arg0, %arg1, %c0_i32, %c0_i32_0 : i32, i32, i32, i32
  }
}

module attributes {stable_mosaic.version = 11 : i64} {
  func.func @_fused_linear_kernel(%arg0: i32, %arg1: memref<2x2048xbf16, #tpu.memory_space<vmem>>, %arg2: memref<2048x256xbf16, #tpu.memory_space<vmem>>, %arg3: memref<1x256xf32, #tpu.memory_space<vmem>>, %arg4: memref<256x18xf32, #tpu.memory_space<vmem>>, %arg5: memref<1x18xf32, #tpu.memory_space<vmem>>, %arg6: memref<2x18xf32, #tpu.memory_space<vmem>>, %arg7: memref<2x256xf32, #tpu.memory_space<vmem>>) attributes {dimension_semantics = [#tpu.dimension_semantics<arbitrary>], iteration_bounds = array<i64: 1>, scalar_prefetch = 0 : i64, scratch_operands = 1 : i64, tpu.core_type = #tpu.core_type<tc>, window_params = [{transform_indices = @transform_0, window_bounds = array<i64: 2, 2048>}, {transform_indices = @transform_1, window_bounds = array<i64: 2048, 256>}, {pipeline_mode = #tpu.pipeline_mode<synchronous>, transform_indices = @transform_2, window_bounds = array<i64: 1, 256>}, {pipeline_mode = #tpu.pipeline_mode<synchronous>, transform_indices = @transform_3, window_bounds = array<i64: 256, 18>}, {pipeline_mode = #tpu.pipeline_mode<synchronous>, transform_indices = @transform_4, window_bounds = array<i64: 1, 18>}, {pipeline_mode = #tpu.pipeline_mode<synchronous>, transform_indices = @transform_5, window_bounds = array<i64: 2, 18>}]} {
    %c0_i32 = arith.constant 0 : i32
    %0 = arith.cmpi eq, %arg0, %c0_i32 : i32
    %1 = arith.extui %0 : i1 to i32
    %c0_i32_0 = arith.constant 0 : i32
    %2 = arith.cmpi ne, %1, %c0_i32_0 : i32
    scf.if %2 {
      %cst_10 = arith.constant 0.000000e+00 : f32
      %12 = vector.broadcast %cst_10 : f32 to vector<2x256xf32>
      %c0_11 = arith.constant 0 : index
      %c0_12 = arith.constant 0 : index
      %13 = vector.load %arg7[%c0_11, %c0_12] : memref<2x256xf32, #tpu.memory_space<vmem>>, vector<2x256xf32>
      tpu.vector_store %arg7[%c0_11, %c0_12], %12 {strides = array<i32>} : memref<2x256xf32, #tpu.memory_space<vmem>>, vector<2x256xf32>,
    } else {
    }
    %c0 = arith.constant 0 : index
    %c0_1 = arith.constant 0 : index
    %3 = vector.load %arg7[%c0, %c0_1] : memref<2x256xf32, #tpu.memory_space<vmem>>, vector<2x256xf32>
    %c0_2 = arith.constant 0 : index
    %c0_3 = arith.constant 0 : index
    %4 = vector.load %arg1[%c0_2, %c0_3] : memref<2x2048xbf16, #tpu.memory_space<vmem>>, vector<2x2048xbf16>
    %c0_4 = arith.constant 0 : index
    %c0_5 = arith.constant 0 : index
    %5 = vector.load %arg2[%c0_4, %c0_5] : memref<2048x256xbf16, #tpu.memory_space<vmem>>, vector<2048x256xbf16>
    %cst = arith.constant dense<0.000000e+00> : vector<2x256xf32>
    %6 = tpu.matmul %4, %5, %cst {dimension_numbers = #tpu.dot_dimension_numbers<[1], [0], [0], [1], [0, 0, 1, 1], [], []>} : vector<2x2048xbf16>, vector<2048x256xbf16>, vector<2x256xf32> -> vector<2x256xf32>
    %7 = arith.addf %3, %6 : vector<2x256xf32>
    %c0_6 = arith.constant 0 : index
    %c0_7 = arith.constant 0 : index
    %8 = vector.load %arg7[%c0_6, %c0_7] : memref<2x256xf32, #tpu.memory_space<vmem>>, vector<2x256xf32>
    tpu.vector_store %arg7[%c0_6, %c0_7], %7 {strides = array<i32>} : memref<2x256xf32, #tpu.memory_space<vmem>>, vector<2x256xf32>,
    %c0_i32_8 = arith.constant 0 : i32
    %9 = arith.cmpi eq, %arg0, %c0_i32_8 : i32
    %10 = arith.extui %9 : i1 to i32
    %c0_i32_9 = arith.constant 0 : i32
    %11 = arith.cmpi ne, %10, %c0_i32_9 : i32
    scf.if %11 {
      %c0_10 = arith.constant 0 : index
      %c0_11 = arith.constant 0 : index
      %12 = vector.load %arg7[%c0_10, %c0_11] : memref<2x256xf32, #tpu.memory_space<vmem>>, vector<2x256xf32>
      %c0_12 = arith.constant 0 : index
      %c0_13 = arith.constant 0 : index
      %13 = vector.load %arg3[%c0_12, %c0_13] : memref<1x256xf32, #tpu.memory_space<vmem>>, vector<1x256xf32>
      %14 = vector.broadcast %13 : vector<1x256xf32> to vector<2x256xf32>
      %15 = arith.addf %12, %14 : vector<2x256xf32>
      %cst_14 = arith.constant 0.000000e+00 : f32
      %16 = vector.broadcast %cst_14 : f32 to vector<2x256xf32>
      %17 = arith.maximumf %15, %16 : vector<2x256xf32>
      %c0_15 = arith.constant 0 : index
      %c0_16 = arith.constant 0 : index
      %18 = vector.load %arg4[%c0_15, %c0_16] : memref<256x18xf32, #tpu.memory_space<vmem>>, vector<256x18xf32>
      %cst_17 = arith.constant dense<0.000000e+00> : vector<2x18xf32>
      %19 = tpu.matmul %17, %18, %cst_17 {dimension_numbers = #tpu.dot_dimension_numbers<[1], [0], [0], [1], [0, 0, 1, 1], [], []>} : vector<2x256xf32>, vector<256x18xf32>, vector<2x18xf32> -> vector<2x18xf32>
      %c0_18 = arith.constant 0 : index
      %c0_19 = arith.constant 0 : index
      %20 = vector.load %arg5[%c0_18, %c0_19] : memref<1x18xf32, #tpu.memory_space<vmem>>, vector<1x18xf32>
      %21 = vector.broadcast %20 : vector<1x18xf32> to vector<2x18xf32>
      %22 = arith.addf %19, %21 : vector<2x18xf32>
      %c0_20 = arith.constant 0 : index
      %c0_21 = arith.constant 0 : index
      %23 = vector.load %arg6[%c0_20, %c0_21] : memref<2x18xf32, #tpu.memory_space<vmem>>, vector<2x18xf32>
      tpu.vector_store %arg6[%c0_20, %c0_21], %22 {strides = array<i32>} : memref<2x18xf32, #tpu.memory_space<vmem>>, vector<2x18xf32>,
    } else {
    }
    return
  }
  func.func @transform_0(%arg0: i32) -> (i32, i32) {
    %c0_i32 = arith.constant 0 : i32
    %c0_i32_0 = arith.constant 0 : i32
    return %c0_i32, %arg0 : i32, i32
  }
  func.func @transform_1(%arg0: i32) -> (i32, i32) {
    %c0_i32 = arith.constant 0 : i32
    %c0_i32_0 = arith.constant 0 : i32
    return %arg0, %c0_i32 : i32, i32
  }
  func.func @transform_2(%arg0: i32) -> (i32, i32) {
    %c0_i32 = arith.constant 0 : i32
    %c0_i32_0 = arith.constant 0 : i32
    %c0_i32_1 = arith.constant 0 : i32
    return %c0_i32, %c0_i32_0 : i32, i32
  }
  func.func @transform_3(%arg0: i32) -> (i32, i32) {
    %c0_i32 = arith.constant 0 : i32
    %c0_i32_0 = arith.constant 0 : i32
    %c0_i32_1 = arith.constant 0 : i32
    return %c0_i32, %c0_i32_0 : i32, i32
  }
  func.func @transform_4(%arg0: i32) -> (i32, i32) {
    %c0_i32 = arith.constant 0 : i32
    %c0_i32_0 = arith.constant 0 : i32
    %c0_i32_1 = arith.constant 0 : i32
    return %c0_i32, %c0_i32_0 : i32, i32
  }
  func.func @transform_5(%arg0: i32) -> (i32, i32) {
    %c0_i32 = arith.constant 0 : i32
    %c0_i32_0 = arith.constant 0 : i32
    %c0_i32_1 = arith.constant 0 : i32
    return %c0_i32, %c0_i32_0 : i32, i32
  }
}

</mosaic_0001>

<llo_original>
// kernel: musiclass_forward.3
$region0: #{musiclass_forward.3}
  #allocation0 [shape = 'u32[]', space=smem, size = 0x4, offset = 0x4, fixed_abs, tag = 'smem constant byte address 0x4 - core index']
  #allocation1 [shape = 'u32[144,128]{1,0:T(1,128)}', space=vmem, size = 0x12000, scoped, tag = 'internal scratch']
  #allocation2 [shape = 'bf16[18,18,32]{2,1,0:T(8,128)(2,1)}', space=vmem, size = 0x1b000, scoped, tag = 'scratch operand']
  %s0 = inlined_call_operand.vmem [shape: bf16[2,20,20,1], index: 0, kind: input, shape index: {}]
  %s1 = inlined_call_operand.vmem [shape: bf16[3,3,1,32], index: 1, kind: input, shape index: {}]
  %s2 = inlined_call_operand.vmem [shape: f32[1,1,32], index: 2, kind: input, shape index: {}]
  %s3 = inlined_call_operand.vmem [shape: bf16[3,3,32,64], index: 3, kind: input, shape index: {}]
  %s4 = inlined_call_operand.vmem [shape: f32[1,1,64], index: 4, kind: input, shape index: {}]
  %s5 = inlined_call_operand.vmem [shape: bf16[2,8,8,64], index: 5, kind: output, shape index: {}]
  %s6 = sld [smem:[#allocation0]]
  $region67: #{musiclass_forward.3} parent=0
    _
  %s8 = ssub.s32 1, %s6
  %s9 = scalar_select 0, %s8, %s6
  loop: start=0, step=1, limit=4
  $region2: #{musiclass_forward.3} parent=0 // loop_pre_header
    _
  $region3: #{musiclass_forward.3} parent=0 // loop_header
    %s11 = sphi 0, %s15
    %p12 = scmp.ge.s32.totalorder %s11, 4
    %s18 = sphi 0, %s30
    %s19 = sphi 0, %s26
    %s20 = sphi 0, %s18
    %s21 = sphi 0, %s19
    %s22 = sphi 0, %s20
    %s23 = sphi 0, %s21
    %s33 = sphi 0, %s35
    %s36 = sphi 0, %s33
    %s37 = sphi 0, %s36
    %s53 = sphi 0, %s37
    %s57 = sphi 0, %s57
    %s59 = sphi 0, %s57
    %s60 = sphi 0, %s59
    %s74 = sphi 0, %s60
    %s78 = sphi 0, %s78
    %s80 = sphi 0, %s78
    %s81 = sphi 0, %s80
    %s95 = sphi 0, %s81
    %s99 = sphi 0, %s99
    %s101 = sphi 0, %s99
    %s102 = sphi 0, %s101
    %s116 = sphi 0, %s102
    %s120 = sphi 0, %s120
    %s122 = sphi 0, %s120
    %s123 = sphi 0, %s122
    %s137 = sphi 0, %s123
    %s145 = sphi 0, %s147
    %s148 = sphi 0, %s145
    %s149 = sphi 0, %s148
    %s165 = sphi 0, %s149
  $region4: #{musiclass_forward.3} parent=0 // loop_header_branch
    %14 = sbr.rel (%p12) target = $region8
  $region5: #{musiclass_forward.3} parent=0 // loop_body
    %s16 = ssub.s32 %s11, 1
    %s17 = ssub.s32 %s11, 2
    %s24 = sadd.s32 1, %s19
    %p25 = scmp.ge.s32.totalorder %s24, 1
    %s26 = scalar_select %p25, 0, %s24
    %s27 = sadd.s32 1, %s18
    %s28 = scalar_select %p25, %s27, %s18
    %p29 = scmp.ge.s32.totalorder %s28, 2
    %s30 = scalar_select %p29, 0, %s28
    %s31 = ssub.s32 %s18, %s30
    %p32 = scmp.eq.s32.totalorder %s31, 0
    %s34 = sadd.s32 %s33, 1
    %s35 = scalar_select %p32, %s33, %s34
    %p38 = pneg %p32
    %p39 = scmp.eq.s32.totalorder %s11, 1
    %p40 = por %p38, %p39
    %p41 = scmp.ne.s32.totalorder %s33, %s36
    %p42 = scmp.eq.s32.totalorder %s11, 0
    %p43 = por %p41, %p42
    %p44 = scmp.ne.s32.totalorder %s33, %s36
    %p45 = scmp.eq.s32.totalorder %s16, 1
    %p46 = por %p44, %p45
    %p47 = scmp.ne.s32.totalorder %s36, %s37
    %p48 = scmp.eq.s32.totalorder %s16, 0
    %p49 = por %p47, %p48
    %p50 = scmp.ne.s32.totalorder %s36, %s37
    %p51 = scmp.eq.s32.totalorder %s17, 1
    %p52 = por %p50, %p51
    %p54 = scmp.ne.s32.totalorder %s37, %s53
    %p55 = scmp.eq.s32.totalorder %s17, 0
    %p56 = por %p54, %p55
    %s58 = sadd.s32 %s57, 1
    %p61 = scmp.eq.s32.totalorder %s11, 1
    %p62 = scmp.ne.s32.totalorder %s57, %s59
    %p63 = scmp.eq.s32.totalorder %s11, 0
    %p64 = por %p62, %p63
    %p65 = scmp.ne.s32.totalorder %s57, %s59
    %p66 = scmp.eq.s32.totalorder %s16, 1
    %p67 = por %p65, %p66
    %p68 = scmp.ne.s32.totalorder %s59, %s60
    %p69 = scmp.eq.s32.totalorder %s16, 0
    %p70 = por %p68, %p69
    %p71 = scmp.ne.s32.totalorder %s59, %s60
    %p72 = scmp.eq.s32.totalorder %s17, 1
    %p73 = por %p71, %p72
    %p75 = scmp.ne.s32.totalorder %s60, %s74
    %p76 = scmp.eq.s32.totalorder %s17, 0
    %p77 = por %p75, %p76
    %s79 = sadd.s32 %s78, 1
    %p82 = scmp.eq.s32.totalorder %s11, 1
    %p83 = scmp.ne.s32.totalorder %s78, %s80
    %p84 = scmp.eq.s32.totalorder %s11, 0
    %p85 = por %p83, %p84
    %p86 = scmp.ne.s32.totalorder %s78, %s80
    %p87 = scmp.eq.s32.totalorder %s16, 1
    %p88 = por %p86, %p87
    %p89 = scmp.ne.s32.totalorder %s80, %s81
    %p90 = scmp.eq.s32.totalorder %s16, 0
    %p91 = por %p89, %p90
    %p92 = scmp.ne.s32.totalorder %s80, %s81
    %p93 = scmp.eq.s32.totalorder %s17, 1
    %p94 = por %p92, %p93
    %p96 = scmp.ne.s32.totalorder %s81, %s95
    %p97 = scmp.eq.s32.totalorder %s17, 0
    %p98 = por %p96, %p97
    %s100 = sadd.s32 %s99, 1
    %p103 = scmp.eq.s32.totalorder %s11, 1
    %p104 = scmp.ne.s32.totalorder %s99, %s101
    %p105 = scmp.eq.s32.totalorder %s11, 0
    %p106 = por %p104, %p105
    %p107 = scmp.ne.s32.totalorder %s99, %s101
    %p108 = scmp.eq.s32.totalorder %s16, 1
    %p109 = por %p107, %p108
    %p110 = scmp.ne.s32.totalorder %s101, %s102
    %p111 = scmp.eq.s32.totalorder %s16, 0
    %p112 = por %p110, %p111
    %p113 = scmp.ne.s32.totalorder %s101, %s102
    %p114 = scmp.eq.s32.totalorder %s17, 1
    %p115 = por %p113, %p114
    %p117 = scmp.ne.s32.totalorder %s102, %s116
    %p118 = scmp.eq.s32.totalorder %s17, 0
    %p119 = por %p117, %p118
    %s121 = sadd.s32 %s120, 1
    %p124 = scmp.eq.s32.totalorder %s11, 1
    %p125 = scmp.ne.s32.totalorder %s120, %s122
    %p126 = scmp.eq.s32.totalorder %s11, 0
    %p127 = por %p125, %p126
    %p128 = scmp.ne.s32.totalorder %s120, %s122
    %p129 = scmp.eq.s32.totalorder %s16, 1
    %p130 = por %p128, %p129
    %p131 = scmp.ne.s32.totalorder %s122, %s123
    %p132 = scmp.eq.s32.totalorder %s16, 0
    %p133 = por %p131, %p132
    %p134 = scmp.ne.s32.totalorder %s122, %s123
    %p135 = scmp.eq.s32.totalorder %s17, 1
    %p136 = por %p134, %p135
    %p138 = scmp.ne.s32.totalorder %s123, %s137
    %p139 = scmp.eq.s32.totalorder %s17, 0
    %p140 = por %p138, %p139
    %s141 = ssub.s32 %s18, %s30
    %s142 = ssub.s32 %s19, %s26
    %s143 = sor.u32 %s141, %s142
    %p144 = scmp.eq.s32.totalorder %s143, 0
    %s146 = sadd.s32 %s145, 1
    %s147 = scalar_select %p144, %s145, %s146
    %p150 = pneg %p144
    %p151 = scmp.eq.s32.totalorder %s11, 1
    %p152 = por %p150, %p151
    %p153 = scmp.ne.s32.totalorder %s145, %s148
    %p154 = scmp.eq.s32.totalorder %s11, 0
    %p155 = por %p153, %p154
    %p156 = scmp.ne.s32.totalorder %s145, %s148
    %p157 = scmp.eq.s32.totalorder %s16, 1
    %p158 = por %p156, %p157
    %p159 = scmp.ne.s32.totalorder %s148, %s149
    %p160 = scmp.eq.s32.totalorder %s16, 0
    %p161 = por %p159, %p160
    %p162 = scmp.ne.s32.totalorder %s148, %s149
    %p163 = scmp.eq.s32.totalorder %s17, 1
    %p164 = por %p162, %p163
    %p166 = scmp.ne.s32.totalorder %s149, %s165
    %p167 = scmp.eq.s32.totalorder %s17, 0
    %p168 = por %p166, %p167
    %p169 = scmp.le.s32.totalorder 1, %s11
    %p170 = scmp.lt.s32.totalorder %s11, 3
    %p171 = pnand %p169, %p170
    %p172 = pneg %p171
    // Predicated region
    $region9: #{musiclass_forward.3} parent=5 // pred_check
      _
    $region10: #{musiclass_forward.3} parent=5 // pred_check_branch
      %174 = sbr.rel (%p171) target = $region12
    $region11: #{musiclass_forward.3} parent=5 // pred_region
      %s175 = ssub.s32 %s11, 1
      // Predicated region
      $region13: #{musiclass_forward.3} parent=11 // pred_check
        %p176 = pneg %p70
      $region14: #{musiclass_forward.3} parent=11 // pred_check_branch
        %178 = sbr.rel (%p176) target = $region16
      $region15: #{musiclass_forward.3} parent=11 // pred_region
        _
      $region16: #{musiclass_forward.3} parent=11 // pred_fallthru
        _
      // Predicated region
      $region17: #{musiclass_forward.3} parent=11 // pred_check
        %p179 = pneg %p91
      $region18: #{musiclass_forward.3} parent=11 // pred_check_branch
        %181 = sbr.rel (%p179) target = $region20
      $region19: #{musiclass_forward.3} parent=11 // pred_region
        _
      $region20: #{musiclass_forward.3} parent=11 // pred_fallthru
        _
      // Predicated region
      $region21: #{musiclass_forward.3} parent=11 // pred_check
        %p182 = pneg %p112
      $region22: #{musiclass_forward.3} parent=11 // pred_check_branch
        %184 = sbr.rel (%p182) target = $region24
      $region23: #{musiclass_forward.3} parent=11 // pred_region
        _
      $region24: #{musiclass_forward.3} parent=11 // pred_fallthru
        _
      // Predicated region
      $region25: #{musiclass_forward.3} parent=11 // pred_check
        %p185 = pneg %p133
      $region26: #{musiclass_forward.3} parent=11 // pred_check_branch
        %187 = sbr.rel (%p185) target = $region28
      $region27: #{musiclass_forward.3} parent=11 // pred_region
        _
      $region28: #{musiclass_forward.3} parent=11 // pred_fallthru
        _
    $region12: #{musiclass_forward.3} parent=5 // pred_fallthru
      _
    %p188 = scmp.lt.s32.totalorder %s11, 2
    // Predicated region
    $region29: #{musiclass_forward.3} parent=5 // pred_check
      %p189 = pneg %p188
    $region30: #{musiclass_forward.3} parent=5 // pred_check_branch
      %191 = sbr.rel (%p189) target = $region32
    $region31: #{musiclass_forward.3} parent=5 // pred_region
      // Predicated region
      $region33: #{musiclass_forward.3} parent=31 // pred_check
        %p192 = pneg %p43
      $region34: #{musiclass_forward.3} parent=31 // pred_check_branch
        %194 = sbr.rel (%p192) target = $region36
      $region35: #{musiclass_forward.3} parent=31 // pred_region
        %p195 = scmp.lt.s32.totalorder %s18, 1
        %s196 = scalar_select %p195, %s18, 1
        %s197 = smul.addr %s196, 60
        %s198 = smul.addr %s197, 4
        %s199 = scalar_lea.vmem %s0, %s198
      $region36: #{musiclass_forward.3} parent=31 // pred_fallthru
        _
    $region32: #{musiclass_forward.3} parent=5 // pred_fallthru
      _
    %p200 = scmp.le.s32.totalorder 1, %s11
    %p201 = scmp.lt.s32.totalorder %s11, 3
    %p202 = pnand %p200, %p201
    %p203 = pneg %p202
    // Predicated region
    $region37: #{musiclass_forward.3} parent=5 // pred_check
      _
    $region38: #{musiclass_forward.3} parent=5 // pred_check_branch
      %205 = sbr.rel (%p202) target = $region40
    $region39: #{musiclass_forward.3} parent=5 // pred_region
      %s206 = ssub.s32 %s11, 1
      %p207 = scmp.lt.s32.totalorder %s20, 1
      %s208 = scalar_select %p207, %s20, 1
      %s209 = smul.addr %s208, 60
      %s210 = smul.addr %s209, 4
      %s211 = scalar_lea.vmem %s0, %s210
      %p212 = pneg %p49
      %p213 = pneg %p46
      %p214 = pneg %p70
      %p215 = pneg %p67
      %p216 = pneg %p91
      %p217 = pneg %p88
      %p218 = pneg %p112
      %p219 = pneg %p109
      %p220 = pneg %p133
      %p221 = pneg %p130
      %p222 = pneg %p161
      %p223 = pneg %p158
      %s224 = smul.u32 8, %s21
      %p225 = scmp.lt.s32.totalorder %s20, 1
      %s226 = scalar_select %p225, %s20, 1
      %p227 = scmp.lt.s32.totalorder %s224, 7
      %s228 = scalar_select %p227, %s224, 7
      %s229 = smul.addr %s226, 8
      %s230 = sadd.s32 %s228, %s229
      %s231 = smul.addr %s230, 4
      %s232 = scalar_lea.vmem %s5, %s231
      %p233 = scmp.lt.s32.totalorder %s20, 1
      %s234 = scalar_select %p233, %s20, 1
      %s235 = smul.addr %s234, 60
      %s236 = smul.addr %s235, 4
      %s237 = scalar_lea.vmem %s0, %s236
      %s238 = smul.u32 8, %s21
      %p239 = scmp.lt.s32.totalorder %s20, 1
      %s240 = scalar_select %p239, %s20, 1
      %p241 = scmp.lt.s32.totalorder %s238, 7
      %s242 = scalar_select %p241, %s238, 7
      %s243 = smul.addr %s240, 8
      %s244 = sadd.s32 %s242, %s243
      %s245 = smul.addr %s244, 4
      %s246 = scalar_lea.vmem %s5, %s245
      %s247 = smul.u32 8, %s21
      %s249 = smul.u32 %s21, 16
      %s250 = ssub.s32 %s249, 1
      loop: start=0, step=1, limit=9
      $region41: #{musiclass_forward.3} parent=39 // loop_pre_header
        _
      $region42: #{musiclass_forward.3} parent=39 // loop_header
        %s252 = sphi 0, %s256
        %p253 = scmp.ge.s32.totalorder %s252, 9
      $region43: #{musiclass_forward.3} parent=39 // loop_header_branch
        %255 = sbr.rel (%p253) target = $region47
      $region44: #{musiclass_forward.3} parent=39 // loop_body
        %s257 = smul.u32 %s252, 2
        %s258 = sadd.s32 %s250, %s257
        %s259 = sadd.s32 %s258, 1
        %s260 = smul.u32 %s259, 3
        %s261 = smul.addr %s260, 4
        %s262 = scalar_lea.vmem %s237, %s261
        %v263 = vld [vmem:[%s262] sm:$0xf]
        %v264 = vld [vmem:[%s262 + $0x4] sm:$0xf]
        %v265 = vld [vmem:[%s262 + $0x8] sm:$0x1]
        %v266 = vld [vmem:[%s262 + $0xc] sm:$0xf]
        %v267 = vld [vmem:[%s262 + $0x10] sm:$0xf]
        %v268 = vld [vmem:[%s262 + $0x14] sm:$0x1]
        %v269 = vunpack.c.l.bf16 %v263
        %v270 = vunpack.c.l.bf16 %v264
        %v271 = vunpack.c.l.bf16 %v265
        %v272 = vunpack.c.l.bf16 %v266
        %v273 = vunpack.c.l.bf16 %v267
        %v274 = vunpack.c.l.bf16 %v268
        %v275 = vld [vmem:[%s1] sm:$0x1]
        %v276 = vunpack.c.l.bf16 %v275
        %278 = vset.pattern.permute.xlu0 0
        %279 = vperm.xlu0 %278, %v269
        %v280 = vpop.permute.xlu0 %279
        %283 = vset.pattern.permute.xlu0 0
        %284 = vperm.xlu0 %283, %v270
        %v285 = vpop.permute.xlu0 %284
        %288 = vset.pattern.permute.xlu0 0
        %289 = vperm.xlu0 %288, %v271
        %v290 = vpop.permute.xlu0 %289
        %293 = vset.pattern.permute.xlu0 0
        %294 = vperm.xlu0 %293, %v272
        %v295 = vpop.permute.xlu0 %294
        %298 = vset.pattern.permute.xlu0 0
        %299 = vperm.xlu0 %298, %v273
        %v300 = vpop.permute.xlu0 %299
        %303 = vset.pattern.permute.xlu0 0
        %304 = vperm.xlu0 %303, %v274
        %v305 = vpop.permute.xlu0 %304
        %v307 = vlaneseq
        %v308 = vshrl.u32 %v307, 7
        %v309 = vsub.s32 0, %v308
        %v310 = vrot.slane %v276, %v309
        %v311 = vmul.f32 %v280, %v310
        %v312 = vmul.f32 %v285, %v310
        %v313 = vmul.f32 %v290, %v310
        %v314 = vmul.f32 %v295, %v310
        %v315 = vmul.f32 %v300, %v310
        %v316 = vmul.f32 %v305, %v310
        %v317 = vadd.f32 %v311, 0.0
        %v318 = vadd.f32 %v312, 0.0
        %v319 = vadd.f32 %v313, 0.0
        %v320 = vadd.f32 %v314, 0.0
        %v321 = vadd.f32 %v315, 0.0
        %v322 = vadd.f32 %v316, 0.0
        %v323 = vld [vmem:[%s262 + $0x8] sm:$0x3]
        %v324 = vld [vmem:[%s262 + $0x14] sm:$0x3]
        %v325 = vunpack.c.l.bf16 %v323
        %v326 = vunpack.c.l.bf16 %v324
        %s327 = scalar_lea.vmem %s1, 1
        %v328 = vld [vmem:[%s327] sm:$0x1]
        %v329 = vunpack.c.l.bf16 %v328
        %331 = vset.pattern.permute.xlu0 0
        %332 = vperm.xlu0 %331, %v325
        %v333 = vpop.permute.xlu0 %332
        %336 = vset.pattern.permute.xlu0 0
        %337 = vperm.xlu0 %336, %v326
        %v338 = vpop.permute.xlu0 %337
        %v340 = vlaneseq
        %v341 = vshrl.u32 %v340, 7
        %v342 = vsub.s32 0, %v341
        %v343 = vrot.slane %v329, %v342
        %v344 = vmul.f32 %v280, %v343
        %v345 = vmul.f32 %v285, %v343
        %v346 = vmul.f32 %v333, %v343
        %v347 = vmul.f32 %v295, %v343
        %v348 = vmul.f32 %v300, %v343
        %v349 = vmul.f32 %v338, %v343
        %vm356 = vcmask 1046528
        %v357 = vrot.slane %v344, 1
        %v358 = vrot.slane %v345, 1
        %v359 = vsel %vm356, %v357, %v358
        %v360 = vrot.slane %v346, 1
        %v361 = vsel %vm356, %v358, %v360
        %v362 = vrot.slane %v347, 1
        %v363 = vrot.slane %v348, 1
        %v364 = vsel %vm356, %v362, %v363
        %v365 = vrot.slane %v349, 1
        %v366 = vsel %vm356, %v363, %v365
        %v373 = vadd.f32 %v317, %v359
        %v374 = vadd.f32 %v318, %v361
        %v375 = vadd.f32 %v319, %v360
        %v376 = vadd.f32 %v320, %v364
        %v377 = vadd.f32 %v321, %v366
        %v378 = vadd.f32 %v322, %v365
        %v379 = vld [vmem:[%s262] sm:$0xe]
        %v380 = vld [vmem:[%s262 + $0xc] sm:$0xe]
        %v381 = vunpack.c.l.bf16 %v379
        %v382 = vunpack.c.l.bf16 %v380
        %s383 = scalar_lea.vmem %s1, 2
        %v384 = vld [vmem:[%s383] sm:$0x1]
        %v385 = vunpack.c.l.bf16 %v384
        %387 = vset.pattern.permute.xlu0 0
        %388 = vperm.xlu0 %387, %v381
        %v389 = vpop.permute.xlu0 %388
        %392 = vset.pattern.permute.xlu0 0
        %393 = vperm.xlu0 %392, %v382
        %v394 = vpop.permute.xlu0 %393
        %v396 = vlaneseq
        %v397 = vshrl.u32 %v396, 7
        %v398 = vsub.s32 0, %v397
        %v399 = vrot.slane %v385, %v398
        %v400 = vmul.f32 %v389, %v399
        %v401 = vmul.f32 %v285, %v399
        %v402 = vmul.f32 %v333, %v399
        %v403 = vmul.f32 %v394, %v399
        %v404 = vmul.f32 %v300, %v399
        %v405 = vmul.f32 %v338, %v399
        %vm412 = vcmask 1045504
        %v413 = vrot.slane %v400, 2
        %v414 = vrot.slane %v401, 2
        %v415 = vsel %vm412, %v413, %v414
        %v416 = vrot.slane %v402, 2
        %v417 = vsel %vm412, %v414, %v416
        %v418 = vrot.slane %v403, 2
        %v419 = vrot.slane %v404, 2
        %v420 = vsel %vm412, %v418, %v419
        %v421 = vrot.slane %v405, 2
        %v422 = vsel %vm412, %v419, %v421
        %v429 = vadd.f32 %v373, %v415
        %v430 = vadd.f32 %v374, %v417
        %v431 = vadd.f32 %v375, %v416
        %v432 = vadd.f32 %v376, %v420
        %v433 = vadd.f32 %v377, %v422
        %v434 = vadd.f32 %v378, %v421
        %s435 = sadd.s32 %s258, 2
        %s436 = smul.u32 %s435, 3
        %s437 = smul.addr %s436, 4
        %s438 = scalar_lea.vmem %s237, %s437
        %v439 = vld [vmem:[%s438] sm:$0xf]
        %v440 = vld [vmem:[%s438 + $0x4] sm:$0xf]
        %v441 = vld [vmem:[%s438 + $0x8] sm:$0x1]
        %v442 = vld [vmem:[%s438 + $0xc] sm:$0xf]
        %v443 = vld [vmem:[%s438 + $0x10] sm:$0xf]
        %v444 = vld [vmem:[%s438 + $0x14] sm:$0x1]
        %v445 = vunpack.c.l.bf16 %v439
        %v446 = vunpack.c.l.bf16 %v440
        %v447 = vunpack.c.l.bf16 %v441
        %v448 = vunpack.c.l.bf16 %v442
        %v449 = vunpack.c.l.bf16 %v443
        %v450 = vunpack.c.l.bf16 %v444
        %s451 = scalar_lea.vmem %s1, 3
        %v452 = vld [vmem:[%s451] sm:$0x1]
        %v453 = vunpack.c.l.bf16 %v452
        %455 = vset.pattern.permute.xlu0 0
        %456 = vperm.xlu0 %455, %v445
        %v457 = vpop.permute.xlu0 %456
        %460 = vset.pattern.permute.xlu0 0
        %461 = vperm.xlu0 %460, %v446
        %v462 = vpop.permute.xlu0 %461
        %465 = vset.pattern.permute.xlu0 0
        %466 = vperm.xlu0 %465, %v447
        %v467 = vpop.permute.xlu0 %466
        %470 = vset.pattern.permute.xlu0 0
        %471 = vperm.xlu0 %470, %v448
        %v472 = vpop.permute.xlu0 %471
        %475 = vset.pattern.permute.xlu0 0
        %476 = vperm.xlu0 %475, %v449
        %v477 = vpop.permute.xlu0 %476
        %480 = vset.pattern.permute.xlu0 0
        %481 = vperm.xlu0 %480, %v450
        %v482 = vpop.permute.xlu0 %481
        %v484 = vlaneseq
        %v485 = vshrl.u32 %v484, 7
        %v486 = vsub.s32 0, %v485
        %v487 = vrot.slane %v453, %v486
        %v488 = vmul.f32 %v457, %v487
        %v489 = vmul.f32 %v462, %v487
        %v490 = vmul.f32 %v467, %v487
        %v491 = vmul.f32 %v472, %v487
        %v492 = vmul.f32 %v477, %v487
        %v493 = vmul.f32 %v482, %v487
        %v494 = vadd.f32 %v429, %v488
        %v495 = vadd.f32 %v430, %v489
        %v496 = vadd.f32 %v431, %v490
        %v497 = vadd.f32 %v432, %v491
        %v498 = vadd.f32 %v433, %v492
        %v499 = vadd.f32 %v434, %v493
        %v500 = vld [vmem:[%s438 + $0x8] sm:$0x3]
        %v501 = vld [vmem:[%s438 + $0x14] sm:$0x3]
        %v502 = vunpack.c.l.bf16 %v500
        %v503 = vunpack.c.l.bf16 %v501
        %s504 = scalar_lea.vmem %s1, 4
        %v505 = vld [vmem:[%s504] sm:$0x1]
        %v506 = vunpack.c.l.bf16 %v505
        %508 = vset.pattern.permute.xlu0 0
        %509 = vperm.xlu0 %508, %v502
        %v510 = vpop.permute.xlu0 %509
        %513 = vset.pattern.permute.xlu0 0
        %514 = vperm.xlu0 %513, %v503
        %v515 = vpop.permute.xlu0 %514
        %v517 = vlaneseq
        %v518 = vshrl.u32 %v517, 7
        %v519 = vsub.s32 0, %v518
        %v520 = vrot.slane %v506, %v519
        %v521 = vmul.f32 %v457, %v520
        %v522 = vmul.f32 %v462, %v520
        %v523 = vmul.f32 %v510, %v520
        %v524 = vmul.f32 %v472, %v520
        %v525 = vmul.f32 %v477, %v520
        %v526 = vmul.f32 %v515, %v520
        %v533 = vrot.slane %v521, 1
        %v534 = vrot.slane %v522, 1
        %v535 = vsel %vm356, %v533, %v534
        %v536 = vrot.slane %v523, 1
        %v537 = vsel %vm356, %v534, %v536
        %v538 = vrot.slane %v524, 1
        %v539 = vrot.slane %v525, 1
        %v540 = vsel %vm356, %v538, %v539
        %v541 = vrot.slane %v526, 1
        %v542 = vsel %vm356, %v539, %v541
        %v549 = vadd.f32 %v494, %v535
        %v550 = vadd.f32 %v495, %v537
        %v551 = vadd.f32 %v496, %v536
        %v552 = vadd.f32 %v497, %v540
        %v553 = vadd.f32 %v498, %v542
        %v554 = vadd.f32 %v499, %v541
        %v555 = vld [vmem:[%s438] sm:$0xe]
        %v556 = vld [vmem:[%s438 + $0xc] sm:$0xe]
        %v557 = vunpack.c.l.bf16 %v555
        %v558 = vunpack.c.l.bf16 %v556
        %s559 = scalar_lea.vmem %s1, 5
        %v560 = vld [vmem:[%s559] sm:$0x1]
        %v561 = vunpack.c.l.bf16 %v560
        %563 = vset.pattern.permute.xlu0 0
        %564 = vperm.xlu0 %563, %v557
        %v565 = vpop.permute.xlu0 %564
        %568 = vset.pattern.permute.xlu0 0
        %569 = vperm.xlu0 %568, %v558
        %v570 = vpop.permute.xlu0 %569
        %v572 = vlaneseq
        %v573 = vshrl.u32 %v572, 7
        %v574 = vsub.s32 0, %v573
        %v575 = vrot.slane %v561, %v574
        %v576 = vmul.f32 %v565, %v575
        %v577 = vmul.f32 %v462, %v575
        %v578 = vmul.f32 %v510, %v575
        %v579 = vmul.f32 %v570, %v575
        %v580 = vmul.f32 %v477, %v575
        %v581 = vmul.f32 %v515, %v575
        %v588 = vrot.slane %v576, 2
        %v589 = vrot.slane %v577, 2
        %v590 = vsel %vm412, %v588, %v589
        %v591 = vrot.slane %v578, 2
        %v592 = vsel %vm412, %v589, %v591
        %v593 = vrot.slane %v579, 2
        %v594 = vrot.slane %v580, 2
        %v595 = vsel %vm412, %v593, %v594
        %v596 = vrot.slane %v581, 2
        %v597 = vsel %vm412, %v594, %v596
        %v604 = vadd.f32 %v549, %v590
        %v605 = vadd.f32 %v550, %v592
        %v606 = vadd.f32 %v551, %v591
        %v607 = vadd.f32 %v552, %v595
        %v608 = vadd.f32 %v553, %v597
        %v609 = vadd.f32 %v554, %v596
        %s610 = sadd.s32 %s258, 3
        %s611 = smul.u32 %s610, 3
        %s612 = smul.addr %s611, 4
        %s613 = scalar_lea.vmem %s237, %s612
        %v614 = vld [vmem:[%s613] sm:$0xf]
        %v615 = vld [vmem:[%s613 + $0x4] sm:$0xf]
        %v616 = vld [vmem:[%s613 + $0x8] sm:$0x1]
        %v617 = vld [vmem:[%s613 + $0xc] sm:$0xf]
        %v618 = vld [vmem:[%s613 + $0x10] sm:$0xf]
        %v619 = vld [vmem:[%s613 + $0x14] sm:$0x1]
        %v620 = vunpack.c.l.bf16 %v614
        %v621 = vunpack.c.l.bf16 %v615
        %v622 = vunpack.c.l.bf16 %v616
        %v623 = vunpack.c.l.bf16 %v617
        %v624 = vunpack.c.l.bf16 %v618
        %v625 = vunpack.c.l.bf16 %v619
        %s626 = scalar_lea.vmem %s1, 6
        %v627 = vld [vmem:[%s626] sm:$0x1]
        %v628 = vunpack.c.l.bf16 %v627
        %630 = vset.pattern.permute.xlu0 0
        %631 = vperm.xlu0 %630, %v620
        %v632 = vpop.permute.xlu0 %631
        %635 = vset.pattern.permute.xlu0 0
        %636 = vperm.xlu0 %635, %v621
        %v637 = vpop.permute.xlu0 %636
        %640 = vset.pattern.permute.xlu0 0
        %641 = vperm.xlu0 %640, %v622
        %v642 = vpop.permute.xlu0 %641
        %645 = vset.pattern.permute.xlu0 0
        %646 = vperm.xlu0 %645, %v623
        %v647 = vpop.permute.xlu0 %646
        %650 = vset.pattern.permute.xlu0 0
        %651 = vperm.xlu0 %650, %v624
        %v652 = vpop.permute.xlu0 %651
        %655 = vset.pattern.permute.xlu0 0
        %656 = vperm.xlu0 %655, %v625
        %v657 = vpop.permute.xlu0 %656
        %v659 = vlaneseq
        %v660 = vshrl.u32 %v659, 7
        %v661 = vsub.s32 0, %v660
        %v662 = vrot.slane %v628, %v661
        %v663 = vmul.f32 %v632, %v662
        %v664 = vmul.f32 %v637, %v662
        %v665 = vmul.f32 %v642, %v662
        %v666 = vmul.f32 %v647, %v662
        %v667 = vmul.f32 %v652, %v662
        %v668 = vmul.f32 %v657, %v662
        %v669 = vadd.f32 %v604, %v663
        %v670 = vadd.f32 %v605, %v664
        %v671 = vadd.f32 %v606, %v665
        %v672 = vadd.f32 %v607, %v666
        %v673 = vadd.f32 %v608, %v667
        %v674 = vadd.f32 %v609, %v668
        %v675 = vld [vmem:[%s613 + $0x8] sm:$0x3]
        %v676 = vld [vmem:[%s613 + $0x14] sm:$0x3]
        %v677 = vunpack.c.l.bf16 %v675
        %v678 = vunpack.c.l.bf16 %v676
        %s679 = scalar_lea.vmem %s1, 7
        %v680 = vld [vmem:[%s679] sm:$0x1]
        %v681 = vunpack.c.l.bf16 %v680
        %683 = vset.pattern.permute.xlu0 0
        %684 = vperm.xlu0 %683, %v677
        %v685 = vpop.permute.xlu0 %684
        %688 = vset.pattern.permute.xlu0 0
        %689 = vperm.xlu0 %688, %v678
        %v690 = vpop.permute.xlu0 %689
        %v692 = vlaneseq
        %v693 = vshrl.u32 %v692, 7
        %v694 = vsub.s32 0, %v693
        %v695 = vrot.slane %v681, %v694
        %v696 = vmul.f32 %v632, %v695
        %v697 = vmul.f32 %v637, %v695
        %v698 = vmul.f32 %v685, %v695
        %v699 = vmul.f32 %v647, %v695
        %v700 = vmul.f32 %v652, %v695
        %v701 = vmul.f32 %v690, %v695
        %v708 = vrot.slane %v696, 1
        %v709 = vrot.slane %v697, 1
        %v710 = vsel %vm356, %v708, %v709
        %v711 = vrot.slane %v698, 1
        %v712 = vsel %vm356, %v709, %v711
        %v713 = vrot.slane %v699, 1
        %v714 = vrot.slane %v700, 1
        %v715 = vsel %vm356, %v713, %v714
        %v716 = vrot.slane %v701, 1
        %v717 = vsel %vm356, %v714, %v716
        %v724 = vadd.f32 %v669, %v710
        %v725 = vadd.f32 %v670, %v712
        %v726 = vadd.f32 %v671, %v711
        %v727 = vadd.f32 %v672, %v715
        %v728 = vadd.f32 %v673, %v717
        %v729 = vadd.f32 %v674, %v716
        %v730 = vld [vmem:[%s613] sm:$0xe]
        %v731 = vld [vmem:[%s613 + $0xc] sm:$0xe]
        %v732 = vunpack.c.l.bf16 %v730
        %v733 = vunpack.c.l.bf16 %v731
        %s734 = scalar_lea.vmem %s1, 8
        %v735 = vld [vmem:[%s734] sm:$0x1]
        %v736 = vunpack.c.l.bf16 %v735
        %738 = vset.pattern.permute.xlu0 0
        %739 = vperm.xlu0 %738, %v732
        %v740 = vpop.permute.xlu0 %739
        %743 = vset.pattern.permute.xlu0 0
        %744 = vperm.xlu0 %743, %v733
        %v745 = vpop.permute.xlu0 %744
        %v747 = vlaneseq
        %v748 = vshrl.u32 %v747, 7
        %v749 = vsub.s32 0, %v748
        %v750 = vrot.slane %v736, %v749
        %v751 = vmul.f32 %v740, %v750
        %v752 = vmul.f32 %v637, %v750
        %v753 = vmul.f32 %v685, %v750
        %v754 = vmul.f32 %v745, %v750
        %v755 = vmul.f32 %v652, %v750
        %v756 = vmul.f32 %v690, %v750
        %v763 = vrot.slane %v751, 2
        %v764 = vrot.slane %v752, 2
        %v765 = vsel %vm412, %v763, %v764
        %v766 = vrot.slane %v753, 2
        %v767 = vsel %vm412, %v764, %v766
        %v768 = vrot.slane %v754, 2
        %v769 = vrot.slane %v755, 2
        %v770 = vsel %vm412, %v768, %v769
        %v771 = vrot.slane %v756, 2
        %v772 = vsel %vm412, %v769, %v771
        %v779 = vadd.f32 %v724, %v765
        %v780 = vadd.f32 %v725, %v767
        %v781 = vadd.f32 %v726, %v766
        %v782 = vadd.f32 %v727, %v770
        %v783 = vadd.f32 %v728, %v772
        %v784 = vadd.f32 %v729, %v771
        %v785 = vld [vmem:[%s2] sm:$0x1]
        %v787 = vlaneseq
        %v788 = vshrl.u32 %v787, 7
        %v789 = vsub.s32 0, %v788
        %v790 = vrot.slane %v785, %v789
        %v792 = vadd.f32 %v779, %v790
        %v793 = vadd.f32 %v780, %v790
        %v794 = vadd.f32 %v781, %v790
        %v795 = vadd.f32 %v782, %v790
        %v796 = vadd.f32 %v783, %v790
        %v797 = vadd.f32 %v784, %v790
        %v798 = vmax.f32 %v792, 0.0
        %v799 = vmax.f32 %v793, 0.0
        %v800 = vmax.f32 %v794, 0.0
        %v801 = vmax.f32 %v795, 0.0
        %v802 = vmax.f32 %v796, 0.0
        %v803 = vmax.f32 %v797, 0.0
        %v804 = vstv %s258
        %v805 = vadd.s32 %v804, 1
        %v806 = vlaneseq
        %v807 = vshrl.u32 %v806, 7
        %v808 = vadd.s32 %v807, 8
        %v809 = vadd.s32 %v807, 16
        %vm810 = vcmp.ge.s32.totalorder %v804, 0
        %vm811 = vcmp.ge.s32.totalorder %v805, 0
        %vm812 = vcmp.lt.s32.totalorder %v804, 16
        %vm813 = vcmp.lt.s32.totalorder %v805, 16
        %vm814 = vmand %vm810, %vm812
        %vm815 = vmand %vm811, %vm813
        %vm816 = vcmp.ge.s32.totalorder %v807, 1
        %vm817 = vcmp.ge.s32.totalorder %v808, 1
        %vm818 = vcmp.ge.s32.totalorder %v809, 1
        %vm819 = vmand %vm814, %vm816
        %vm820 = vmand %vm814, %vm817
        %vm821 = vmand %vm814, %vm818
        %vm822 = vmand %vm815, %vm816
        %vm823 = vmand %vm815, %vm817
        %vm824 = vmand %vm815, %vm818
        %vm825 = vcmp.le.s32.totalorder %v807, 16
        %vm826 = vcmp.le.s32.totalorder %v808, 16
        %vm827 = vcmp.le.s32.totalorder %v809, 16
        %vm828 = vmand %vm819, %vm825
        %vm829 = vmand %vm820, %vm826
        %vm830 = vmand %vm821, %vm827
        %vm831 = vmand %vm822, %vm825
        %vm832 = vmand %vm823, %vm826
        %vm833 = vmand %vm824, %vm827
        %v834 = vsel %vm828, %v798, 0.0
        %v835 = vsel %vm829, %v799, 0.0
        %v836 = vsel %vm830, %v800, 0.0
        %v837 = vsel %vm831, %v801, 0.0
        %v838 = vsel %vm832, %v802, 0.0
        %v839 = vsel %vm833, %v803, 0.0
        %v840 = vpack.c.bf16 %v835, %v834
        %v841 = vpack.c.bf16 %v836, %v836
        %v842 = vpack.c.bf16 %v838, %v837
        %v843 = vpack.c.bf16 %v839, %v839
        %v848 = vunpack.c.l.b16 %v840
        %v849 = vunpack.c.h.b16 %v840
        %v850 = vunpack.c.l.b16 %v841
        %v851 = vunpack.c.l.b16 %v842
        %v852 = vunpack.c.h.b16 %v842
        %v853 = vunpack.c.l.b16 %v843
        %v854 = vpack.c.b16 %v848, %v848
        %v855 = vpack.c.b16 %v849, %v849
        %v856 = vpack.c.b16 %v850, %v850
        %v857 = vpack.c.b16 %v851, %v851
        %v858 = vpack.c.b16 %v852, %v852
        %v859 = vpack.c.b16 %v853, %v853
        %s866 = smul.u32 %s257, 3
        %s867 = smul.addr %s866, 4
        %s868 = scalar_lea.vmem [#allocation2], %s867
        %vm869 = vcmask 257024
        %870 = vst.msk [vmem:[%s868] sm:$0xf] %vm869, %v854
        %871 = vst.msk [vmem:[%s868 + $0x4] sm:$0xf] %vm869, %v855
        %vm872 = vcmask 253952
        %873 = vst.msk [vmem:[%s868 + $0x8] sm:$0x1] %vm872, %v856
        %874 = vst.msk [vmem:[%s868 + $0xc] sm:$0xf] %vm869, %v857
        %875 = vst.msk [vmem:[%s868 + $0x10] sm:$0xf] %vm869, %v858
        %876 = vst.msk [vmem:[%s868 + $0x14] sm:$0x1] %vm872, %v859
      $region45: #{musiclass_forward.3} parent=39 // loop_footer
        %s256 = sadd.s32 1, %s252
      $region46: #{musiclass_forward.3} parent=39 // loop_footer_branch
        %251 = sbr.rel target = $region42
      $region47: #{musiclass_forward.3} parent=39 // loop_exit
        _
      loop: start=0, step=1, limit=8
      $region48: #{musiclass_forward.3} parent=39 // loop_pre_header
        _
      $region49: #{musiclass_forward.3} parent=39 // loop_header
        %s878 = sphi 0, %s882
        %p879 = scmp.ge.s32.totalorder %s878, 8
      $region50: #{musiclass_forward.3} parent=39 // loop_header_branch
        %881 = sbr.rel (%p879) target = $region54
      $region51: #{musiclass_forward.3} parent=39 // loop_body
        %s883 = smul.u32 %s878, 2
        %s884 = smul.u32 %s883, 3
        %s885 = smul.addr %s884, 4
        %s886 = scalar_lea.vmem [#allocation2], %s885
        %v887 = vld [vmem:[%s886] sm:$0xf]
        %v888 = vld [vmem:[%s886 + $0x4] sm:$0xf]
        %v889 = vld [vmem:[%s886 + $0xc] sm:$0xf]
        %v890 = vld [vmem:[%s886 + $0x10] sm:$0xf]
        %v891 = vld [vmem:[%s3] sm:$0xf]
        %v892 = vld [vmem:[%s3 + $0x4] sm:$0xf]
        %v893 = vld [vmem:[%s3 + $0x8] sm:$0xf]
        %v894 = vld [vmem:[%s3 + $0xc] sm:$0xf]
        %v895 = vld [vmem:[%s886 + $0x8] sm:$0x1]
        %v896 = vld [vmem:[%s886 + $0x14] sm:$0x1]
        %vm897 = vsmask.f32 3328
        %vm898 = vsmask.f32 7440
        %vm899 = vmor %vm897, %vm898
        %v901 = vshrl.u32 %v887, 16
        %v903 = vrot.slane %v901, 4
        %v904 = vshll.u32 %v887, 16
        %v906 = vrot.slane %v904, 5
        %v907 = vor.u32 %v903, %v906
        %v908 = vrot.slane %v907, 4
        %v910 = vshll.u32 %v888, 16
        %v912 = vrot.slane %v910, 5
        %v913 = vsel %vm899, %v908, %v912
        %v914 = vshrl.u32 %v888, 16
        %v916 = vrot.slane %v914, 4
        %v917 = vor.u32 %v916, %v912
        %v918 = vrot.slane %v917, 4
        %v920 = vshll.u32 %v895, 16
        %v922 = vrot.slane %v920, 5
        %v923 = vsel %vm899, %v918, %v922
        %v925 = vshrl.u32 %v889, 16
        %v927 = vrot.slane %v925, 4
        %v928 = vshll.u32 %v889, 16
        %v930 = vrot.slane %v928, 5
        %v931 = vor.u32 %v927, %v930
        %v932 = vrot.slane %v931, 4
        %v934 = vshll.u32 %v890, 16
        %v936 = vrot.slane %v934, 5
        %v937 = vsel %vm899, %v932, %v936
        %v938 = vshrl.u32 %v890, 16
        %v940 = vrot.slane %v938, 4
        %v941 = vor.u32 %v940, %v936
        %v942 = vrot.slane %v941, 4
        %v944 = vshll.u32 %v896, 16
        %v946 = vrot.slane %v944, 5
        %v947 = vsel %vm899, %v942, %v946
        %s948 = scalar_lea.vmem %s3, 16
        %v949 = vld [vmem:[%s948] sm:$0xf]
        %v950 = vld [vmem:[%s948 + $0x4] sm:$0xf]
        %v951 = vld [vmem:[%s948 + $0x8] sm:$0xf]
        %v952 = vld [vmem:[%s948 + $0xc] sm:$0xf]
        %v953 = vunpack.c.l.b16 %v913
        %v954 = vunpack.c.l.b16 %v923
        %v955 = vunpack.c.l.b16 %v937
        %v956 = vunpack.c.l.b16 %v947
        %v957 = vpack.c.b16 %v954, %v953
        %v958 = vpack.c.b16 %v956, %v955
        %v963 = vunpack.c.l.b16 %v949
        %v964 = vunpack.c.l.b16 %v950
        %v965 = vunpack.c.l.b16 %v951
        %v966 = vunpack.c.l.b16 %v952
        %v967 = vpack.c.b16 %v964, %v963
        %v968 = vpack.c.b16 %v966, %v965
        %vm971 = vcmask 261120
        %v973 = vsel %vm971, %v957, 0
        %v976 = vsel %vm971, %v958, 0
        %978 = vmatprep.subr.bf16.mxu0 0
        %979 = vmatpush1.bf16.msra.mxu0 %v967
        %980 = vmatprep.subr.bf16.mxu0 0
        %981 = vmatpush1.bf16.msra.mxu0 %v968
        %982 = vmatprep.subr.bf16.mxu0 0
        %983 = vmatpush1.bf16.msra.mxu0 0
        %984 = vmatprep.subr.bf16.mxu0 0
        %985 = vmatpush1.bf16.msra.mxu0 0
        %986 = vmatprep.subr.bf16.mxu0 0
        %987 = vmatpush1.bf16.msra.mxu0 0
        %988 = vmatprep.subr.bf16.mxu0 0
        %989 = vmatpush1.bf16.msra.mxu0 0
        %990 = vmatprep.subr.bf16.mxu0 0
        %991 = vmatpush1.bf16.msra.mxu0 0
        %992 = vmatprep.subr.bf16.mxu0 0
        %993 = vmatpush1.bf16.msra.mxu0 0
        %994 = vmatprep.subr.bf16.mxu0 0
        %995 = vmatpush1.bf16.msra.mxu0 0
        %996 = vmatprep.subr.bf16.mxu0 0
        %997 = vmatpush1.bf16.msra.mxu0 0
        %998 = vmatprep.subr.bf16.mxu0 0
        %999 = vmatpush1.bf16.msra.mxu0 0
        %1000 = vmatprep.subr.bf16.mxu0 0
        %1001 = vmatpush1.bf16.msra.mxu0 0
        %1002 = vmatprep.subr.bf16.mxu0 0
        %1003 = vmatpush1.bf16.msra.mxu0 0
        %1004 = vmatprep.subr.bf16.mxu0 0
        %1005 = vmatpush1.bf16.msra.mxu0 0
        %1006 = vmatprep.subr.bf16.mxu0 0
        %1007 = vmatpush1.bf16.msra.mxu0 0
        %1008 = vmatprep.subr.bf16.mxu0 0
        %1009 = vmatpush1.bf16.msra.mxu0 0
        %1010 = vmatprep.mubr.bf16.mxu0 0
        %1011 = vmatmul.mubr.bf16.gmra.mrb[0].mxu0 %v973
        %v1012 = vpop.f32.mrb[0].mxu0
        %v1013 = vadd.f32 0.0, %v1012
        %v1014 = vpop.f32.mrb[0].mxu0
        %v1015 = vpop.f32.mrb[0].mxu0
        %v1016 = vadd.f32 0.0, %v1015
        %v1017 = vpop.f32.mrb[0].mxu0
        %1018 = vmatprep.mubr.bf16.mxu0 0
        %1019 = vmatmul.mubr.bf16.gmra.mrb[0].mxu0 %v976
        %v1020 = vpop.f32.mrb[0].mxu0
        %v1021 = vadd.f32 0.0, %v1020
        %v1022 = vpop.f32.mrb[0].mxu0
        %v1023 = vpop.f32.mrb[0].mxu0
        %v1024 = vadd.f32 0.0, %v1023
        %v1025 = vpop.f32.mrb[0].mxu0
        %1026 = vdwg.mxu0
        %v1031 = vunpack.c.l.b16 %v887
        %v1032 = vunpack.c.l.b16 %v888
        %v1033 = vunpack.c.l.b16 %v889
        %v1034 = vunpack.c.l.b16 %v890
        %v1035 = vpack.c.b16 %v1032, %v1031
        %v1036 = vpack.c.b16 %v1034, %v1033
        %v1041 = vunpack.c.l.b16 %v891
        %v1042 = vunpack.c.l.b16 %v892
        %v1043 = vunpack.c.l.b16 %v893
        %v1044 = vunpack.c.l.b16 %v894
        %v1045 = vpack.c.b16 %v1042, %v1041
        %v1046 = vpack.c.b16 %v1044, %v1043
        %v1050 = vsel %vm971, %v1035, 0
        %v1053 = vsel %vm971, %v1036, 0
        %1055 = vmatprep.subr.bf16.mxu0 0
        %1056 = vmatpush1.bf16.msra.mxu0 %v1045
        %1057 = vmatprep.subr.bf16.mxu0 0
        %1058 = vmatpush1.bf16.msra.mxu0 %v1046
        %1059 = vmatprep.subr.bf16.mxu0 0
        %1060 = vmatpush1.bf16.msra.mxu0 0
        %1061 = vmatprep.subr.bf16.mxu0 0
        %1062 = vmatpush1.bf16.msra.mxu0 0
        %1063 = vmatprep.subr.bf16.mxu0 0
        %1064 = vmatpush1.bf16.msra.mxu0 0
        %1065 = vmatprep.subr.bf16.mxu0 0
        %1066 = vmatpush1.bf16.msra.mxu0 0
        %1067 = vmatprep.subr.bf16.mxu0 0
        %1068 = vmatpush1.bf16.msra.mxu0 0
        %1069 = vmatprep.subr.bf16.mxu0 0
        %1070 = vmatpush1.bf16.msra.mxu0 0
        %1071 = vmatprep.subr.bf16.mxu0 0
        %1072 = vmatpush1.bf16.msra.mxu0 0
        %1073 = vmatprep.subr.bf16.mxu0 0
        %1074 = vmatpush1.bf16.msra.mxu0 0
        %1075 = vmatprep.subr.bf16.mxu0 0
        %1076 = vmatpush1.bf16.msra.mxu0 0
        %1077 = vmatprep.subr.bf16.mxu0 0
        %1078 = vmatpush1.bf16.msra.mxu0 0
        %1079 = vmatprep.subr.bf16.mxu0 0
        %1080 = vmatpush1.bf16.msra.mxu0 0
        %1081 = vmatprep.subr.bf16.mxu0 0
        %1082 = vmatpush1.bf16.msra.mxu0 0
        %1083 = vmatprep.subr.bf16.mxu0 0
        %1084 = vmatpush1.bf16.msra.mxu0 0
        %1085 = vmatprep.subr.bf16.mxu0 0
        %1086 = vmatpush1.bf16.msra.mxu0 0
        %1087 = vmatprep.mubr.bf16.mxu0 0
        %1088 = vmatmul.mubr.bf16.gmra.mrb[0].mxu0 %v1050
        %v1089 = vpop.f32.mrb[0].mxu0
        %v1090 = vadd.f32 %v1013, %v1089
        %v1091 = vpop.f32.mrb[0].mxu0
        %v1092 = vpop.f32.mrb[0].mxu0
        %v1093 = vadd.f32 %v1016, %v1092
        %v1094 = vpop.f32.mrb[0].mxu0
        %1095 = vmatprep.mubr.bf16.mxu0 0
        %1096 = vmatmul.mubr.bf16.gmra.mrb[0].mxu0 %v1053
        %v1097 = vpop.f32.mrb[0].mxu0
        %v1098 = vadd.f32 %v1021, %v1097
        %v1099 = vpop.f32.mrb[0].mxu0
        %v1100 = vpop.f32.mrb[0].mxu0
        %v1101 = vadd.f32 %v1024, %v1100
        %v1102 = vpop.f32.mrb[0].mxu0
        %1103 = vdwg.mxu0
        %v1104 = vld [vmem:[%s886] sm:$0xe]
        %v1105 = vld [vmem:[%s886 + $0xc] sm:$0xe]
        %vm1110 = vcmask 1042432
        %vm1111 = vcmask 1046532
        %vm1112 = vmor %vm1110, %vm1111
        %v1113 = vrot.slane %v1104, 5
        %v1114 = vrot.slane %v1113, 4
        %v1115 = vrot.slane %v888, 5
        %v1116 = vsel %vm1112, %v1114, %v1115
        %v1117 = vrot.slane %v1115, 4
        %v1118 = vrot.slane %v895, 5
        %v1119 = vsel %vm1112, %v1117, %v1118
        %v1120 = vrot.slane %v1105, 5
        %v1121 = vrot.slane %v1120, 4
        %v1122 = vrot.slane %v890, 5
        %v1123 = vsel %vm1112, %v1121, %v1122
        %v1124 = vrot.slane %v1122, 4
        %v1125 = vrot.slane %v896, 5
        %v1126 = vsel %vm1112, %v1124, %v1125
        %s1127 = scalar_lea.vmem %s3, 32
        %v1128 = vld [vmem:[%s1127] sm:$0xf]
        %v1129 = vld [vmem:[%s1127 + $0x4] sm:$0xf]
        %v1130 = vld [vmem:[%s1127 + $0x8] sm:$0xf]
        %v1131 = vld [vmem:[%s1127 + $0xc] sm:$0xf]
        %v1132 = vunpack.c.l.b16 %v1116
        %v1133 = vunpack.c.l.b16 %v1119
        %v1134 = vunpack.c.l.b16 %v1123
        %v1135 = vunpack.c.l.b16 %v1126
        %v1136 = vpack.c.b16 %v1133, %v1132
        %v1137 = vpack.c.b16 %v1135, %v1134
        %v1142 = vunpack.c.l.b16 %v1128
        %v1143 = vunpack.c.l.b16 %v1129
        %v1144 = vunpack.c.l.b16 %v1130
        %v1145 = vunpack.c.l.b16 %v1131
        %v1146 = vpack.c.b16 %v1143, %v1142
        %v1147 = vpack.c.b16 %v1145, %v1144
        %v1151 = vsel %vm971, %v1136, 0
        %v1154 = vsel %vm971, %v1137, 0
        %1156 = vmatprep.subr.bf16.mxu0 0
        %1157 = vmatpush1.bf16.msra.mxu0 %v1146
        %1158 = vmatprep.subr.bf16.mxu0 0
        %1159 = vmatpush1.bf16.msra.mxu0 %v1147
        %1160 = vmatprep.subr.bf16.mxu0 0
        %1161 = vmatpush1.bf16.msra.mxu0 0
        %1162 = vmatprep.subr.bf16.mxu0 0
        %1163 = vmatpush1.bf16.msra.mxu0 0
        %1164 = vmatprep.subr.bf16.mxu0 0
        %1165 = vmatpush1.bf16.msra.mxu0 0
        %1166 = vmatprep.subr.bf16.mxu0 0
        %1167 = vmatpush1.bf16.msra.mxu0 0
        %1168 = vmatprep.subr.bf16.mxu0 0
        %1169 = vmatpush1.bf16.msra.mxu0 0
        %1170 = vmatprep.subr.bf16.mxu0 0
        %1171 = vmatpush1.bf16.msra.mxu0 0
        %1172 = vmatprep.subr.bf16.mxu0 0
        %1173 = vmatpush1.bf16.msra.mxu0 0
        %1174 = vmatprep.subr.bf16.mxu0 0
        %1175 = vmatpush1.bf16.msra.mxu0 0
        %1176 = vmatprep.subr.bf16.mxu0 0
        %1177 = vmatpush1.bf16.msra.mxu0 0
        %1178 = vmatprep.subr.bf16.mxu0 0
        %1179 = vmatpush1.bf16.msra.mxu0 0
        %1180 = vmatprep.subr.bf16.mxu0 0
        %1181 = vmatpush1.bf16.msra.mxu0 0
        %1182 = vmatprep.subr.bf16.mxu0 0
        %1183 = vmatpush1.bf16.msra.mxu0 0
        %1184 = vmatprep.subr.bf16.mxu0 0
        %1185 = vmatpush1.bf16.msra.mxu0 0
        %1186 = vmatprep.subr.bf16.mxu0 0
        %1187 = vmatpush1.bf16.msra.mxu0 0
        %1188 = vmatprep.mubr.bf16.mxu0 0
        %1189 = vmatmul.mubr.bf16.gmra.mrb[0].mxu0 %v1151
        %v1190 = vpop.f32.mrb[0].mxu0
        %v1191 = vadd.f32 0.0, %v1190
        %v1192 = vpop.f32.mrb[0].mxu0
        %v1193 = vpop.f32.mrb[0].mxu0
        %v1194 = vadd.f32 0.0, %v1193
        %v1195 = vpop.f32.mrb[0].mxu0
        %1196 = vmatprep.mubr.bf16.mxu0 0
        %1197 = vmatmul.mubr.bf16.gmra.mrb[0].mxu0 %v1154
        %v1198 = vpop.f32.mrb[0].mxu0
        %v1199 = vadd.f32 0.0, %v1198
        %v1200 = vpop.f32.mrb[0].mxu0
        %v1201 = vpop.f32.mrb[0].mxu0
        %v1202 = vadd.f32 0.0, %v1201
        %v1203 = vpop.f32.mrb[0].mxu0
        %1204 = vdwg.mxu0
        %v1205 = vadd.f32 %v1090, %v1191
        %v1206 = vadd.f32 %v1093, %v1194
        %v1207 = vadd.f32 %v1098, %v1199
        %v1208 = vadd.f32 %v1101, %v1202
        %s1209 = sadd.s32 %s883, 1
        %s1210 = smul.u32 %s1209, 3
        %s1211 = smul.addr %s1210, 4
        %s1212 = scalar_lea.vmem [#allocation2], %s1211
        %v1213 = vld [vmem:[%s1212] sm:$0xf]
        %v1214 = vld [vmem:[%s1212 + $0x4] sm:$0xf]
        %v1215 = vld [vmem:[%s1212 + $0xc] sm:$0xf]
        %v1216 = vld [vmem:[%s1212 + $0x10] sm:$0xf]
        %s1217 = scalar_lea.vmem %s3, 48
        %v1218 = vld [vmem:[%s1217] sm:$0xf]
        %v1219 = vld [vmem:[%s1217 + $0x4] sm:$0xf]
        %v1220 = vld [vmem:[%s1217 + $0x8] sm:$0xf]
        %v1221 = vld [vmem:[%s1217 + $0xc] sm:$0xf]
        %v1226 = vunpack.c.l.b16 %v1213
        %v1227 = vunpack.c.l.b16 %v1214
        %v1228 = vunpack.c.l.b16 %v1215
        %v1229 = vunpack.c.l.b16 %v1216
        %v1230 = vpack.c.b16 %v1227, %v1226
        %v1231 = vpack.c.b16 %v1229, %v1228
        %v1236 = vunpack.c.l.b16 %v1218
        %v1237 = vunpack.c.l.b16 %v1219
        %v1238 = vunpack.c.l.b16 %v1220
        %v1239 = vunpack.c.l.b16 %v1221
        %v1240 = vpack.c.b16 %v1237, %v1236
        %v1241 = vpack.c.b16 %v1239, %v1238
        %v1245 = vsel %vm971, %v1230, 0
        %v1248 = vsel %vm971, %v1231, 0
        %1250 = vmatprep.subr.bf16.mxu0 0
        %1251 = vmatpush1.bf16.msra.mxu0 %v1240
        %1252 = vmatprep.subr.bf16.mxu0 0
        %1253 = vmatpush1.bf16.msra.mxu0 %v1241
        %1254 = vmatprep.subr.bf16.mxu0 0
        %1255 = vmatpush1.bf16.msra.mxu0 0
        %1256 = vmatprep.subr.bf16.mxu0 0
        %1257 = vmatpush1.bf16.msra.mxu0 0
        %1258 = vmatprep.subr.bf16.mxu0 0
        %1259 = vmatpush1.bf16.msra.mxu0 0
        %1260 = vmatprep.subr.bf16.mxu0 0
        %1261 = vmatpush1.bf16.msra.mxu0 0
        %1262 = vmatprep.subr.bf16.mxu0 0
        %1263 = vmatpush1.bf16.msra.mxu0 0
        %1264 = vmatprep.subr.bf16.mxu0 0
        %1265 = vmatpush1.bf16.msra.mxu0 0
        %1266 = vmatprep.subr.bf16.mxu0 0
        %1267 = vmatpush1.bf16.msra.mxu0 0
        %1268 = vmatprep.subr.bf16.mxu0 0
        %1269 = vmatpush1.bf16.msra.mxu0 0
        %1270 = vmatprep.subr.bf16.mxu0 0
        %1271 = vmatpush1.bf16.msra.mxu0 0
        %1272 = vmatprep.subr.bf16.mxu0 0
        %1273 = vmatpush1.bf16.msra.mxu0 0
        %1274 = vmatprep.subr.bf16.mxu0 0
        %1275 = vmatpush1.bf16.msra.mxu0 0
        %1276 = vmatprep.subr.bf16.mxu0 0
        %1277 = vmatpush1.bf16.msra.mxu0 0
        %1278 = vmatprep.subr.bf16.mxu0 0
        %1279 = vmatpush1.bf16.msra.mxu0 0
        %1280 = vmatprep.subr.bf16.mxu0 0
        %1281 = vmatpush1.bf16.msra.mxu0 0
        %1282 = vmatprep.mubr.bf16.mxu0 0
        %1283 = vmatmul.mubr.bf16.gmra.mrb[0].mxu0 %v1245
        %v1284 = vpop.f32.mrb[0].mxu0
        %v1285 = vadd.f32 0.0, %v1284
        %v1286 = vpop.f32.mrb[0].mxu0
        %v1287 = vpop.f32.mrb[0].mxu0
        %v1288 = vadd.f32 0.0, %v1287
        %v1289 = vpop.f32.mrb[0].mxu0
        %1290 = vmatprep.mubr.bf16.mxu0 0
        %1291 = vmatmul.mubr.bf16.gmra.mrb[0].mxu0 %v1248
        %v1292 = vpop.f32.mrb[0].mxu0
        %v1293 = vadd.f32 0.0, %v1292
        %v1294 = vpop.f32.mrb[0].mxu0
        %v1295 = vpop.f32.mrb[0].mxu0
        %v1296 = vadd.f32 0.0, %v1295
        %v1297 = vpop.f32.mrb[0].mxu0
        %1298 = vdwg.mxu0
        %v1299 = vadd.f32 %v1205, %v1285
        %v1300 = vadd.f32 %v1206, %v1288
        %v1301 = vadd.f32 %v1207, %v1293
        %v1302 = vadd.f32 %v1208, %v1296
        %v1303 = vld [vmem:[%s1212] sm:$0xf]
        %v1304 = vld [vmem:[%s1212 + $0x4] sm:$0xf]
        %v1305 = vld [vmem:[%s1212 + $0x8] sm:$0x1]
        %v1306 = vld [vmem:[%s1212 + $0xc] sm:$0xf]
        %v1307 = vld [vmem:[%s1212 + $0x10] sm:$0xf]
        %v1308 = vld [vmem:[%s1212 + $0x14] sm:$0x1]
        %v1310 = vshrl.u32 %v1303, 16
        %v1312 = vrot.slane %v1310, 4
        %v1313 = vshll.u32 %v1303, 16
        %v1315 = vrot.slane %v1313, 5
        %v1316 = vor.u32 %v1312, %v1315
        %v1317 = vrot.slane %v1316, 4
        %v1319 = vshll.u32 %v1304, 16
        %v1321 = vrot.slane %v1319, 5
        %v1322 = vsel %vm899, %v1317, %v1321
        %v1323 = vshrl.u32 %v1304, 16
        %v1325 = vrot.slane %v1323, 4
        %v1326 = vor.u32 %v1325, %v1321
        %v1327 = vrot.slane %v1326, 4
        %v1329 = vshll.u32 %v1305, 16
        %v1331 = vrot.slane %v1329, 5
        %v1332 = vsel %vm899, %v1327, %v1331
        %v1334 = vshrl.u32 %v1306, 16
        %v1336 = vrot.slane %v1334, 4
        %v1337 = vshll.u32 %v1306, 16
        %v1339 = vrot.slane %v1337, 5
        %v1340 = vor.u32 %v1336, %v1339
        %v1341 = vrot.slane %v1340, 4
        %v1343 = vshll.u32 %v1307, 16
        %v1345 = vrot.slane %v1343, 5
        %v1346 = vsel %vm899, %v1341, %v1345
        %v1347 = vshrl.u32 %v1307, 16
        %v1349 = vrot.slane %v1347, 4
        %v1350 = vor.u32 %v1349, %v1345
        %v1351 = vrot.slane %v1350, 4
        %v1353 = vshll.u32 %v1308, 16
        %v1355 = vrot.slane %v1353, 5
        %v1356 = vsel %vm899, %v1351, %v1355
        %s1357 = scalar_lea.vmem %s3, 64
        %v1358 = vld [vmem:[%s1357] sm:$0xf]
        %v1359 = vld [vmem:[%s1357 + $0x4] sm:$0xf]
        %v1360 = vld [vmem:[%s1357 + $0x8] sm:$0xf]
        %v1361 = vld [vmem:[%s1357 + $0xc] sm:$0xf]
        %v1362 = vunpack.c.l.b16 %v1322
        %v1363 = vunpack.c.l.b16 %v1332
        %v1364 = vunpack.c.l.b16 %v1346
        %v1365 = vunpack.c.l.b16 %v1356
        %v1366 = vpack.c.b16 %v1363, %v1362
        %v1367 = vpack.c.b16 %v1365, %v1364
        %v1372 = vunpack.c.l.b16 %v1358
        %v1373 = vunpack.c.l.b16 %v1359
        %v1374 = vunpack.c.l.b16 %v1360
        %v1375 = vunpack.c.l.b16 %v1361
        %v1376 = vpack.c.b16 %v1373, %v1372
        %v1377 = vpack.c.b16 %v1375, %v1374
        %v1381 = vsel %vm971, %v1366, 0
        %v1384 = vsel %vm971, %v1367, 0
        %1386 = vmatprep.subr.bf16.mxu0 0
        %1387 = vmatpush1.bf16.msra.mxu0 %v1376
        %1388 = vmatprep.subr.bf16.mxu0 0
        %1389 = vmatpush1.bf16.msra.mxu0 %v1377
        %1390 = vmatprep.subr.bf16.mxu0 0
        %1391 = vmatpush1.bf16.msra.mxu0 0
        %1392 = vmatprep.subr.bf16.mxu0 0
        %1393 = vmatpush1.bf16.msra.mxu0 0
        %1394 = vmatprep.subr.bf16.mxu0 0
        %1395 = vmatpush1.bf16.msra.mxu0 0
        %1396 = vmatprep.subr.bf16.mxu0 0
        %1397 = vmatpush1.bf16.msra.mxu0 0
        %1398 = vmatprep.subr.bf16.mxu0 0
        %1399 = vmatpush1.bf16.msra.mxu0 0
        %1400 = vmatprep.subr.bf16.mxu0 0
        %1401 = vmatpush1.bf16.msra.mxu0 0
        %1402 = vmatprep.subr.bf16.mxu0 0
        %1403 = vmatpush1.bf16.msra.mxu0 0
        %1404 = vmatprep.subr.bf16.mxu0 0
        %1405 = vmatpush1.bf16.msra.mxu0 0
        %1406 = vmatprep.subr.bf16.mxu0 0
        %1407 = vmatpush1.bf16.msra.mxu0 0
        %1408 = vmatprep.subr.bf16.mxu0 0
        %1409 = vmatpush1.bf16.msra.mxu0 0
        %1410 = vmatprep.subr.bf16.mxu0 0
        %1411 = vmatpush1.bf16.msra.mxu0 0
        %1412 = vmatprep.subr.bf16.mxu0 0
        %1413 = vmatpush1.bf16.msra.mxu0 0
        %1414 = vmatprep.subr.bf16.mxu0 0
        %1415 = vmatpush1.bf16.msra.mxu0 0
        %1416 = vmatprep.subr.bf16.mxu0 0
        %1417 = vmatpush1.bf16.msra.mxu0 0
        %1418 = vmatprep.mubr.bf16.mxu0 0
        %1419 = vmatmul.mubr.bf16.gmra.mrb[0].mxu0 %v1381
        %v1420 = vpop.f32.mrb[0].mxu0
        %v1421 = vadd.f32 0.0, %v1420
        %v1422 = vpop.f32.mrb[0].mxu0
        %v1423 = vpop.f32.mrb[0].mxu0
        %v1424 = vadd.f32 0.0, %v1423
        %v1425 = vpop.f32.mrb[0].mxu0
        %1426 = vmatprep.mubr.bf16.mxu0 0
        %1427 = vmatmul.mubr.bf16.gmra.mrb[0].mxu0 %v1384
        %v1428 = vpop.f32.mrb[0].mxu0
        %v1429 = vadd.f32 0.0, %v1428
        %v1430 = vpop.f32.mrb[0].mxu0
        %v1431 = vpop.f32.mrb[0].mxu0
        %v1432 = vadd.f32 0.0, %v1431
        %v1433 = vpop.f32.mrb[0].mxu0
        %1434 = vdwg.mxu0
        %v1435 = vadd.f32 %v1299, %v1421
        %v1436 = vadd.f32 %v1300, %v1424
        %v1437 = vadd.f32 %v1301, %v1429
        %v1438 = vadd.f32 %v1302, %v1432
        %v1439 = vld [vmem:[%s1212] sm:$0xe]
        %v1440 = vld [vmem:[%s1212 + $0xc] sm:$0xe]
        %v1447 = vrot.slane %v1439, 5
        %v1448 = vrot.slane %v1447, 4
        %v1449 = vrot.slane %v1304, 5
        %v1450 = vsel %vm1112, %v1448, %v1449
        %v1451 = vrot.slane %v1449, 4
        %v1452 = vrot.slane %v1305, 5
        %v1453 = vsel %vm1112, %v1451, %v1452
        %v1454 = vrot.slane %v1440, 5
        %v1455 = vrot.slane %v1454, 4
        %v1456 = vrot.slane %v1307, 5
        %v1457 = vsel %vm1112, %v1455, %v1456
        %v1458 = vrot.slane %v1456, 4
        %v1459 = vrot.slane %v1308, 5
        %v1460 = vsel %vm1112, %v1458, %v1459
        %s1461 = scalar_lea.vmem %s3, 80
        %v1462 = vld [vmem:[%s1461] sm:$0xf]
        %v1463 = vld [vmem:[%s1461 + $0x4] sm:$0xf]
        %v1464 = vld [vmem:[%s1461 + $0x8] sm:$0xf]
        %v1465 = vld [vmem:[%s1461 + $0xc] sm:$0xf]
        %v1466 = vunpack.c.l.b16 %v1450
        %v1467 = vunpack.c.l.b16 %v1453
        %v1468 = vunpack.c.l.b16 %v1457
        %v1469 = vunpack.c.l.b16 %v1460
        %v1470 = vpack.c.b16 %v1467, %v1466
        %v1471 = vpack.c.b16 %v1469, %v1468
        %v1476 = vunpack.c.l.b16 %v1462
        %v1477 = vunpack.c.l.b16 %v1463
        %v1478 = vunpack.c.l.b16 %v1464
        %v1479 = vunpack.c.l.b16 %v1465
        %v1480 = vpack.c.b16 %v1477, %v1476
        %v1481 = vpack.c.b16 %v1479, %v1478
        %v1485 = vsel %vm971, %v1470, 0
        %v1488 = vsel %vm971, %v1471, 0
        %1490 = vmatprep.subr.bf16.mxu0 0
        %1491 = vmatpush1.bf16.msra.mxu0 %v1480
        %1492 = vmatprep.subr.bf16.mxu0 0
        %1493 = vmatpush1.bf16.msra.mxu0 %v1481
        %1494 = vmatprep.subr.bf16.mxu0 0
        %1495 = vmatpush1.bf16.msra.mxu0 0
        %1496 = vmatprep.subr.bf16.mxu0 0
        %1497 = vmatpush1.bf16.msra.mxu0 0
        %1498 = vmatprep.subr.bf16.mxu0 0
        %1499 = vmatpush1.bf16.msra.mxu0 0
        %1500 = vmatprep.subr.bf16.mxu0 0
        %1501 = vmatpush1.bf16.msra.mxu0 0
        %1502 = vmatprep.subr.bf16.mxu0 0
        %1503 = vmatpush1.bf16.msra.mxu0 0
        %1504 = vmatprep.subr.bf16.mxu0 0
        %1505 = vmatpush1.bf16.msra.mxu0 0
        %1506 = vmatprep.subr.bf16.mxu0 0
        %1507 = vmatpush1.bf16.msra.mxu0 0
        %1508 = vmatprep.subr.bf16.mxu0 0
        %1509 = vmatpush1.bf16.msra.mxu0 0
        %1510 = vmatprep.subr.bf16.mxu0 0
        %1511 = vmatpush1.bf16.msra.mxu0 0
        %1512 = vmatprep.subr.bf16.mxu0 0
        %1513 = vmatpush1.bf16.msra.mxu0 0
        %1514 = vmatprep.subr.bf16.mxu0 0
        %1515 = vmatpush1.bf16.msra.mxu0 0
        %1516 = vmatprep.subr.bf16.mxu0 0
        %1517 = vmatpush1.bf16.msra.mxu0 0
        %1518 = vmatprep.subr.bf16.mxu0 0
        %1519 = vmatpush1.bf16.msra.mxu0 0
        %1520 = vmatprep.subr.bf16.mxu0 0
        %1521 = vmatpush1.bf16.msra.mxu0 0
        %1522 = vmatprep.mubr.bf16.mxu0 0
        %1523 = vmatmul.mubr.bf16.gmra.mrb[0].mxu0 %v1485
        %v1524 = vpop.f32.mrb[0].mxu0
        %v1525 = vadd.f32 0.0, %v1524
        %v1526 = vpop.f32.mrb[0].mxu0
        %v1527 = vpop.f32.mrb[0].mxu0
        %v1528 = vadd.f32 0.0, %v1527
        %v1529 = vpop.f32.mrb[0].mxu0
        %1530 = vmatprep.mubr.bf16.mxu0 0
        %1531 = vmatmul.mubr.bf16.gmra.mrb[0].mxu0 %v1488
        %v1532 = vpop.f32.mrb[0].mxu0
        %v1533 = vadd.f32 0.0, %v1532
        %v1534 = vpop.f32.mrb[0].mxu0
        %v1535 = vpop.f32.mrb[0].mxu0
        %v1536 = vadd.f32 0.0, %v1535
        %v1537 = vpop.f32.mrb[0].mxu0
        %1538 = vdwg.mxu0
        %v1539 = vadd.f32 %v1435, %v1525
        %v1540 = vadd.f32 %v1436, %v1528
        %v1541 = vadd.f32 %v1437, %v1533
        %v1542 = vadd.f32 %v1438, %v1536
        %s1543 = sadd.s32 %s883, 2
        %s1544 = smul.u32 %s1543, 3
        %s1545 = smul.addr %s1544, 4
        %s1546 = scalar_lea.vmem [#allocation2], %s1545
        %v1547 = vld [vmem:[%s1546] sm:$0xf]
        %v1548 = vld [vmem:[%s1546 + $0x4] sm:$0xf]
        %v1549 = vld [vmem:[%s1546 + $0xc] sm:$0xf]
        %v1550 = vld [vmem:[%s1546 + $0x10] sm:$0xf]
        %s1551 = scalar_lea.vmem %s3, 96
        %v1552 = vld [vmem:[%s1551] sm:$0xf]
        %v1553 = vld [vmem:[%s1551 + $0x4] sm:$0xf]
        %v1554 = vld [vmem:[%s1551 + $0x8] sm:$0xf]
        %v1555 = vld [vmem:[%s1551 + $0xc] sm:$0xf]
        %v1560 = vunpack.c.l.b16 %v1547
        %v1561 = vunpack.c.l.b16 %v1548
        %v1562 = vunpack.c.l.b16 %v1549
        %v1563 = vunpack.c.l.b16 %v1550
        %v1564 = vpack.c.b16 %v1561, %v1560
        %v1565 = vpack.c.b16 %v1563, %v1562
        %v1570 = vunpack.c.l.b16 %v1552
        %v1571 = vunpack.c.l.b16 %v1553
        %v1572 = vunpack.c.l.b16 %v1554
        %v1573 = vunpack.c.l.b16 %v1555
        %v1574 = vpack.c.b16 %v1571, %v1570
        %v1575 = vpack.c.b16 %v1573, %v1572
        %v1579 = vsel %vm971, %v1564, 0
        %v1582 = vsel %vm971, %v1565, 0
        %1584 = vmatprep.subr.bf16.mxu0 0
        %1585 = vmatpush1.bf16.msra.mxu0 %v1574
        %1586 = vmatprep.subr.bf16.mxu0 0
        %1587 = vmatpush1.bf16.msra.mxu0 %v1575
        %1588 = vmatprep.subr.bf16.mxu0 0
        %1589 = vmatpush1.bf16.msra.mxu0 0
        %1590 = vmatprep.subr.bf16.mxu0 0
        %1591 = vmatpush1.bf16.msra.mxu0 0
        %1592 = vmatprep.subr.bf16.mxu0 0
        %1593 = vmatpush1.bf16.msra.mxu0 0
        %1594 = vmatprep.subr.bf16.mxu0 0
        %1595 = vmatpush1.bf16.msra.mxu0 0
        %1596 = vmatprep.subr.bf16.mxu0 0
        %1597 = vmatpush1.bf16.msra.mxu0 0
        %1598 = vmatprep.subr.bf16.mxu0 0
        %1599 = vmatpush1.bf16.msra.mxu0 0
        %1600 = vmatprep.subr.bf16.mxu0 0
        %1601 = vmatpush1.bf16.msra.mxu0 0
        %1602 = vmatprep.subr.bf16.mxu0 0
        %1603 = vmatpush1.bf16.msra.mxu0 0
        %1604 = vmatprep.subr.bf16.mxu0 0
        %1605 = vmatpush1.bf16.msra.mxu0 0
        %1606 = vmatprep.subr.bf16.mxu0 0
        %1607 = vmatpush1.bf16.msra.mxu0 0
        %1608 = vmatprep.subr.bf16.mxu0 0
        %1609 = vmatpush1.bf16.msra.mxu0 0
        %1610 = vmatprep.subr.bf16.mxu0 0
        %1611 = vmatpush1.bf16.msra.mxu0 0
        %1612 = vmatprep.subr.bf16.mxu0 0
        %1613 = vmatpush1.bf16.msra.mxu0 0
        %1614 = vmatprep.subr.bf16.mxu0 0
        %1615 = vmatpush1.bf16.msra.mxu0 0
        %1616 = vmatprep.mubr.bf16.mxu0 0
        %1617 = vmatmul.mubr.bf16.gmra.mrb[0].mxu0 %v1579
        %v1618 = vpop.f32.mrb[0].mxu0
        %v1619 = vadd.f32 0.0, %v1618
        %v1620 = vpop.f32.mrb[0].mxu0
        %v1621 = vpop.f32.mrb[0].mxu0
        %v1622 = vadd.f32 0.0, %v1621
        %v1623 = vpop.f32.mrb[0].mxu0
        %1624 = vmatprep.mubr.bf16.mxu0 0
        %1625 = vmatmul.mubr.bf16.gmra.mrb[0].mxu0 %v1582
        %v1626 = vpop.f32.mrb[0].mxu0
        %v1627 = vadd.f32 0.0, %v1626
        %v1628 = vpop.f32.mrb[0].mxu0
        %v1629 = vpop.f32.mrb[0].mxu0
        %v1630 = vadd.f32 0.0, %v1629
        %v1631 = vpop.f32.mrb[0].mxu0
        %1632 = vdwg.mxu0
        %v1633 = vadd.f32 %v1539, %v1619
        %v1634 = vadd.f32 %v1540, %v1622
        %v1635 = vadd.f32 %v1541, %v1627
        %v1636 = vadd.f32 %v1542, %v1630
        %v1637 = vld [vmem:[%s1546] sm:$0xf]
        %v1638 = vld [vmem:[%s1546 + $0x4] sm:$0xf]
        %v1639 = vld [vmem:[%s1546 + $0x8] sm:$0x1]
        %v1640 = vld [vmem:[%s1546 + $0xc] sm:$0xf]
        %v1641 = vld [vmem:[%s1546 + $0x10] sm:$0xf]
        %v1642 = vld [vmem:[%s1546 + $0x14] sm:$0x1]
        %v1644 = vshrl.u32 %v1637, 16
        %v1646 = vrot.slane %v1644, 4
        %v1647 = vshll.u32 %v1637, 16
        %v1649 = vrot.slane %v1647, 5
        %v1650 = vor.u32 %v1646, %v1649
        %v1651 = vrot.slane %v1650, 4
        %v1653 = vshll.u32 %v1638, 16
        %v1655 = vrot.slane %v1653, 5
        %v1656 = vsel %vm899, %v1651, %v1655
        %v1657 = vshrl.u32 %v1638, 16
        %v1659 = vrot.slane %v1657, 4
        %v1660 = vor.u32 %v1659, %v1655
        %v1661 = vrot.slane %v1660, 4
        %v1663 = vshll.u32 %v1639, 16
        %v1665 = vrot.slane %v1663, 5
        %v1666 = vsel %vm899, %v1661, %v1665
        %v1668 = vshrl.u32 %v1640, 16
        %v1670 = vrot.slane %v1668, 4
        %v1671 = vshll.u32 %v1640, 16
        %v1673 = vrot.slane %v1671, 5
        %v1674 = vor.u32 %v1670, %v1673
        %v1675 = vrot.slane %v1674, 4
        %v1677 = vshll.u32 %v1641, 16
        %v1679 = vrot.slane %v1677, 5
        %v1680 = vsel %vm899, %v1675, %v1679
        %v1681 = vshrl.u32 %v1641, 16
        %v1683 = vrot.slane %v1681, 4
        %v1684 = vor.u32 %v1683, %v1679
        %v1685 = vrot.slane %v1684, 4
        %v1687 = vshll.u32 %v1642, 16
        %v1689 = vrot.slane %v1687, 5
        %v1690 = vsel %vm899, %v1685, %v1689
        %s1691 = scalar_lea.vmem %s3, 112
        %v1692 = vld [vmem:[%s1691] sm:$0xf]
        %v1693 = vld [vmem:[%s1691 + $0x4] sm:$0xf]
        %v1694 = vld [vmem:[%s1691 + $0x8] sm:$0xf]
        %v1695 = vld [vmem:[%s1691 + $0xc] sm:$0xf]
        %v1696 = vunpack.c.l.b16 %v1656
        %v1697 = vunpack.c.l.b16 %v1666
        %v1698 = vunpack.c.l.b16 %v1680
        %v1699 = vunpack.c.l.b16 %v1690
        %v1700 = vpack.c.b16 %v1697, %v1696
        %v1701 = vpack.c.b16 %v1699, %v1698
        %v1706 = vunpack.c.l.b16 %v1692
        %v1707 = vunpack.c.l.b16 %v1693
        %v1708 = vunpack.c.l.b16 %v1694
        %v1709 = vunpack.c.l.b16 %v1695
        %v1710 = vpack.c.b16 %v1707, %v1706
        %v1711 = vpack.c.b16 %v1709, %v1708
        %v1715 = vsel %vm971, %v1700, 0
        %v1718 = vsel %vm971, %v1701, 0
        %1720 = vmatprep.subr.bf16.mxu0 0
        %1721 = vmatpush1.bf16.msra.mxu0 %v1710
        %1722 = vmatprep.subr.bf16.mxu0 0
        %1723 = vmatpush1.bf16.msra.mxu0 %v1711
        %1724 = vmatprep.subr.bf16.mxu0 0
        %1725 = vmatpush1.bf16.msra.mxu0 0
        %1726 = vmatprep.subr.bf16.mxu0 0
        %1727 = vmatpush1.bf16.msra.mxu0 0
        %1728 = vmatprep.subr.bf16.mxu0 0
        %1729 = vmatpush1.bf16.msra.mxu0 0
        %1730 = vmatprep.subr.bf16.mxu0 0
        %1731 = vmatpush1.bf16.msra.mxu0 0
        %1732 = vmatprep.subr.bf16.mxu0 0
        %1733 = vmatpush1.bf16.msra.mxu0 0
        %1734 = vmatprep.subr.bf16.mxu0 0
        %1735 = vmatpush1.bf16.msra.mxu0 0
        %1736 = vmatprep.subr.bf16.mxu0 0
        %1737 = vmatpush1.bf16.msra.mxu0 0
        %1738 = vmatprep.subr.bf16.mxu0 0
        %1739 = vmatpush1.bf16.msra.mxu0 0
        %1740 = vmatprep.subr.bf16.mxu0 0
        %1741 = vmatpush1.bf16.msra.mxu0 0
        %1742 = vmatprep.subr.bf16.mxu0 0
        %1743 = vmatpush1.bf16.msra.mxu0 0
        %1744 = vmatprep.subr.bf16.mxu0 0
        %1745 = vmatpush1.bf16.msra.mxu0 0
        %1746 = vmatprep.subr.bf16.mxu0 0
        %1747 = vmatpush1.bf16.msra.mxu0 0
        %1748 = vmatprep.subr.bf16.mxu0 0
        %1749 = vmatpush1.bf16.msra.mxu0 0
        %1750 = vmatprep.subr.bf16.mxu0 0
        %1751 = vmatpush1.bf16.msra.mxu0 0
        %1752 = vmatprep.mubr.bf16.mxu0 0
        %1753 = vmatmul.mubr.bf16.gmra.mrb[0].mxu0 %v1715
        %v1754 = vpop.f32.mrb[0].mxu0
        %v1755 = vadd.f32 0.0, %v1754
        %v1756 = vpop.f32.mrb[0].mxu0
        %v1757 = vpop.f32.mrb[0].mxu0
        %v1758 = vadd.f32 0.0, %v1757
        %v1759 = vpop.f32.mrb[0].mxu0
        %1760 = vmatprep.mubr.bf16.mxu0 0
        %1761 = vmatmul.mubr.bf16.gmra.mrb[0].mxu0 %v1718
        %v1762 = vpop.f32.mrb[0].mxu0
        %v1763 = vadd.f32 0.0, %v1762
        %v1764 = vpop.f32.mrb[0].mxu0
        %v1765 = vpop.f32.mrb[0].mxu0
        %v1766 = vadd.f32 0.0, %v1765
        %v1767 = vpop.f32.mrb[0].mxu0
        %1768 = vdwg.mxu0
        %v1769 = vadd.f32 %v1633, %v1755
        %v1770 = vadd.f32 %v1634, %v1758
        %v1771 = vadd.f32 %v1635, %v1763
        %v1772 = vadd.f32 %v1636, %v1766
        %v1773 = vld [vmem:[%s1546] sm:$0xe]
        %v1774 = vld [vmem:[%s1546 + $0xc] sm:$0xe]
        %v1781 = vrot.slane %v1773, 5
        %v1782 = vrot.slane %v1781, 4
        %v1783 = vrot.slane %v1638, 5
        %v1784 = vsel %vm1112, %v1782, %v1783
        %v1785 = vrot.slane %v1783, 4
        %v1786 = vrot.slane %v1639, 5
        %v1787 = vsel %vm1112, %v1785, %v1786
        %v1788 = vrot.slane %v1774, 5
        %v1789 = vrot.slane %v1788, 4
        %v1790 = vrot.slane %v1641, 5
        %v1791 = vsel %vm1112, %v1789, %v1790
        %v1792 = vrot.slane %v1790, 4
        %v1793 = vrot.slane %v1642, 5
        %v1794 = vsel %vm1112, %v1792, %v1793
        %s1795 = scalar_lea.vmem %s3, 128
        %v1796 = vld [vmem:[%s1795] sm:$0xf]
        %v1797 = vld [vmem:[%s1795 + $0x4] sm:$0xf]
        %v1798 = vld [vmem:[%s1795 + $0x8] sm:$0xf]
        %v1799 = vld [vmem:[%s1795 + $0xc] sm:$0xf]
        %v1800 = vunpack.c.l.b16 %v1784
        %v1801 = vunpack.c.l.b16 %v1787
        %v1802 = vunpack.c.l.b16 %v1791
        %v1803 = vunpack.c.l.b16 %v1794
        %v1804 = vpack.c.b16 %v1801, %v1800
        %v1805 = vpack.c.b16 %v1803, %v1802
        %v1810 = vunpack.c.l.b16 %v1796
        %v1811 = vunpack.c.l.b16 %v1797
        %v1812 = vunpack.c.l.b16 %v1798
        %v1813 = vunpack.c.l.b16 %v1799
        %v1814 = vpack.c.b16 %v1811, %v1810
        %v1815 = vpack.c.b16 %v1813, %v1812
        %v1819 = vsel %vm971, %v1804, 0
        %v1822 = vsel %vm971, %v1805, 0
        %1824 = vmatprep.subr.bf16.mxu0 0
        %1825 = vmatpush1.bf16.msra.mxu0 %v1814
        %1826 = vmatprep.subr.bf16.mxu0 0
        %1827 = vmatpush1.bf16.msra.mxu0 %v1815
        %1828 = vmatprep.subr.bf16.mxu0 0
        %1829 = vmatpush1.bf16.msra.mxu0 0
        %1830 = vmatprep.subr.bf16.mxu0 0
        %1831 = vmatpush1.bf16.msra.mxu0 0
        %1832 = vmatprep.subr.bf16.mxu0 0
        %1833 = vmatpush1.bf16.msra.mxu0 0
        %1834 = vmatprep.subr.bf16.mxu0 0
        %1835 = vmatpush1.bf16.msra.mxu0 0
        %1836 = vmatprep.subr.bf16.mxu0 0
        %1837 = vmatpush1.bf16.msra.mxu0 0
        %1838 = vmatprep.subr.bf16.mxu0 0
        %1839 = vmatpush1.bf16.msra.mxu0 0
        %1840 = vmatprep.subr.bf16.mxu0 0
        %1841 = vmatpush1.bf16.msra.mxu0 0
        %1842 = vmatprep.subr.bf16.mxu0 0
        %1843 = vmatpush1.bf16.msra.mxu0 0
        %1844 = vmatprep.subr.bf16.mxu0 0
        %1845 = vmatpush1.bf16.msra.mxu0 0
        %1846 = vmatprep.subr.bf16.mxu0 0
        %1847 = vmatpush1.bf16.msra.mxu0 0
        %1848 = vmatprep.subr.bf16.mxu0 0
        %1849 = vmatpush1.bf16.msra.mxu0 0
        %1850 = vmatprep.subr.bf16.mxu0 0
        %1851 = vmatpush1.bf16.msra.mxu0 0
        %1852 = vmatprep.subr.bf16.mxu0 0
        %1853 = vmatpush1.bf16.msra.mxu0 0
        %1854 = vmatprep.subr.bf16.mxu0 0
        %1855 = vmatpush1.bf16.msra.mxu0 0
        %1856 = vmatprep.mubr.bf16.mxu0 0
        %1857 = vmatmul.mubr.bf16.gmra.mrb[0].mxu0 %v1819
        %v1858 = vpop.f32.mrb[0].mxu0
        %v1859 = vadd.f32 0.0, %v1858
        %v1860 = vpop.f32.mrb[0].mxu0
        %v1861 = vpop.f32.mrb[0].mxu0
        %v1862 = vadd.f32 0.0, %v1861
        %v1863 = vpop.f32.mrb[0].mxu0
        %1864 = vmatprep.mubr.bf16.mxu0 0
        %1865 = vmatmul.mubr.bf16.gmra.mrb[0].mxu0 %v1822
        %v1866 = vpop.f32.mrb[0].mxu0
        %v1867 = vadd.f32 0.0, %v1866
        %v1868 = vpop.f32.mrb[0].mxu0
        %v1869 = vpop.f32.mrb[0].mxu0
        %v1870 = vadd.f32 0.0, %v1869
        %v1871 = vpop.f32.mrb[0].mxu0
        %1872 = vdwg.mxu0
        %v1873 = vadd.f32 %v1769, %v1859
        %v1874 = vadd.f32 %v1770, %v1862
        %v1875 = vadd.f32 %v1771, %v1867
        %v1876 = vadd.f32 %v1772, %v1870
        %v1877 = vld [vmem:[%s4] sm:$0x1]
        %v1879 = vlaneseq
        %v1880 = vshrl.u32 %v1879, 7
        %v1881 = vsub.s32 0, %v1880
        %v1882 = vrot.slane %v1877, %v1881
        %v1884 = vadd.f32 %v1873, %v1882
        %v1885 = vadd.f32 %v1874, %v1882
        %v1886 = vadd.f32 %v1875, %v1882
        %v1887 = vadd.f32 %v1876, %v1882
        %v1888 = vmax.f32 %v1884, 0.0
        %v1889 = vmax.f32 %v1885, 0.0
        %v1890 = vmax.f32 %v1886, 0.0
        %v1891 = vmax.f32 %v1887, 0.0
        %vm1892 = vcmask 523264
        %v1893 = vsel %vm1892, %v1888, -inf
        %v1894 = vsel %vm1892, %v1890, -inf
        %v1895 = vmax.f32 %v1893, %v1894
        %v1896 = vsel %vm1892, %v1889, -inf
        %v1897 = vsel %vm1892, %v1891, -inf
        %v1898 = vmax.f32 %v1896, %v1897
        %v1901 = vcombine.high %v1895, %v1895
        %v1903 = vunpack.c.l.s4 1983009808
        %v1904 = vunpack.c.0.s8 %v1903
        %v1905 = vlaneseq
        %v1906 = vshrl.u32 %v1905, 7
        %v1907 = vsub.s32 %v1904, %v1906
        %v1908 = vrot.slane %v1895, %v1907
        %v1910 = vunpack.c.l.s4 1983009808
        %v1911 = vunpack.c.0.s8 %v1910
        %v1912 = vlaneseq
        %v1913 = vshrl.u32 %v1912, 7
        %v1914 = vsub.s32 %v1911, %v1913
        %v1915 = vrot.slane %v1901, %v1914
        %v1916 = vcombine.high %v1908, %v1908
        %v1917 = vcombine.high %v1915, %v1915
        %v1918 = vcombine.high %v1898, %v1898
        %v1920 = vunpack.c.l.s4 1983009808
        %v1921 = vunpack.c.0.s8 %v1920
        %v1922 = vlaneseq
        %v1923 = vshrl.u32 %v1922, 7
        %v1924 = vsub.s32 %v1921, %v1923
        %v1925 = vrot.slane %v1898, %v1924
        %v1927 = vunpack.c.l.s4 1983009808
        %v1928 = vunpack.c.0.s8 %v1927
        %v1929 = vlaneseq
        %v1930 = vshrl.u32 %v1929, 7
        %v1931 = vsub.s32 %v1928, %v1930
        %v1932 = vrot.slane %v1918, %v1931
        %v1933 = vcombine.high %v1925, %v1925
        %v1934 = vcombine.high %v1932, %v1932
        %vm1943 = vcmask 517120
        %v1944 = vsel %vm1943, %v1908, -inf
        %v1945 = vrot.slane %v1944, 4
        %v1946 = vmax.f32 %v1944, %v1945
        %v1947 = vrot.slane %v1946, 2
        %v1948 = vmax.f32 %v1946, %v1947
        %v1949 = vrot.slane %v1948, 1
        %v1950 = vmax.f32 %v1948, %v1949
        %v1951 = vsel %vm1943, %v1916, -inf
        %v1952 = vrot.slane %v1951, 4
        %v1953 = vmax.f32 %v1951, %v1952
        %v1954 = vrot.slane %v1953, 2
        %v1955 = vmax.f32 %v1953, %v1954
        %v1956 = vrot.slane %v1955, 1
        %v1957 = vmax.f32 %v1955, %v1956
        %v1958 = vsel %vm1943, %v1915, -inf
        %v1959 = vrot.slane %v1958, 4
        %v1960 = vmax.f32 %v1958, %v1959
        %v1961 = vrot.slane %v1960, 2
        %v1962 = vmax.f32 %v1960, %v1961
        %v1963 = vrot.slane %v1962, 1
        %v1964 = vmax.f32 %v1962, %v1963
        %v1965 = vsel %vm1943, %v1917, -inf
        %v1966 = vrot.slane %v1965, 4
        %v1967 = vmax.f32 %v1965, %v1966
        %v1968 = vrot.slane %v1967, 2
        %v1969 = vmax.f32 %v1967, %v1968
        %v1970 = vrot.slane %v1969, 1
        %v1971 = vmax.f32 %v1969, %v1970
        %v1972 = vsel %vm1943, %v1925, -inf
        %v1973 = vrot.slane %v1972, 4
        %v1974 = vmax.f32 %v1972, %v1973
        %v1975 = vrot.slane %v1974, 2
        %v1976 = vmax.f32 %v1974, %v1975
        %v1977 = vrot.slane %v1976, 1
        %v1978 = vmax.f32 %v1976, %v1977
        %v1979 = vsel %vm1943, %v1933, -inf
        %v1980 = vrot.slane %v1979, 4
        %v1981 = vmax.f32 %v1979, %v1980
        %v1982 = vrot.slane %v1981, 2
        %v1983 = vmax.f32 %v1981, %v1982
        %v1984 = vrot.slane %v1983, 1
        %v1985 = vmax.f32 %v1983, %v1984
        %v1986 = vsel %vm1943, %v1932, -inf
        %v1987 = vrot.slane %v1986, 4
        %v1988 = vmax.f32 %v1986, %v1987
        %v1989 = vrot.slane %v1988, 2
        %v1990 = vmax.f32 %v1988, %v1989
        %v1991 = vrot.slane %v1990, 1
        %v1992 = vmax.f32 %v1990, %v1991
        %v1993 = vsel %vm1943, %v1934, -inf
        %v1994 = vrot.slane %v1993, 4
        %v1995 = vmax.f32 %v1993, %v1994
        %v1996 = vrot.slane %v1995, 2
        %v1997 = vmax.f32 %v1995, %v1996
        %v1998 = vrot.slane %v1997, 1
        %v1999 = vmax.f32 %v1997, %v1998
        %v2000 = vlaneseq
        %v2001 = vshrl.u32 %v2000, 7
        %vm2002 = vcmp.lt.s32.totalorder %v2001, 8
        %vm2011 = vcmask 1041409
        %v2012 = vsel %vm2011, %v1957, %v1950
        %vm2013 = vcmask 1042434
        %v2014 = vsel %vm2013, %v1964, %v2012
        %vm2015 = vcmask 1043459
        %v2016 = vsel %vm2015, %v1971, %v2014
        %vm2017 = vcmask 1044484
        %v2018 = vsel %vm2017, %v1978, %v2016
        %vm2019 = vcmask 1045509
        %v2020 = vsel %vm2019, %v1985, %v2018
        %vm2021 = vcmask 1046534
        %v2022 = vsel %vm2021, %v1992, %v2020
        %vm2023 = vcmask 1047559
        %v2024 = vsel %vm2023, %v1999, %v2022
        %v2026 = vsel %vm2002, %v2024, 0.0
        %v2027 = vpack.c.bf16 %v2026, %v2026
        %s2028 = smul.addr %s878, 4
        %s2029 = scalar_lea.vmem %s246, %s2028
        %vm2030 = vcmask 519168
        %2031 = vst.msk [vmem:[%s2029] sm:$0xf] %vm2030, %v2027
      $region52: #{musiclass_forward.3} parent=39 // loop_footer
        %s882 = sadd.s32 1, %s878
      $region53: #{musiclass_forward.3} parent=39 // loop_footer_branch
        %877 = sbr.rel target = $region49
      $region54: #{musiclass_forward.3} parent=39 // loop_exit
        _
      %s2032 = smul.u32 8, %s21
      %p2033 = scmp.lt.s32.totalorder %s20, 1
      %s2034 = scalar_select %p2033, %s20, 1
      %p2035 = scmp.lt.s32.totalorder %s2032, 7
      %s2036 = scalar_select %p2035, %s2032, 7
      %s2037 = smul.addr %s2034, 8
      %s2038 = sadd.s32 %s2036, %s2037
      %s2039 = smul.addr %s2038, 4
      %s2040 = scalar_lea.vmem %s5, %s2039
      // Predicated region
      $region55: #{musiclass_forward.3} parent=39 // pred_check
        %p2041 = pneg %p158
      $region56: #{musiclass_forward.3} parent=39 // pred_check_branch
        %2043 = sbr.rel (%p2041) target = $region58
      $region57: #{musiclass_forward.3} parent=39 // pred_region
        %s2044 = smul.u32 8, %s21
      $region58: #{musiclass_forward.3} parent=39 // pred_fallthru
        _
    $region40: #{musiclass_forward.3} parent=5 // pred_fallthru
      _
    %p2045 = scmp.le.s32.totalorder 2, %s11
    // Predicated region
    $region59: #{musiclass_forward.3} parent=5 // pred_check
      %p2046 = pneg %p2045
    $region60: #{musiclass_forward.3} parent=5 // pred_check_branch
      %2048 = sbr.rel (%p2046) target = $region62
    $region61: #{musiclass_forward.3} parent=5 // pred_region
      %s2049 = ssub.s32 %s11, 2
      // Predicated region
      $region63: #{musiclass_forward.3} parent=61 // pred_check
        %p2050 = pneg %p164
      $region64: #{musiclass_forward.3} parent=61 // pred_check_branch
        %2052 = sbr.rel (%p2050) target = $region66
      $region65: #{musiclass_forward.3} parent=61 // pred_region
        %s2053 = smul.u32 8, %s23
        %p2054 = scmp.lt.s32.totalorder %s22, 1
        %s2055 = scalar_select %p2054, %s22, 1
        %p2056 = scmp.lt.s32.totalorder %s2053, 7
        %s2057 = scalar_select %p2056, %s2053, 7
        %s2058 = smul.addr %s2055, 8
        %s2059 = sadd.s32 %s2057, %s2058
        %s2060 = smul.addr %s2059, 4
        %s2061 = scalar_lea.vmem %s5, %s2060
      $region66: #{musiclass_forward.3} parent=61 // pred_fallthru
        _
    $region62: #{musiclass_forward.3} parent=5 // pred_fallthru
      _
  $region6: #{musiclass_forward.3} parent=0 // loop_footer
    %s15 = sadd.s32 1, %s11
  $region7: #{musiclass_forward.3} parent=0 // loop_footer_branch
    %10 = sbr.rel target = $region3
  $region8: #{musiclass_forward.3} parent=0 // loop_exit
    _

// kernel: musiclass_forward.5
$region0: #{musiclass_forward.5}
  #allocation0 [shape = 'u32[]', space=smem, size = 0x4, offset = 0x4, fixed_abs, tag = 'smem constant byte address 0x4 - core index']
  #allocation1 [shape = 'u32[144,128]{1,0:T(1,128)}', space=vmem, size = 0x12000, scoped, tag = 'internal scratch']
  #allocation2 [shape = 'f32[2,256]{1,0:T(2,128)}', space=vmem, size = 0x800, scoped, tag = 'scratch operand']
  %s0 = inlined_call_operand.vmem [shape: bf16[2,2048], index: 0, kind: input, shape index: {}]
  %s1 = inlined_call_operand.vmem [shape: bf16[2048,256], index: 1, kind: input, shape index: {}]
  %s2 = inlined_call_operand.vmem [shape: f32[1,256], index: 2, kind: input, shape index: {}]
  %s3 = inlined_call_operand.vmem [shape: f32[256,18], index: 3, kind: input, shape index: {}]
  %s4 = inlined_call_operand.vmem [shape: f32[1,18], index: 4, kind: input, shape index: {}]
  %s5 = inlined_call_operand.hbm [shape: f32[2,18], index: 5, kind: output, shape index: {}]
  %s6 = sld [smem:[#allocation0]]
  $region38: #{musiclass_forward.5} parent=0
    _
  %s8 = ssub.s32 1, %s6
  %s9 = scalar_select 0, %s8, %s6
  $region1: #{musiclass_forward.5} parent=0
    #allocation3 [shape = 'u8[1024]{0}', space=vmem, size = 0x400, scoped, tag = 'output window, operand 0, single buffered']
    #allocation4 [shape = 's32[1]{0}', space=sflag, size = 0x4, scoped, tag = 'scoped memory for musiclass_forward.5']
    %10 = vsyncpa [#allocation4], 0
    // Predicated region
    $region2: #{musiclass_forward.5} parent=1 // pred_check
      _
    $region3: #{musiclass_forward.5} parent=1 // pred_check_branch
      %12 = sbr.rel (0) target = $region5
    $region4: #{musiclass_forward.5} parent=1 // pred_region
      _
    $region5: #{musiclass_forward.5} parent=1 // pred_fallthru
      _
    // Predicated region
    $region6: #{musiclass_forward.5} parent=1 // pred_check
      _
    $region7: #{musiclass_forward.5} parent=1 // pred_check_branch
      %14 = sbr.rel (0) target = $region9
    $region8: #{musiclass_forward.5} parent=1 // pred_region
      _
    $region9: #{musiclass_forward.5} parent=1 // pred_fallthru
      _
    // Predicated region
    $region10: #{musiclass_forward.5} parent=1 // pred_check
      _
    $region11: #{musiclass_forward.5} parent=1 // pred_check_branch
      %16 = sbr.rel (0) target = $region13
    $region12: #{musiclass_forward.5} parent=1 // pred_region
      _
    $region13: #{musiclass_forward.5} parent=1 // pred_fallthru
      _
    // Predicated region
    $region14: #{musiclass_forward.5} parent=1 // pred_check
      _
    $region15: #{musiclass_forward.5} parent=1 // pred_check_branch
      %18 = sbr.rel (0) target = $region17
    $region16: #{musiclass_forward.5} parent=1 // pred_region
      _
    $region17: #{musiclass_forward.5} parent=1 // pred_fallthru
      _
    // Predicated region
    $region18: #{musiclass_forward.5} parent=1 // pred_check
      _
    $region19: #{musiclass_forward.5} parent=1 // pred_check_branch
      %20 = sbr.rel (0) target = $region21
    $region20: #{musiclass_forward.5} parent=1 // pred_region
      _
    $region21: #{musiclass_forward.5} parent=1 // pred_fallthru
      _
    %p21 = scmp.eq.s32.totalorder 0, 0
    // Predicated region
    $region22: #{musiclass_forward.5} parent=1 // pred_check
      %p22 = pneg %p21
    $region23: #{musiclass_forward.5} parent=1 // pred_check_branch
      %24 = sbr.rel (%p22) target = $region25
    $region24: #{musiclass_forward.5} parent=1 // pred_region
      %25 = vst [vmem:[#allocation2] sm:$0xf] 0.0
    $region25: #{musiclass_forward.5} parent=1 // pred_fallthru
      _
    %v26 = vld [vmem:[#allocation2] sm:$0xf]
    %v27 = vld [vmem:[%s0] sm:$0xff]
    %v28 = vld [vmem:[%s0 + $0x8] sm:$0xff]
    %v29 = vld [vmem:[%s1] sm:$0xff]
    %v30 = vld [vmem:[%s1 + $0x8] sm:$0xff]
    %v31 = vld [vmem:[%s1 + $0x10] sm:$0xff]
    %v32 = vld [vmem:[%s1 + $0x18] sm:$0xff]
    %v33 = vld [vmem:[%s1 + $0x20] sm:$0xff]
    %v34 = vld [vmem:[%s1 + $0x28] sm:$0xff]
    %v35 = vld [vmem:[%s1 + $0x30] sm:$0xff]
    %v36 = vld [vmem:[%s1 + $0x38] sm:$0xff]
    %v37 = vld [vmem:[%s1 + $0x40] sm:$0xff]
    %v38 = vld [vmem:[%s1 + $0x48] sm:$0xff]
    %v39 = vld [vmem:[%s1 + $0x50] sm:$0xff]
    %v40 = vld [vmem:[%s1 + $0x58] sm:$0xff]
    %v41 = vld [vmem:[%s1 + $0x60] sm:$0xff]
    %v42 = vld [vmem:[%s1 + $0x68] sm:$0xff]
    %v43 = vld [vmem:[%s1 + $0x70] sm:$0xff]
    %v44 = vld [vmem:[%s1 + $0x78] sm:$0xff]
    %v45 = vld [vmem:[%s1 + $0x80] sm:$0xff]
    %v46 = vld [vmem:[%s1 + $0x88] sm:$0xff]
    %v47 = vld [vmem:[%s1 + $0x90] sm:$0xff]
    %v48 = vld [vmem:[%s1 + $0x98] sm:$0xff]
    %v49 = vld [vmem:[%s1 + $0xa0] sm:$0xff]
    %v50 = vld [vmem:[%s1 + $0xa8] sm:$0xff]
    %v51 = vld [vmem:[%s1 + $0xb0] sm:$0xff]
    %v52 = vld [vmem:[%s1 + $0xb8] sm:$0xff]
    %v53 = vld [vmem:[%s1 + $0xc0] sm:$0xff]
    %v54 = vld [vmem:[%s1 + $0xc8] sm:$0xff]
    %v55 = vld [vmem:[%s1 + $0xd0] sm:$0xff]
    %v56 = vld [vmem:[%s1 + $0xd8] sm:$0xff]
    %v57 = vld [vmem:[%s1 + $0xe0] sm:$0xff]
    %v58 = vld [vmem:[%s1 + $0xe8] sm:$0xff]
    %v59 = vld [vmem:[%s1 + $0xf0] sm:$0xff]
    %v60 = vld [vmem:[%s1 + $0xf8] sm:$0xff]
    %v61 = vld [vmem:[%s1 + $0x100] sm:$0xff]
    %v62 = vld [vmem:[%s1 + $0x108] sm:$0xff]
    %v63 = vld [vmem:[%s1 + $0x110] sm:$0xff]
    %v64 = vld [vmem:[%s1 + $0x118] sm:$0xff]
    %v65 = vld [vmem:[%s1 + $0x120] sm:$0xff]
    %v66 = vld [vmem:[%s1 + $0x128] sm:$0xff]
    %v67 = vld [vmem:[%s1 + $0x130] sm:$0xff]
    %v68 = vld [vmem:[%s1 + $0x138] sm:$0xff]
    %v69 = vld [vmem:[%s1 + $0x140] sm:$0xff]
    %v70 = vld [vmem:[%s1 + $0x148] sm:$0xff]
    %v71 = vld [vmem:[%s1 + $0x150] sm:$0xff]
    %v72 = vld [vmem:[%s1 + $0x158] sm:$0xff]
    %v73 = vld [vmem:[%s1 + $0x160] sm:$0xff]
    %v74 = vld [vmem:[%s1 + $0x168] sm:$0xff]
    %v75 = vld [vmem:[%s1 + $0x170] sm:$0xff]
    %v76 = vld [vmem:[%s1 + $0x178] sm:$0xff]
    %v77 = vld [vmem:[%s1 + $0x180] sm:$0xff]
    %v78 = vld [vmem:[%s1 + $0x188] sm:$0xff]
    %v79 = vld [vmem:[%s1 + $0x190] sm:$0xff]
    %v80 = vld [vmem:[%s1 + $0x198] sm:$0xff]
    %v81 = vld [vmem:[%s1 + $0x1a0] sm:$0xff]
    %v82 = vld [vmem:[%s1 + $0x1a8] sm:$0xff]
    %v83 = vld [vmem:[%s1 + $0x1b0] sm:$0xff]
    %v84 = vld [vmem:[%s1 + $0x1b8] sm:$0xff]
    %v85 = vld [vmem:[%s1 + $0x1c0] sm:$0xff]
    %v86 = vld [vmem:[%s1 + $0x1c8] sm:$0xff]
    %v87 = vld [vmem:[%s1 + $0x1d0] sm:$0xff]
    %v88 = vld [vmem:[%s1 + $0x1d8] sm:$0xff]
    %v89 = vld [vmem:[%s1 + $0x1e0] sm:$0xff]
    %v90 = vld [vmem:[%s1 + $0x1e8] sm:$0xff]
    %v91 = vld [vmem:[%s1 + $0x1f0] sm:$0xff]
    %v92 = vld [vmem:[%s1 + $0x1f8] sm:$0xff]
    %v93 = vld [vmem:[%s1 + $0x200] sm:$0xff]
    %v94 = vld [vmem:[%s1 + $0x208] sm:$0xff]
    %v95 = vld [vmem:[%s1 + $0x210] sm:$0xff]
    %v96 = vld [vmem:[%s1 + $0x218] sm:$0xff]
    %v97 = vld [vmem:[%s1 + $0x220] sm:$0xff]
    %v98 = vld [vmem:[%s1 + $0x228] sm:$0xff]
    %v99 = vld [vmem:[%s1 + $0x230] sm:$0xff]
    %v100 = vld [vmem:[%s1 + $0x238] sm:$0xff]
    %v101 = vld [vmem:[%s1 + $0x240] sm:$0xff]
    %v102 = vld [vmem:[%s1 + $0x248] sm:$0xff]
    %v103 = vld [vmem:[%s1 + $0x250] sm:$0xff]
    %v104 = vld [vmem:[%s1 + $0x258] sm:$0xff]
    %v105 = vld [vmem:[%s1 + $0x260] sm:$0xff]
    %v106 = vld [vmem:[%s1 + $0x268] sm:$0xff]
    %v107 = vld [vmem:[%s1 + $0x270] sm:$0xff]
    %v108 = vld [vmem:[%s1 + $0x278] sm:$0xff]
    %v109 = vld [vmem:[%s1 + $0x280] sm:$0xff]
    %v110 = vld [vmem:[%s1 + $0x288] sm:$0xff]
    %v111 = vld [vmem:[%s1 + $0x290] sm:$0xff]
    %v112 = vld [vmem:[%s1 + $0x298] sm:$0xff]
    %v113 = vld [vmem:[%s1 + $0x2a0] sm:$0xff]
    %v114 = vld [vmem:[%s1 + $0x2a8] sm:$0xff]
    %v115 = vld [vmem:[%s1 + $0x2b0] sm:$0xff]
    %v116 = vld [vmem:[%s1 + $0x2b8] sm:$0xff]
    %v117 = vld [vmem:[%s1 + $0x2c0] sm:$0xff]
    %v118 = vld [vmem:[%s1 + $0x2c8] sm:$0xff]
    %v119 = vld [vmem:[%s1 + $0x2d0] sm:$0xff]
    %v120 = vld [vmem:[%s1 + $0x2d8] sm:$0xff]
    %v121 = vld [vmem:[%s1 + $0x2e0] sm:$0xff]
    %v122 = vld [vmem:[%s1 + $0x2e8] sm:$0xff]
    %v123 = vld [vmem:[%s1 + $0x2f0] sm:$0xff]
    %v124 = vld [vmem:[%s1 + $0x2f8] sm:$0xff]
    %v125 = vld [vmem:[%s1 + $0x300] sm:$0xff]
    %v126 = vld [vmem:[%s1 + $0x308] sm:$0xff]
    %v127 = vld [vmem:[%s1 + $0x310] sm:$0xff]
    %v128 = vld [vmem:[%s1 + $0x318] sm:$0xff]
    %v129 = vld [vmem:[%s1 + $0x320] sm:$0xff]
    %v130 = vld [vmem:[%s1 + $0x328] sm:$0xff]
    %v131 = vld [vmem:[%s1 + $0x330] sm:$0xff]
    %v132 = vld [vmem:[%s1 + $0x338] sm:$0xff]
    %v133 = vld [vmem:[%s1 + $0x340] sm:$0xff]
    %v134 = vld [vmem:[%s1 + $0x348] sm:$0xff]
    %v135 = vld [vmem:[%s1 + $0x350] sm:$0xff]
    %v136 = vld [vmem:[%s1 + $0x358] sm:$0xff]
    %v137 = vld [vmem:[%s1 + $0x360] sm:$0xff]
    %v138 = vld [vmem:[%s1 + $0x368] sm:$0xff]
    %v139 = vld [vmem:[%s1 + $0x370] sm:$0xff]
    %v140 = vld [vmem:[%s1 + $0x378] sm:$0xff]
    %v141 = vld [vmem:[%s1 + $0x380] sm:$0xff]
    %v142 = vld [vmem:[%s1 + $0x388] sm:$0xff]
    %v143 = vld [vmem:[%s1 + $0x390] sm:$0xff]
    %v144 = vld [vmem:[%s1 + $0x398] sm:$0xff]
    %v145 = vld [vmem:[%s1 + $0x3a0] sm:$0xff]
    %v146 = vld [vmem:[%s1 + $0x3a8] sm:$0xff]
    %v147 = vld [vmem:[%s1 + $0x3b0] sm:$0xff]
    %v148 = vld [vmem:[%s1 + $0x3b8] sm:$0xff]
    %v149 = vld [vmem:[%s1 + $0x3c0] sm:$0xff]
    %v150 = vld [vmem:[%s1 + $0x3c8] sm:$0xff]
    %v151 = vld [vmem:[%s1 + $0x3d0] sm:$0xff]
    %v152 = vld [vmem:[%s1 + $0x3d8] sm:$0xff]
    %v153 = vld [vmem:[%s1 + $0x3e0] sm:$0xff]
    %v154 = vld [vmem:[%s1 + $0x3e8] sm:$0xff]
    %v155 = vld [vmem:[%s1 + $0x3f0] sm:$0xff]
    %v156 = vld [vmem:[%s1 + $0x3f8] sm:$0xff]
    %v157 = vld [vmem:[%s1 + $0x400] sm:$0xff]
    %v158 = vld [vmem:[%s1 + $0x408] sm:$0xff]
    %v159 = vld [vmem:[%s1 + $0x410] sm:$0xff]
    %v160 = vld [vmem:[%s1 + $0x418] sm:$0xff]
    %v161 = vld [vmem:[%s1 + $0x420] sm:$0xff]
    %v162 = vld [vmem:[%s1 + $0x428] sm:$0xff]
    %v163 = vld [vmem:[%s1 + $0x430] sm:$0xff]
    %v164 = vld [vmem:[%s1 + $0x438] sm:$0xff]
    %v165 = vld [vmem:[%s1 + $0x440] sm:$0xff]
    %v166 = vld [vmem:[%s1 + $0x448] sm:$0xff]
    %v167 = vld [vmem:[%s1 + $0x450] sm:$0xff]
    %v168 = vld [vmem:[%s1 + $0x458] sm:$0xff]
    %v169 = vld [vmem:[%s1 + $0x460] sm:$0xff]
    %v170 = vld [vmem:[%s1 + $0x468] sm:$0xff]
    %v171 = vld [vmem:[%s1 + $0x470] sm:$0xff]
    %v172 = vld [vmem:[%s1 + $0x478] sm:$0xff]
    %v173 = vld [vmem:[%s1 + $0x480] sm:$0xff]
    %v174 = vld [vmem:[%s1 + $0x488] sm:$0xff]
    %v175 = vld [vmem:[%s1 + $0x490] sm:$0xff]
    %v176 = vld [vmem:[%s1 + $0x498] sm:$0xff]
    %v177 = vld [vmem:[%s1 + $0x4a0] sm:$0xff]
    %v178 = vld [vmem:[%s1 + $0x4a8] sm:$0xff]
    %v179 = vld [vmem:[%s1 + $0x4b0] sm:$0xff]
    %v180 = vld [vmem:[%s1 + $0x4b8] sm:$0xff]
    %v181 = vld [vmem:[%s1 + $0x4c0] sm:$0xff]
    %v182 = vld [vmem:[%s1 + $0x4c8] sm:$0xff]
    %v183 = vld [vmem:[%s1 + $0x4d0] sm:$0xff]
    %v184 = vld [vmem:[%s1 + $0x4d8] sm:$0xff]
    %v185 = vld [vmem:[%s1 + $0x4e0] sm:$0xff]
    %v186 = vld [vmem:[%s1 + $0x4e8] sm:$0xff]
    %v187 = vld [vmem:[%s1 + $0x4f0] sm:$0xff]
    %v188 = vld [vmem:[%s1 + $0x4f8] sm:$0xff]
    %v189 = vld [vmem:[%s1 + $0x500] sm:$0xff]
    %v190 = vld [vmem:[%s1 + $0x508] sm:$0xff]
    %v191 = vld [vmem:[%s1 + $0x510] sm:$0xff]
    %v192 = vld [vmem:[%s1 + $0x518] sm:$0xff]
    %v193 = vld [vmem:[%s1 + $0x520] sm:$0xff]
    %v194 = vld [vmem:[%s1 + $0x528] sm:$0xff]
    %v195 = vld [vmem:[%s1 + $0x530] sm:$0xff]
    %v196 = vld [vmem:[%s1 + $0x538] sm:$0xff]
    %v197 = vld [vmem:[%s1 + $0x540] sm:$0xff]
    %v198 = vld [vmem:[%s1 + $0x548] sm:$0xff]
    %v199 = vld [vmem:[%s1 + $0x550] sm:$0xff]
    %v200 = vld [vmem:[%s1 + $0x558] sm:$0xff]
    %v201 = vld [vmem:[%s1 + $0x560] sm:$0xff]
    %v202 = vld [vmem:[%s1 + $0x568] sm:$0xff]
    %v203 = vld [vmem:[%s1 + $0x570] sm:$0xff]
    %v204 = vld [vmem:[%s1 + $0x578] sm:$0xff]
    %v205 = vld [vmem:[%s1 + $0x580] sm:$0xff]
    %v206 = vld [vmem:[%s1 + $0x588] sm:$0xff]
    %v207 = vld [vmem:[%s1 + $0x590] sm:$0xff]
    %v208 = vld [vmem:[%s1 + $0x598] sm:$0xff]
    %v209 = vld [vmem:[%s1 + $0x5a0] sm:$0xff]
    %v210 = vld [vmem:[%s1 + $0x5a8] sm:$0xff]
    %v211 = vld [vmem:[%s1 + $0x5b0] sm:$0xff]
    %v212 = vld [vmem:[%s1 + $0x5b8] sm:$0xff]
    %v213 = vld [vmem:[%s1 + $0x5c0] sm:$0xff]
    %v214 = vld [vmem:[%s1 + $0x5c8] sm:$0xff]
    %v215 = vld [vmem:[%s1 + $0x5d0] sm:$0xff]
    %v216 = vld [vmem:[%s1 + $0x5d8] sm:$0xff]
    %v217 = vld [vmem:[%s1 + $0x5e0] sm:$0xff]
    %v218 = vld [vmem:[%s1 + $0x5e8] sm:$0xff]
    %v219 = vld [vmem:[%s1 + $0x5f0] sm:$0xff]
    %v220 = vld [vmem:[%s1 + $0x5f8] sm:$0xff]
    %v221 = vld [vmem:[%s1 + $0x600] sm:$0xff]
    %v222 = vld [vmem:[%s1 + $0x608] sm:$0xff]
    %v223 = vld [vmem:[%s1 + $0x610] sm:$0xff]
    %v224 = vld [vmem:[%s1 + $0x618] sm:$0xff]
    %v225 = vld [vmem:[%s1 + $0x620] sm:$0xff]
    %v226 = vld [vmem:[%s1 + $0x628] sm:$0xff]
    %v227 = vld [vmem:[%s1 + $0x630] sm:$0xff]
    %v228 = vld [vmem:[%s1 + $0x638] sm:$0xff]
    %v229 = vld [vmem:[%s1 + $0x640] sm:$0xff]
    %v230 = vld [vmem:[%s1 + $0x648] sm:$0xff]
    %v231 = vld [vmem:[%s1 + $0x650] sm:$0xff]
    %v232 = vld [vmem:[%s1 + $0x658] sm:$0xff]
    %v233 = vld [vmem:[%s1 + $0x660] sm:$0xff]
    %v234 = vld [vmem:[%s1 + $0x668] sm:$0xff]
    %v235 = vld [vmem:[%s1 + $0x670] sm:$0xff]
    %v236 = vld [vmem:[%s1 + $0x678] sm:$0xff]
    %v237 = vld [vmem:[%s1 + $0x680] sm:$0xff]
    %v238 = vld [vmem:[%s1 + $0x688] sm:$0xff]
    %v239 = vld [vmem:[%s1 + $0x690] sm:$0xff]
    %v240 = vld [vmem:[%s1 + $0x698] sm:$0xff]
    %v241 = vld [vmem:[%s1 + $0x6a0] sm:$0xff]
    %v242 = vld [vmem:[%s1 + $0x6a8] sm:$0xff]
    %v243 = vld [vmem:[%s1 + $0x6b0] sm:$0xff]
    %v244 = vld [vmem:[%s1 + $0x6b8] sm:$0xff]
    %v245 = vld [vmem:[%s1 + $0x6c0] sm:$0xff]
    %v246 = vld [vmem:[%s1 + $0x6c8] sm:$0xff]
    %v247 = vld [vmem:[%s1 + $0x6d0] sm:$0xff]
    %v248 = vld [vmem:[%s1 + $0x6d8] sm:$0xff]
    %v249 = vld [vmem:[%s1 + $0x6e0] sm:$0xff]
    %v250 = vld [vmem:[%s1 + $0x6e8] sm:$0xff]
    %v251 = vld [vmem:[%s1 + $0x6f0] sm:$0xff]
    %v252 = vld [vmem:[%s1 + $0x6f8] sm:$0xff]
    %v253 = vld [vmem:[%s1 + $0x700] sm:$0xff]
    %v254 = vld [vmem:[%s1 + $0x708] sm:$0xff]
    %v255 = vld [vmem:[%s1 + $0x710] sm:$0xff]
    %v256 = vld [vmem:[%s1 + $0x718] sm:$0xff]
    %v257 = vld [vmem:[%s1 + $0x720] sm:$0xff]
    %v258 = vld [vmem:[%s1 + $0x728] sm:$0xff]
    %v259 = vld [vmem:[%s1 + $0x730] sm:$0xff]
    %v260 = vld [vmem:[%s1 + $0x738] sm:$0xff]
    %v261 = vld [vmem:[%s1 + $0x740] sm:$0xff]
    %v262 = vld [vmem:[%s1 + $0x748] sm:$0xff]
    %v263 = vld [vmem:[%s1 + $0x750] sm:$0xff]
    %v264 = vld [vmem:[%s1 + $0x758] sm:$0xff]
    %v265 = vld [vmem:[%s1 + $0x760] sm:$0xff]
    %v266 = vld [vmem:[%s1 + $0x768] sm:$0xff]
    %v267 = vld [vmem:[%s1 + $0x770] sm:$0xff]
    %v268 = vld [vmem:[%s1 + $0x778] sm:$0xff]
    %v269 = vld [vmem:[%s1 + $0x780] sm:$0xff]
    %v270 = vld [vmem:[%s1 + $0x788] sm:$0xff]
    %v271 = vld [vmem:[%s1 + $0x790] sm:$0xff]
    %v272 = vld [vmem:[%s1 + $0x798] sm:$0xff]
    %v273 = vld [vmem:[%s1 + $0x7a0] sm:$0xff]
    %v274 = vld [vmem:[%s1 + $0x7a8] sm:$0xff]
    %v275 = vld [vmem:[%s1 + $0x7b0] sm:$0xff]
    %v276 = vld [vmem:[%s1 + $0x7b8] sm:$0xff]
    %v277 = vld [vmem:[%s1 + $0x7c0] sm:$0xff]
    %v278 = vld [vmem:[%s1 + $0x7c8] sm:$0xff]
    %v279 = vld [vmem:[%s1 + $0x7d0] sm:$0xff]
    %v280 = vld [vmem:[%s1 + $0x7d8] sm:$0xff]
    %v281 = vld [vmem:[%s1 + $0x7e0] sm:$0xff]
    %v282 = vld [vmem:[%s1 + $0x7e8] sm:$0xff]
    %v283 = vld [vmem:[%s1 + $0x7f0] sm:$0xff]
    %v284 = vld [vmem:[%s1 + $0x7f8] sm:$0xff]
    %v287 = vcombine.high %v27, %v27
    %v289 = vunpack.c.l.s4 1966171168
    %v290 = vunpack.c.0.s8 %v289
    %v291 = vlaneseq
    %v292 = vshrl.u32 %v291, 7
    %v293 = vsub.s32 %v290, %v292
    %v294 = vrot.slane %v27, %v293
    %v296 = vunpack.c.l.s4 1966171168
    %v297 = vunpack.c.0.s8 %v296
    %v298 = vlaneseq
    %v299 = vshrl.u32 %v298, 7
    %v300 = vsub.s32 %v297, %v299
    %v301 = vrot.slane %v287, %v300
    %v302 = vcombine.high %v294, %v294
    %v303 = vcombine.high %v301, %v301
    %v305 = vunpack.c.l.s4 1966171168
    %v306 = vunpack.c.0.s8 %v305
    %v307 = vlaneseq
    %v308 = vshrl.u32 %v307, 7
    %v309 = vsub.s32 %v306, %v308
    %v310 = vrot.slane %v294, %v309
    %v312 = vunpack.c.l.s4 1966171168
    %v313 = vunpack.c.0.s8 %v312
    %v314 = vlaneseq
    %v315 = vshrl.u32 %v314, 7
    %v316 = vsub.s32 %v313, %v315
    %v317 = vrot.slane %v301, %v316
    %v319 = vunpack.c.l.s4 1966171168
    %v320 = vunpack.c.0.s8 %v319
    %v321 = vlaneseq
    %v322 = vshrl.u32 %v321, 7
    %v323 = vsub.s32 %v320, %v322
    %v324 = vrot.slane %v302, %v323
    %v326 = vunpack.c.l.s4 1966171168
    %v327 = vunpack.c.0.s8 %v326
    %v328 = vlaneseq
    %v329 = vshrl.u32 %v328, 7
    %v330 = vsub.s32 %v327, %v329
    %v331 = vrot.slane %v303, %v330
    %v332 = vcombine.high %v310, %v310
    %v333 = vcombine.high %v317, %v317
    %v334 = vcombine.high %v324, %v324
    %v335 = vcombine.high %v331, %v331
    %v336 = vcombine.high %v28, %v28
    %v338 = vunpack.c.l.s4 1966171168
    %v339 = vunpack.c.0.s8 %v338
    %v340 = vlaneseq
    %v341 = vshrl.u32 %v340, 7
    %v342 = vsub.s32 %v339, %v341
    %v343 = vrot.slane %v28, %v342
    %v345 = vunpack.c.l.s4 1966171168
    %v346 = vunpack.c.0.s8 %v345
    %v347 = vlaneseq
    %v348 = vshrl.u32 %v347, 7
    %v349 = vsub.s32 %v346, %v348
    %v350 = vrot.slane %v336, %v349
    %v351 = vcombine.high %v343, %v343
    %v352 = vcombine.high %v350, %v350
    %v354 = vunpack.c.l.s4 1966171168
    %v355 = vunpack.c.0.s8 %v354
    %v356 = vlaneseq
    %v357 = vshrl.u32 %v356, 7
    %v358 = vsub.s32 %v355, %v357
    %v359 = vrot.slane %v343, %v358
    %v361 = vunpack.c.l.s4 1966171168
    %v362 = vunpack.c.0.s8 %v361
    %v363 = vlaneseq
    %v364 = vshrl.u32 %v363, 7
    %v365 = vsub.s32 %v362, %v364
    %v366 = vrot.slane %v350, %v365
    %v368 = vunpack.c.l.s4 1966171168
    %v369 = vunpack.c.0.s8 %v368
    %v370 = vlaneseq
    %v371 = vshrl.u32 %v370, 7
    %v372 = vsub.s32 %v369, %v371
    %v373 = vrot.slane %v351, %v372
    %v375 = vunpack.c.l.s4 1966171168
    %v376 = vunpack.c.0.s8 %v375
    %v377 = vlaneseq
    %v378 = vshrl.u32 %v377, 7
    %v379 = vsub.s32 %v376, %v378
    %v380 = vrot.slane %v352, %v379
    %v381 = vcombine.high %v359, %v359
    %v382 = vcombine.high %v366, %v366
    %v383 = vcombine.high %v373, %v373
    %v384 = vcombine.high %v380, %v380
    %v657 = vunpack.c.l.b16 %v29
    %v658 = vunpack.c.h.b16 %v29
    %v659 = vunpack.c.l.b16 %v30
    %v660 = vunpack.c.h.b16 %v30
    %v661 = vunpack.c.l.b16 %v31
    %v662 = vunpack.c.h.b16 %v31
    %v663 = vunpack.c.l.b16 %v32
    %v664 = vunpack.c.h.b16 %v32
    %v665 = vunpack.c.l.b16 %v33
    %v666 = vunpack.c.h.b16 %v33
    %v667 = vunpack.c.l.b16 %v34
    %v668 = vunpack.c.h.b16 %v34
    %v669 = vunpack.c.l.b16 %v35
    %v670 = vunpack.c.h.b16 %v35
    %v671 = vunpack.c.l.b16 %v36
    %v672 = vunpack.c.h.b16 %v36
    %v673 = vunpack.c.l.b16 %v37
    %v674 = vunpack.c.h.b16 %v37
    %v675 = vunpack.c.l.b16 %v38
    %v676 = vunpack.c.h.b16 %v38
    %v677 = vunpack.c.l.b16 %v39
    %v678 = vunpack.c.h.b16 %v39
    %v679 = vunpack.c.l.b16 %v40
    %v680 = vunpack.c.h.b16 %v40
    %v681 = vunpack.c.l.b16 %v41
    %v682 = vunpack.c.h.b16 %v41
    %v683 = vunpack.c.l.b16 %v42
    %v684 = vunpack.c.h.b16 %v42
    %v685 = vunpack.c.l.b16 %v43
    %v686 = vunpack.c.h.b16 %v43
    %v687 = vunpack.c.l.b16 %v44
    %v688 = vunpack.c.h.b16 %v44
    %v689 = vunpack.c.l.b16 %v45
    %v690 = vunpack.c.h.b16 %v45
    %v691 = vunpack.c.l.b16 %v46
    %v692 = vunpack.c.h.b16 %v46
    %v693 = vunpack.c.l.b16 %v47
    %v694 = vunpack.c.h.b16 %v47
    %v695 = vunpack.c.l.b16 %v48
    %v696 = vunpack.c.h.b16 %v48
    %v697 = vunpack.c.l.b16 %v49
    %v698 = vunpack.c.h.b16 %v49
    %v699 = vunpack.c.l.b16 %v50
    %v700 = vunpack.c.h.b16 %v50
    %v701 = vunpack.c.l.b16 %v51
    %v702 = vunpack.c.h.b16 %v51
    %v703 = vunpack.c.l.b16 %v52
    %v704 = vunpack.c.h.b16 %v52
    %v705 = vunpack.c.l.b16 %v53
    %v706 = vunpack.c.h.b16 %v53
    %v707 = vunpack.c.l.b16 %v54
    %v708 = vunpack.c.h.b16 %v54
    %v709 = vunpack.c.l.b16 %v55
    %v710 = vunpack.c.h.b16 %v55
    %v711 = vunpack.c.l.b16 %v56
    %v712 = vunpack.c.h.b16 %v56
    %v713 = vunpack.c.l.b16 %v57
    %v714 = vunpack.c.h.b16 %v57
    %v715 = vunpack.c.l.b16 %v58
    %v716 = vunpack.c.h.b16 %v58
    %v717 = vunpack.c.l.b16 %v59
    %v718 = vunpack.c.h.b16 %v59
    %v719 = vunpack.c.l.b16 %v60
    %v720 = vunpack.c.h.b16 %v60
    %v721 = vunpack.c.l.b16 %v61
    %v722 = vunpack.c.h.b16 %v61
    %v723 = vunpack.c.l.b16 %v62
    %v724 = vunpack.c.h.b16 %v62
    %v725 = vunpack.c.l.b16 %v63
    %v726 = vunpack.c.h.b16 %v63
    %v727 = vunpack.c.l.b16 %v64
    %v728 = vunpack.c.h.b16 %v64
    %v729 = vunpack.c.l.b16 %v65
    %v730 = vunpack.c.h.b16 %v65
    %v731 = vunpack.c.l.b16 %v66
    %v732 = vunpack.c.h.b16 %v66
    %v733 = vunpack.c.l.b16 %v67
    %v734 = vunpack.c.h.b16 %v67
    %v735 = vunpack.c.l.b16 %v68
    %v736 = vunpack.c.h.b16 %v68
    %v737 = vunpack.c.l.b16 %v69
    %v738 = vunpack.c.h.b16 %v69
    %v739 = vunpack.c.l.b16 %v70
    %v740 = vunpack.c.h.b16 %v70
    %v741 = vunpack.c.l.b16 %v71
    %v742 = vunpack.c.h.b16 %v71
    %v743 = vunpack.c.l.b16 %v72
    %v744 = vunpack.c.h.b16 %v72
    %v745 = vunpack.c.l.b16 %v73
    %v746 = vunpack.c.h.b16 %v73
    %v747 = vunpack.c.l.b16 %v74
    %v748 = vunpack.c.h.b16 %v74
    %v749 = vunpack.c.l.b16 %v75
    %v750 = vunpack.c.h.b16 %v75
    %v751 = vunpack.c.l.b16 %v76
    %v752 = vunpack.c.h.b16 %v76
    %v753 = vunpack.c.l.b16 %v77
    %v754 = vunpack.c.h.b16 %v77
    %v755 = vunpack.c.l.b16 %v78
    %v756 = vunpack.c.h.b16 %v78
    %v757 = vunpack.c.l.b16 %v79
    %v758 = vunpack.c.h.b16 %v79
    %v759 = vunpack.c.l.b16 %v80
    %v760 = vunpack.c.h.b16 %v80
    %v761 = vunpack.c.l.b16 %v81
    %v762 = vunpack.c.h.b16 %v81
    %v763 = vunpack.c.l.b16 %v82
    %v764 = vunpack.c.h.b16 %v82
    %v765 = vunpack.c.l.b16 %v83
    %v766 = vunpack.c.h.b16 %v83
    %v767 = vunpack.c.l.b16 %v84
    %v768 = vunpack.c.h.b16 %v84
    %v769 = vunpack.c.l.b16 %v85
    %v770 = vunpack.c.h.b16 %v85
    %v771 = vunpack.c.l.b16 %v86
    %v772 = vunpack.c.h.b16 %v86
    %v773 = vunpack.c.l.b16 %v87
    %v774 = vunpack.c.h.b16 %v87
    %v775 = vunpack.c.l.b16 %v88
    %v776 = vunpack.c.h.b16 %v88
    %v777 = vunpack.c.l.b16 %v89
    %v778 = vunpack.c.h.b16 %v89
    %v779 = vunpack.c.l.b16 %v90
    %v780 = vunpack.c.h.b16 %v90
    %v781 = vunpack.c.l.b16 %v91
    %v782 = vunpack.c.h.b16 %v91
    %v783 = vunpack.c.l.b16 %v92
    %v784 = vunpack.c.h.b16 %v92
    %v785 = vunpack.c.l.b16 %v93
    %v786 = vunpack.c.h.b16 %v93
    %v787 = vunpack.c.l.b16 %v94
    %v788 = vunpack.c.h.b16 %v94
    %v789 = vunpack.c.l.b16 %v95
    %v790 = vunpack.c.h.b16 %v95
    %v791 = vunpack.c.l.b16 %v96
    %v792 = vunpack.c.h.b16 %v96
    %v793 = vunpack.c.l.b16 %v97
    %v794 = vunpack.c.h.b16 %v97
    %v795 = vunpack.c.l.b16 %v98
    %v796 = vunpack.c.h.b16 %v98
    %v797 = vunpack.c.l.b16 %v99
    %v798 = vunpack.c.h.b16 %v99
    %v799 = vunpack.c.l.b16 %v100
    %v800 = vunpack.c.h.b16 %v100
    %v801 = vunpack.c.l.b16 %v101
    %v802 = vunpack.c.h.b16 %v101
    %v803 = vunpack.c.l.b16 %v102
    %v804 = vunpack.c.h.b16 %v102
    %v805 = vunpack.c.l.b16 %v103
    %v806 = vunpack.c.h.b16 %v103
    %v807 = vunpack.c.l.b16 %v104
    %v808 = vunpack.c.h.b16 %v104
    %v809 = vunpack.c.l.b16 %v105
    %v810 = vunpack.c.h.b16 %v105
    %v811 = vunpack.c.l.b16 %v106
    %v812 = vunpack.c.h.b16 %v106
    %v813 = vunpack.c.l.b16 %v107
    %v814 = vunpack.c.h.b16 %v107
    %v815 = vunpack.c.l.b16 %v108
    %v816 = vunpack.c.h.b16 %v108
    %v817 = vunpack.c.l.b16 %v109
    %v818 = vunpack.c.h.b16 %v109
    %v819 = vunpack.c.l.b16 %v110
    %v820 = vunpack.c.h.b16 %v110
    %v821 = vunpack.c.l.b16 %v111
    %v822 = vunpack.c.h.b16 %v111
    %v823 = vunpack.c.l.b16 %v112
    %v824 = vunpack.c.h.b16 %v112
    %v825 = vunpack.c.l.b16 %v113
    %v826 = vunpack.c.h.b16 %v113
    %v827 = vunpack.c.l.b16 %v114
    %v828 = vunpack.c.h.b16 %v114
    %v829 = vunpack.c.l.b16 %v115
    %v830 = vunpack.c.h.b16 %v115
    %v831 = vunpack.c.l.b16 %v116
    %v832 = vunpack.c.h.b16 %v116
    %v833 = vunpack.c.l.b16 %v117
    %v834 = vunpack.c.h.b16 %v117
    %v835 = vunpack.c.l.b16 %v118
    %v836 = vunpack.c.h.b16 %v118
    %v837 = vunpack.c.l.b16 %v119
    %v838 = vunpack.c.h.b16 %v119
    %v839 = vunpack.c.l.b16 %v120
    %v840 = vunpack.c.h.b16 %v120
    %v841 = vunpack.c.l.b16 %v121
    %v842 = vunpack.c.h.b16 %v121
    %v843 = vunpack.c.l.b16 %v122
    %v844 = vunpack.c.h.b16 %v122
    %v845 = vunpack.c.l.b16 %v123
    %v846 = vunpack.c.h.b16 %v123
    %v847 = vunpack.c.l.b16 %v124
    %v848 = vunpack.c.h.b16 %v124
    %v849 = vunpack.c.l.b16 %v125
    %v850 = vunpack.c.h.b16 %v125
    %v851 = vunpack.c.l.b16 %v126
    %v852 = vunpack.c.h.b16 %v126
    %v853 = vunpack.c.l.b16 %v127
    %v854 = vunpack.c.h.b16 %v127
    %v855 = vunpack.c.l.b16 %v128
    %v856 = vunpack.c.h.b16 %v128
    %v857 = vunpack.c.l.b16 %v129
    %v858 = vunpack.c.h.b16 %v129
    %v859 = vunpack.c.l.b16 %v130
    %v860 = vunpack.c.h.b16 %v130
    %v861 = vunpack.c.l.b16 %v131
    %v862 = vunpack.c.h.b16 %v131
    %v863 = vunpack.c.l.b16 %v132
    %v864 = vunpack.c.h.b16 %v132
    %v865 = vunpack.c.l.b16 %v133
    %v866 = vunpack.c.h.b16 %v133
    %v867 = vunpack.c.l.b16 %v134
    %v868 = vunpack.c.h.b16 %v134
    %v869 = vunpack.c.l.b16 %v135
    %v870 = vunpack.c.h.b16 %v135
    %v871 = vunpack.c.l.b16 %v136
    %v872 = vunpack.c.h.b16 %v136
    %v873 = vunpack.c.l.b16 %v137
    %v874 = vunpack.c.h.b16 %v137
    %v875 = vunpack.c.l.b16 %v138
    %v876 = vunpack.c.h.b16 %v138
    %v877 = vunpack.c.l.b16 %v139
    %v878 = vunpack.c.h.b16 %v139
    %v879 = vunpack.c.l.b16 %v140
    %v880 = vunpack.c.h.b16 %v140
    %v881 = vunpack.c.l.b16 %v141
    %v882 = vunpack.c.h.b16 %v141
    %v883 = vunpack.c.l.b16 %v142
    %v884 = vunpack.c.h.b16 %v142
    %v885 = vunpack.c.l.b16 %v143
    %v886 = vunpack.c.h.b16 %v143
    %v887 = vunpack.c.l.b16 %v144
    %v888 = vunpack.c.h.b16 %v144
    %v889 = vunpack.c.l.b16 %v145
    %v890 = vunpack.c.h.b16 %v145
    %v891 = vunpack.c.l.b16 %v146
    %v892 = vunpack.c.h.b16 %v146
    %v893 = vunpack.c.l.b16 %v147
    %v894 = vunpack.c.h.b16 %v147
    %v895 = vunpack.c.l.b16 %v148
    %v896 = vunpack.c.h.b16 %v148
    %v897 = vunpack.c.l.b16 %v149
    %v898 = vunpack.c.h.b16 %v149
    %v899 = vunpack.c.l.b16 %v150
    %v900 = vunpack.c.h.b16 %v150
    %v901 = vunpack.c.l.b16 %v151
    %v902 = vunpack.c.h.b16 %v151
    %v903 = vunpack.c.l.b16 %v152
    %v904 = vunpack.c.h.b16 %v152
    %v905 = vunpack.c.l.b16 %v153
    %v906 = vunpack.c.h.b16 %v153
    %v907 = vunpack.c.l.b16 %v154
    %v908 = vunpack.c.h.b16 %v154
    %v909 = vunpack.c.l.b16 %v155
    %v910 = vunpack.c.h.b16 %v155
    %v911 = vunpack.c.l.b16 %v156
    %v912 = vunpack.c.h.b16 %v156
    %v913 = vunpack.c.l.b16 %v157
    %v914 = vunpack.c.h.b16 %v157
    %v915 = vunpack.c.l.b16 %v158
    %v916 = vunpack.c.h.b16 %v158
    %v917 = vunpack.c.l.b16 %v159
    %v918 = vunpack.c.h.b16 %v159
    %v919 = vunpack.c.l.b16 %v160
    %v920 = vunpack.c.h.b16 %v160
    %v921 = vunpack.c.l.b16 %v161
    %v922 = vunpack.c.h.b16 %v161
    %v923 = vunpack.c.l.b16 %v162
    %v924 = vunpack.c.h.b16 %v162
    %v925 = vunpack.c.l.b16 %v163
    %v926 = vunpack.c.h.b16 %v163
    %v927 = vunpack.c.l.b16 %v164
    %v928 = vunpack.c.h.b16 %v164
    %v929 = vunpack.c.l.b16 %v165
    %v930 = vunpack.c.h.b16 %v165
    %v931 = vunpack.c.l.b16 %v166
    %v932 = vunpack.c.h.b16 %v166
    %v933 = vunpack.c.l.b16 %v167
    %v934 = vunpack.c.h.b16 %v167
    %v935 = vunpack.c.l.b16 %v168
    %v936 = vunpack.c.h.b16 %v168
    %v937 = vunpack.c.l.b16 %v169
    %v938 = vunpack.c.h.b16 %v169
    %v939 = vunpack.c.l.b16 %v170
    %v940 = vunpack.c.h.b16 %v170
    %v941 = vunpack.c.l.b16 %v171
    %v942 = vunpack.c.h.b16 %v171
    %v943 = vunpack.c.l.b16 %v172
    %v944 = vunpack.c.h.b16 %v172
    %v945 = vunpack.c.l.b16 %v173
    %v946 = vunpack.c.h.b16 %v173
    %v947 = vunpack.c.l.b16 %v174
    %v948 = vunpack.c.h.b16 %v174
    %v949 = vunpack.c.l.b16 %v175
    %v950 = vunpack.c.h.b16 %v175
    %v951 = vunpack.c.l.b16 %v176
    %v952 = vunpack.c.h.b16 %v176
    %v953 = vunpack.c.l.b16 %v177
    %v954 = vunpack.c.h.b16 %v177
    %v955 = vunpack.c.l.b16 %v178
    %v956 = vunpack.c.h.b16 %v178
    %v957 = vunpack.c.l.b16 %v179
    %v958 = vunpack.c.h.b16 %v179
    %v959 = vunpack.c.l.b16 %v180
    %v960 = vunpack.c.h.b16 %v180
    %v961 = vunpack.c.l.b16 %v181
    %v962 = vunpack.c.h.b16 %v181
    %v963 = vunpack.c.l.b16 %v182
    %v964 = vunpack.c.h.b16 %v182
    %v965 = vunpack.c.l.b16 %v183
    %v966 = vunpack.c.h.b16 %v183
    %v967 = vunpack.c.l.b16 %v184
    %v968 = vunpack.c.h.b16 %v184
    %v969 = vunpack.c.l.b16 %v185
    %v970 = vunpack.c.h.b16 %v185
    %v971 = vunpack.c.l.b16 %v186
    %v972 = vunpack.c.h.b16 %v186
    %v973 = vunpack.c.l.b16 %v187
    %v974 = vunpack.c.h.b16 %v187
    %v975 = vunpack.c.l.b16 %v188
    %v976 = vunpack.c.h.b16 %v188
    %v977 = vunpack.c.l.b16 %v189
    %v978 = vunpack.c.h.b16 %v189
    %v979 = vunpack.c.l.b16 %v190
    %v980 = vunpack.c.h.b16 %v190
    %v981 = vunpack.c.l.b16 %v191
    %v982 = vunpack.c.h.b16 %v191
    %v983 = vunpack.c.l.b16 %v192
    %v984 = vunpack.c.h.b16 %v192
    %v985 = vunpack.c.l.b16 %v193
    %v986 = vunpack.c.h.b16 %v193
    %v987 = vunpack.c.l.b16 %v194
    %v988 = vunpack.c.h.b16 %v194
    %v989 = vunpack.c.l.b16 %v195
    %v990 = vunpack.c.h.b16 %v195
    %v991 = vunpack.c.l.b16 %v196
    %v992 = vunpack.c.h.b16 %v196
    %v993 = vunpack.c.l.b16 %v197
    %v994 = vunpack.c.h.b16 %v197
    %v995 = vunpack.c.l.b16 %v198
    %v996 = vunpack.c.h.b16 %v198
    %v997 = vunpack.c.l.b16 %v199
    %v998 = vunpack.c.h.b16 %v199
    %v999 = vunpack.c.l.b16 %v200
    %v1000 = vunpack.c.h.b16 %v200
    %v1001 = vunpack.c.l.b16 %v201
    %v1002 = vunpack.c.h.b16 %v201
    %v1003 = vunpack.c.l.b16 %v202
    %v1004 = vunpack.c.h.b16 %v202
    %v1005 = vunpack.c.l.b16 %v203
    %v1006 = vunpack.c.h.b16 %v203
    %v1007 = vunpack.c.l.b16 %v204
    %v1008 = vunpack.c.h.b16 %v204
    %v1009 = vunpack.c.l.b16 %v205
    %v1010 = vunpack.c.h.b16 %v205
    %v1011 = vunpack.c.l.b16 %v206
    %v1012 = vunpack.c.h.b16 %v206
    %v1013 = vunpack.c.l.b16 %v207
    %v1014 = vunpack.c.h.b16 %v207
    %v1015 = vunpack.c.l.b16 %v208
    %v1016 = vunpack.c.h.b16 %v208
    %v1017 = vunpack.c.l.b16 %v209
    %v1018 = vunpack.c.h.b16 %v209
    %v1019 = vunpack.c.l.b16 %v210
    %v1020 = vunpack.c.h.b16 %v210
    %v1021 = vunpack.c.l.b16 %v211
    %v1022 = vunpack.c.h.b16 %v211
    %v1023 = vunpack.c.l.b16 %v212
    %v1024 = vunpack.c.h.b16 %v212
    %v1025 = vunpack.c.l.b16 %v213
    %v1026 = vunpack.c.h.b16 %v213
    %v1027 = vunpack.c.l.b16 %v214
    %v1028 = vunpack.c.h.b16 %v214
    %v1029 = vunpack.c.l.b16 %v215
    %v1030 = vunpack.c.h.b16 %v215
    %v1031 = vunpack.c.l.b16 %v216
    %v1032 = vunpack.c.h.b16 %v216
    %v1033 = vunpack.c.l.b16 %v217
    %v1034 = vunpack.c.h.b16 %v217
    %v1035 = vunpack.c.l.b16 %v218
    %v1036 = vunpack.c.h.b16 %v218
    %v1037 = vunpack.c.l.b16 %v219
    %v1038 = vunpack.c.h.b16 %v219
    %v1039 = vunpack.c.l.b16 %v220
    %v1040 = vunpack.c.h.b16 %v220
    %v1041 = vunpack.c.l.b16 %v221
    %v1042 = vunpack.c.h.b16 %v221
    %v1043 = vunpack.c.l.b16 %v222
    %v1044 = vunpack.c.h.b16 %v222
    %v1045 = vunpack.c.l.b16 %v223
    %v1046 = vunpack.c.h.b16 %v223
    %v1047 = vunpack.c.l.b16 %v224
    %v1048 = vunpack.c.h.b16 %v224
    %v1049 = vunpack.c.l.b16 %v225
    %v1050 = vunpack.c.h.b16 %v225
    %v1051 = vunpack.c.l.b16 %v226
    %v1052 = vunpack.c.h.b16 %v226
    %v1053 = vunpack.c.l.b16 %v227
    %v1054 = vunpack.c.h.b16 %v227
    %v1055 = vunpack.c.l.b16 %v228
    %v1056 = vunpack.c.h.b16 %v228
    %v1057 = vunpack.c.l.b16 %v229
    %v1058 = vunpack.c.h.b16 %v229
    %v1059 = vunpack.c.l.b16 %v230
    %v1060 = vunpack.c.h.b16 %v230
    %v1061 = vunpack.c.l.b16 %v231
    %v1062 = vunpack.c.h.b16 %v231
    %v1063 = vunpack.c.l.b16 %v232
    %v1064 = vunpack.c.h.b16 %v232
    %v1065 = vunpack.c.l.b16 %v233
    %v1066 = vunpack.c.h.b16 %v233
    %v1067 = vunpack.c.l.b16 %v234
    %v1068 = vunpack.c.h.b16 %v234
    %v1069 = vunpack.c.l.b16 %v235
    %v1070 = vunpack.c.h.b16 %v235
    %v1071 = vunpack.c.l.b16 %v236
    %v1072 = vunpack.c.h.b16 %v236
    %v1073 = vunpack.c.l.b16 %v237
    %v1074 = vunpack.c.h.b16 %v237
    %v1075 = vunpack.c.l.b16 %v238
    %v1076 = vunpack.c.h.b16 %v238
    %v1077 = vunpack.c.l.b16 %v239
    %v1078 = vunpack.c.h.b16 %v239
    %v1079 = vunpack.c.l.b16 %v240
    %v1080 = vunpack.c.h.b16 %v240
    %v1081 = vunpack.c.l.b16 %v241
    %v1082 = vunpack.c.h.b16 %v241
    %v1083 = vunpack.c.l.b16 %v242
    %v1084 = vunpack.c.h.b16 %v242
    %v1085 = vunpack.c.l.b16 %v243
    %v1086 = vunpack.c.h.b16 %v243
    %v1087 = vunpack.c.l.b16 %v244
    %v1088 = vunpack.c.h.b16 %v244
    %v1089 = vunpack.c.l.b16 %v245
    %v1090 = vunpack.c.h.b16 %v245
    %v1091 = vunpack.c.l.b16 %v246
    %v1092 = vunpack.c.h.b16 %v246
    %v1093 = vunpack.c.l.b16 %v247
    %v1094 = vunpack.c.h.b16 %v247
    %v1095 = vunpack.c.l.b16 %v248
    %v1096 = vunpack.c.h.b16 %v248
    %v1097 = vunpack.c.l.b16 %v249
    %v1098 = vunpack.c.h.b16 %v249
    %v1099 = vunpack.c.l.b16 %v250
    %v1100 = vunpack.c.h.b16 %v250
    %v1101 = vunpack.c.l.b16 %v251
    %v1102 = vunpack.c.h.b16 %v251
    %v1103 = vunpack.c.l.b16 %v252
    %v1104 = vunpack.c.h.b16 %v252
    %v1105 = vunpack.c.l.b16 %v253
    %v1106 = vunpack.c.h.b16 %v253
    %v1107 = vunpack.c.l.b16 %v254
    %v1108 = vunpack.c.h.b16 %v254
    %v1109 = vunpack.c.l.b16 %v255
    %v1110 = vunpack.c.h.b16 %v255
    %v1111 = vunpack.c.l.b16 %v256
    %v1112 = vunpack.c.h.b16 %v256
    %v1113 = vunpack.c.l.b16 %v257
    %v1114 = vunpack.c.h.b16 %v257
    %v1115 = vunpack.c.l.b16 %v258
    %v1116 = vunpack.c.h.b16 %v258
    %v1117 = vunpack.c.l.b16 %v259
    %v1118 = vunpack.c.h.b16 %v259
    %v1119 = vunpack.c.l.b16 %v260
    %v1120 = vunpack.c.h.b16 %v260
    %v1121 = vunpack.c.l.b16 %v261
    %v1122 = vunpack.c.h.b16 %v261
    %v1123 = vunpack.c.l.b16 %v262
    %v1124 = vunpack.c.h.b16 %v262
    %v1125 = vunpack.c.l.b16 %v263
    %v1126 = vunpack.c.h.b16 %v263
    %v1127 = vunpack.c.l.b16 %v264
    %v1128 = vunpack.c.h.b16 %v264
    %v1129 = vunpack.c.l.b16 %v265
    %v1130 = vunpack.c.h.b16 %v265
    %v1131 = vunpack.c.l.b16 %v266
    %v1132 = vunpack.c.h.b16 %v266
    %v1133 = vunpack.c.l.b16 %v267
    %v1134 = vunpack.c.h.b16 %v267
    %v1135 = vunpack.c.l.b16 %v268
    %v1136 = vunpack.c.h.b16 %v268
    %v1137 = vunpack.c.l.b16 %v269
    %v1138 = vunpack.c.h.b16 %v269
    %v1139 = vunpack.c.l.b16 %v270
    %v1140 = vunpack.c.h.b16 %v270
    %v1141 = vunpack.c.l.b16 %v271
    %v1142 = vunpack.c.h.b16 %v271
    %v1143 = vunpack.c.l.b16 %v272
    %v1144 = vunpack.c.h.b16 %v272
    %v1145 = vunpack.c.l.b16 %v273
    %v1146 = vunpack.c.h.b16 %v273
    %v1147 = vunpack.c.l.b16 %v274
    %v1148 = vunpack.c.h.b16 %v274
    %v1149 = vunpack.c.l.b16 %v275
    %v1150 = vunpack.c.h.b16 %v275
    %v1151 = vunpack.c.l.b16 %v276
    %v1152 = vunpack.c.h.b16 %v276
    %v1153 = vunpack.c.l.b16 %v277
    %v1154 = vunpack.c.h.b16 %v277
    %v1155 = vunpack.c.l.b16 %v278
    %v1156 = vunpack.c.h.b16 %v278
    %v1157 = vunpack.c.l.b16 %v279
    %v1158 = vunpack.c.h.b16 %v279
    %v1159 = vunpack.c.l.b16 %v280
    %v1160 = vunpack.c.h.b16 %v280
    %v1161 = vunpack.c.l.b16 %v281
    %v1162 = vunpack.c.h.b16 %v281
    %v1163 = vunpack.c.l.b16 %v282
    %v1164 = vunpack.c.h.b16 %v282
    %v1165 = vunpack.c.l.b16 %v283
    %v1166 = vunpack.c.h.b16 %v283
    %v1167 = vunpack.c.l.b16 %v284
    %v1168 = vunpack.c.h.b16 %v284
    %v1169 = vpack.c.b16 %v659, %v657
    %v1170 = vpack.c.b16 %v660, %v658
    %v1171 = vpack.c.b16 %v663, %v661
    %v1172 = vpack.c.b16 %v664, %v662
    %v1173 = vpack.c.b16 %v667, %v665
    %v1174 = vpack.c.b16 %v668, %v666
    %v1175 = vpack.c.b16 %v671, %v669
    %v1176 = vpack.c.b16 %v672, %v670
    %v1177 = vpack.c.b16 %v675, %v673
    %v1178 = vpack.c.b16 %v676, %v674
    %v1179 = vpack.c.b16 %v679, %v677
    %v1180 = vpack.c.b16 %v680, %v678
    %v1181 = vpack.c.b16 %v683, %v681
    %v1182 = vpack.c.b16 %v684, %v682
    %v1183 = vpack.c.b16 %v687, %v685
    %v1184 = vpack.c.b16 %v688, %v686
    %v1185 = vpack.c.b16 %v691, %v689
    %v1186 = vpack.c.b16 %v692, %v690
    %v1187 = vpack.c.b16 %v695, %v693
    %v1188 = vpack.c.b16 %v696, %v694
    %v1189 = vpack.c.b16 %v699, %v697
    %v1190 = vpack.c.b16 %v700, %v698
    %v1191 = vpack.c.b16 %v703, %v701
    %v1192 = vpack.c.b16 %v704, %v702
    %v1193 = vpack.c.b16 %v707, %v705
    %v1194 = vpack.c.b16 %v708, %v706
    %v1195 = vpack.c.b16 %v711, %v709
    %v1196 = vpack.c.b16 %v712, %v710
    %v1197 = vpack.c.b16 %v715, %v713
    %v1198 = vpack.c.b16 %v716, %v714
    %v1199 = vpack.c.b16 %v719, %v717
    %v1200 = vpack.c.b16 %v720, %v718
    %v1201 = vpack.c.b16 %v723, %v721
    %v1202 = vpack.c.b16 %v724, %v722
    %v1203 = vpack.c.b16 %v727, %v725
    %v1204 = vpack.c.b16 %v728, %v726
    %v1205 = vpack.c.b16 %v731, %v729
    %v1206 = vpack.c.b16 %v732, %v730
    %v1207 = vpack.c.b16 %v735, %v733
    %v1208 = vpack.c.b16 %v736, %v734
    %v1209 = vpack.c.b16 %v739, %v737
    %v1210 = vpack.c.b16 %v740, %v738
    %v1211 = vpack.c.b16 %v743, %v741
    %v1212 = vpack.c.b16 %v744, %v742
    %v1213 = vpack.c.b16 %v747, %v745
    %v1214 = vpack.c.b16 %v748, %v746
    %v1215 = vpack.c.b16 %v751, %v749
    %v1216 = vpack.c.b16 %v752, %v750
    %v1217 = vpack.c.b16 %v755, %v753
    %v1218 = vpack.c.b16 %v756, %v754
    %v1219 = vpack.c.b16 %v759, %v757
    %v1220 = vpack.c.b16 %v760, %v758
    %v1221 = vpack.c.b16 %v763, %v761
    %v1222 = vpack.c.b16 %v764, %v762
    %v1223 = vpack.c.b16 %v767, %v765
    %v1224 = vpack.c.b16 %v768, %v766
    %v1225 = vpack.c.b16 %v771, %v769
    %v1226 = vpack.c.b16 %v772, %v770
    %v1227 = vpack.c.b16 %v775, %v773
    %v1228 = vpack.c.b16 %v776, %v774
    %v1229 = vpack.c.b16 %v779, %v777
    %v1230 = vpack.c.b16 %v780, %v778
    %v1231 = vpack.c.b16 %v783, %v781
    %v1232 = vpack.c.b16 %v784, %v782
    %v1233 = vpack.c.b16 %v787, %v785
    %v1234 = vpack.c.b16 %v788, %v786
    %v1235 = vpack.c.b16 %v791, %v789
    %v1236 = vpack.c.b16 %v792, %v790
    %v1237 = vpack.c.b16 %v795, %v793
    %v1238 = vpack.c.b16 %v796, %v794
    %v1239 = vpack.c.b16 %v799, %v797
    %v1240 = vpack.c.b16 %v800, %v798
    %v1241 = vpack.c.b16 %v803, %v801
    %v1242 = vpack.c.b16 %v804, %v802
    %v1243 = vpack.c.b16 %v807, %v805
    %v1244 = vpack.c.b16 %v808, %v806
    %v1245 = vpack.c.b16 %v811, %v809
    %v1246 = vpack.c.b16 %v812, %v810
    %v1247 = vpack.c.b16 %v815, %v813
    %v1248 = vpack.c.b16 %v816, %v814
    %v1249 = vpack.c.b16 %v819, %v817
    %v1250 = vpack.c.b16 %v820, %v818
    %v1251 = vpack.c.b16 %v823, %v821
    %v1252 = vpack.c.b16 %v824, %v822
    %v1253 = vpack.c.b16 %v827, %v825
    %v1254 = vpack.c.b16 %v828, %v826
    %v1255 = vpack.c.b16 %v831, %v829
    %v1256 = vpack.c.b16 %v832, %v830
    %v1257 = vpack.c.b16 %v835, %v833
    %v1258 = vpack.c.b16 %v836, %v834
    %v1259 = vpack.c.b16 %v839, %v837
    %v1260 = vpack.c.b16 %v840, %v838
    %v1261 = vpack.c.b16 %v843, %v841
    %v1262 = vpack.c.b16 %v844, %v842
    %v1263 = vpack.c.b16 %v847, %v845
    %v1264 = vpack.c.b16 %v848, %v846
    %v1265 = vpack.c.b16 %v851, %v849
    %v1266 = vpack.c.b16 %v852, %v850
    %v1267 = vpack.c.b16 %v855, %v853
    %v1268 = vpack.c.b16 %v856, %v854
    %v1269 = vpack.c.b16 %v859, %v857
    %v1270 = vpack.c.b16 %v860, %v858
    %v1271 = vpack.c.b16 %v863, %v861
    %v1272 = vpack.c.b16 %v864, %v862
    %v1273 = vpack.c.b16 %v867, %v865
    %v1274 = vpack.c.b16 %v868, %v866
    %v1275 = vpack.c.b16 %v871, %v869
    %v1276 = vpack.c.b16 %v872, %v870
    %v1277 = vpack.c.b16 %v875, %v873
    %v1278 = vpack.c.b16 %v876, %v874
    %v1279 = vpack.c.b16 %v879, %v877
    %v1280 = vpack.c.b16 %v880, %v878
    %v1281 = vpack.c.b16 %v883, %v881
    %v1282 = vpack.c.b16 %v884, %v882
    %v1283 = vpack.c.b16 %v887, %v885
    %v1284 = vpack.c.b16 %v888, %v886
    %v1285 = vpack.c.b16 %v891, %v889
    %v1286 = vpack.c.b16 %v892, %v890
    %v1287 = vpack.c.b16 %v895, %v893
    %v1288 = vpack.c.b16 %v896, %v894
    %v1289 = vpack.c.b16 %v899, %v897
    %v1290 = vpack.c.b16 %v900, %v898
    %v1291 = vpack.c.b16 %v903, %v901
    %v1292 = vpack.c.b16 %v904, %v902
    %v1293 = vpack.c.b16 %v907, %v905
    %v1294 = vpack.c.b16 %v908, %v906
    %v1295 = vpack.c.b16 %v911, %v909
    %v1296 = vpack.c.b16 %v912, %v910
    %v1297 = vpack.c.b16 %v915, %v913
    %v1298 = vpack.c.b16 %v916, %v914
    %v1299 = vpack.c.b16 %v919, %v917
    %v1300 = vpack.c.b16 %v920, %v918
    %v1301 = vpack.c.b16 %v923, %v921
    %v1302 = vpack.c.b16 %v924, %v922
    %v1303 = vpack.c.b16 %v927, %v925
    %v1304 = vpack.c.b16 %v928, %v926
    %v1305 = vpack.c.b16 %v931, %v929
    %v1306 = vpack.c.b16 %v932, %v930
    %v1307 = vpack.c.b16 %v935, %v933
    %v1308 = vpack.c.b16 %v936, %v934
    %v1309 = vpack.c.b16 %v939, %v937
    %v1310 = vpack.c.b16 %v940, %v938
    %v1311 = vpack.c.b16 %v943, %v941
    %v1312 = vpack.c.b16 %v944, %v942
    %v1313 = vpack.c.b16 %v947, %v945
    %v1314 = vpack.c.b16 %v948, %v946
    %v1315 = vpack.c.b16 %v951, %v949
    %v1316 = vpack.c.b16 %v952, %v950
    %v1317 = vpack.c.b16 %v955, %v953
    %v1318 = vpack.c.b16 %v956, %v954
    %v1319 = vpack.c.b16 %v959, %v957
    %v1320 = vpack.c.b16 %v960, %v958
    %v1321 = vpack.c.b16 %v963, %v961
    %v1322 = vpack.c.b16 %v964, %v962
    %v1323 = vpack.c.b16 %v967, %v965
    %v1324 = vpack.c.b16 %v968, %v966
    %v1325 = vpack.c.b16 %v971, %v969
    %v1326 = vpack.c.b16 %v972, %v970
    %v1327 = vpack.c.b16 %v975, %v973
    %v1328 = vpack.c.b16 %v976, %v974
    %v1329 = vpack.c.b16 %v979, %v977
    %v1330 = vpack.c.b16 %v980, %v978
    %v1331 = vpack.c.b16 %v983, %v981
    %v1332 = vpack.c.b16 %v984, %v982
    %v1333 = vpack.c.b16 %v987, %v985
    %v1334 = vpack.c.b16 %v988, %v986
    %v1335 = vpack.c.b16 %v991, %v989
    %v1336 = vpack.c.b16 %v992, %v990
    %v1337 = vpack.c.b16 %v995, %v993
    %v1338 = vpack.c.b16 %v996, %v994
    %v1339 = vpack.c.b16 %v999, %v997
    %v1340 = vpack.c.b16 %v1000, %v998
    %v1341 = vpack.c.b16 %v1003, %v1001
    %v1342 = vpack.c.b16 %v1004, %v1002
    %v1343 = vpack.c.b16 %v1007, %v1005
    %v1344 = vpack.c.b16 %v1008, %v1006
    %v1345 = vpack.c.b16 %v1011, %v1009
    %v1346 = vpack.c.b16 %v1012, %v1010
    %v1347 = vpack.c.b16 %v1015, %v1013
    %v1348 = vpack.c.b16 %v1016, %v1014
    %v1349 = vpack.c.b16 %v1019, %v1017
    %v1350 = vpack.c.b16 %v1020, %v1018
    %v1351 = vpack.c.b16 %v1023, %v1021
    %v1352 = vpack.c.b16 %v1024, %v1022
    %v1353 = vpack.c.b16 %v1027, %v1025
    %v1354 = vpack.c.b16 %v1028, %v1026
    %v1355 = vpack.c.b16 %v1031, %v1029
    %v1356 = vpack.c.b16 %v1032, %v1030
    %v1357 = vpack.c.b16 %v1035, %v1033
    %v1358 = vpack.c.b16 %v1036, %v1034
    %v1359 = vpack.c.b16 %v1039, %v1037
    %v1360 = vpack.c.b16 %v1040, %v1038
    %v1361 = vpack.c.b16 %v1043, %v1041
    %v1362 = vpack.c.b16 %v1044, %v1042
    %v1363 = vpack.c.b16 %v1047, %v1045
    %v1364 = vpack.c.b16 %v1048, %v1046
    %v1365 = vpack.c.b16 %v1051, %v1049
    %v1366 = vpack.c.b16 %v1052, %v1050
    %v1367 = vpack.c.b16 %v1055, %v1053
    %v1368 = vpack.c.b16 %v1056, %v1054
    %v1369 = vpack.c.b16 %v1059, %v1057
    %v1370 = vpack.c.b16 %v1060, %v1058
    %v1371 = vpack.c.b16 %v1063, %v1061
    %v1372 = vpack.c.b16 %v1064, %v1062
    %v1373 = vpack.c.b16 %v1067, %v1065
    %v1374 = vpack.c.b16 %v1068, %v1066
    %v1375 = vpack.c.b16 %v1071, %v1069
    %v1376 = vpack.c.b16 %v1072, %v1070
    %v1377 = vpack.c.b16 %v1075, %v1073
    %v1378 = vpack.c.b16 %v1076, %v1074
    %v1379 = vpack.c.b16 %v1079, %v1077
    %v1380 = vpack.c.b16 %v1080, %v1078
    %v1381 = vpack.c.b16 %v1083, %v1081
    %v1382 = vpack.c.b16 %v1084, %v1082
    %v1383 = vpack.c.b16 %v1087, %v1085
    %v1384 = vpack.c.b16 %v1088, %v1086
    %v1385 = vpack.c.b16 %v1091, %v1089
    %v1386 = vpack.c.b16 %v1092, %v1090
    %v1387 = vpack.c.b16 %v1095, %v1093
    %v1388 = vpack.c.b16 %v1096, %v1094
    %v1389 = vpack.c.b16 %v1099, %v1097
    %v1390 = vpack.c.b16 %v1100, %v1098
    %v1391 = vpack.c.b16 %v1103, %v1101
    %v1392 = vpack.c.b16 %v1104, %v1102
    %v1393 = vpack.c.b16 %v1107, %v1105
    %v1394 = vpack.c.b16 %v1108, %v1106
    %v1395 = vpack.c.b16 %v1111, %v1109
    %v1396 = vpack.c.b16 %v1112, %v1110
    %v1397 = vpack.c.b16 %v1115, %v1113
    %v1398 = vpack.c.b16 %v1116, %v1114
    %v1399 = vpack.c.b16 %v1119, %v1117
    %v1400 = vpack.c.b16 %v1120, %v1118
    %v1401 = vpack.c.b16 %v1123, %v1121
    %v1402 = vpack.c.b16 %v1124, %v1122
    %v1403 = vpack.c.b16 %v1127, %v1125
    %v1404 = vpack.c.b16 %v1128, %v1126
    %v1405 = vpack.c.b16 %v1131, %v1129
    %v1406 = vpack.c.b16 %v1132, %v1130
    %v1407 = vpack.c.b16 %v1135, %v1133
    %v1408 = vpack.c.b16 %v1136, %v1134
    %v1409 = vpack.c.b16 %v1139, %v1137
    %v1410 = vpack.c.b16 %v1140, %v1138
    %v1411 = vpack.c.b16 %v1143, %v1141
    %v1412 = vpack.c.b16 %v1144, %v1142
    %v1413 = vpack.c.b16 %v1147, %v1145
    %v1414 = vpack.c.b16 %v1148, %v1146
    %v1415 = vpack.c.b16 %v1151, %v1149
    %v1416 = vpack.c.b16 %v1152, %v1150
    %v1417 = vpack.c.b16 %v1155, %v1153
    %v1418 = vpack.c.b16 %v1156, %v1154
    %v1419 = vpack.c.b16 %v1159, %v1157
    %v1420 = vpack.c.b16 %v1160, %v1158
    %v1421 = vpack.c.b16 %v1163, %v1161
    %v1422 = vpack.c.b16 %v1164, %v1162
    %v1423 = vpack.c.b16 %v1167, %v1165
    %v1424 = vpack.c.b16 %v1168, %v1166
    %1681 = vmatprep.subr.bf16.mxu0 %v1170
    %1682 = vmatpush1.bf16.msra.mxu0 %v1169
    %1683 = vmatprep.subr.bf16.mxu0 %v1172
    %1684 = vmatpush1.bf16.msra.mxu0 %v1171
    %1685 = vmatprep.subr.bf16.mxu0 %v1174
    %1686 = vmatpush1.bf16.msra.mxu0 %v1173
    %1687 = vmatprep.subr.bf16.mxu0 %v1176
    %1688 = vmatpush1.bf16.msra.mxu0 %v1175
    %1689 = vmatprep.subr.bf16.mxu0 %v1178
    %1690 = vmatpush1.bf16.msra.mxu0 %v1177
    %1691 = vmatprep.subr.bf16.mxu0 %v1180
    %1692 = vmatpush1.bf16.msra.mxu0 %v1179
    %1693 = vmatprep.subr.bf16.mxu0 %v1182
    %1694 = vmatpush1.bf16.msra.mxu0 %v1181
    %1695 = vmatprep.subr.bf16.mxu0 %v1184
    %1696 = vmatpush1.bf16.msra.mxu0 %v1183
    %1697 = vmatprep.subr.bf16.mxu0 %v1186
    %1698 = vmatpush1.bf16.msra.mxu0 %v1185
    %1699 = vmatprep.subr.bf16.mxu0 %v1188
    %1700 = vmatpush1.bf16.msra.mxu0 %v1187
    %1701 = vmatprep.subr.bf16.mxu0 %v1190
    %1702 = vmatpush1.bf16.msra.mxu0 %v1189
    %1703 = vmatprep.subr.bf16.mxu0 %v1192
    %1704 = vmatpush1.bf16.msra.mxu0 %v1191
    %1705 = vmatprep.subr.bf16.mxu0 %v1194
    %1706 = vmatpush1.bf16.msra.mxu0 %v1193
    %1707 = vmatprep.subr.bf16.mxu0 %v1196
    %1708 = vmatpush1.bf16.msra.mxu0 %v1195
    %1709 = vmatprep.subr.bf16.mxu0 %v1198
    %1710 = vmatpush1.bf16.msra.mxu0 %v1197
    %1711 = vmatprep.subr.bf16.mxu0 %v1200
    %1712 = vmatpush1.bf16.msra.mxu0 %v1199
    %1713 = vmatprep.mubr.bf16.mxu0 %v324
    %1714 = vmatmul.mubr.bf16.gmra.mrb[0].mxu0 %v310
    %v1715 = vpop.f32.mrb[0].mxu0
    %v1716 = vadd.f32 0.0, %v1715
    %v1717 = vpop.f32.mrb[0].mxu0
    %v1718 = vadd.f32 0.0, %v1717
    %v1719 = vpop.f32.mrb[0].mxu0
    %v1720 = vpop.f32.mrb[0].mxu0
    %1721 = vdwg.mxu0
    %1722 = vmatprep.subr.bf16.mxu0 %v1202
    %1723 = vmatpush1.bf16.msra.mxu0 %v1201
    %1724 = vmatprep.subr.bf16.mxu0 %v1204
    %1725 = vmatpush1.bf16.msra.mxu0 %v1203
    %1726 = vmatprep.subr.bf16.mxu0 %v1206
    %1727 = vmatpush1.bf16.msra.mxu0 %v1205
    %1728 = vmatprep.subr.bf16.mxu0 %v1208
    %1729 = vmatpush1.bf16.msra.mxu0 %v1207
    %1730 = vmatprep.subr.bf16.mxu0 %v1210
    %1731 = vmatpush1.bf16.msra.mxu0 %v1209
    %1732 = vmatprep.subr.bf16.mxu0 %v1212
    %1733 = vmatpush1.bf16.msra.mxu0 %v1211
    %1734 = vmatprep.subr.bf16.mxu0 %v1214
    %1735 = vmatpush1.bf16.msra.mxu0 %v1213
    %1736 = vmatprep.subr.bf16.mxu0 %v1216
    %1737 = vmatpush1.bf16.msra.mxu0 %v1215
    %1738 = vmatprep.subr.bf16.mxu0 %v1218
    %1739 = vmatpush1.bf16.msra.mxu0 %v1217
    %1740 = vmatprep.subr.bf16.mxu0 %v1220
    %1741 = vmatpush1.bf16.msra.mxu0 %v1219
    %1742 = vmatprep.subr.bf16.mxu0 %v1222
    %1743 = vmatpush1.bf16.msra.mxu0 %v1221
    %1744 = vmatprep.subr.bf16.mxu0 %v1224
    %1745 = vmatpush1.bf16.msra.mxu0 %v1223
    %1746 = vmatprep.subr.bf16.mxu0 %v1226
    %1747 = vmatpush1.bf16.msra.mxu0 %v1225
    %1748 = vmatprep.subr.bf16.mxu0 %v1228
    %1749 = vmatpush1.bf16.msra.mxu0 %v1227
    %1750 = vmatprep.subr.bf16.mxu0 %v1230
    %1751 = vmatpush1.bf16.msra.mxu0 %v1229
    %1752 = vmatprep.subr.bf16.mxu0 %v1232
    %1753 = vmatpush1.bf16.msra.mxu0 %v1231
    %1754 = vmatprep.mubr.bf16.mxu0 %v334
    %1755 = vmatmul.mubr.bf16.gmra.mrb[0].mxu0 %v332
    %v1756 = vpop.f32.mrb[0].mxu0
    %v1757 = vadd.f32 %v1716, %v1756
    %v1758 = vpop.f32.mrb[0].mxu0
    %v1759 = vadd.f32 %v1718, %v1758
    %v1760 = vpop.f32.mrb[0].mxu0
    %v1761 = vpop.f32.mrb[0].mxu0
    %1762 = vdwg.mxu0
    %1763 = vmatprep.subr.bf16.mxu0 %v1234
    %1764 = vmatpush1.bf16.msra.mxu0 %v1233
    %1765 = vmatprep.subr.bf16.mxu0 %v1236
    %1766 = vmatpush1.bf16.msra.mxu0 %v1235
    %1767 = vmatprep.subr.bf16.mxu0 %v1238
    %1768 = vmatpush1.bf16.msra.mxu0 %v1237
    %1769 = vmatprep.subr.bf16.mxu0 %v1240
    %1770 = vmatpush1.bf16.msra.mxu0 %v1239
    %1771 = vmatprep.subr.bf16.mxu0 %v1242
    %1772 = vmatpush1.bf16.msra.mxu0 %v1241
    %1773 = vmatprep.subr.bf16.mxu0 %v1244
    %1774 = vmatpush1.bf16.msra.mxu0 %v1243
    %1775 = vmatprep.subr.bf16.mxu0 %v1246
    %1776 = vmatpush1.bf16.msra.mxu0 %v1245
    %1777 = vmatprep.subr.bf16.mxu0 %v1248
    %1778 = vmatpush1.bf16.msra.mxu0 %v1247
    %1779 = vmatprep.subr.bf16.mxu0 %v1250
    %1780 = vmatpush1.bf16.msra.mxu0 %v1249
    %1781 = vmatprep.subr.bf16.mxu0 %v1252
    %1782 = vmatpush1.bf16.msra.mxu0 %v1251
    %1783 = vmatprep.subr.bf16.mxu0 %v1254
    %1784 = vmatpush1.bf16.msra.mxu0 %v1253
    %1785 = vmatprep.subr.bf16.mxu0 %v1256
    %1786 = vmatpush1.bf16.msra.mxu0 %v1255
    %1787 = vmatprep.subr.bf16.mxu0 %v1258
    %1788 = vmatpush1.bf16.msra.mxu0 %v1257
    %1789 = vmatprep.subr.bf16.mxu0 %v1260
    %1790 = vmatpush1.bf16.msra.mxu0 %v1259
    %1791 = vmatprep.subr.bf16.mxu0 %v1262
    %1792 = vmatpush1.bf16.msra.mxu0 %v1261
    %1793 = vmatprep.subr.bf16.mxu0 %v1264
    %1794 = vmatpush1.bf16.msra.mxu0 %v1263
    %1795 = vmatprep.mubr.bf16.mxu0 %v331
    %1796 = vmatmul.mubr.bf16.gmra.mrb[0].mxu0 %v317
    %v1797 = vpop.f32.mrb[0].mxu0
    %v1798 = vadd.f32 %v1757, %v1797
    %v1799 = vpop.f32.mrb[0].mxu0
    %v1800 = vadd.f32 %v1759, %v1799
    %v1801 = vpop.f32.mrb[0].mxu0
    %v1802 = vpop.f32.mrb[0].mxu0
    %1803 = vdwg.mxu0
    %1804 = vmatprep.subr.bf16.mxu0 %v1266
    %1805 = vmatpush1.bf16.msra.mxu0 %v1265
    %1806 = vmatprep.subr.bf16.mxu0 %v1268
    %1807 = vmatpush1.bf16.msra.mxu0 %v1267
    %1808 = vmatprep.subr.bf16.mxu0 %v1270
    %1809 = vmatpush1.bf16.msra.mxu0 %v1269
    %1810 = vmatprep.subr.bf16.mxu0 %v1272
    %1811 = vmatpush1.bf16.msra.mxu0 %v1271
    %1812 = vmatprep.subr.bf16.mxu0 %v1274
    %1813 = vmatpush1.bf16.msra.mxu0 %v1273
    %1814 = vmatprep.subr.bf16.mxu0 %v1276
    %1815 = vmatpush1.bf16.msra.mxu0 %v1275
    %1816 = vmatprep.subr.bf16.mxu0 %v1278
    %1817 = vmatpush1.bf16.msra.mxu0 %v1277
    %1818 = vmatprep.subr.bf16.mxu0 %v1280
    %1819 = vmatpush1.bf16.msra.mxu0 %v1279
    %1820 = vmatprep.subr.bf16.mxu0 %v1282
    %1821 = vmatpush1.bf16.msra.mxu0 %v1281
    %1822 = vmatprep.subr.bf16.mxu0 %v1284
    %1823 = vmatpush1.bf16.msra.mxu0 %v1283
    %1824 = vmatprep.subr.bf16.mxu0 %v1286
    %1825 = vmatpush1.bf16.msra.mxu0 %v1285
    %1826 = vmatprep.subr.bf16.mxu0 %v1288
    %1827 = vmatpush1.bf16.msra.mxu0 %v1287
    %1828 = vmatprep.subr.bf16.mxu0 %v1290
    %1829 = vmatpush1.bf16.msra.mxu0 %v1289
    %1830 = vmatprep.subr.bf16.mxu0 %v1292
    %1831 = vmatpush1.bf16.msra.mxu0 %v1291
    %1832 = vmatprep.subr.bf16.mxu0 %v1294
    %1833 = vmatpush1.bf16.msra.mxu0 %v1293
    %1834 = vmatprep.subr.bf16.mxu0 %v1296
    %1835 = vmatpush1.bf16.msra.mxu0 %v1295
    %1836 = vmatprep.mubr.bf16.mxu0 %v335
    %1837 = vmatmul.mubr.bf16.gmra.mrb[0].mxu0 %v333
    %v1838 = vpop.f32.mrb[0].mxu0
    %v1839 = vadd.f32 %v1798, %v1838
    %v1840 = vpop.f32.mrb[0].mxu0
    %v1841 = vadd.f32 %v1800, %v1840
    %v1842 = vpop.f32.mrb[0].mxu0
    %v1843 = vpop.f32.mrb[0].mxu0
    %1844 = vdwg.mxu0
    %1845 = vmatprep.subr.bf16.mxu0 %v1298
    %1846 = vmatpush1.bf16.msra.mxu0 %v1297
    %1847 = vmatprep.subr.bf16.mxu0 %v1300
    %1848 = vmatpush1.bf16.msra.mxu0 %v1299
    %1849 = vmatprep.subr.bf16.mxu0 %v1302
    %1850 = vmatpush1.bf16.msra.mxu0 %v1301
    %1851 = vmatprep.subr.bf16.mxu0 %v1304
    %1852 = vmatpush1.bf16.msra.mxu0 %v1303
    %1853 = vmatprep.subr.bf16.mxu0 %v1306
    %1854 = vmatpush1.bf16.msra.mxu0 %v1305
    %1855 = vmatprep.subr.bf16.mxu0 %v1308
    %1856 = vmatpush1.bf16.msra.mxu0 %v1307
    %1857 = vmatprep.subr.bf16.mxu0 %v1310
    %1858 = vmatpush1.bf16.msra.mxu0 %v1309
    %1859 = vmatprep.subr.bf16.mxu0 %v1312
    %1860 = vmatpush1.bf16.msra.mxu0 %v1311
    %1861 = vmatprep.subr.bf16.mxu0 %v1314
    %1862 = vmatpush1.bf16.msra.mxu0 %v1313
    %1863 = vmatprep.subr.bf16.mxu0 %v1316
    %1864 = vmatpush1.bf16.msra.mxu0 %v1315
    %1865 = vmatprep.subr.bf16.mxu0 %v1318
    %1866 = vmatpush1.bf16.msra.mxu0 %v1317
    %1867 = vmatprep.subr.bf16.mxu0 %v1320
    %1868 = vmatpush1.bf16.msra.mxu0 %v1319
    %1869 = vmatprep.subr.bf16.mxu0 %v1322
    %1870 = vmatpush1.bf16.msra.mxu0 %v1321
    %1871 = vmatprep.subr.bf16.mxu0 %v1324
    %1872 = vmatpush1.bf16.msra.mxu0 %v1323
    %1873 = vmatprep.subr.bf16.mxu0 %v1326
    %1874 = vmatpush1.bf16.msra.mxu0 %v1325
    %1875 = vmatprep.subr.bf16.mxu0 %v1328
    %1876 = vmatpush1.bf16.msra.mxu0 %v1327
    %1877 = vmatprep.mubr.bf16.mxu0 %v373
    %1878 = vmatmul.mubr.bf16.gmra.mrb[0].mxu0 %v359
    %v1879 = vpop.f32.mrb[0].mxu0
    %v1880 = vadd.f32 %v1839, %v1879
    %v1881 = vpop.f32.mrb[0].mxu0
    %v1882 = vadd.f32 %v1841, %v1881
    %v1883 = vpop.f32.mrb[0].mxu0
    %v1884 = vpop.f32.mrb[0].mxu0
    %1885 = vdwg.mxu0
    %1886 = vmatprep.subr.bf16.mxu0 %v1330
    %1887 = vmatpush1.bf16.msra.mxu0 %v1329
    %1888 = vmatprep.subr.bf16.mxu0 %v1332
    %1889 = vmatpush1.bf16.msra.mxu0 %v1331
    %1890 = vmatprep.subr.bf16.mxu0 %v1334
    %1891 = vmatpush1.bf16.msra.mxu0 %v1333
    %1892 = vmatprep.subr.bf16.mxu0 %v1336
    %1893 = vmatpush1.bf16.msra.mxu0 %v1335
    %1894 = vmatprep.subr.bf16.mxu0 %v1338
    %1895 = vmatpush1.bf16.msra.mxu0 %v1337
    %1896 = vmatprep.subr.bf16.mxu0 %v1340
    %1897 = vmatpush1.bf16.msra.mxu0 %v1339
    %1898 = vmatprep.subr.bf16.mxu0 %v1342
    %1899 = vmatpush1.bf16.msra.mxu0 %v1341
    %1900 = vmatprep.subr.bf16.mxu0 %v1344
    %1901 = vmatpush1.bf16.msra.mxu0 %v1343
    %1902 = vmatprep.subr.bf16.mxu0 %v1346
    %1903 = vmatpush1.bf16.msra.mxu0 %v1345
    %1904 = vmatprep.subr.bf16.mxu0 %v1348
    %1905 = vmatpush1.bf16.msra.mxu0 %v1347
    %1906 = vmatprep.subr.bf16.mxu0 %v1350
    %1907 = vmatpush1.bf16.msra.mxu0 %v1349
    %1908 = vmatprep.subr.bf16.mxu0 %v1352
    %1909 = vmatpush1.bf16.msra.mxu0 %v1351
    %1910 = vmatprep.subr.bf16.mxu0 %v1354
    %1911 = vmatpush1.bf16.msra.mxu0 %v1353
    %1912 = vmatprep.subr.bf16.mxu0 %v1356
    %1913 = vmatpush1.bf16.msra.mxu0 %v1355
    %1914 = vmatprep.subr.bf16.mxu0 %v1358
    %1915 = vmatpush1.bf16.msra.mxu0 %v1357
    %1916 = vmatprep.subr.bf16.mxu0 %v1360
    %1917 = vmatpush1.bf16.msra.mxu0 %v1359
    %1918 = vmatprep.mubr.bf16.mxu0 %v383
    %1919 = vmatmul.mubr.bf16.gmra.mrb[0].mxu0 %v381
    %v1920 = vpop.f32.mrb[0].mxu0
    %v1921 = vadd.f32 %v1880, %v1920
    %v1922 = vpop.f32.mrb[0].mxu0
    %v1923 = vadd.f32 %v1882, %v1922
    %v1924 = vpop.f32.mrb[0].mxu0
    %v1925 = vpop.f32.mrb[0].mxu0
    %1926 = vdwg.mxu0
    %1927 = vmatprep.subr.bf16.mxu0 %v1362
    %1928 = vmatpush1.bf16.msra.mxu0 %v1361
    %1929 = vmatprep.subr.bf16.mxu0 %v1364
    %1930 = vmatpush1.bf16.msra.mxu0 %v1363
    %1931 = vmatprep.subr.bf16.mxu0 %v1366
    %1932 = vmatpush1.bf16.msra.mxu0 %v1365
    %1933 = vmatprep.subr.bf16.mxu0 %v1368
    %1934 = vmatpush1.bf16.msra.mxu0 %v1367
    %1935 = vmatprep.subr.bf16.mxu0 %v1370
    %1936 = vmatpush1.bf16.msra.mxu0 %v1369
    %1937 = vmatprep.subr.bf16.mxu0 %v1372
    %1938 = vmatpush1.bf16.msra.mxu0 %v1371
    %1939 = vmatprep.subr.bf16.mxu0 %v1374
    %1940 = vmatpush1.bf16.msra.mxu0 %v1373
    %1941 = vmatprep.subr.bf16.mxu0 %v1376
    %1942 = vmatpush1.bf16.msra.mxu0 %v1375
    %1943 = vmatprep.subr.bf16.mxu0 %v1378
    %1944 = vmatpush1.bf16.msra.mxu0 %v1377
    %1945 = vmatprep.subr.bf16.mxu0 %v1380
    %1946 = vmatpush1.bf16.msra.mxu0 %v1379
    %1947 = vmatprep.subr.bf16.mxu0 %v1382
    %1948 = vmatpush1.bf16.msra.mxu0 %v1381
    %1949 = vmatprep.subr.bf16.mxu0 %v1384
    %1950 = vmatpush1.bf16.msra.mxu0 %v1383
    %1951 = vmatprep.subr.bf16.mxu0 %v1386
    %1952 = vmatpush1.bf16.msra.mxu0 %v1385
    %1953 = vmatprep.subr.bf16.mxu0 %v1388
    %1954 = vmatpush1.bf16.msra.mxu0 %v1387
    %1955 = vmatprep.subr.bf16.mxu0 %v1390
    %1956 = vmatpush1.bf16.msra.mxu0 %v1389
    %1957 = vmatprep.subr.bf16.mxu0 %v1392
    %1958 = vmatpush1.bf16.msra.mxu0 %v1391
    %1959 = vmatprep.mubr.bf16.mxu0 %v380
    %1960 = vmatmul.mubr.bf16.gmra.mrb[0].mxu0 %v366
    %v1961 = vpop.f32.mrb[0].mxu0
    %v1962 = vadd.f32 %v1921, %v1961
    %v1963 = vpop.f32.mrb[0].mxu0
    %v1964 = vadd.f32 %v1923, %v1963
    %v1965 = vpop.f32.mrb[0].mxu0
    %v1966 = vpop.f32.mrb[0].mxu0
    %1967 = vdwg.mxu0
    %1968 = vmatprep.subr.bf16.mxu0 %v1394
    %1969 = vmatpush1.bf16.msra.mxu0 %v1393
    %1970 = vmatprep.subr.bf16.mxu0 %v1396
    %1971 = vmatpush1.bf16.msra.mxu0 %v1395
    %1972 = vmatprep.subr.bf16.mxu0 %v1398
    %1973 = vmatpush1.bf16.msra.mxu0 %v1397
    %1974 = vmatprep.subr.bf16.mxu0 %v1400
    %1975 = vmatpush1.bf16.msra.mxu0 %v1399
    %1976 = vmatprep.subr.bf16.mxu0 %v1402
    %1977 = vmatpush1.bf16.msra.mxu0 %v1401
    %1978 = vmatprep.subr.bf16.mxu0 %v1404
    %1979 = vmatpush1.bf16.msra.mxu0 %v1403
    %1980 = vmatprep.subr.bf16.mxu0 %v1406
    %1981 = vmatpush1.bf16.msra.mxu0 %v1405
    %1982 = vmatprep.subr.bf16.mxu0 %v1408
    %1983 = vmatpush1.bf16.msra.mxu0 %v1407
    %1984 = vmatprep.subr.bf16.mxu0 %v1410
    %1985 = vmatpush1.bf16.msra.mxu0 %v1409
    %1986 = vmatprep.subr.bf16.mxu0 %v1412
    %1987 = vmatpush1.bf16.msra.mxu0 %v1411
    %1988 = vmatprep.subr.bf16.mxu0 %v1414
    %1989 = vmatpush1.bf16.msra.mxu0 %v1413
    %1990 = vmatprep.subr.bf16.mxu0 %v1416
    %1991 = vmatpush1.bf16.msra.mxu0 %v1415
    %1992 = vmatprep.subr.bf16.mxu0 %v1418
    %1993 = vmatpush1.bf16.msra.mxu0 %v1417
    %1994 = vmatprep.subr.bf16.mxu0 %v1420
    %1995 = vmatpush1.bf16.msra.mxu0 %v1419
    %1996 = vmatprep.subr.bf16.mxu0 %v1422
    %1997 = vmatpush1.bf16.msra.mxu0 %v1421
    %1998 = vmatprep.subr.bf16.mxu0 %v1424
    %1999 = vmatpush1.bf16.msra.mxu0 %v1423
    %2000 = vmatprep.mubr.bf16.mxu0 %v384
    %2001 = vmatmul.mubr.bf16.gmra.mrb[0].mxu0 %v382
    %v2002 = vpop.f32.mrb[0].mxu0
    %v2003 = vadd.f32 %v1962, %v2002
    %v2004 = vpop.f32.mrb[0].mxu0
    %v2005 = vadd.f32 %v1964, %v2004
    %v2006 = vpop.f32.mrb[0].mxu0
    %v2007 = vpop.f32.mrb[0].mxu0
    %2008 = vdwg.mxu0
    %v2011 = vcombine.low %v2003, %v2005
    %v2013 = vunpack.c.l.s4 1983009808
    %v2014 = vunpack.c.0.s8 %v2013
    %v2015 = vlaneseq
    %v2016 = vshrl.u32 %v2015, 7
    %v2017 = vsub.s32 %v2014, %v2016
    %v2018 = vrot.slane %v2011, %v2017
    %v2020 = vadd.f32 %v26, %v2018
    %2021 = vst [vmem:[#allocation2] sm:$0xf] %v2020
    // Predicated region
    $region26: #{musiclass_forward.5} parent=1 // pred_check
      %p2022 = pneg %p21
    $region27: #{musiclass_forward.5} parent=1 // pred_check_branch
      %2024 = sbr.rel (%p2022) target = $region29
    $region28: #{musiclass_forward.5} parent=1 // pred_region
      %v2025 = vld [vmem:[#allocation2] sm:$0xf]
      %v2026 = vld [vmem:[%s2] sm:$0x3]
      %v2028 = vlaneseq
      %v2029 = vshrl.u32 %v2028, 7
      %v2030 = vsub.s32 0, %v2029
      %v2031 = vrot.slane %v2026, %v2030
      %v2032 = vlaneseq
      %v2033 = vshrl.u32 %v2032, 7
      %v2034 = vsub.s32 1, %v2033
      %v2035 = vrot.slane %v2026, %v2034
      %v2036 = vcombine.low %v2031, %v2035
      %v2038 = vunpack.c.l.s4 1983009808
      %v2039 = vunpack.c.0.s8 %v2038
      %v2040 = vlaneseq
      %v2041 = vshrl.u32 %v2040, 7
      %v2042 = vsub.s32 %v2039, %v2041
      %v2043 = vrot.slane %v2036, %v2042
      %v2045 = vadd.f32 %v2025, %v2043
      %v2046 = vmax.f32 %v2045, 0.0
      %v2047 = vld [vmem:[%s3] sm:$0xff]
      %v2048 = vld [vmem:[%s3 + $0x8] sm:$0xff]
      %v2049 = vld [vmem:[%s3 + $0x10] sm:$0xff]
      %v2050 = vld [vmem:[%s3 + $0x18] sm:$0xff]
      %v2051 = vld [vmem:[%s3 + $0x20] sm:$0xff]
      %v2052 = vld [vmem:[%s3 + $0x28] sm:$0xff]
      %v2053 = vld [vmem:[%s3 + $0x30] sm:$0xff]
      %v2054 = vld [vmem:[%s3 + $0x38] sm:$0xff]
      %v2055 = vld [vmem:[%s3 + $0x40] sm:$0xff]
      %v2056 = vld [vmem:[%s3 + $0x48] sm:$0xff]
      %v2057 = vld [vmem:[%s3 + $0x50] sm:$0xff]
      %v2058 = vld [vmem:[%s3 + $0x58] sm:$0xff]
      %v2059 = vld [vmem:[%s3 + $0x60] sm:$0xff]
      %v2060 = vld [vmem:[%s3 + $0x68] sm:$0xff]
      %v2061 = vld [vmem:[%s3 + $0x70] sm:$0xff]
      %v2062 = vld [vmem:[%s3 + $0x78] sm:$0xff]
      %v2063 = vld [vmem:[%s3 + $0x80] sm:$0xff]
      %v2064 = vld [vmem:[%s3 + $0x88] sm:$0xff]
      %v2065 = vld [vmem:[%s3 + $0x90] sm:$0xff]
      %v2066 = vld [vmem:[%s3 + $0x98] sm:$0xff]
      %v2067 = vld [vmem:[%s3 + $0xa0] sm:$0xff]
      %v2068 = vld [vmem:[%s3 + $0xa8] sm:$0xff]
      %v2069 = vld [vmem:[%s3 + $0xb0] sm:$0xff]
      %v2070 = vld [vmem:[%s3 + $0xb8] sm:$0xff]
      %v2071 = vld [vmem:[%s3 + $0xc0] sm:$0xff]
      %v2072 = vld [vmem:[%s3 + $0xc8] sm:$0xff]
      %v2073 = vld [vmem:[%s3 + $0xd0] sm:$0xff]
      %v2074 = vld [vmem:[%s3 + $0xd8] sm:$0xff]
      %v2075 = vld [vmem:[%s3 + $0xe0] sm:$0xff]
      %v2076 = vld [vmem:[%s3 + $0xe8] sm:$0xff]
      %v2077 = vld [vmem:[%s3 + $0xf0] sm:$0xff]
      %v2078 = vld [vmem:[%s3 + $0xf8] sm:$0xff]
      %v2079 = vld [vmem:[%s4] sm:$0x1]
      %v2081 = vlaneseq
      %v2082 = vshrl.u32 %v2081, 7
      %v2083 = vsub.s32 0, %v2082
      %v2084 = vrot.slane %v2079, %v2083
      %v2088 = vunpack.c.l.s4 1983009808
      %v2089 = vunpack.c.0.s8 %v2088
      %v2090 = vlaneseq
      %v2091 = vshrl.u32 %v2090, 7
      %v2092 = vsub.s32 %v2089, %v2091
      %v2093 = vrot.slane %v2046, %v2092
      %v2094 = vcombine.high %v2093, %v2093
      %2097 = vmatprep.subr.mxu0 0.0
      %2098 = vmatpush1.msra.mxu0 %v2047
      %2099 = vmatprep.subr.mxu0 0.0
      %2100 = vmatpush1.msra.mxu0 %v2048
      %2101 = vmatprep.subr.mxu0 0.0
      %2102 = vmatpush1.msra.mxu0 %v2049
      %2103 = vmatprep.subr.mxu0 0.0
      %2104 = vmatpush1.msra.mxu0 %v2050
      %2105 = vmatprep.subr.mxu0 0.0
      %2106 = vmatpush1.msra.mxu0 %v2051
      %2107 = vmatprep.subr.mxu0 0.0
      %2108 = vmatpush1.msra.mxu0 %v2052
      %2109 = vmatprep.subr.mxu0 0.0
      %2110 = vmatpush1.msra.mxu0 %v2053
      %2111 = vmatprep.subr.mxu0 0.0
      %2112 = vmatpush1.msra.mxu0 %v2054
      %2113 = vmatprep.subr.mxu0 0.0
      %2114 = vmatpush1.msra.mxu0 %v2055
      %2115 = vmatprep.subr.mxu0 0.0
      %2116 = vmatpush1.msra.mxu0 %v2056
      %2117 = vmatprep.subr.mxu0 0.0
      %2118 = vmatpush1.msra.mxu0 %v2057
      %2119 = vmatprep.subr.mxu0 0.0
      %2120 = vmatpush1.msra.mxu0 %v2058
      %2121 = vmatprep.subr.mxu0 0.0
      %2122 = vmatpush1.msra.mxu0 %v2059
      %2123 = vmatprep.subr.mxu0 0.0
      %2124 = vmatpush1.msra.mxu0 %v2060
      %2125 = vmatprep.subr.mxu0 0.0
      %2126 = vmatpush1.msra.mxu0 %v2061
      %2127 = vmatprep.subr.mxu0 0.0
      %2128 = vmatpush1.msra.mxu0 %v2062
      %2129 = vmatprep.subr.mxu0 0.0
      %2130 = vmatpush1.msra.mxu0 %v2063
      %2131 = vmatprep.subr.mxu0 0.0
      %2132 = vmatpush1.msra.mxu0 %v2064
      %2133 = vmatprep.subr.mxu0 0.0
      %2134 = vmatpush1.msra.mxu0 %v2065
      %2135 = vmatprep.subr.mxu0 0.0
      %2136 = vmatpush1.msra.mxu0 %v2066
      %2137 = vmatprep.subr.mxu0 0.0
      %2138 = vmatpush1.msra.mxu0 %v2067
      %2139 = vmatprep.subr.mxu0 0.0
      %2140 = vmatpush1.msra.mxu0 %v2068
      %2141 = vmatprep.subr.mxu0 0.0
      %2142 = vmatpush1.msra.mxu0 %v2069
      %2143 = vmatprep.subr.mxu0 0.0
      %2144 = vmatpush1.msra.mxu0 %v2070
      %2145 = vmatprep.subr.mxu0 0.0
      %2146 = vmatpush1.msra.mxu0 %v2071
      %2147 = vmatprep.subr.mxu0 0.0
      %2148 = vmatpush1.msra.mxu0 %v2072
      %2149 = vmatprep.subr.mxu0 0.0
      %2150 = vmatpush1.msra.mxu0 %v2073
      %2151 = vmatprep.subr.mxu0 0.0
      %2152 = vmatpush1.msra.mxu0 %v2074
      %2153 = vmatprep.subr.mxu0 0.0
      %2154 = vmatpush1.msra.mxu0 %v2075
      %2155 = vmatprep.subr.mxu0 0.0
      %2156 = vmatpush1.msra.mxu0 %v2076
      %2157 = vmatprep.subr.mxu0 0.0
      %2158 = vmatpush1.msra.mxu0 %v2077
      %2159 = vmatprep.subr.mxu0 0.0
      %2160 = vmatpush1.msra.mxu0 %v2078
      %2161 = vmatprep.mubr.f32.mxu0 %v2094
      %2162 = vmatmul.mubr.f32.gmra.mrb[0].mxu0 %v2093
      %v2163 = vpop.f32.mrb[0].mxu0
      %v2164 = vadd.f32 %v2084, %v2163
      %v2165 = vpop.f32.mrb[0].mxu0
      %2166 = vdwg.mxu0
      %vm2167 = vcmask 140288
      %2168 = vst.msk [vmem:[#allocation3] sm:$0x3] %vm2167, %v2164
    $region29: #{musiclass_forward.5} parent=1 // pred_fallthru
      _
    // Predicated region
    $region30: #{musiclass_forward.5} parent=1 // pred_check
      _
    $region31: #{musiclass_forward.5} parent=1 // pred_check_branch
      %2170 = sbr.rel (0) target = $region33
    $region32: #{musiclass_forward.5} parent=1 // pred_region
      %s2172 = ssub.s32 32, 32
      %2173 = vsyncadd [#allocation4], %s2172
      %s2175 = sshll.u32 [#allocation3], 4
      %s2176 = int_to_ptr.vmem [resolvable:$true] %s2175
      %2178 = dma.vmem_to_hbm [thread:$0]  %s2176, 32, %s5, [#allocation4]
    $region33: #{musiclass_forward.5} parent=1 // pred_fallthru
      _
    // Predicated region
    $region34: #{musiclass_forward.5} parent=1 // pred_check
      _
    $region35: #{musiclass_forward.5} parent=1 // pred_check_branch
      %2180 = sbr.rel (0) target = $region37
    $region36: #{musiclass_forward.5} parent=1 // pred_region
      %2181 = dma.done [#allocation4], 32
    $region37: #{musiclass_forward.5} parent=1 // pred_fallthru
      _
    %2182 = vsyncpa [#allocation4], 1

// kernel: musiclass_forward.4
$region0: #{musiclass_forward.4}
  #allocation0 [shape = 'u32[]', space=smem, size = 0x4, offset = 0x4, fixed_abs, tag = 'smem constant byte address 0x4 - core index']
  #allocation1 [shape = 'u32[144,128]{1,0:T(1,128)}', space=vmem, size = 0x12000, scoped, tag = 'internal scratch']
  #allocation2 [shape = 'bf16[12,24,64]{2,1,0:T(8,128)(2,1)}', space=vmem, size = 0x12000, scoped, tag = 'scratch operand']
  #allocation3 [shape = 'bf16[10,16,128]{2,1,0:T(16,128)(2,1)}', space=vmem, size = 0xa000, scoped, tag = 'scratch operand']
  %s0 = inlined_call_operand.vmem [shape: bf16[2,8,8,64], index: 0, kind: input, shape index: {}]
  %s1 = inlined_call_operand.vmem [shape: bf16[3,3,64,128], index: 1, kind: input, shape index: {}]
  %s2 = inlined_call_operand.vmem [shape: f32[1,1,128], index: 2, kind: input, shape index: {}]
  %s3 = inlined_call_operand.hbm [shape: bf16[3,3,128,128], index: 3, kind: input, shape index: {}]
  %s4 = inlined_call_operand.vmem [shape: f32[1,1,128], index: 4, kind: input, shape index: {}]
  %s5 = inlined_call_operand.vmem [shape: bf16[2,4,4,128], index: 5, kind: output, shape index: {}]
  %s6 = sld [smem:[#allocation0]]
  $region75: #{musiclass_forward.4} parent=0
    _
  %s8 = ssub.s32 1, %s6
  %s9 = scalar_select 0, %s8, %s6
  $region1: #{musiclass_forward.4} parent=0
    #allocation4 [shape = 'u8[294912]{0}', space=vmem, size = 0x48000, scoped, tag = 'input window, operand 3, single buffered']
    #allocation5 [shape = 's32[2]{0}', space=sflag, size = 0x8, scoped, tag = 'scoped memory for musiclass_forward.4']
    %10 = vsyncpa [#allocation5], 0
    loop: start=0, step=1, limit=4
    $region2: #{musiclass_forward.4} parent=1 // loop_pre_header
      _
    $region3: #{musiclass_forward.4} parent=1 // loop_header
      %s12 = sphi 0, %s16
      %p13 = scmp.ge.s32.totalorder %s12, 4
      %s19 = sphi 0, %s31
      %s20 = sphi 0, %s27
      %s21 = sphi 0, %s19
      %s22 = sphi 0, %s20
      %s23 = sphi 0, %s21
      %s24 = sphi 0, %s22
      %s34 = sphi 0, %s36
      %s37 = sphi 0, %s34
      %s38 = sphi 0, %s37
      %s54 = sphi 0, %s38
      %s58 = sphi 0, %s58
      %s60 = sphi 0, %s58
      %s61 = sphi 0, %s60
      %s75 = sphi 0, %s61
      %s79 = sphi 0, %s79
      %s81 = sphi 0, %s79
      %s82 = sphi 0, %s81
      %s96 = sphi 0, %s82
      %s100 = sphi 0, %s100
      %s102 = sphi 0, %s100
      %s103 = sphi 0, %s102
      %s117 = sphi 0, %s103
      %s121 = sphi 0, %s121
      %s123 = sphi 0, %s121
      %s124 = sphi 0, %s123
      %s138 = sphi 0, %s124
      %s146 = sphi 0, %s148
      %s149 = sphi 0, %s146
      %s150 = sphi 0, %s149
      %s166 = sphi 0, %s150
    $region4: #{musiclass_forward.4} parent=1 // loop_header_branch
      %15 = sbr.rel (%p13) target = $region8
    $region5: #{musiclass_forward.4} parent=1 // loop_body
      %s17 = ssub.s32 %s12, 1
      %s18 = ssub.s32 %s12, 2
      %s25 = sadd.s32 1, %s20
      %p26 = scmp.ge.s32.totalorder %s25, 1
      %s27 = scalar_select %p26, 0, %s25
      %s28 = sadd.s32 1, %s19
      %s29 = scalar_select %p26, %s28, %s19
      %p30 = scmp.ge.s32.totalorder %s29, 2
      %s31 = scalar_select %p30, 0, %s29
      %s32 = ssub.s32 %s19, %s31
      %p33 = scmp.eq.s32.totalorder %s32, 0
      %s35 = sadd.s32 %s34, 1
      %s36 = scalar_select %p33, %s34, %s35
      %p39 = pneg %p33
      %p40 = scmp.eq.s32.totalorder %s12, 1
      %p41 = por %p39, %p40
      %p42 = scmp.ne.s32.totalorder %s34, %s37
      %p43 = scmp.eq.s32.totalorder %s12, 0
      %p44 = por %p42, %p43
      %p45 = scmp.ne.s32.totalorder %s34, %s37
      %p46 = scmp.eq.s32.totalorder %s17, 1
      %p47 = por %p45, %p46
      %p48 = scmp.ne.s32.totalorder %s37, %s38
      %p49 = scmp.eq.s32.totalorder %s17, 0
      %p50 = por %p48, %p49
      %p51 = scmp.ne.s32.totalorder %s37, %s38
      %p52 = scmp.eq.s32.totalorder %s18, 1
      %p53 = por %p51, %p52
      %p55 = scmp.ne.s32.totalorder %s38, %s54
      %p56 = scmp.eq.s32.totalorder %s18, 0
      %p57 = por %p55, %p56
      %s59 = sadd.s32 %s58, 1
      %p62 = scmp.eq.s32.totalorder %s12, 1
      %p63 = scmp.ne.s32.totalorder %s58, %s60
      %p64 = scmp.eq.s32.totalorder %s12, 0
      %p65 = por %p63, %p64
      %p66 = scmp.ne.s32.totalorder %s58, %s60
      %p67 = scmp.eq.s32.totalorder %s17, 1
      %p68 = por %p66, %p67
      %p69 = scmp.ne.s32.totalorder %s60, %s61
      %p70 = scmp.eq.s32.totalorder %s17, 0
      %p71 = por %p69, %p70
      %p72 = scmp.ne.s32.totalorder %s60, %s61
      %p73 = scmp.eq.s32.totalorder %s18, 1
      %p74 = por %p72, %p73
      %p76 = scmp.ne.s32.totalorder %s61, %s75
      %p77 = scmp.eq.s32.totalorder %s18, 0
      %p78 = por %p76, %p77
      %s80 = sadd.s32 %s79, 1
      %p83 = scmp.eq.s32.totalorder %s12, 1
      %p84 = scmp.ne.s32.totalorder %s79, %s81
      %p85 = scmp.eq.s32.totalorder %s12, 0
      %p86 = por %p84, %p85
      %p87 = scmp.ne.s32.totalorder %s79, %s81
      %p88 = scmp.eq.s32.totalorder %s17, 1
      %p89 = por %p87, %p88
      %p90 = scmp.ne.s32.totalorder %s81, %s82
      %p91 = scmp.eq.s32.totalorder %s17, 0
      %p92 = por %p90, %p91
      %p93 = scmp.ne.s32.totalorder %s81, %s82
      %p94 = scmp.eq.s32.totalorder %s18, 1
      %p95 = por %p93, %p94
      %p97 = scmp.ne.s32.totalorder %s82, %s96
      %p98 = scmp.eq.s32.totalorder %s18, 0
      %p99 = por %p97, %p98
      %s101 = sadd.s32 %s100, 1
      %p104 = scmp.eq.s32.totalorder %s12, 1
      %p105 = scmp.ne.s32.totalorder %s100, %s102
      %p106 = scmp.eq.s32.totalorder %s12, 0
      %p107 = por %p105, %p106
      %p108 = scmp.ne.s32.totalorder %s100, %s102
      %p109 = scmp.eq.s32.totalorder %s17, 1
      %p110 = por %p108, %p109
      %p111 = scmp.ne.s32.totalorder %s102, %s103
      %p112 = scmp.eq.s32.totalorder %s17, 0
      %p113 = por %p111, %p112
      %p114 = scmp.ne.s32.totalorder %s102, %s103
      %p115 = scmp.eq.s32.totalorder %s18, 1
      %p116 = por %p114, %p115
      %p118 = scmp.ne.s32.totalorder %s103, %s117
      %p119 = scmp.eq.s32.totalorder %s18, 0
      %p120 = por %p118, %p119
      %s122 = sadd.s32 %s121, 1
      %p125 = scmp.eq.s32.totalorder %s12, 1
      %p126 = scmp.ne.s32.totalorder %s121, %s123
      %p127 = scmp.eq.s32.totalorder %s12, 0
      %p128 = por %p126, %p127
      %p129 = scmp.ne.s32.totalorder %s121, %s123
      %p130 = scmp.eq.s32.totalorder %s17, 1
      %p131 = por %p129, %p130
      %p132 = scmp.ne.s32.totalorder %s123, %s124
      %p133 = scmp.eq.s32.totalorder %s17, 0
      %p134 = por %p132, %p133
      %p135 = scmp.ne.s32.totalorder %s123, %s124
      %p136 = scmp.eq.s32.totalorder %s18, 1
      %p137 = por %p135, %p136
      %p139 = scmp.ne.s32.totalorder %s124, %s138
      %p140 = scmp.eq.s32.totalorder %s18, 0
      %p141 = por %p139, %p140
      %s142 = ssub.s32 %s19, %s31
      %s143 = ssub.s32 %s20, %s27
      %s144 = sor.u32 %s142, %s143
      %p145 = scmp.eq.s32.totalorder %s144, 0
      %s147 = sadd.s32 %s146, 1
      %s148 = scalar_select %p145, %s146, %s147
      %p151 = pneg %p145
      %p152 = scmp.eq.s32.totalorder %s12, 1
      %p153 = por %p151, %p152
      %p154 = scmp.ne.s32.totalorder %s146, %s149
      %p155 = scmp.eq.s32.totalorder %s12, 0
      %p156 = por %p154, %p155
      %p157 = scmp.ne.s32.totalorder %s146, %s149
      %p158 = scmp.eq.s32.totalorder %s17, 1
      %p159 = por %p157, %p158
      %p160 = scmp.ne.s32.totalorder %s149, %s150
      %p161 = scmp.eq.s32.totalorder %s17, 0
      %p162 = por %p160, %p161
      %p163 = scmp.ne.s32.totalorder %s149, %s150
      %p164 = scmp.eq.s32.totalorder %s18, 1
      %p165 = por %p163, %p164
      %p167 = scmp.ne.s32.totalorder %s150, %s166
      %p168 = scmp.eq.s32.totalorder %s18, 0
      %p169 = por %p167, %p168
      %p170 = scmp.le.s32.totalorder 1, %s12
      %p171 = scmp.lt.s32.totalorder %s12, 3
      %p172 = pnand %p170, %p171
      %p173 = pneg %p172
      // Predicated region
      $region9: #{musiclass_forward.4} parent=5 // pred_check
        _
      $region10: #{musiclass_forward.4} parent=5 // pred_check_branch
        %175 = sbr.rel (%p172) target = $region12
      $region11: #{musiclass_forward.4} parent=5 // pred_region
        %s176 = ssub.s32 %s12, 1
        // Predicated region
        $region13: #{musiclass_forward.4} parent=11 // pred_check
          %p177 = pneg %p71
        $region14: #{musiclass_forward.4} parent=11 // pred_check_branch
          %179 = sbr.rel (%p177) target = $region16
        $region15: #{musiclass_forward.4} parent=11 // pred_region
          _
        $region16: #{musiclass_forward.4} parent=11 // pred_fallthru
          _
        // Predicated region
        $region17: #{musiclass_forward.4} parent=11 // pred_check
          %p180 = pneg %p92
        $region18: #{musiclass_forward.4} parent=11 // pred_check_branch
          %182 = sbr.rel (%p180) target = $region20
        $region19: #{musiclass_forward.4} parent=11 // pred_region
          _
        $region20: #{musiclass_forward.4} parent=11 // pred_fallthru
          _
        // Predicated region
        $region21: #{musiclass_forward.4} parent=11 // pred_check
          %p183 = pneg %p113
        $region22: #{musiclass_forward.4} parent=11 // pred_check_branch
          %185 = sbr.rel (%p183) target = $region24
        $region23: #{musiclass_forward.4} parent=11 // pred_region
          %s187 = ssub.s32 9216, 9216
          %188 = vsyncadd [#allocation5], %s187
          %s189 = sshll.u32 [#allocation4], 4
          %s190 = int_to_ptr.vmem [resolvable:$true] %s189
          %195 = dma.hbm_to_vmem [thread:$0]  %s3, 9216, %s190, [#allocation5], 64, 64, 4
        $region24: #{musiclass_forward.4} parent=11 // pred_fallthru
          _
        // Predicated region
        $region25: #{musiclass_forward.4} parent=11 // pred_check
          %p196 = pneg %p134
        $region26: #{musiclass_forward.4} parent=11 // pred_check_branch
          %198 = sbr.rel (%p196) target = $region28
        $region27: #{musiclass_forward.4} parent=11 // pred_region
          _
        $region28: #{musiclass_forward.4} parent=11 // pred_fallthru
          _
      $region12: #{musiclass_forward.4} parent=5 // pred_fallthru
        _
      %p199 = scmp.lt.s32.totalorder %s12, 2
      // Predicated region
      $region29: #{musiclass_forward.4} parent=5 // pred_check
        %p200 = pneg %p199
      $region30: #{musiclass_forward.4} parent=5 // pred_check_branch
        %202 = sbr.rel (%p200) target = $region32
      $region31: #{musiclass_forward.4} parent=5 // pred_region
        // Predicated region
        $region33: #{musiclass_forward.4} parent=31 // pred_check
          %p203 = pneg %p44
        $region34: #{musiclass_forward.4} parent=31 // pred_check_branch
          %205 = sbr.rel (%p203) target = $region36
        $region35: #{musiclass_forward.4} parent=31 // pred_region
          %p206 = scmp.lt.s32.totalorder %s19, 1
          %s207 = scalar_select %p206, %s19, 1
          %s208 = smul.addr %s207, 8
          %s209 = smul.addr %s208, 4
          %s210 = scalar_lea.vmem %s0, %s209
        $region36: #{musiclass_forward.4} parent=31 // pred_fallthru
          _
      $region32: #{musiclass_forward.4} parent=5 // pred_fallthru
        _
      %p211 = scmp.le.s32.totalorder 1, %s12
      %p212 = scmp.lt.s32.totalorder %s12, 3
      %p213 = pnand %p211, %p212
      %p214 = pneg %p213
      // Predicated region
      $region37: #{musiclass_forward.4} parent=5 // pred_check
        _
      $region38: #{musiclass_forward.4} parent=5 // pred_check_branch
        %216 = sbr.rel (%p213) target = $region40
      $region39: #{musiclass_forward.4} parent=5 // pred_region
        %s217 = ssub.s32 %s12, 1
        // Predicated region
        $region41: #{musiclass_forward.4} parent=39 // pred_check
          %p218 = pneg %p113
        $region42: #{musiclass_forward.4} parent=39 // pred_check_branch
          %220 = sbr.rel (%p218) target = $region44
        $region43: #{musiclass_forward.4} parent=39 // pred_region
          %221 = dma.done [#allocation5], 9216
        $region44: #{musiclass_forward.4} parent=39 // pred_fallthru
          _
        %p222 = scmp.lt.s32.totalorder %s21, 1
        %s223 = scalar_select %p222, %s21, 1
        %s224 = smul.addr %s223, 8
        %s225 = smul.addr %s224, 4
        %s226 = scalar_lea.vmem %s0, %s225
        %p227 = pneg %p50
        %p228 = pneg %p47
        %p229 = pneg %p71
        %p230 = pneg %p68
        %p231 = pneg %p92
        %p232 = pneg %p89
        %p233 = pneg %p113
        %p234 = pneg %p110
        %p235 = pneg %p134
        %p236 = pneg %p131
        %p237 = pneg %p162
        %p238 = pneg %p159
        %s239 = smul.u32 4, %s22
        %p240 = scmp.lt.s32.totalorder %s21, 1
        %s241 = scalar_select %p240, %s21, 1
        %p242 = scmp.lt.s32.totalorder %s239, 3
        %s243 = scalar_select %p242, %s239, 3
        %s244 = smul.addr %s241, 4
        %s245 = sadd.s32 %s243, %s244
        %s246 = smul.addr %s245, 2
        %s247 = scalar_lea.vmem %s5, %s246
        %p248 = scmp.lt.s32.totalorder %s21, 1
        %s249 = scalar_select %p248, %s21, 1
        %s250 = smul.addr %s249, 8
        %s251 = smul.addr %s250, 4
        %s252 = scalar_lea.vmem %s0, %s251
        %s253 = smul.u32 4, %s22
        %p254 = scmp.lt.s32.totalorder %s21, 1
        %s255 = scalar_select %p254, %s21, 1
        %p256 = scmp.lt.s32.totalorder %s253, 3
        %s257 = scalar_select %p256, %s253, 3
        %s258 = smul.addr %s255, 4
        %s259 = sadd.s32 %s257, %s258
        %s260 = smul.addr %s259, 2
        %s261 = scalar_lea.vmem %s5, %s260
        %s262 = smul.u32 4, %s22
        %p264 = scmp.eq.s32.totalorder %s22, 0
        // Predicated region
        $region45: #{musiclass_forward.4} parent=39 // pred_check
          %p265 = pneg %p264
        $region46: #{musiclass_forward.4} parent=39 // pred_check_branch
          %267 = sbr.rel (%p265) target = $region48
        $region47: #{musiclass_forward.4} parent=39 // pred_region
          %vm268 = vcmask 519168
          %269 = vst.msk [vmem:[#allocation2] sm:$0xf] %vm268, 0
          %270 = vst.msk [vmem:[#allocation2 + $0x4] sm:$0xf] %vm268, 0
          %271 = vst.msk [vmem:[#allocation2 + $0x8] sm:$0xf] %vm268, 0
          %272 = vst.msk [vmem:[#allocation2 + $0xc] sm:$0xf] %vm268, 0
          %273 = vst.msk [vmem:[#allocation2 + $0x10] sm:$0xf] %vm268, 0
          %274 = vst.msk [vmem:[#allocation2 + $0x14] sm:$0xf] %vm268, 0
          %275 = vst.msk [vmem:[#allocation2 + $0x18] sm:$0xf] %vm268, 0
          %276 = vst.msk [vmem:[#allocation2 + $0x1c] sm:$0xf] %vm268, 0
          %277 = vst.msk [vmem:[#allocation2 + $0x20] sm:$0xf] %vm268, 0
          %278 = vst.msk [vmem:[#allocation2 + $0x24] sm:$0xf] %vm268, 0
          %279 = vst.msk [vmem:[#allocation2 + $0x28] sm:$0xf] %vm268, 0
          %280 = vst.msk [vmem:[#allocation2 + $0x2c] sm:$0xf] %vm268, 0
          %281 = vst.msk [vmem:[#allocation2 + $0x30] sm:$0xf] %vm268, 0
          %282 = vst.msk [vmem:[#allocation2 + $0x34] sm:$0xf] %vm268, 0
          %283 = vst.msk [vmem:[#allocation2 + $0x38] sm:$0xf] %vm268, 0
          %284 = vst.msk [vmem:[#allocation2 + $0x3c] sm:$0xf] %vm268, 0
          %285 = vst.msk [vmem:[#allocation2 + $0x40] sm:$0xf] %vm268, 0
          %286 = vst.msk [vmem:[#allocation2 + $0x44] sm:$0xf] %vm268, 0
          %287 = vst.msk [vmem:[#allocation2 + $0x48] sm:$0xf] %vm268, 0
          %288 = vst.msk [vmem:[#allocation2 + $0x4c] sm:$0xf] %vm268, 0
          %289 = vst.msk [vmem:[#allocation2 + $0x50] sm:$0xf] %vm268, 0
          %290 = vst.msk [vmem:[#allocation2 + $0x54] sm:$0xf] %vm268, 0
          %291 = vst.msk [vmem:[#allocation2 + $0x58] sm:$0xf] %vm268, 0
          %292 = vst.msk [vmem:[#allocation2 + $0x5c] sm:$0xf] %vm268, 0
          %293 = vst.msk [vmem:[#allocation2 + $0x60] sm:$0xf] %vm268, 0
          %294 = vst.msk [vmem:[#allocation2 + $0x64] sm:$0xf] %vm268, 0
          %295 = vst.msk [vmem:[#allocation2 + $0x68] sm:$0xf] %vm268, 0
          %296 = vst.msk [vmem:[#allocation2 + $0x6c] sm:$0xf] %vm268, 0
          %297 = vst.msk [vmem:[#allocation2 + $0x70] sm:$0xf] %vm268, 0
          %298 = vst.msk [vmem:[#allocation2 + $0x74] sm:$0xf] %vm268, 0
          %299 = vst.msk [vmem:[#allocation2 + $0x78] sm:$0xf] %vm268, 0
          %300 = vst.msk [vmem:[#allocation2 + $0x7c] sm:$0xf] %vm268, 0
          %301 = vst.msk [vmem:[#allocation2 + $0x80] sm:$0xf] %vm268, 0
          %302 = vst.msk [vmem:[#allocation2 + $0x84] sm:$0xf] %vm268, 0
          %303 = vst.msk [vmem:[#allocation2 + $0x88] sm:$0xf] %vm268, 0
          %304 = vst.msk [vmem:[#allocation2 + $0x8c] sm:$0xf] %vm268, 0
          %v305 = vld [vmem:[%s252] sm:$0xf]
          %v306 = vld [vmem:[%s252 + $0x4] sm:$0xf]
          %v307 = vld [vmem:[%s252 + $0x8] sm:$0xf]
          %v308 = vld [vmem:[%s252 + $0xc] sm:$0xf]
          %v309 = vld [vmem:[%s252 + $0x10] sm:$0xf]
          %v310 = vld [vmem:[%s252 + $0x14] sm:$0xf]
          %v311 = vld [vmem:[%s252 + $0x18] sm:$0xf]
          %v312 = vld [vmem:[%s252 + $0x1c] sm:$0xf]
          %s313 = scalar_lea.vmem [#allocation2], 24
          %314 = vst.msk [vmem:[%s313 + $0x4] sm:$0xf] %vm268, %v305
          %315 = vst.msk [vmem:[%s313 + $0x10] sm:$0xf] %vm268, %v306
          %316 = vst.msk [vmem:[%s313 + $0x1c] sm:$0xf] %vm268, %v307
          %317 = vst.msk [vmem:[%s313 + $0x28] sm:$0xf] %vm268, %v308
          %318 = vst.msk [vmem:[%s313 + $0x34] sm:$0xf] %vm268, %v309
          %319 = vst.msk [vmem:[%s313 + $0x40] sm:$0xf] %vm268, %v310
          %320 = vst.msk [vmem:[%s313 + $0x4c] sm:$0xf] %vm268, %v311
          %321 = vst.msk [vmem:[%s313 + $0x58] sm:$0xf] %vm268, %v312
        $region48: #{musiclass_forward.4} parent=39 // pred_fallthru
          _
        %s322 = smul.u32 %s22, 8
        %s323 = ssub.s32 %s322, 1
        loop: start=0, step=1, limit=5
        $region49: #{musiclass_forward.4} parent=39 // loop_pre_header
          _
        $region50: #{musiclass_forward.4} parent=39 // loop_header
          %s325 = sphi 0, %s329
          %p326 = scmp.ge.s32.totalorder %s325, 5
        $region51: #{musiclass_forward.4} parent=39 // loop_header_branch
          %328 = sbr.rel (%p326) target = $region55
        $region52: #{musiclass_forward.4} parent=39 // loop_body
          %s330 = smul.u32 %s325, 2
          %s331 = sadd.s32 %s323, %s330
          %s332 = sadd.s32 %s331, 1
          %s333 = smul.u32 %s332, 3
          %s334 = smul.addr %s333, 4
          %s335 = scalar_lea.vmem [#allocation2], %s334
          %v336 = vld [vmem:[%s335] sm:$0x8]
          %v337 = vld [vmem:[%s335 + $0x4] sm:$0xf]
          %v338 = vld [vmem:[%s335 + $0x8] sm:$0x7]
          %v339 = vld [vmem:[%s335 + $0xc] sm:$0x8]
          %v340 = vld [vmem:[%s335 + $0x10] sm:$0xf]
          %v341 = vld [vmem:[%s335 + $0x14] sm:$0x7]
          %vm348 = vcmask 1040384
          %vm349 = vcmask 1044484
          %vm350 = vmor %vm348, %vm349
          %v351 = vrot.slane %v336, 7
          %v352 = vrot.slane %v351, 4
          %v353 = vrot.slane %v337, 7
          %v354 = vsel %vm350, %v352, %v353
          %v355 = vrot.slane %v353, 4
          %v356 = vrot.slane %v338, 7
          %v357 = vsel %vm350, %v355, %v356
          %v358 = vrot.slane %v339, 7
          %v359 = vrot.slane %v358, 4
          %v360 = vrot.slane %v340, 7
          %v361 = vsel %vm350, %v359, %v360
          %v362 = vrot.slane %v360, 4
          %v363 = vrot.slane %v341, 7
          %v364 = vsel %vm350, %v362, %v363
          %v365 = vld [vmem:[%s1] sm:$0xf]
          %v366 = vld [vmem:[%s1 + $0x4] sm:$0xf]
          %v367 = vld [vmem:[%s1 + $0x8] sm:$0xf]
          %v368 = vld [vmem:[%s1 + $0xc] sm:$0xf]
          %v369 = vld [vmem:[%s1 + $0x10] sm:$0xf]
          %v370 = vld [vmem:[%s1 + $0x14] sm:$0xf]
          %v371 = vld [vmem:[%s1 + $0x18] sm:$0xf]
          %v372 = vld [vmem:[%s1 + $0x1c] sm:$0xf]
          %v373 = vld [vmem:[%s335 + $0x8] sm:$0xf]
          %v374 = vld [vmem:[%s335 + $0x14] sm:$0xf]
          %vm375 = vsmask.f32 256
          %vm376 = vsmask.f32 4368
          %vm377 = vmor %vm375, %vm376
          %v379 = vshrl.u32 %v336, 16
          %v381 = vrot.slane %v379, 7
          %v382 = vrot.slane %v381, 4
          %v384 = vshrl.u32 %v337, 16
          %v386 = vrot.slane %v384, 7
          %v387 = vshll.u32 %v337, 16
          %v389 = vor.u32 %v386, %v387
          %v390 = vsel %vm377, %v382, %v389
          %v391 = vrot.slane %v386, 4
          %v393 = vshrl.u32 %v373, 16
          %v395 = vrot.slane %v393, 7
          %v396 = vshll.u32 %v373, 16
          %v398 = vor.u32 %v395, %v396
          %v399 = vsel %vm377, %v391, %v398
          %v401 = vshrl.u32 %v339, 16
          %v403 = vrot.slane %v401, 7
          %v404 = vrot.slane %v403, 4
          %v406 = vshrl.u32 %v340, 16
          %v408 = vrot.slane %v406, 7
          %v409 = vshll.u32 %v340, 16
          %v411 = vor.u32 %v408, %v409
          %v412 = vsel %vm377, %v404, %v411
          %v413 = vrot.slane %v408, 4
          %v415 = vshrl.u32 %v374, 16
          %v417 = vrot.slane %v415, 7
          %v418 = vshll.u32 %v374, 16
          %v420 = vor.u32 %v417, %v418
          %v421 = vsel %vm377, %v413, %v420
          %s422 = scalar_lea.vmem %s1, 32
          %v423 = vld [vmem:[%s422] sm:$0xf]
          %v424 = vld [vmem:[%s422 + $0x4] sm:$0xf]
          %v425 = vld [vmem:[%s422 + $0x8] sm:$0xf]
          %v426 = vld [vmem:[%s422 + $0xc] sm:$0xf]
          %v427 = vld [vmem:[%s422 + $0x10] sm:$0xf]
          %v428 = vld [vmem:[%s422 + $0x14] sm:$0xf]
          %v429 = vld [vmem:[%s422 + $0x18] sm:$0xf]
          %v430 = vld [vmem:[%s422 + $0x1c] sm:$0xf]
          %v431 = vunpack.c.l.b16 %v390
          %v432 = vunpack.c.l.b16 %v399
          %v433 = vunpack.c.l.b16 %v412
          %v434 = vunpack.c.l.b16 %v421
          %v435 = vpack.c.b16 %v432, %v431
          %v436 = vpack.c.b16 %v434, %v433
          %v445 = vunpack.c.l.b16 %v423
          %v446 = vunpack.c.l.b16 %v424
          %v447 = vunpack.c.l.b16 %v425
          %v448 = vunpack.c.l.b16 %v426
          %v449 = vunpack.c.l.b16 %v427
          %v450 = vunpack.c.l.b16 %v428
          %v451 = vunpack.c.l.b16 %v429
          %v452 = vunpack.c.l.b16 %v430
          %v453 = vpack.c.b16 %v446, %v445
          %v454 = vpack.c.b16 %v448, %v447
          %v455 = vpack.c.b16 %v450, %v449
          %v456 = vpack.c.b16 %v452, %v451
          %vm461 = vcmask 523264
          %v463 = vsel %vm461, %v435, 0
          %v466 = vsel %vm461, %v436, 0
          %468 = vmatprep.subr.bf16.mxu0 0
          %469 = vmatpush1.bf16.msra.mxu0 %v453
          %470 = vmatprep.subr.bf16.mxu0 0
          %471 = vmatpush1.bf16.msra.mxu0 %v454
          %472 = vmatprep.subr.bf16.mxu0 0
          %473 = vmatpush1.bf16.msra.mxu0 %v455
          %474 = vmatprep.subr.bf16.mxu0 0
          %475 = vmatpush1.bf16.msra.mxu0 %v456
          %476 = vmatprep.subr.bf16.mxu0 0
          %477 = vmatpush1.bf16.msra.mxu0 0
          %478 = vmatprep.subr.bf16.mxu0 0
          %479 = vmatpush1.bf16.msra.mxu0 0
          %480 = vmatprep.subr.bf16.mxu0 0
          %481 = vmatpush1.bf16.msra.mxu0 0
          %482 = vmatprep.subr.bf16.mxu0 0
          %483 = vmatpush1.bf16.msra.mxu0 0
          %484 = vmatprep.subr.bf16.mxu0 0
          %485 = vmatpush1.bf16.msra.mxu0 0
          %486 = vmatprep.subr.bf16.mxu0 0
          %487 = vmatpush1.bf16.msra.mxu0 0
          %488 = vmatprep.subr.bf16.mxu0 0
          %489 = vmatpush1.bf16.msra.mxu0 0
          %490 = vmatprep.subr.bf16.mxu0 0
          %491 = vmatpush1.bf16.msra.mxu0 0
          %492 = vmatprep.subr.bf16.mxu0 0
          %493 = vmatpush1.bf16.msra.mxu0 0
          %494 = vmatprep.subr.bf16.mxu0 0
          %495 = vmatpush1.bf16.msra.mxu0 0
          %496 = vmatprep.subr.bf16.mxu0 0
          %497 = vmatpush1.bf16.msra.mxu0 0
          %498 = vmatprep.subr.bf16.mxu0 0
          %499 = vmatpush1.bf16.msra.mxu0 0
          %500 = vmatprep.mubr.bf16.mxu0 0
          %501 = vmatmul.mubr.bf16.gmra.mrb[0].mxu0 %v463
          %v502 = vpop.f32.mrb[0].mxu0
          %v503 = vadd.f32 0.0, %v502
          %v504 = vpop.f32.mrb[0].mxu0
          %v505 = vpop.f32.mrb[0].mxu0
          %v506 = vadd.f32 0.0, %v505
          %v507 = vpop.f32.mrb[0].mxu0
          %508 = vmatprep.mubr.bf16.mxu0 0
          %509 = vmatmul.mubr.bf16.gmra.mrb[0].mxu0 %v466
          %v510 = vpop.f32.mrb[0].mxu0
          %v511 = vadd.f32 0.0, %v510
          %v512 = vpop.f32.mrb[0].mxu0
          %v513 = vpop.f32.mrb[0].mxu0
          %v514 = vadd.f32 0.0, %v513
          %v515 = vpop.f32.mrb[0].mxu0
          %516 = vdwg.mxu0
          %v517 = vunpack.c.l.b16 %v354
          %v518 = vunpack.c.l.b16 %v357
          %v519 = vunpack.c.l.b16 %v361
          %v520 = vunpack.c.l.b16 %v364
          %v521 = vpack.c.b16 %v518, %v517
          %v522 = vpack.c.b16 %v520, %v519
          %v531 = vunpack.c.l.b16 %v365
          %v532 = vunpack.c.l.b16 %v366
          %v533 = vunpack.c.l.b16 %v367
          %v534 = vunpack.c.l.b16 %v368
          %v535 = vunpack.c.l.b16 %v369
          %v536 = vunpack.c.l.b16 %v370
          %v537 = vunpack.c.l.b16 %v371
          %v538 = vunpack.c.l.b16 %v372
          %v539 = vpack.c.b16 %v532, %v531
          %v540 = vpack.c.b16 %v534, %v533
          %v541 = vpack.c.b16 %v536, %v535
          %v542 = vpack.c.b16 %v538, %v537
          %v548 = vsel %vm461, %v521, 0
          %v551 = vsel %vm461, %v522, 0
          %553 = vmatprep.subr.bf16.mxu0 0
          %554 = vmatpush1.bf16.msra.mxu0 %v539
          %555 = vmatprep.subr.bf16.mxu0 0
          %556 = vmatpush1.bf16.msra.mxu0 %v540
          %557 = vmatprep.subr.bf16.mxu0 0
          %558 = vmatpush1.bf16.msra.mxu0 %v541
          %559 = vmatprep.subr.bf16.mxu0 0
          %560 = vmatpush1.bf16.msra.mxu0 %v542
          %561 = vmatprep.subr.bf16.mxu0 0
          %562 = vmatpush1.bf16.msra.mxu0 0
          %563 = vmatprep.subr.bf16.mxu0 0
          %564 = vmatpush1.bf16.msra.mxu0 0
          %565 = vmatprep.subr.bf16.mxu0 0
          %566 = vmatpush1.bf16.msra.mxu0 0
          %567 = vmatprep.subr.bf16.mxu0 0
          %568 = vmatpush1.bf16.msra.mxu0 0
          %569 = vmatprep.subr.bf16.mxu0 0
          %570 = vmatpush1.bf16.msra.mxu0 0
          %571 = vmatprep.subr.bf16.mxu0 0
          %572 = vmatpush1.bf16.msra.mxu0 0
          %573 = vmatprep.subr.bf16.mxu0 0
          %574 = vmatpush1.bf16.msra.mxu0 0
          %575 = vmatprep.subr.bf16.mxu0 0
          %576 = vmatpush1.bf16.msra.mxu0 0
          %577 = vmatprep.subr.bf16.mxu0 0
          %578 = vmatpush1.bf16.msra.mxu0 0
          %579 = vmatprep.subr.bf16.mxu0 0
          %580 = vmatpush1.bf16.msra.mxu0 0
          %581 = vmatprep.subr.bf16.mxu0 0
          %582 = vmatpush1.bf16.msra.mxu0 0
          %583 = vmatprep.subr.bf16.mxu0 0
          %584 = vmatpush1.bf16.msra.mxu0 0
          %585 = vmatprep.mubr.bf16.mxu0 0
          %586 = vmatmul.mubr.bf16.gmra.mrb[0].mxu0 %v548
          %v587 = vpop.f32.mrb[0].mxu0
          %v588 = vadd.f32 %v503, %v587
          %v589 = vpop.f32.mrb[0].mxu0
          %v590 = vpop.f32.mrb[0].mxu0
          %v591 = vadd.f32 %v506, %v590
          %v592 = vpop.f32.mrb[0].mxu0
          %593 = vmatprep.mubr.bf16.mxu0 0
          %594 = vmatmul.mubr.bf16.gmra.mrb[0].mxu0 %v551
          %v595 = vpop.f32.mrb[0].mxu0
          %v596 = vadd.f32 %v511, %v595
          %v597 = vpop.f32.mrb[0].mxu0
          %v598 = vpop.f32.mrb[0].mxu0
          %v599 = vadd.f32 %v514, %v598
          %v600 = vpop.f32.mrb[0].mxu0
          %601 = vdwg.mxu0
          %s602 = scalar_lea.vmem %s1, 64
          %v603 = vld [vmem:[%s602] sm:$0xf]
          %v604 = vld [vmem:[%s602 + $0x4] sm:$0xf]
          %v605 = vld [vmem:[%s602 + $0x8] sm:$0xf]
          %v606 = vld [vmem:[%s602 + $0xc] sm:$0xf]
          %v607 = vld [vmem:[%s602 + $0x10] sm:$0xf]
          %v608 = vld [vmem:[%s602 + $0x14] sm:$0xf]
          %v609 = vld [vmem:[%s602 + $0x18] sm:$0xf]
          %v610 = vld [vmem:[%s602 + $0x1c] sm:$0xf]
          %v613 = vunpack.c.l.b16 %v337
          %v614 = vunpack.c.l.b16 %v373
          %v615 = vunpack.c.l.b16 %v340
          %v616 = vunpack.c.l.b16 %v374
          %v617 = vpack.c.b16 %v614, %v613
          %v618 = vpack.c.b16 %v616, %v615
          %v627 = vunpack.c.l.b16 %v603
          %v628 = vunpack.c.l.b16 %v604
          %v629 = vunpack.c.l.b16 %v605
          %v630 = vunpack.c.l.b16 %v606
          %v631 = vunpack.c.l.b16 %v607
          %v632 = vunpack.c.l.b16 %v608
          %v633 = vunpack.c.l.b16 %v609
          %v634 = vunpack.c.l.b16 %v610
          %v635 = vpack.c.b16 %v628, %v627
          %v636 = vpack.c.b16 %v630, %v629
          %v637 = vpack.c.b16 %v632, %v631
          %v638 = vpack.c.b16 %v634, %v633
          %v644 = vsel %vm461, %v617, 0
          %v647 = vsel %vm461, %v618, 0
          %649 = vmatprep.subr.bf16.mxu0 0
          %650 = vmatpush1.bf16.msra.mxu0 %v635
          %651 = vmatprep.subr.bf16.mxu0 0
          %652 = vmatpush1.bf16.msra.mxu0 %v636
          %653 = vmatprep.subr.bf16.mxu0 0
          %654 = vmatpush1.bf16.msra.mxu0 %v637
          %655 = vmatprep.subr.bf16.mxu0 0
          %656 = vmatpush1.bf16.msra.mxu0 %v638
          %657 = vmatprep.subr.bf16.mxu0 0
          %658 = vmatpush1.bf16.msra.mxu0 0
          %659 = vmatprep.subr.bf16.mxu0 0
          %660 = vmatpush1.bf16.msra.mxu0 0
          %661 = vmatprep.subr.bf16.mxu0 0
          %662 = vmatpush1.bf16.msra.mxu0 0
          %663 = vmatprep.subr.bf16.mxu0 0
          %664 = vmatpush1.bf16.msra.mxu0 0
          %665 = vmatprep.subr.bf16.mxu0 0
          %666 = vmatpush1.bf16.msra.mxu0 0
          %667 = vmatprep.subr.bf16.mxu0 0
          %668 = vmatpush1.bf16.msra.mxu0 0
          %669 = vmatprep.subr.bf16.mxu0 0
          %670 = vmatpush1.bf16.msra.mxu0 0
          %671 = vmatprep.subr.bf16.mxu0 0
          %672 = vmatpush1.bf16.msra.mxu0 0
          %673 = vmatprep.subr.bf16.mxu0 0
          %674 = vmatpush1.bf16.msra.mxu0 0
          %675 = vmatprep.subr.bf16.mxu0 0
          %676 = vmatpush1.bf16.msra.mxu0 0
          %677 = vmatprep.subr.bf16.mxu0 0
          %678 = vmatpush1.bf16.msra.mxu0 0
          %679 = vmatprep.subr.bf16.mxu0 0
          %680 = vmatpush1.bf16.msra.mxu0 0
          %681 = vmatprep.mubr.bf16.mxu0 0
          %682 = vmatmul.mubr.bf16.gmra.mrb[0].mxu0 %v644
          %v683 = vpop.f32.mrb[0].mxu0
          %v684 = vadd.f32 0.0, %v683
          %v685 = vpop.f32.mrb[0].mxu0
          %v686 = vpop.f32.mrb[0].mxu0
          %v687 = vadd.f32 0.0, %v686
          %v688 = vpop.f32.mrb[0].mxu0
          %689 = vmatprep.mubr.bf16.mxu0 0
          %690 = vmatmul.mubr.bf16.gmra.mrb[0].mxu0 %v647
          %v691 = vpop.f32.mrb[0].mxu0
          %v692 = vadd.f32 0.0, %v691
          %v693 = vpop.f32.mrb[0].mxu0
          %v694 = vpop.f32.mrb[0].mxu0
          %v695 = vadd.f32 0.0, %v694
          %v696 = vpop.f32.mrb[0].mxu0
          %697 = vdwg.mxu0
          %v698 = vadd.f32 %v588, %v684
          %v699 = vadd.f32 %v591, %v687
          %v700 = vadd.f32 %v596, %v692
          %v701 = vadd.f32 %v599, %v695
          %s702 = sadd.s32 %s331, 2
          %s703 = smul.u32 %s702, 3
          %s704 = smul.addr %s703, 4
          %s705 = scalar_lea.vmem [#allocation2], %s704
          %v706 = vld [vmem:[%s705] sm:$0x8]
          %v707 = vld [vmem:[%s705 + $0x4] sm:$0xf]
          %v708 = vld [vmem:[%s705 + $0x8] sm:$0x7]
          %v709 = vld [vmem:[%s705 + $0xc] sm:$0x8]
          %v710 = vld [vmem:[%s705 + $0x10] sm:$0xf]
          %v711 = vld [vmem:[%s705 + $0x14] sm:$0x7]
          %v718 = vrot.slane %v706, 7
          %v719 = vrot.slane %v718, 4
          %v720 = vrot.slane %v707, 7
          %v721 = vsel %vm350, %v719, %v720
          %v722 = vrot.slane %v720, 4
          %v723 = vrot.slane %v708, 7
          %v724 = vsel %vm350, %v722, %v723
          %v725 = vrot.slane %v709, 7
          %v726 = vrot.slane %v725, 4
          %v727 = vrot.slane %v710, 7
          %v728 = vsel %vm350, %v726, %v727
          %v729 = vrot.slane %v727, 4
          %v730 = vrot.slane %v711, 7
          %v731 = vsel %vm350, %v729, %v730
          %s732 = scalar_lea.vmem %s1, 96
          %v733 = vld [vmem:[%s732] sm:$0xf]
          %v734 = vld [vmem:[%s732 + $0x4] sm:$0xf]
          %v735 = vld [vmem:[%s732 + $0x8] sm:$0xf]
          %v736 = vld [vmem:[%s732 + $0xc] sm:$0xf]
          %v737 = vld [vmem:[%s732 + $0x10] sm:$0xf]
          %v738 = vld [vmem:[%s732 + $0x14] sm:$0xf]
          %v739 = vld [vmem:[%s732 + $0x18] sm:$0xf]
          %v740 = vld [vmem:[%s732 + $0x1c] sm:$0xf]
          %v741 = vunpack.c.l.b16 %v721
          %v742 = vunpack.c.l.b16 %v724
          %v743 = vunpack.c.l.b16 %v728
          %v744 = vunpack.c.l.b16 %v731
          %v745 = vpack.c.b16 %v742, %v741
          %v746 = vpack.c.b16 %v744, %v743
          %v755 = vunpack.c.l.b16 %v733
          %v756 = vunpack.c.l.b16 %v734
          %v757 = vunpack.c.l.b16 %v735
          %v758 = vunpack.c.l.b16 %v736
          %v759 = vunpack.c.l.b16 %v737
          %v760 = vunpack.c.l.b16 %v738
          %v761 = vunpack.c.l.b16 %v739
          %v762 = vunpack.c.l.b16 %v740
          %v763 = vpack.c.b16 %v756, %v755
          %v764 = vpack.c.b16 %v758, %v757
          %v765 = vpack.c.b16 %v760, %v759
          %v766 = vpack.c.b16 %v762, %v761
          %v772 = vsel %vm461, %v745, 0
          %v775 = vsel %vm461, %v746, 0
          %777 = vmatprep.subr.bf16.mxu0 0
          %778 = vmatpush1.bf16.msra.mxu0 %v763
          %779 = vmatprep.subr.bf16.mxu0 0
          %780 = vmatpush1.bf16.msra.mxu0 %v764
          %781 = vmatprep.subr.bf16.mxu0 0
          %782 = vmatpush1.bf16.msra.mxu0 %v765
          %783 = vmatprep.subr.bf16.mxu0 0
          %784 = vmatpush1.bf16.msra.mxu0 %v766
          %785 = vmatprep.subr.bf16.mxu0 0
          %786 = vmatpush1.bf16.msra.mxu0 0
          %787 = vmatprep.subr.bf16.mxu0 0
          %788 = vmatpush1.bf16.msra.mxu0 0
          %789 = vmatprep.subr.bf16.mxu0 0
          %790 = vmatpush1.bf16.msra.mxu0 0
          %791 = vmatprep.subr.bf16.mxu0 0
          %792 = vmatpush1.bf16.msra.mxu0 0
          %793 = vmatprep.subr.bf16.mxu0 0
          %794 = vmatpush1.bf16.msra.mxu0 0
          %795 = vmatprep.subr.bf16.mxu0 0
          %796 = vmatpush1.bf16.msra.mxu0 0
          %797 = vmatprep.subr.bf16.mxu0 0
          %798 = vmatpush1.bf16.msra.mxu0 0
          %799 = vmatprep.subr.bf16.mxu0 0
          %800 = vmatpush1.bf16.msra.mxu0 0
          %801 = vmatprep.subr.bf16.mxu0 0
          %802 = vmatpush1.bf16.msra.mxu0 0
          %803 = vmatprep.subr.bf16.mxu0 0
          %804 = vmatpush1.bf16.msra.mxu0 0
          %805 = vmatprep.subr.bf16.mxu0 0
          %806 = vmatpush1.bf16.msra.mxu0 0
          %807 = vmatprep.subr.bf16.mxu0 0
          %808 = vmatpush1.bf16.msra.mxu0 0
          %809 = vmatprep.mubr.bf16.mxu0 0
          %810 = vmatmul.mubr.bf16.gmra.mrb[0].mxu0 %v772
          %v811 = vpop.f32.mrb[0].mxu0
          %v812 = vadd.f32 0.0, %v811
          %v813 = vpop.f32.mrb[0].mxu0
          %v814 = vpop.f32.mrb[0].mxu0
          %v815 = vadd.f32 0.0, %v814
          %v816 = vpop.f32.mrb[0].mxu0
          %817 = vmatprep.mubr.bf16.mxu0 0
          %818 = vmatmul.mubr.bf16.gmra.mrb[0].mxu0 %v775
          %v819 = vpop.f32.mrb[0].mxu0
          %v820 = vadd.f32 0.0, %v819
          %v821 = vpop.f32.mrb[0].mxu0
          %v822 = vpop.f32.mrb[0].mxu0
          %v823 = vadd.f32 0.0, %v822
          %v824 = vpop.f32.mrb[0].mxu0
          %825 = vdwg.mxu0
          %v826 = vadd.f32 %v698, %v812
          %v827 = vadd.f32 %v699, %v815
          %v828 = vadd.f32 %v700, %v820
          %v829 = vadd.f32 %v701, %v823
          %v830 = vld [vmem:[%s705 + $0x8] sm:$0xf]
          %v831 = vld [vmem:[%s705 + $0x14] sm:$0xf]
          %v833 = vshrl.u32 %v706, 16
          %v835 = vrot.slane %v833, 7
          %v836 = vrot.slane %v835, 4
          %v838 = vshrl.u32 %v707, 16
          %v840 = vrot.slane %v838, 7
          %v841 = vshll.u32 %v707, 16
          %v843 = vor.u32 %v840, %v841
          %v844 = vsel %vm377, %v836, %v843
          %v845 = vrot.slane %v840, 4
          %v847 = vshrl.u32 %v830, 16
          %v849 = vrot.slane %v847, 7
          %v850 = vshll.u32 %v830, 16
          %v852 = vor.u32 %v849, %v850
          %v853 = vsel %vm377, %v845, %v852
          %v855 = vshrl.u32 %v709, 16
          %v857 = vrot.slane %v855, 7
          %v858 = vrot.slane %v857, 4
          %v860 = vshrl.u32 %v710, 16
          %v862 = vrot.slane %v860, 7
          %v863 = vshll.u32 %v710, 16
          %v865 = vor.u32 %v862, %v863
          %v866 = vsel %vm377, %v858, %v865
          %v867 = vrot.slane %v862, 4
          %v869 = vshrl.u32 %v831, 16
          %v871 = vrot.slane %v869, 7
          %v872 = vshll.u32 %v831, 16
          %v874 = vor.u32 %v871, %v872
          %v875 = vsel %vm377, %v867, %v874
          %s876 = scalar_lea.vmem %s1, 128
          %v877 = vld [vmem:[%s876] sm:$0xf]
          %v878 = vld [vmem:[%s876 + $0x4] sm:$0xf]
          %v879 = vld [vmem:[%s876 + $0x8] sm:$0xf]
          %v880 = vld [vmem:[%s876 + $0xc] sm:$0xf]
          %v881 = vld [vmem:[%s876 + $0x10] sm:$0xf]
          %v882 = vld [vmem:[%s876 + $0x14] sm:$0xf]
          %v883 = vld [vmem:[%s876 + $0x18] sm:$0xf]
          %v884 = vld [vmem:[%s876 + $0x1c] sm:$0xf]
          %v885 = vunpack.c.l.b16 %v844
          %v886 = vunpack.c.l.b16 %v853
          %v887 = vunpack.c.l.b16 %v866
          %v888 = vunpack.c.l.b16 %v875
          %v889 = vpack.c.b16 %v886, %v885
          %v890 = vpack.c.b16 %v888, %v887
          %v899 = vunpack.c.l.b16 %v877
          %v900 = vunpack.c.l.b16 %v878
          %v901 = vunpack.c.l.b16 %v879
          %v902 = vunpack.c.l.b16 %v880
          %v903 = vunpack.c.l.b16 %v881
          %v904 = vunpack.c.l.b16 %v882
          %v905 = vunpack.c.l.b16 %v883
          %v906 = vunpack.c.l.b16 %v884
          %v907 = vpack.c.b16 %v900, %v899
          %v908 = vpack.c.b16 %v902, %v901
          %v909 = vpack.c.b16 %v904, %v903
          %v910 = vpack.c.b16 %v906, %v905
          %v916 = vsel %vm461, %v889, 0
          %v919 = vsel %vm461, %v890, 0
          %921 = vmatprep.subr.bf16.mxu0 0
          %922 = vmatpush1.bf16.msra.mxu0 %v907
          %923 = vmatprep.subr.bf16.mxu0 0
          %924 = vmatpush1.bf16.msra.mxu0 %v908
          %925 = vmatprep.subr.bf16.mxu0 0
          %926 = vmatpush1.bf16.msra.mxu0 %v909
          %927 = vmatprep.subr.bf16.mxu0 0
          %928 = vmatpush1.bf16.msra.mxu0 %v910
          %929 = vmatprep.subr.bf16.mxu0 0
          %930 = vmatpush1.bf16.msra.mxu0 0
          %931 = vmatprep.subr.bf16.mxu0 0
          %932 = vmatpush1.bf16.msra.mxu0 0
          %933 = vmatprep.subr.bf16.mxu0 0
          %934 = vmatpush1.bf16.msra.mxu0 0
          %935 = vmatprep.subr.bf16.mxu0 0
          %936 = vmatpush1.bf16.msra.mxu0 0
          %937 = vmatprep.subr.bf16.mxu0 0
          %938 = vmatpush1.bf16.msra.mxu0 0
          %939 = vmatprep.subr.bf16.mxu0 0
          %940 = vmatpush1.bf16.msra.mxu0 0
          %941 = vmatprep.subr.bf16.mxu0 0
          %942 = vmatpush1.bf16.msra.mxu0 0
          %943 = vmatprep.subr.bf16.mxu0 0
          %944 = vmatpush1.bf16.msra.mxu0 0
          %945 = vmatprep.subr.bf16.mxu0 0
          %946 = vmatpush1.bf16.msra.mxu0 0
          %947 = vmatprep.subr.bf16.mxu0 0
          %948 = vmatpush1.bf16.msra.mxu0 0
          %949 = vmatprep.subr.bf16.mxu0 0
          %950 = vmatpush1.bf16.msra.mxu0 0
          %951 = vmatprep.subr.bf16.mxu0 0
          %952 = vmatpush1.bf16.msra.mxu0 0
          %953 = vmatprep.mubr.bf16.mxu0 0
          %954 = vmatmul.mubr.bf16.gmra.mrb[0].mxu0 %v916
          %v955 = vpop.f32.mrb[0].mxu0
          %v956 = vadd.f32 0.0, %v955
          %v957 = vpop.f32.mrb[0].mxu0
          %v958 = vpop.f32.mrb[0].mxu0
          %v959 = vadd.f32 0.0, %v958
          %v960 = vpop.f32.mrb[0].mxu0
          %961 = vmatprep.mubr.bf16.mxu0 0
          %962 = vmatmul.mubr.bf16.gmra.mrb[0].mxu0 %v919
          %v963 = vpop.f32.mrb[0].mxu0
          %v964 = vadd.f32 0.0, %v963
          %v965 = vpop.f32.mrb[0].mxu0
          %v966 = vpop.f32.mrb[0].mxu0
          %v967 = vadd.f32 0.0, %v966
          %v968 = vpop.f32.mrb[0].mxu0
          %969 = vdwg.mxu0
          %v970 = vadd.f32 %v826, %v956
          %v971 = vadd.f32 %v827, %v959
          %v972 = vadd.f32 %v828, %v964
          %v973 = vadd.f32 %v829, %v967
          %s974 = scalar_lea.vmem %s1, 160
          %v975 = vld [vmem:[%s974] sm:$0xf]
          %v976 = vld [vmem:[%s974 + $0x4] sm:$0xf]
          %v977 = vld [vmem:[%s974 + $0x8] sm:$0xf]
          %v978 = vld [vmem:[%s974 + $0xc] sm:$0xf]
          %v979 = vld [vmem:[%s974 + $0x10] sm:$0xf]
          %v980 = vld [vmem:[%s974 + $0x14] sm:$0xf]
          %v981 = vld [vmem:[%s974 + $0x18] sm:$0xf]
          %v982 = vld [vmem:[%s974 + $0x1c] sm:$0xf]
          %v985 = vunpack.c.l.b16 %v707
          %v986 = vunpack.c.l.b16 %v830
          %v987 = vunpack.c.l.b16 %v710
          %v988 = vunpack.c.l.b16 %v831
          %v989 = vpack.c.b16 %v986, %v985
          %v990 = vpack.c.b16 %v988, %v987
          %v999 = vunpack.c.l.b16 %v975
          %v1000 = vunpack.c.l.b16 %v976
          %v1001 = vunpack.c.l.b16 %v977
          %v1002 = vunpack.c.l.b16 %v978
          %v1003 = vunpack.c.l.b16 %v979
          %v1004 = vunpack.c.l.b16 %v980
          %v1005 = vunpack.c.l.b16 %v981
          %v1006 = vunpack.c.l.b16 %v982
          %v1007 = vpack.c.b16 %v1000, %v999
          %v1008 = vpack.c.b16 %v1002, %v1001
          %v1009 = vpack.c.b16 %v1004, %v1003
          %v1010 = vpack.c.b16 %v1006, %v1005
          %v1016 = vsel %vm461, %v989, 0
          %v1019 = vsel %vm461, %v990, 0
          %1021 = vmatprep.subr.bf16.mxu0 0
          %1022 = vmatpush1.bf16.msra.mxu0 %v1007
          %1023 = vmatprep.subr.bf16.mxu0 0
          %1024 = vmatpush1.bf16.msra.mxu0 %v1008
          %1025 = vmatprep.subr.bf16.mxu0 0
          %1026 = vmatpush1.bf16.msra.mxu0 %v1009
          %1027 = vmatprep.subr.bf16.mxu0 0
          %1028 = vmatpush1.bf16.msra.mxu0 %v1010
          %1029 = vmatprep.subr.bf16.mxu0 0
          %1030 = vmatpush1.bf16.msra.mxu0 0
          %1031 = vmatprep.subr.bf16.mxu0 0
          %1032 = vmatpush1.bf16.msra.mxu0 0
          %1033 = vmatprep.subr.bf16.mxu0 0
          %1034 = vmatpush1.bf16.msra.mxu0 0
          %1035 = vmatprep.subr.bf16.mxu0 0
          %1036 = vmatpush1.bf16.msra.mxu0 0
          %1037 = vmatprep.subr.bf16.mxu0 0
          %1038 = vmatpush1.bf16.msra.mxu0 0
          %1039 = vmatprep.subr.bf16.mxu0 0
          %1040 = vmatpush1.bf16.msra.mxu0 0
          %1041 = vmatprep.subr.bf16.mxu0 0
          %1042 = vmatpush1.bf16.msra.mxu0 0
          %1043 = vmatprep.subr.bf16.mxu0 0
          %1044 = vmatpush1.bf16.msra.mxu0 0
          %1045 = vmatprep.subr.bf16.mxu0 0
          %1046 = vmatpush1.bf16.msra.mxu0 0
          %1047 = vmatprep.subr.bf16.mxu0 0
          %1048 = vmatpush1.bf16.msra.mxu0 0
          %1049 = vmatprep.subr.bf16.mxu0 0
          %1050 = vmatpush1.bf16.msra.mxu0 0
          %1051 = vmatprep.subr.bf16.mxu0 0
          %1052 = vmatpush1.bf16.msra.mxu0 0
          %1053 = vmatprep.mubr.bf16.mxu0 0
          %1054 = vmatmul.mubr.bf16.gmra.mrb[0].mxu0 %v1016
          %v1055 = vpop.f32.mrb[0].mxu0
          %v1056 = vadd.f32 0.0, %v1055
          %v1057 = vpop.f32.mrb[0].mxu0
          %v1058 = vpop.f32.mrb[0].mxu0
          %v1059 = vadd.f32 0.0, %v1058
          %v1060 = vpop.f32.mrb[0].mxu0
          %1061 = vmatprep.mubr.bf16.mxu0 0
          %1062 = vmatmul.mubr.bf16.gmra.mrb[0].mxu0 %v1019
          %v1063 = vpop.f32.mrb[0].mxu0
          %v1064 = vadd.f32 0.0, %v1063
          %v1065 = vpop.f32.mrb[0].mxu0
          %v1066 = vpop.f32.mrb[0].mxu0
          %v1067 = vadd.f32 0.0, %v1066
          %v1068 = vpop.f32.mrb[0].mxu0
          %1069 = vdwg.mxu0
          %v1070 = vadd.f32 %v970, %v1056
          %v1071 = vadd.f32 %v971, %v1059
          %v1072 = vadd.f32 %v972, %v1064
          %v1073 = vadd.f32 %v973, %v1067
          %s1074 = sadd.s32 %s331, 3
          %s1075 = smul.u32 %s1074, 3
          %s1076 = smul.addr %s1075, 4
          %s1077 = scalar_lea.vmem [#allocation2], %s1076
          %v1078 = vld [vmem:[%s1077] sm:$0x8]
          %v1079 = vld [vmem:[%s1077 + $0x4] sm:$0xf]
          %v1080 = vld [vmem:[%s1077 + $0x8] sm:$0x7]
          %v1081 = vld [vmem:[%s1077 + $0xc] sm:$0x8]
          %v1082 = vld [vmem:[%s1077 + $0x10] sm:$0xf]
          %v1083 = vld [vmem:[%s1077 + $0x14] sm:$0x7]
          %v1090 = vrot.slane %v1078, 7
          %v1091 = vrot.slane %v1090, 4
          %v1092 = vrot.slane %v1079, 7
          %v1093 = vsel %vm350, %v1091, %v1092
          %v1094 = vrot.slane %v1092, 4
          %v1095 = vrot.slane %v1080, 7
          %v1096 = vsel %vm350, %v1094, %v1095
          %v1097 = vrot.slane %v1081, 7
          %v1098 = vrot.slane %v1097, 4
          %v1099 = vrot.slane %v1082, 7
          %v1100 = vsel %vm350, %v1098, %v1099
          %v1101 = vrot.slane %v1099, 4
          %v1102 = vrot.slane %v1083, 7
          %v1103 = vsel %vm350, %v1101, %v1102
          %s1104 = scalar_lea.vmem %s1, 192
          %v1105 = vld [vmem:[%s1104] sm:$0xf]
          %v1106 = vld [vmem:[%s1104 + $0x4] sm:$0xf]
          %v1107 = vld [vmem:[%s1104 + $0x8] sm:$0xf]
          %v1108 = vld [vmem:[%s1104 + $0xc] sm:$0xf]
          %v1109 = vld [vmem:[%s1104 + $0x10] sm:$0xf]
          %v1110 = vld [vmem:[%s1104 + $0x14] sm:$0xf]
          %v1111 = vld [vmem:[%s1104 + $0x18] sm:$0xf]
          %v1112 = vld [vmem:[%s1104 + $0x1c] sm:$0xf]
          %v1113 = vunpack.c.l.b16 %v1093
          %v1114 = vunpack.c.l.b16 %v1096
          %v1115 = vunpack.c.l.b16 %v1100
          %v1116 = vunpack.c.l.b16 %v1103
          %v1117 = vpack.c.b16 %v1114, %v1113
          %v1118 = vpack.c.b16 %v1116, %v1115
          %v1127 = vunpack.c.l.b16 %v1105
          %v1128 = vunpack.c.l.b16 %v1106
          %v1129 = vunpack.c.l.b16 %v1107
          %v1130 = vunpack.c.l.b16 %v1108
          %v1131 = vunpack.c.l.b16 %v1109
          %v1132 = vunpack.c.l.b16 %v1110
          %v1133 = vunpack.c.l.b16 %v1111
          %v1134 = vunpack.c.l.b16 %v1112
          %v1135 = vpack.c.b16 %v1128, %v1127
          %v1136 = vpack.c.b16 %v1130, %v1129
          %v1137 = vpack.c.b16 %v1132, %v1131
          %v1138 = vpack.c.b16 %v1134, %v1133
          %v1144 = vsel %vm461, %v1117, 0
          %v1147 = vsel %vm461, %v1118, 0
          %1149 = vmatprep.subr.bf16.mxu0 0
          %1150 = vmatpush1.bf16.msra.mxu0 %v1135
          %1151 = vmatprep.subr.bf16.mxu0 0
          %1152 = vmatpush1.bf16.msra.mxu0 %v1136
          %1153 = vmatprep.subr.bf16.mxu0 0
          %1154 = vmatpush1.bf16.msra.mxu0 %v1137
          %1155 = vmatprep.subr.bf16.mxu0 0
          %1156 = vmatpush1.bf16.msra.mxu0 %v1138
          %1157 = vmatprep.subr.bf16.mxu0 0
          %1158 = vmatpush1.bf16.msra.mxu0 0
          %1159 = vmatprep.subr.bf16.mxu0 0
          %1160 = vmatpush1.bf16.msra.mxu0 0
          %1161 = vmatprep.subr.bf16.mxu0 0
          %1162 = vmatpush1.bf16.msra.mxu0 0
          %1163 = vmatprep.subr.bf16.mxu0 0
          %1164 = vmatpush1.bf16.msra.mxu0 0
          %1165 = vmatprep.subr.bf16.mxu0 0
          %1166 = vmatpush1.bf16.msra.mxu0 0
          %1167 = vmatprep.subr.bf16.mxu0 0
          %1168 = vmatpush1.bf16.msra.mxu0 0
          %1169 = vmatprep.subr.bf16.mxu0 0
          %1170 = vmatpush1.bf16.msra.mxu0 0
          %1171 = vmatprep.subr.bf16.mxu0 0
          %1172 = vmatpush1.bf16.msra.mxu0 0
          %1173 = vmatprep.subr.bf16.mxu0 0
          %1174 = vmatpush1.bf16.msra.mxu0 0
          %1175 = vmatprep.subr.bf16.mxu0 0
          %1176 = vmatpush1.bf16.msra.mxu0 0
          %1177 = vmatprep.subr.bf16.mxu0 0
          %1178 = vmatpush1.bf16.msra.mxu0 0
          %1179 = vmatprep.subr.bf16.mxu0 0
          %1180 = vmatpush1.bf16.msra.mxu0 0
          %1181 = vmatprep.mubr.bf16.mxu0 0
          %1182 = vmatmul.mubr.bf16.gmra.mrb[0].mxu0 %v1144
          %v1183 = vpop.f32.mrb[0].mxu0
          %v1184 = vadd.f32 0.0, %v1183
          %v1185 = vpop.f32.mrb[0].mxu0
          %v1186 = vpop.f32.mrb[0].mxu0
          %v1187 = vadd.f32 0.0, %v1186
          %v1188 = vpop.f32.mrb[0].mxu0
          %1189 = vmatprep.mubr.bf16.mxu0 0
          %1190 = vmatmul.mubr.bf16.gmra.mrb[0].mxu0 %v1147
          %v1191 = vpop.f32.mrb[0].mxu0
          %v1192 = vadd.f32 0.0, %v1191
          %v1193 = vpop.f32.mrb[0].mxu0
          %v1194 = vpop.f32.mrb[0].mxu0
          %v1195 = vadd.f32 0.0, %v1194
          %v1196 = vpop.f32.mrb[0].mxu0
          %1197 = vdwg.mxu0
          %v1198 = vadd.f32 %v1070, %v1184
          %v1199 = vadd.f32 %v1071, %v1187
          %v1200 = vadd.f32 %v1072, %v1192
          %v1201 = vadd.f32 %v1073, %v1195
          %v1202 = vld [vmem:[%s1077 + $0x8] sm:$0xf]
          %v1203 = vld [vmem:[%s1077 + $0x14] sm:$0xf]
          %v1205 = vshrl.u32 %v1078, 16
          %v1207 = vrot.slane %v1205, 7
          %v1208 = vrot.slane %v1207, 4
          %v1210 = vshrl.u32 %v1079, 16
          %v1212 = vrot.slane %v1210, 7
          %v1213 = vshll.u32 %v1079, 16
          %v1215 = vor.u32 %v1212, %v1213
          %v1216 = vsel %vm377, %v1208, %v1215
          %v1217 = vrot.slane %v1212, 4
          %v1219 = vshrl.u32 %v1202, 16
          %v1221 = vrot.slane %v1219, 7
          %v1222 = vshll.u32 %v1202, 16
          %v1224 = vor.u32 %v1221, %v1222
          %v1225 = vsel %vm377, %v1217, %v1224
          %v1227 = vshrl.u32 %v1081, 16
          %v1229 = vrot.slane %v1227, 7
          %v1230 = vrot.slane %v1229, 4
          %v1232 = vshrl.u32 %v1082, 16
          %v1234 = vrot.slane %v1232, 7
          %v1235 = vshll.u32 %v1082, 16
          %v1237 = vor.u32 %v1234, %v1235
          %v1238 = vsel %vm377, %v1230, %v1237
          %v1239 = vrot.slane %v1234, 4
          %v1241 = vshrl.u32 %v1203, 16
          %v1243 = vrot.slane %v1241, 7
          %v1244 = vshll.u32 %v1203, 16
          %v1246 = vor.u32 %v1243, %v1244
          %v1247 = vsel %vm377, %v1239, %v1246
          %s1248 = scalar_lea.vmem %s1, 224
          %v1249 = vld [vmem:[%s1248] sm:$0xf]
          %v1250 = vld [vmem:[%s1248 + $0x4] sm:$0xf]
          %v1251 = vld [vmem:[%s1248 + $0x8] sm:$0xf]
          %v1252 = vld [vmem:[%s1248 + $0xc] sm:$0xf]
          %v1253 = vld [vmem:[%s1248 + $0x10] sm:$0xf]
          %v1254 = vld [vmem:[%s1248 + $0x14] sm:$0xf]
          %v1255 = vld [vmem:[%s1248 + $0x18] sm:$0xf]
          %v1256 = vld [vmem:[%s1248 + $0x1c] sm:$0xf]
          %v1257 = vunpack.c.l.b16 %v1216
          %v1258 = vunpack.c.l.b16 %v1225
          %v1259 = vunpack.c.l.b16 %v1238
          %v1260 = vunpack.c.l.b16 %v1247
          %v1261 = vpack.c.b16 %v1258, %v1257
          %v1262 = vpack.c.b16 %v1260, %v1259
          %v1271 = vunpack.c.l.b16 %v1249
          %v1272 = vunpack.c.l.b16 %v1250
          %v1273 = vunpack.c.l.b16 %v1251
          %v1274 = vunpack.c.l.b16 %v1252
          %v1275 = vunpack.c.l.b16 %v1253
          %v1276 = vunpack.c.l.b16 %v1254
          %v1277 = vunpack.c.l.b16 %v1255
          %v1278 = vunpack.c.l.b16 %v1256
          %v1279 = vpack.c.b16 %v1272, %v1271
          %v1280 = vpack.c.b16 %v1274, %v1273
          %v1281 = vpack.c.b16 %v1276, %v1275
          %v1282 = vpack.c.b16 %v1278, %v1277
          %v1288 = vsel %vm461, %v1261, 0
          %v1291 = vsel %vm461, %v1262, 0
          %1293 = vmatprep.subr.bf16.mxu0 0
          %1294 = vmatpush1.bf16.msra.mxu0 %v1279
          %1295 = vmatprep.subr.bf16.mxu0 0
          %1296 = vmatpush1.bf16.msra.mxu0 %v1280
          %1297 = vmatprep.subr.bf16.mxu0 0
          %1298 = vmatpush1.bf16.msra.mxu0 %v1281
          %1299 = vmatprep.subr.bf16.mxu0 0
          %1300 = vmatpush1.bf16.msra.mxu0 %v1282
          %1301 = vmatprep.subr.bf16.mxu0 0
          %1302 = vmatpush1.bf16.msra.mxu0 0
          %1303 = vmatprep.subr.bf16.mxu0 0
          %1304 = vmatpush1.bf16.msra.mxu0 0
          %1305 = vmatprep.subr.bf16.mxu0 0
          %1306 = vmatpush1.bf16.msra.mxu0 0
          %1307 = vmatprep.subr.bf16.mxu0 0
          %1308 = vmatpush1.bf16.msra.mxu0 0
          %1309 = vmatprep.subr.bf16.mxu0 0
          %1310 = vmatpush1.bf16.msra.mxu0 0
          %1311 = vmatprep.subr.bf16.mxu0 0
          %1312 = vmatpush1.bf16.msra.mxu0 0
          %1313 = vmatprep.subr.bf16.mxu0 0
          %1314 = vmatpush1.bf16.msra.mxu0 0
          %1315 = vmatprep.subr.bf16.mxu0 0
          %1316 = vmatpush1.bf16.msra.mxu0 0
          %1317 = vmatprep.subr.bf16.mxu0 0
          %1318 = vmatpush1.bf16.msra.mxu0 0
          %1319 = vmatprep.subr.bf16.mxu0 0
          %1320 = vmatpush1.bf16.msra.mxu0 0
          %1321 = vmatprep.subr.bf16.mxu0 0
          %1322 = vmatpush1.bf16.msra.mxu0 0
          %1323 = vmatprep.subr.bf16.mxu0 0
          %1324 = vmatpush1.bf16.msra.mxu0 0
          %1325 = vmatprep.mubr.bf16.mxu0 0
          %1326 = vmatmul.mubr.bf16.gmra.mrb[0].mxu0 %v1288
          %v1327 = vpop.f32.mrb[0].mxu0
          %v1328 = vadd.f32 0.0, %v1327
          %v1329 = vpop.f32.mrb[0].mxu0
          %v1330 = vpop.f32.mrb[0].mxu0
          %v1331 = vadd.f32 0.0, %v1330
          %v1332 = vpop.f32.mrb[0].mxu0
          %1333 = vmatprep.mubr.bf16.mxu0 0
          %1334 = vmatmul.mubr.bf16.gmra.mrb[0].mxu0 %v1291
          %v1335 = vpop.f32.mrb[0].mxu0
          %v1336 = vadd.f32 0.0, %v1335
          %v1337 = vpop.f32.mrb[0].mxu0
          %v1338 = vpop.f32.mrb[0].mxu0
          %v1339 = vadd.f32 0.0, %v1338
          %v1340 = vpop.f32.mrb[0].mxu0
          %1341 = vdwg.mxu0
          %v1342 = vadd.f32 %v1198, %v1328
          %v1343 = vadd.f32 %v1199, %v1331
          %v1344 = vadd.f32 %v1200, %v1336
          %v1345 = vadd.f32 %v1201, %v1339
          %s1346 = scalar_lea.vmem %s1, 256
          %v1347 = vld [vmem:[%s1346] sm:$0xf]
          %v1348 = vld [vmem:[%s1346 + $0x4] sm:$0xf]
          %v1349 = vld [vmem:[%s1346 + $0x8] sm:$0xf]
          %v1350 = vld [vmem:[%s1346 + $0xc] sm:$0xf]
          %v1351 = vld [vmem:[%s1346 + $0x10] sm:$0xf]
          %v1352 = vld [vmem:[%s1346 + $0x14] sm:$0xf]
          %v1353 = vld [vmem:[%s1346 + $0x18] sm:$0xf]
          %v1354 = vld [vmem:[%s1346 + $0x1c] sm:$0xf]
          %v1357 = vunpack.c.l.b16 %v1079
          %v1358 = vunpack.c.l.b16 %v1202
          %v1359 = vunpack.c.l.b16 %v1082
          %v1360 = vunpack.c.l.b16 %v1203
          %v1361 = vpack.c.b16 %v1358, %v1357
          %v1362 = vpack.c.b16 %v1360, %v1359
          %v1371 = vunpack.c.l.b16 %v1347
          %v1372 = vunpack.c.l.b16 %v1348
          %v1373 = vunpack.c.l.b16 %v1349
          %v1374 = vunpack.c.l.b16 %v1350
          %v1375 = vunpack.c.l.b16 %v1351
          %v1376 = vunpack.c.l.b16 %v1352
          %v1377 = vunpack.c.l.b16 %v1353
          %v1378 = vunpack.c.l.b16 %v1354
          %v1379 = vpack.c.b16 %v1372, %v1371
          %v1380 = vpack.c.b16 %v1374, %v1373
          %v1381 = vpack.c.b16 %v1376, %v1375
          %v1382 = vpack.c.b16 %v1378, %v1377
          %v1388 = vsel %vm461, %v1361, 0
          %v1391 = vsel %vm461, %v1362, 0
          %1393 = vmatprep.subr.bf16.mxu0 0
          %1394 = vmatpush1.bf16.msra.mxu0 %v1379
          %1395 = vmatprep.subr.bf16.mxu0 0
          %1396 = vmatpush1.bf16.msra.mxu0 %v1380
          %1397 = vmatprep.subr.bf16.mxu0 0
          %1398 = vmatpush1.bf16.msra.mxu0 %v1381
          %1399 = vmatprep.subr.bf16.mxu0 0
          %1400 = vmatpush1.bf16.msra.mxu0 %v1382
          %1401 = vmatprep.subr.bf16.mxu0 0
          %1402 = vmatpush1.bf16.msra.mxu0 0
          %1403 = vmatprep.subr.bf16.mxu0 0
          %1404 = vmatpush1.bf16.msra.mxu0 0
          %1405 = vmatprep.subr.bf16.mxu0 0
          %1406 = vmatpush1.bf16.msra.mxu0 0
          %1407 = vmatprep.subr.bf16.mxu0 0
          %1408 = vmatpush1.bf16.msra.mxu0 0
          %1409 = vmatprep.subr.bf16.mxu0 0
          %1410 = vmatpush1.bf16.msra.mxu0 0
          %1411 = vmatprep.subr.bf16.mxu0 0
          %1412 = vmatpush1.bf16.msra.mxu0 0
          %1413 = vmatprep.subr.bf16.mxu0 0
          %1414 = vmatpush1.bf16.msra.mxu0 0
          %1415 = vmatprep.subr.bf16.mxu0 0
          %1416 = vmatpush1.bf16.msra.mxu0 0
          %1417 = vmatprep.subr.bf16.mxu0 0
          %1418 = vmatpush1.bf16.msra.mxu0 0
          %1419 = vmatprep.subr.bf16.mxu0 0
          %1420 = vmatpush1.bf16.msra.mxu0 0
          %1421 = vmatprep.subr.bf16.mxu0 0
          %1422 = vmatpush1.bf16.msra.mxu0 0
          %1423 = vmatprep.subr.bf16.mxu0 0
          %1424 = vmatpush1.bf16.msra.mxu0 0
          %1425 = vmatprep.mubr.bf16.mxu0 0
          %1426 = vmatmul.mubr.bf16.gmra.mrb[0].mxu0 %v1388
          %v1427 = vpop.f32.mrb[0].mxu0
          %v1428 = vadd.f32 0.0, %v1427
          %v1429 = vpop.f32.mrb[0].mxu0
          %v1430 = vpop.f32.mrb[0].mxu0
          %v1431 = vadd.f32 0.0, %v1430
          %v1432 = vpop.f32.mrb[0].mxu0
          %1433 = vmatprep.mubr.bf16.mxu0 0
          %1434 = vmatmul.mubr.bf16.gmra.mrb[0].mxu0 %v1391
          %v1435 = vpop.f32.mrb[0].mxu0
          %v1436 = vadd.f32 0.0, %v1435
          %v1437 = vpop.f32.mrb[0].mxu0
          %v1438 = vpop.f32.mrb[0].mxu0
          %v1439 = vadd.f32 0.0, %v1438
          %v1440 = vpop.f32.mrb[0].mxu0
          %1441 = vdwg.mxu0
          %v1442 = vadd.f32 %v1342, %v1428
          %v1443 = vadd.f32 %v1343, %v1431
          %v1444 = vadd.f32 %v1344, %v1436
          %v1445 = vadd.f32 %v1345, %v1439
          %v1446 = vld [vmem:[%s2] sm:$0x1]
          %v1448 = vlaneseq
          %v1449 = vshrl.u32 %v1448, 7
          %v1450 = vsub.s32 0, %v1449
          %v1451 = vrot.slane %v1446, %v1450
          %v1453 = vadd.f32 %v1442, %v1451
          %v1454 = vadd.f32 %v1443, %v1451
          %v1455 = vadd.f32 %v1444, %v1451
          %v1456 = vadd.f32 %v1445, %v1451
          %v1457 = vmax.f32 %v1453, 0.0
          %v1458 = vmax.f32 %v1454, 0.0
          %v1459 = vmax.f32 %v1455, 0.0
          %v1460 = vmax.f32 %v1456, 0.0
          %v1461 = vstv %s331
          %v1462 = vadd.s32 %v1461, 1
          %v1463 = vlaneseq
          %v1464 = vshrl.u32 %v1463, 7
          %v1465 = vadd.s32 %v1464, 8
          %vm1466 = vcmp.ge.s32.totalorder %v1461, 0
          %vm1467 = vcmp.ge.s32.totalorder %v1462, 0
          %vm1468 = vcmp.lt.s32.totalorder %v1461, 8
          %vm1469 = vcmp.lt.s32.totalorder %v1462, 8
          %vm1470 = vmand %vm1466, %vm1468
          %vm1471 = vmand %vm1467, %vm1469
          %vm1472 = vcmp.ge.s32.totalorder %v1464, 1
          %vm1473 = vcmp.ge.s32.totalorder %v1465, 1
          %vm1474 = vmand %vm1470, %vm1472
          %vm1475 = vmand %vm1470, %vm1473
          %vm1476 = vmand %vm1471, %vm1472
          %vm1477 = vmand %vm1471, %vm1473
          %vm1478 = vcmp.le.s32.totalorder %v1464, 8
          %vm1479 = vcmp.le.s32.totalorder %v1465, 8
          %vm1480 = vmand %vm1474, %vm1478
          %vm1481 = vmand %vm1475, %vm1479
          %vm1482 = vmand %vm1476, %vm1478
          %vm1483 = vmand %vm1477, %vm1479
          %v1484 = vsel %vm1480, %v1457, 0.0
          %v1485 = vsel %vm1481, %v1458, 0.0
          %v1486 = vsel %vm1482, %v1459, 0.0
          %v1487 = vsel %vm1483, %v1460, 0.0
          %v1488 = vpack.c.bf16 %v1485, %v1484
          %v1489 = vpack.c.bf16 %v1487, %v1486
          %s1490 = smul.addr %s330, 8
          %s1491 = scalar_lea.vmem [#allocation3], %s1490
          %1492 = vst [vmem:[%s1491] sm:$0xff] %v1488
          %1493 = vst [vmem:[%s1491 + $0x8] sm:$0xff] %v1489
        $region53: #{musiclass_forward.4} parent=39 // loop_footer
          %s329 = sadd.s32 1, %s325
        $region54: #{musiclass_forward.4} parent=39 // loop_footer_branch
          %324 = sbr.rel target = $region50
        $region55: #{musiclass_forward.4} parent=39 // loop_exit
          _
        loop: start=0, step=1, limit=4
        $region56: #{musiclass_forward.4} parent=39 // loop_pre_header
          _
        $region57: #{musiclass_forward.4} parent=39 // loop_header
          %s1495 = sphi 0, %s1499
          %p1496 = scmp.ge.s32.totalorder %s1495, 4
        $region58: #{musiclass_forward.4} parent=39 // loop_header_branch
          %1498 = sbr.rel (%p1496) target = $region62
        $region59: #{musiclass_forward.4} parent=39 // loop_body
          %s1500 = smul.u32 %s1495, 2
          %s1501 = smul.addr %s1500, 8
          %s1502 = scalar_lea.vmem [#allocation3], %s1501
          %v1503 = vld [vmem:[%s1502] sm:$0xf]
          %v1504 = vld [vmem:[%s1502 + $0x8] sm:$0xf]
          %v1505 = vld [vmem:[#allocation4] sm:$0xf]
          %v1506 = vld [vmem:[#allocation4 + $0x4] sm:$0xf]
          %v1507 = vld [vmem:[#allocation4 + $0x8] sm:$0xf]
          %v1508 = vld [vmem:[#allocation4 + $0xc] sm:$0xf]
          %v1509 = vld [vmem:[#allocation4 + $0x10] sm:$0xf]
          %v1510 = vld [vmem:[#allocation4 + $0x14] sm:$0xf]
          %v1511 = vld [vmem:[#allocation4 + $0x18] sm:$0xf]
          %v1512 = vld [vmem:[#allocation4 + $0x1c] sm:$0xf]
          %v1513 = vld [vmem:[#allocation4 + $0x20] sm:$0xf]
          %v1514 = vld [vmem:[#allocation4 + $0x24] sm:$0xf]
          %v1515 = vld [vmem:[#allocation4 + $0x28] sm:$0xf]
          %v1516 = vld [vmem:[#allocation4 + $0x2c] sm:$0xf]
          %v1517 = vld [vmem:[#allocation4 + $0x30] sm:$0xf]
          %v1518 = vld [vmem:[#allocation4 + $0x34] sm:$0xf]
          %v1519 = vld [vmem:[#allocation4 + $0x38] sm:$0xf]
          %v1520 = vld [vmem:[#allocation4 + $0x3c] sm:$0xf]
          %v1521 = vld [vmem:[%s1502] sm:$0x1f]
          %v1522 = vld [vmem:[%s1502 + $0x8] sm:$0x1f]
          %v1525 = vunpack.c.l.b16 %v1521
          %v1526 = vunpack.c.h.b16 %v1521
          %v1527 = vunpack.c.l.b16 %v1522
          %v1528 = vunpack.c.h.b16 %v1522
          %v1529 = vpack.c.b16 %v1525, %v1525
          %v1530 = vpack.c.b16 %v1526, %v1526
          %v1531 = vpack.c.b16 %v1527, %v1527
          %v1532 = vpack.c.b16 %v1528, %v1528
          %vm1533 = vsmask.f32 3328
          %vm1534 = vsmask.f32 7440
          %vm1535 = vmor %vm1533, %vm1534
          %v1537 = vshrl.u32 %v1529, 16
          %v1539 = vrot.slane %v1537, 4
          %v1540 = vshll.u32 %v1529, 16
          %v1542 = vrot.slane %v1540, 5
          %v1543 = vor.u32 %v1539, %v1542
          %v1544 = vrot.slane %v1543, 4
          %v1546 = vshll.u32 %v1530, 16
          %v1548 = vrot.slane %v1546, 5
          %v1549 = vsel %vm1535, %v1544, %v1548
          %v1551 = vshrl.u32 %v1531, 16
          %v1553 = vrot.slane %v1551, 4
          %v1554 = vshll.u32 %v1531, 16
          %v1556 = vrot.slane %v1554, 5
          %v1557 = vor.u32 %v1553, %v1556
          %v1558 = vrot.slane %v1557, 4
          %v1560 = vshll.u32 %v1532, 16
          %v1562 = vrot.slane %v1560, 5
          %v1563 = vsel %vm1535, %v1558, %v1562
          %s1564 = scalar_lea.vmem [#allocation4], 64
          %v1565 = vld [vmem:[%s1564] sm:$0xf]
          %v1566 = vld [vmem:[%s1564 + $0x4] sm:$0xf]
          %v1567 = vld [vmem:[%s1564 + $0x8] sm:$0xf]
          %v1568 = vld [vmem:[%s1564 + $0xc] sm:$0xf]
          %v1569 = vld [vmem:[%s1564 + $0x10] sm:$0xf]
          %v1570 = vld [vmem:[%s1564 + $0x14] sm:$0xf]
          %v1571 = vld [vmem:[%s1564 + $0x18] sm:$0xf]
          %v1572 = vld [vmem:[%s1564 + $0x1c] sm:$0xf]
          %v1573 = vld [vmem:[%s1564 + $0x20] sm:$0xf]
          %v1574 = vld [vmem:[%s1564 + $0x24] sm:$0xf]
          %v1575 = vld [vmem:[%s1564 + $0x28] sm:$0xf]
          %v1576 = vld [vmem:[%s1564 + $0x2c] sm:$0xf]
          %v1577 = vld [vmem:[%s1564 + $0x30] sm:$0xf]
          %v1578 = vld [vmem:[%s1564 + $0x34] sm:$0xf]
          %v1579 = vld [vmem:[%s1564 + $0x38] sm:$0xf]
          %v1580 = vld [vmem:[%s1564 + $0x3c] sm:$0xf]
          %v1581 = vunpack.c.l.b16 %v1549
          %v1582 = vunpack.c.l.b16 %v1563
          %v1583 = vpack.c.b16 %v1582, %v1581
          %v1601 = vunpack.c.l.b16 %v1565
          %v1602 = vunpack.c.l.b16 %v1566
          %v1603 = vunpack.c.l.b16 %v1567
          %v1604 = vunpack.c.l.b16 %v1568
          %v1605 = vunpack.c.l.b16 %v1569
          %v1606 = vunpack.c.l.b16 %v1570
          %v1607 = vunpack.c.l.b16 %v1571
          %v1608 = vunpack.c.l.b16 %v1572
          %v1609 = vunpack.c.l.b16 %v1573
          %v1610 = vunpack.c.l.b16 %v1574
          %v1611 = vunpack.c.l.b16 %v1575
          %v1612 = vunpack.c.l.b16 %v1576
          %v1613 = vunpack.c.l.b16 %v1577
          %v1614 = vunpack.c.l.b16 %v1578
          %v1615 = vunpack.c.l.b16 %v1579
          %v1616 = vunpack.c.l.b16 %v1580
          %v1617 = vpack.c.b16 %v1602, %v1601
          %v1618 = vpack.c.b16 %v1604, %v1603
          %v1619 = vpack.c.b16 %v1606, %v1605
          %v1620 = vpack.c.b16 %v1608, %v1607
          %v1621 = vpack.c.b16 %v1610, %v1609
          %v1622 = vpack.c.b16 %v1612, %v1611
          %v1623 = vpack.c.b16 %v1614, %v1613
          %v1624 = vpack.c.b16 %v1616, %v1615
          %1633 = vmatprep.subr.bf16.mxu0 0
          %1634 = vmatpush1.bf16.msra.mxu0 %v1617
          %1635 = vmatprep.subr.bf16.mxu0 0
          %1636 = vmatpush1.bf16.msra.mxu0 %v1618
          %1637 = vmatprep.subr.bf16.mxu0 0
          %1638 = vmatpush1.bf16.msra.mxu0 %v1619
          %1639 = vmatprep.subr.bf16.mxu0 0
          %1640 = vmatpush1.bf16.msra.mxu0 %v1620
          %1641 = vmatprep.subr.bf16.mxu0 0
          %1642 = vmatpush1.bf16.msra.mxu0 %v1621
          %1643 = vmatprep.subr.bf16.mxu0 0
          %1644 = vmatpush1.bf16.msra.mxu0 %v1622
          %1645 = vmatprep.subr.bf16.mxu0 0
          %1646 = vmatpush1.bf16.msra.mxu0 %v1623
          %1647 = vmatprep.subr.bf16.mxu0 0
          %1648 = vmatpush1.bf16.msra.mxu0 %v1624
          %1649 = vmatprep.subr.bf16.mxu0 0
          %1650 = vmatpush1.bf16.msra.mxu0 0
          %1651 = vmatprep.subr.bf16.mxu0 0
          %1652 = vmatpush1.bf16.msra.mxu0 0
          %1653 = vmatprep.subr.bf16.mxu0 0
          %1654 = vmatpush1.bf16.msra.mxu0 0
          %1655 = vmatprep.subr.bf16.mxu0 0
          %1656 = vmatpush1.bf16.msra.mxu0 0
          %1657 = vmatprep.subr.bf16.mxu0 0
          %1658 = vmatpush1.bf16.msra.mxu0 0
          %1659 = vmatprep.subr.bf16.mxu0 0
          %1660 = vmatpush1.bf16.msra.mxu0 0
          %1661 = vmatprep.subr.bf16.mxu0 0
          %1662 = vmatpush1.bf16.msra.mxu0 0
          %1663 = vmatprep.subr.bf16.mxu0 0
          %1664 = vmatpush1.bf16.msra.mxu0 0
          %1665 = vmatprep.mubr.bf16.mxu0 0
          %1666 = vmatmul.mubr.bf16.gmra.mrb[0].mxu0 %v1583
          %v1667 = vpop.f32.mrb[0].mxu0
          %v1668 = vadd.f32 0.0, %v1667
          %v1669 = vpop.f32.mrb[0].mxu0
          %v1670 = vpop.f32.mrb[0].mxu0
          %v1671 = vadd.f32 0.0, %v1670
          %v1672 = vpop.f32.mrb[0].mxu0
          %1673 = vdwg.mxu0
          %v1676 = vunpack.c.l.b16 %v1503
          %v1677 = vunpack.c.l.b16 %v1504
          %v1678 = vpack.c.b16 %v1677, %v1676
          %v1696 = vunpack.c.l.b16 %v1505
          %v1697 = vunpack.c.l.b16 %v1506
          %v1698 = vunpack.c.l.b16 %v1507
          %v1699 = vunpack.c.l.b16 %v1508
          %v1700 = vunpack.c.l.b16 %v1509
          %v1701 = vunpack.c.l.b16 %v1510
          %v1702 = vunpack.c.l.b16 %v1511
          %v1703 = vunpack.c.l.b16 %v1512
          %v1704 = vunpack.c.l.b16 %v1513
          %v1705 = vunpack.c.l.b16 %v1514
          %v1706 = vunpack.c.l.b16 %v1515
          %v1707 = vunpack.c.l.b16 %v1516
          %v1708 = vunpack.c.l.b16 %v1517
          %v1709 = vunpack.c.l.b16 %v1518
          %v1710 = vunpack.c.l.b16 %v1519
          %v1711 = vunpack.c.l.b16 %v1520
          %v1712 = vpack.c.b16 %v1697, %v1696
          %v1713 = vpack.c.b16 %v1699, %v1698
          %v1714 = vpack.c.b16 %v1701, %v1700
          %v1715 = vpack.c.b16 %v1703, %v1702
          %v1716 = vpack.c.b16 %v1705, %v1704
          %v1717 = vpack.c.b16 %v1707, %v1706
          %v1718 = vpack.c.b16 %v1709, %v1708
          %v1719 = vpack.c.b16 %v1711, %v1710
          %1728 = vmatprep.subr.bf16.mxu0 0
          %1729 = vmatpush1.bf16.msra.mxu0 %v1712
          %1730 = vmatprep.subr.bf16.mxu0 0
          %1731 = vmatpush1.bf16.msra.mxu0 %v1713
          %1732 = vmatprep.subr.bf16.mxu0 0
          %1733 = vmatpush1.bf16.msra.mxu0 %v1714
          %1734 = vmatprep.subr.bf16.mxu0 0
          %1735 = vmatpush1.bf16.msra.mxu0 %v1715
          %1736 = vmatprep.subr.bf16.mxu0 0
          %1737 = vmatpush1.bf16.msra.mxu0 %v1716
          %1738 = vmatprep.subr.bf16.mxu0 0
          %1739 = vmatpush1.bf16.msra.mxu0 %v1717
          %1740 = vmatprep.subr.bf16.mxu0 0
          %1741 = vmatpush1.bf16.msra.mxu0 %v1718
          %1742 = vmatprep.subr.bf16.mxu0 0
          %1743 = vmatpush1.bf16.msra.mxu0 %v1719
          %1744 = vmatprep.subr.bf16.mxu0 0
          %1745 = vmatpush1.bf16.msra.mxu0 0
          %1746 = vmatprep.subr.bf16.mxu0 0
          %1747 = vmatpush1.bf16.msra.mxu0 0
          %1748 = vmatprep.subr.bf16.mxu0 0
          %1749 = vmatpush1.bf16.msra.mxu0 0
          %1750 = vmatprep.subr.bf16.mxu0 0
          %1751 = vmatpush1.bf16.msra.mxu0 0
          %1752 = vmatprep.subr.bf16.mxu0 0
          %1753 = vmatpush1.bf16.msra.mxu0 0
          %1754 = vmatprep.subr.bf16.mxu0 0
          %1755 = vmatpush1.bf16.msra.mxu0 0
          %1756 = vmatprep.subr.bf16.mxu0 0
          %1757 = vmatpush1.bf16.msra.mxu0 0
          %1758 = vmatprep.subr.bf16.mxu0 0
          %1759 = vmatpush1.bf16.msra.mxu0 0
          %1760 = vmatprep.mubr.bf16.mxu0 0
          %1761 = vmatmul.mubr.bf16.gmra.mrb[0].mxu0 %v1678
          %v1762 = vpop.f32.mrb[0].mxu0
          %v1763 = vadd.f32 %v1668, %v1762
          %v1764 = vpop.f32.mrb[0].mxu0
          %v1765 = vpop.f32.mrb[0].mxu0
          %v1766 = vadd.f32 %v1671, %v1765
          %v1767 = vpop.f32.mrb[0].mxu0
          %1768 = vdwg.mxu0
          %v1769 = vld [vmem:[%s1502] sm:$0x1e]
          %v1770 = vld [vmem:[%s1502 + $0x8] sm:$0x1e]
          %v1773 = vunpack.c.l.b16 %v1769
          %v1774 = vunpack.c.h.b16 %v1769
          %v1775 = vunpack.c.l.b16 %v1770
          %v1776 = vunpack.c.h.b16 %v1770
          %v1777 = vpack.c.b16 %v1773, %v1773
          %v1778 = vpack.c.b16 %v1774, %v1774
          %v1779 = vpack.c.b16 %v1775, %v1775
          %v1780 = vpack.c.b16 %v1776, %v1776
          %vm1781 = vcmask 1042432
          %vm1782 = vcmask 1046532
          %vm1783 = vmor %vm1781, %vm1782
          %v1784 = vrot.slane %v1777, 5
          %v1785 = vrot.slane %v1784, 4
          %v1786 = vrot.slane %v1778, 5
          %v1787 = vsel %vm1783, %v1785, %v1786
          %v1788 = vrot.slane %v1779, 5
          %v1789 = vrot.slane %v1788, 4
          %v1790 = vrot.slane %v1780, 5
          %v1791 = vsel %vm1783, %v1789, %v1790
          %s1792 = scalar_lea.vmem [#allocation4], 128
          %v1793 = vld [vmem:[%s1792] sm:$0xf]
          %v1794 = vld [vmem:[%s1792 + $0x4] sm:$0xf]
          %v1795 = vld [vmem:[%s1792 + $0x8] sm:$0xf]
          %v1796 = vld [vmem:[%s1792 + $0xc] sm:$0xf]
          %v1797 = vld [vmem:[%s1792 + $0x10] sm:$0xf]
          %v1798 = vld [vmem:[%s1792 + $0x14] sm:$0xf]
          %v1799 = vld [vmem:[%s1792 + $0x18] sm:$0xf]
          %v1800 = vld [vmem:[%s1792 + $0x1c] sm:$0xf]
          %v1801 = vld [vmem:[%s1792 + $0x20] sm:$0xf]
          %v1802 = vld [vmem:[%s1792 + $0x24] sm:$0xf]
          %v1803 = vld [vmem:[%s1792 + $0x28] sm:$0xf]
          %v1804 = vld [vmem:[%s1792 + $0x2c] sm:$0xf]
          %v1805 = vld [vmem:[%s1792 + $0x30] sm:$0xf]
          %v1806 = vld [vmem:[%s1792 + $0x34] sm:$0xf]
          %v1807 = vld [vmem:[%s1792 + $0x38] sm:$0xf]
          %v1808 = vld [vmem:[%s1792 + $0x3c] sm:$0xf]
          %v1809 = vunpack.c.l.b16 %v1787
          %v1810 = vunpack.c.l.b16 %v1791
          %v1811 = vpack.c.b16 %v1810, %v1809
          %v1829 = vunpack.c.l.b16 %v1793
          %v1830 = vunpack.c.l.b16 %v1794
          %v1831 = vunpack.c.l.b16 %v1795
          %v1832 = vunpack.c.l.b16 %v1796
          %v1833 = vunpack.c.l.b16 %v1797
          %v1834 = vunpack.c.l.b16 %v1798
          %v1835 = vunpack.c.l.b16 %v1799
          %v1836 = vunpack.c.l.b16 %v1800
          %v1837 = vunpack.c.l.b16 %v1801
          %v1838 = vunpack.c.l.b16 %v1802
          %v1839 = vunpack.c.l.b16 %v1803
          %v1840 = vunpack.c.l.b16 %v1804
          %v1841 = vunpack.c.l.b16 %v1805
          %v1842 = vunpack.c.l.b16 %v1806
          %v1843 = vunpack.c.l.b16 %v1807
          %v1844 = vunpack.c.l.b16 %v1808
          %v1845 = vpack.c.b16 %v1830, %v1829
          %v1846 = vpack.c.b16 %v1832, %v1831
          %v1847 = vpack.c.b16 %v1834, %v1833
          %v1848 = vpack.c.b16 %v1836, %v1835
          %v1849 = vpack.c.b16 %v1838, %v1837
          %v1850 = vpack.c.b16 %v1840, %v1839
          %v1851 = vpack.c.b16 %v1842, %v1841
          %v1852 = vpack.c.b16 %v1844, %v1843
          %1861 = vmatprep.subr.bf16.mxu0 0
          %1862 = vmatpush1.bf16.msra.mxu0 %v1845
          %1863 = vmatprep.subr.bf16.mxu0 0
          %1864 = vmatpush1.bf16.msra.mxu0 %v1846
          %1865 = vmatprep.subr.bf16.mxu0 0
          %1866 = vmatpush1.bf16.msra.mxu0 %v1847
          %1867 = vmatprep.subr.bf16.mxu0 0
          %1868 = vmatpush1.bf16.msra.mxu0 %v1848
          %1869 = vmatprep.subr.bf16.mxu0 0
          %1870 = vmatpush1.bf16.msra.mxu0 %v1849
          %1871 = vmatprep.subr.bf16.mxu0 0
          %1872 = vmatpush1.bf16.msra.mxu0 %v1850
          %1873 = vmatprep.subr.bf16.mxu0 0
          %1874 = vmatpush1.bf16.msra.mxu0 %v1851
          %1875 = vmatprep.subr.bf16.mxu0 0
          %1876 = vmatpush1.bf16.msra.mxu0 %v1852
          %1877 = vmatprep.subr.bf16.mxu0 0
          %1878 = vmatpush1.bf16.msra.mxu0 0
          %1879 = vmatprep.subr.bf16.mxu0 0
          %1880 = vmatpush1.bf16.msra.mxu0 0
          %1881 = vmatprep.subr.bf16.mxu0 0
          %1882 = vmatpush1.bf16.msra.mxu0 0
          %1883 = vmatprep.subr.bf16.mxu0 0
          %1884 = vmatpush1.bf16.msra.mxu0 0
          %1885 = vmatprep.subr.bf16.mxu0 0
          %1886 = vmatpush1.bf16.msra.mxu0 0
          %1887 = vmatprep.subr.bf16.mxu0 0
          %1888 = vmatpush1.bf16.msra.mxu0 0
          %1889 = vmatprep.subr.bf16.mxu0 0
          %1890 = vmatpush1.bf16.msra.mxu0 0
          %1891 = vmatprep.subr.bf16.mxu0 0
          %1892 = vmatpush1.bf16.msra.mxu0 0
          %1893 = vmatprep.mubr.bf16.mxu0 0
          %1894 = vmatmul.mubr.bf16.gmra.mrb[0].mxu0 %v1811
          %v1895 = vpop.f32.mrb[0].mxu0
          %v1896 = vadd.f32 0.0, %v1895
          %v1897 = vpop.f32.mrb[0].mxu0
          %v1898 = vpop.f32.mrb[0].mxu0
          %v1899 = vadd.f32 0.0, %v1898
          %v1900 = vpop.f32.mrb[0].mxu0
          %1901 = vdwg.mxu0
          %v1902 = vadd.f32 %v1763, %v1896
          %v1903 = vadd.f32 %v1766, %v1899
          %s1904 = sadd.s32 %s1500, 1
          %s1905 = smul.addr %s1904, 8
          %s1906 = scalar_lea.vmem [#allocation3], %s1905
          %v1907 = vld [vmem:[%s1906] sm:$0xf]
          %v1908 = vld [vmem:[%s1906 + $0x8] sm:$0xf]
          %s1909 = scalar_lea.vmem [#allocation4], 192
          %v1910 = vld [vmem:[%s1909] sm:$0xf]
          %v1911 = vld [vmem:[%s1909 + $0x4] sm:$0xf]
          %v1912 = vld [vmem:[%s1909 + $0x8] sm:$0xf]
          %v1913 = vld [vmem:[%s1909 + $0xc] sm:$0xf]
          %v1914 = vld [vmem:[%s1909 + $0x10] sm:$0xf]
          %v1915 = vld [vmem:[%s1909 + $0x14] sm:$0xf]
          %v1916 = vld [vmem:[%s1909 + $0x18] sm:$0xf]
          %v1917 = vld [vmem:[%s1909 + $0x1c] sm:$0xf]
          %v1918 = vld [vmem:[%s1909 + $0x20] sm:$0xf]
          %v1919 = vld [vmem:[%s1909 + $0x24] sm:$0xf]
          %v1920 = vld [vmem:[%s1909 + $0x28] sm:$0xf]
          %v1921 = vld [vmem:[%s1909 + $0x2c] sm:$0xf]
          %v1922 = vld [vmem:[%s1909 + $0x30] sm:$0xf]
          %v1923 = vld [vmem:[%s1909 + $0x34] sm:$0xf]
          %v1924 = vld [vmem:[%s1909 + $0x38] sm:$0xf]
          %v1925 = vld [vmem:[%s1909 + $0x3c] sm:$0xf]
          %v1928 = vunpack.c.l.b16 %v1907
          %v1929 = vunpack.c.l.b16 %v1908
          %v1930 = vpack.c.b16 %v1929, %v1928
          %v1948 = vunpack.c.l.b16 %v1910
          %v1949 = vunpack.c.l.b16 %v1911
          %v1950 = vunpack.c.l.b16 %v1912
          %v1951 = vunpack.c.l.b16 %v1913
          %v1952 = vunpack.c.l.b16 %v1914
          %v1953 = vunpack.c.l.b16 %v1915
          %v1954 = vunpack.c.l.b16 %v1916
          %v1955 = vunpack.c.l.b16 %v1917
          %v1956 = vunpack.c.l.b16 %v1918
          %v1957 = vunpack.c.l.b16 %v1919
          %v1958 = vunpack.c.l.b16 %v1920
          %v1959 = vunpack.c.l.b16 %v1921
          %v1960 = vunpack.c.l.b16 %v1922
          %v1961 = vunpack.c.l.b16 %v1923
          %v1962 = vunpack.c.l.b16 %v1924
          %v1963 = vunpack.c.l.b16 %v1925
          %v1964 = vpack.c.b16 %v1949, %v1948
          %v1965 = vpack.c.b16 %v1951, %v1950
          %v1966 = vpack.c.b16 %v1953, %v1952
          %v1967 = vpack.c.b16 %v1955, %v1954
          %v1968 = vpack.c.b16 %v1957, %v1956
          %v1969 = vpack.c.b16 %v1959, %v1958
          %v1970 = vpack.c.b16 %v1961, %v1960
          %v1971 = vpack.c.b16 %v1963, %v1962
          %1980 = vmatprep.subr.bf16.mxu0 0
          %1981 = vmatpush1.bf16.msra.mxu0 %v1964
          %1982 = vmatprep.subr.bf16.mxu0 0
          %1983 = vmatpush1.bf16.msra.mxu0 %v1965
          %1984 = vmatprep.subr.bf16.mxu0 0
          %1985 = vmatpush1.bf16.msra.mxu0 %v1966
          %1986 = vmatprep.subr.bf16.mxu0 0
          %1987 = vmatpush1.bf16.msra.mxu0 %v1967
          %1988 = vmatprep.subr.bf16.mxu0 0
          %1989 = vmatpush1.bf16.msra.mxu0 %v1968
          %1990 = vmatprep.subr.bf16.mxu0 0
          %1991 = vmatpush1.bf16.msra.mxu0 %v1969
          %1992 = vmatprep.subr.bf16.mxu0 0
          %1993 = vmatpush1.bf16.msra.mxu0 %v1970
          %1994 = vmatprep.subr.bf16.mxu0 0
          %1995 = vmatpush1.bf16.msra.mxu0 %v1971
          %1996 = vmatprep.subr.bf16.mxu0 0
          %1997 = vmatpush1.bf16.msra.mxu0 0
          %1998 = vmatprep.subr.bf16.mxu0 0
          %1999 = vmatpush1.bf16.msra.mxu0 0
          %2000 = vmatprep.subr.bf16.mxu0 0
          %2001 = vmatpush1.bf16.msra.mxu0 0
          %2002 = vmatprep.subr.bf16.mxu0 0
          %2003 = vmatpush1.bf16.msra.mxu0 0
          %2004 = vmatprep.subr.bf16.mxu0 0
          %2005 = vmatpush1.bf16.msra.mxu0 0
          %2006 = vmatprep.subr.bf16.mxu0 0
          %2007 = vmatpush1.bf16.msra.mxu0 0
          %2008 = vmatprep.subr.bf16.mxu0 0
          %2009 = vmatpush1.bf16.msra.mxu0 0
          %2010 = vmatprep.subr.bf16.mxu0 0
          %2011 = vmatpush1.bf16.msra.mxu0 0
          %2012 = vmatprep.mubr.bf16.mxu0 0
          %2013 = vmatmul.mubr.bf16.gmra.mrb[0].mxu0 %v1930
          %v2014 = vpop.f32.mrb[0].mxu0
          %v2015 = vadd.f32 0.0, %v2014
          %v2016 = vpop.f32.mrb[0].mxu0
          %v2017 = vpop.f32.mrb[0].mxu0
          %v2018 = vadd.f32 0.0, %v2017
          %v2019 = vpop.f32.mrb[0].mxu0
          %2020 = vdwg.mxu0
          %v2021 = vadd.f32 %v1902, %v2015
          %v2022 = vadd.f32 %v1903, %v2018
          %v2023 = vld [vmem:[%s1906] sm:$0x1f]
          %v2024 = vld [vmem:[%s1906 + $0x8] sm:$0x1f]
          %v2027 = vunpack.c.l.b16 %v2023
          %v2028 = vunpack.c.h.b16 %v2023
          %v2029 = vunpack.c.l.b16 %v2024
          %v2030 = vunpack.c.h.b16 %v2024
          %v2031 = vpack.c.b16 %v2027, %v2027
          %v2032 = vpack.c.b16 %v2028, %v2028
          %v2033 = vpack.c.b16 %v2029, %v2029
          %v2034 = vpack.c.b16 %v2030, %v2030
          %v2036 = vshrl.u32 %v2031, 16
          %v2038 = vrot.slane %v2036, 4
          %v2039 = vshll.u32 %v2031, 16
          %v2041 = vrot.slane %v2039, 5
          %v2042 = vor.u32 %v2038, %v2041
          %v2043 = vrot.slane %v2042, 4
          %v2045 = vshll.u32 %v2032, 16
          %v2047 = vrot.slane %v2045, 5
          %v2048 = vsel %vm1535, %v2043, %v2047
          %v2050 = vshrl.u32 %v2033, 16
          %v2052 = vrot.slane %v2050, 4
          %v2053 = vshll.u32 %v2033, 16
          %v2055 = vrot.slane %v2053, 5
          %v2056 = vor.u32 %v2052, %v2055
          %v2057 = vrot.slane %v2056, 4
          %v2059 = vshll.u32 %v2034, 16
          %v2061 = vrot.slane %v2059, 5
          %v2062 = vsel %vm1535, %v2057, %v2061
          %s2063 = scalar_lea.vmem [#allocation4], 256
          %v2064 = vld [vmem:[%s2063] sm:$0xf]
          %v2065 = vld [vmem:[%s2063 + $0x4] sm:$0xf]
          %v2066 = vld [vmem:[%s2063 + $0x8] sm:$0xf]
          %v2067 = vld [vmem:[%s2063 + $0xc] sm:$0xf]
          %v2068 = vld [vmem:[%s2063 + $0x10] sm:$0xf]
          %v2069 = vld [vmem:[%s2063 + $0x14] sm:$0xf]
          %v2070 = vld [vmem:[%s2063 + $0x18] sm:$0xf]
          %v2071 = vld [vmem:[%s2063 + $0x1c] sm:$0xf]
          %v2072 = vld [vmem:[%s2063 + $0x20] sm:$0xf]
          %v2073 = vld [vmem:[%s2063 + $0x24] sm:$0xf]
          %v2074 = vld [vmem:[%s2063 + $0x28] sm:$0xf]
          %v2075 = vld [vmem:[%s2063 + $0x2c] sm:$0xf]
          %v2076 = vld [vmem:[%s2063 + $0x30] sm:$0xf]
          %v2077 = vld [vmem:[%s2063 + $0x34] sm:$0xf]
          %v2078 = vld [vmem:[%s2063 + $0x38] sm:$0xf]
          %v2079 = vld [vmem:[%s2063 + $0x3c] sm:$0xf]
          %v2080 = vunpack.c.l.b16 %v2048
          %v2081 = vunpack.c.l.b16 %v2062
          %v2082 = vpack.c.b16 %v2081, %v2080
          %v2100 = vunpack.c.l.b16 %v2064
          %v2101 = vunpack.c.l.b16 %v2065
          %v2102 = vunpack.c.l.b16 %v2066
          %v2103 = vunpack.c.l.b16 %v2067
          %v2104 = vunpack.c.l.b16 %v2068
          %v2105 = vunpack.c.l.b16 %v2069
          %v2106 = vunpack.c.l.b16 %v2070
          %v2107 = vunpack.c.l.b16 %v2071
          %v2108 = vunpack.c.l.b16 %v2072
          %v2109 = vunpack.c.l.b16 %v2073
          %v2110 = vunpack.c.l.b16 %v2074
          %v2111 = vunpack.c.l.b16 %v2075
          %v2112 = vunpack.c.l.b16 %v2076
          %v2113 = vunpack.c.l.b16 %v2077
          %v2114 = vunpack.c.l.b16 %v2078
          %v2115 = vunpack.c.l.b16 %v2079
          %v2116 = vpack.c.b16 %v2101, %v2100
          %v2117 = vpack.c.b16 %v2103, %v2102
          %v2118 = vpack.c.b16 %v2105, %v2104
          %v2119 = vpack.c.b16 %v2107, %v2106
          %v2120 = vpack.c.b16 %v2109, %v2108
          %v2121 = vpack.c.b16 %v2111, %v2110
          %v2122 = vpack.c.b16 %v2113, %v2112
          %v2123 = vpack.c.b16 %v2115, %v2114
          %2132 = vmatprep.subr.bf16.mxu0 0
          %2133 = vmatpush1.bf16.msra.mxu0 %v2116
          %2134 = vmatprep.subr.bf16.mxu0 0
          %2135 = vmatpush1.bf16.msra.mxu0 %v2117
          %2136 = vmatprep.subr.bf16.mxu0 0
          %2137 = vmatpush1.bf16.msra.mxu0 %v2118
          %2138 = vmatprep.subr.bf16.mxu0 0
          %2139 = vmatpush1.bf16.msra.mxu0 %v2119
          %2140 = vmatprep.subr.bf16.mxu0 0
          %2141 = vmatpush1.bf16.msra.mxu0 %v2120
          %2142 = vmatprep.subr.bf16.mxu0 0
          %2143 = vmatpush1.bf16.msra.mxu0 %v2121
          %2144 = vmatprep.subr.bf16.mxu0 0
          %2145 = vmatpush1.bf16.msra.mxu0 %v2122
          %2146 = vmatprep.subr.bf16.mxu0 0
          %2147 = vmatpush1.bf16.msra.mxu0 %v2123
          %2148 = vmatprep.subr.bf16.mxu0 0
          %2149 = vmatpush1.bf16.msra.mxu0 0
          %2150 = vmatprep.subr.bf16.mxu0 0
          %2151 = vmatpush1.bf16.msra.mxu0 0
          %2152 = vmatprep.subr.bf16.mxu0 0
          %2153 = vmatpush1.bf16.msra.mxu0 0
          %2154 = vmatprep.subr.bf16.mxu0 0
          %2155 = vmatpush1.bf16.msra.mxu0 0
          %2156 = vmatprep.subr.bf16.mxu0 0
          %2157 = vmatpush1.bf16.msra.mxu0 0
          %2158 = vmatprep.subr.bf16.mxu0 0
          %2159 = vmatpush1.bf16.msra.mxu0 0
          %2160 = vmatprep.subr.bf16.mxu0 0
          %2161 = vmatpush1.bf16.msra.mxu0 0
          %2162 = vmatprep.subr.bf16.mxu0 0
          %2163 = vmatpush1.bf16.msra.mxu0 0
          %2164 = vmatprep.mubr.bf16.mxu0 0
          %2165 = vmatmul.mubr.bf16.gmra.mrb[0].mxu0 %v2082
          %v2166 = vpop.f32.mrb[0].mxu0
          %v2167 = vadd.f32 0.0, %v2166
          %v2168 = vpop.f32.mrb[0].mxu0
          %v2169 = vpop.f32.mrb[0].mxu0
          %v2170 = vadd.f32 0.0, %v2169
          %v2171 = vpop.f32.mrb[0].mxu0
          %2172 = vdwg.mxu0
          %v2173 = vadd.f32 %v2021, %v2167
          %v2174 = vadd.f32 %v2022, %v2170
          %v2175 = vld [vmem:[%s1906] sm:$0x1e]
          %v2176 = vld [vmem:[%s1906 + $0x8] sm:$0x1e]
          %v2179 = vunpack.c.l.b16 %v2175
          %v2180 = vunpack.c.h.b16 %v2175
          %v2181 = vunpack.c.l.b16 %v2176
          %v2182 = vunpack.c.h.b16 %v2176
          %v2183 = vpack.c.b16 %v2179, %v2179
          %v2184 = vpack.c.b16 %v2180, %v2180
          %v2185 = vpack.c.b16 %v2181, %v2181
          %v2186 = vpack.c.b16 %v2182, %v2182
          %v2187 = vrot.slane %v2183, 5
          %v2188 = vrot.slane %v2187, 4
          %v2189 = vrot.slane %v2184, 5
          %v2190 = vsel %vm1783, %v2188, %v2189
          %v2191 = vrot.slane %v2185, 5
          %v2192 = vrot.slane %v2191, 4
          %v2193 = vrot.slane %v2186, 5
          %v2194 = vsel %vm1783, %v2192, %v2193
          %s2195 = scalar_lea.vmem [#allocation4], 320
          %v2196 = vld [vmem:[%s2195] sm:$0xf]
          %v2197 = vld [vmem:[%s2195 + $0x4] sm:$0xf]
          %v2198 = vld [vmem:[%s2195 + $0x8] sm:$0xf]
          %v2199 = vld [vmem:[%s2195 + $0xc] sm:$0xf]
          %v2200 = vld [vmem:[%s2195 + $0x10] sm:$0xf]
          %v2201 = vld [vmem:[%s2195 + $0x14] sm:$0xf]
          %v2202 = vld [vmem:[%s2195 + $0x18] sm:$0xf]
          %v2203 = vld [vmem:[%s2195 + $0x1c] sm:$0xf]
          %v2204 = vld [vmem:[%s2195 + $0x20] sm:$0xf]
          %v2205 = vld [vmem:[%s2195 + $0x24] sm:$0xf]
          %v2206 = vld [vmem:[%s2195 + $0x28] sm:$0xf]
          %v2207 = vld [vmem:[%s2195 + $0x2c] sm:$0xf]
          %v2208 = vld [vmem:[%s2195 + $0x30] sm:$0xf]
          %v2209 = vld [vmem:[%s2195 + $0x34] sm:$0xf]
          %v2210 = vld [vmem:[%s2195 + $0x38] sm:$0xf]
          %v2211 = vld [vmem:[%s2195 + $0x3c] sm:$0xf]
          %v2212 = vunpack.c.l.b16 %v2190
          %v2213 = vunpack.c.l.b16 %v2194
          %v2214 = vpack.c.b16 %v2213, %v2212
          %v2232 = vunpack.c.l.b16 %v2196
          %v2233 = vunpack.c.l.b16 %v2197
          %v2234 = vunpack.c.l.b16 %v2198
          %v2235 = vunpack.c.l.b16 %v2199
          %v2236 = vunpack.c.l.b16 %v2200
          %v2237 = vunpack.c.l.b16 %v2201
          %v2238 = vunpack.c.l.b16 %v2202
          %v2239 = vunpack.c.l.b16 %v2203
          %v2240 = vunpack.c.l.b16 %v2204
          %v2241 = vunpack.c.l.b16 %v2205
          %v2242 = vunpack.c.l.b16 %v2206
          %v2243 = vunpack.c.l.b16 %v2207
          %v2244 = vunpack.c.l.b16 %v2208
          %v2245 = vunpack.c.l.b16 %v2209
          %v2246 = vunpack.c.l.b16 %v2210
          %v2247 = vunpack.c.l.b16 %v2211
          %v2248 = vpack.c.b16 %v2233, %v2232
          %v2249 = vpack.c.b16 %v2235, %v2234
          %v2250 = vpack.c.b16 %v2237, %v2236
          %v2251 = vpack.c.b16 %v2239, %v2238
          %v2252 = vpack.c.b16 %v2241, %v2240
          %v2253 = vpack.c.b16 %v2243, %v2242
          %v2254 = vpack.c.b16 %v2245, %v2244
          %v2255 = vpack.c.b16 %v2247, %v2246
          %2264 = vmatprep.subr.bf16.mxu0 0
          %2265 = vmatpush1.bf16.msra.mxu0 %v2248
          %2266 = vmatprep.subr.bf16.mxu0 0
          %2267 = vmatpush1.bf16.msra.mxu0 %v2249
          %2268 = vmatprep.subr.bf16.mxu0 0
          %2269 = vmatpush1.bf16.msra.mxu0 %v2250
          %2270 = vmatprep.subr.bf16.mxu0 0
          %2271 = vmatpush1.bf16.msra.mxu0 %v2251
          %2272 = vmatprep.subr.bf16.mxu0 0
          %2273 = vmatpush1.bf16.msra.mxu0 %v2252
          %2274 = vmatprep.subr.bf16.mxu0 0
          %2275 = vmatpush1.bf16.msra.mxu0 %v2253
          %2276 = vmatprep.subr.bf16.mxu0 0
          %2277 = vmatpush1.bf16.msra.mxu0 %v2254
          %2278 = vmatprep.subr.bf16.mxu0 0
          %2279 = vmatpush1.bf16.msra.mxu0 %v2255
          %2280 = vmatprep.subr.bf16.mxu0 0
          %2281 = vmatpush1.bf16.msra.mxu0 0
          %2282 = vmatprep.subr.bf16.mxu0 0
          %2283 = vmatpush1.bf16.msra.mxu0 0
          %2284 = vmatprep.subr.bf16.mxu0 0
          %2285 = vmatpush1.bf16.msra.mxu0 0
          %2286 = vmatprep.subr.bf16.mxu0 0
          %2287 = vmatpush1.bf16.msra.mxu0 0
          %2288 = vmatprep.subr.bf16.mxu0 0
          %2289 = vmatpush1.bf16.msra.mxu0 0
          %2290 = vmatprep.subr.bf16.mxu0 0
          %2291 = vmatpush1.bf16.msra.mxu0 0
          %2292 = vmatprep.subr.bf16.mxu0 0
          %2293 = vmatpush1.bf16.msra.mxu0 0
          %2294 = vmatprep.subr.bf16.mxu0 0
          %2295 = vmatpush1.bf16.msra.mxu0 0
          %2296 = vmatprep.mubr.bf16.mxu0 0
          %2297 = vmatmul.mubr.bf16.gmra.mrb[0].mxu0 %v2214
          %v2298 = vpop.f32.mrb[0].mxu0
          %v2299 = vadd.f32 0.0, %v2298
          %v2300 = vpop.f32.mrb[0].mxu0
          %v2301 = vpop.f32.mrb[0].mxu0
          %v2302 = vadd.f32 0.0, %v2301
          %v2303 = vpop.f32.mrb[0].mxu0
          %2304 = vdwg.mxu0
          %v2305 = vadd.f32 %v2173, %v2299
          %v2306 = vadd.f32 %v2174, %v2302
          %s2307 = sadd.s32 %s1500, 2
          %s2308 = smul.addr %s2307, 8
          %s2309 = scalar_lea.vmem [#allocation3], %s2308
          %v2310 = vld [vmem:[%s2309] sm:$0xf]
          %v2311 = vld [vmem:[%s2309 + $0x8] sm:$0xf]
          %s2312 = scalar_lea.vmem [#allocation4], 384
          %v2313 = vld [vmem:[%s2312] sm:$0xf]
          %v2314 = vld [vmem:[%s2312 + $0x4] sm:$0xf]
          %v2315 = vld [vmem:[%s2312 + $0x8] sm:$0xf]
          %v2316 = vld [vmem:[%s2312 + $0xc] sm:$0xf]
          %v2317 = vld [vmem:[%s2312 + $0x10] sm:$0xf]
          %v2318 = vld [vmem:[%s2312 + $0x14] sm:$0xf]
          %v2319 = vld [vmem:[%s2312 + $0x18] sm:$0xf]
          %v2320 = vld [vmem:[%s2312 + $0x1c] sm:$0xf]
          %v2321 = vld [vmem:[%s2312 + $0x20] sm:$0xf]
          %v2322 = vld [vmem:[%s2312 + $0x24] sm:$0xf]
          %v2323 = vld [vmem:[%s2312 + $0x28] sm:$0xf]
          %v2324 = vld [vmem:[%s2312 + $0x2c] sm:$0xf]
          %v2325 = vld [vmem:[%s2312 + $0x30] sm:$0xf]
          %v2326 = vld [vmem:[%s2312 + $0x34] sm:$0xf]
          %v2327 = vld [vmem:[%s2312 + $0x38] sm:$0xf]
          %v2328 = vld [vmem:[%s2312 + $0x3c] sm:$0xf]
          %v2331 = vunpack.c.l.b16 %v2310
          %v2332 = vunpack.c.l.b16 %v2311
          %v2333 = vpack.c.b16 %v2332, %v2331
          %v2351 = vunpack.c.l.b16 %v2313
          %v2352 = vunpack.c.l.b16 %v2314
          %v2353 = vunpack.c.l.b16 %v2315
          %v2354 = vunpack.c.l.b16 %v2316
          %v2355 = vunpack.c.l.b16 %v2317
          %v2356 = vunpack.c.l.b16 %v2318
          %v2357 = vunpack.c.l.b16 %v2319
          %v2358 = vunpack.c.l.b16 %v2320
          %v2359 = vunpack.c.l.b16 %v2321
          %v2360 = vunpack.c.l.b16 %v2322
          %v2361 = vunpack.c.l.b16 %v2323
          %v2362 = vunpack.c.l.b16 %v2324
          %v2363 = vunpack.c.l.b16 %v2325
          %v2364 = vunpack.c.l.b16 %v2326
          %v2365 = vunpack.c.l.b16 %v2327
          %v2366 = vunpack.c.l.b16 %v2328
          %v2367 = vpack.c.b16 %v2352, %v2351
          %v2368 = vpack.c.b16 %v2354, %v2353
          %v2369 = vpack.c.b16 %v2356, %v2355
          %v2370 = vpack.c.b16 %v2358, %v2357
          %v2371 = vpack.c.b16 %v2360, %v2359
          %v2372 = vpack.c.b16 %v2362, %v2361
          %v2373 = vpack.c.b16 %v2364, %v2363
          %v2374 = vpack.c.b16 %v2366, %v2365
          %2383 = vmatprep.subr.bf16.mxu0 0
          %2384 = vmatpush1.bf16.msra.mxu0 %v2367
          %2385 = vmatprep.subr.bf16.mxu0 0
          %2386 = vmatpush1.bf16.msra.mxu0 %v2368
          %2387 = vmatprep.subr.bf16.mxu0 0
          %2388 = vmatpush1.bf16.msra.mxu0 %v2369
          %2389 = vmatprep.subr.bf16.mxu0 0
          %2390 = vmatpush1.bf16.msra.mxu0 %v2370
          %2391 = vmatprep.subr.bf16.mxu0 0
          %2392 = vmatpush1.bf16.msra.mxu0 %v2371
          %2393 = vmatprep.subr.bf16.mxu0 0
          %2394 = vmatpush1.bf16.msra.mxu0 %v2372
          %2395 = vmatprep.subr.bf16.mxu0 0
          %2396 = vmatpush1.bf16.msra.mxu0 %v2373
          %2397 = vmatprep.subr.bf16.mxu0 0
          %2398 = vmatpush1.bf16.msra.mxu0 %v2374
          %2399 = vmatprep.subr.bf16.mxu0 0
          %2400 = vmatpush1.bf16.msra.mxu0 0
          %2401 = vmatprep.subr.bf16.mxu0 0
          %2402 = vmatpush1.bf16.msra.mxu0 0
          %2403 = vmatprep.subr.bf16.mxu0 0
          %2404 = vmatpush1.bf16.msra.mxu0 0
          %2405 = vmatprep.subr.bf16.mxu0 0
          %2406 = vmatpush1.bf16.msra.mxu0 0
          %2407 = vmatprep.subr.bf16.mxu0 0
          %2408 = vmatpush1.bf16.msra.mxu0 0
          %2409 = vmatprep.subr.bf16.mxu0 0
          %2410 = vmatpush1.bf16.msra.mxu0 0
          %2411 = vmatprep.subr.bf16.mxu0 0
          %2412 = vmatpush1.bf16.msra.mxu0 0
          %2413 = vmatprep.subr.bf16.mxu0 0
          %2414 = vmatpush1.bf16.msra.mxu0 0
          %2415 = vmatprep.mubr.bf16.mxu0 0
          %2416 = vmatmul.mubr.bf16.gmra.mrb[0].mxu0 %v2333
          %v2417 = vpop.f32.mrb[0].mxu0
          %v2418 = vadd.f32 0.0, %v2417
          %v2419 = vpop.f32.mrb[0].mxu0
          %v2420 = vpop.f32.mrb[0].mxu0
          %v2421 = vadd.f32 0.0, %v2420
          %v2422 = vpop.f32.mrb[0].mxu0
          %2423 = vdwg.mxu0
          %v2424 = vadd.f32 %v2305, %v2418
          %v2425 = vadd.f32 %v2306, %v2421
          %v2426 = vld [vmem:[%s2309] sm:$0x1f]
          %v2427 = vld [vmem:[%s2309 + $0x8] sm:$0x1f]
          %v2430 = vunpack.c.l.b16 %v2426
          %v2431 = vunpack.c.h.b16 %v2426
          %v2432 = vunpack.c.l.b16 %v2427
          %v2433 = vunpack.c.h.b16 %v2427
          %v2434 = vpack.c.b16 %v2430, %v2430
          %v2435 = vpack.c.b16 %v2431, %v2431
          %v2436 = vpack.c.b16 %v2432, %v2432
          %v2437 = vpack.c.b16 %v2433, %v2433
          %v2439 = vshrl.u32 %v2434, 16
          %v2441 = vrot.slane %v2439, 4
          %v2442 = vshll.u32 %v2434, 16
          %v2444 = vrot.slane %v2442, 5
          %v2445 = vor.u32 %v2441, %v2444
          %v2446 = vrot.slane %v2445, 4
          %v2448 = vshll.u32 %v2435, 16
          %v2450 = vrot.slane %v2448, 5
          %v2451 = vsel %vm1535, %v2446, %v2450
          %v2453 = vshrl.u32 %v2436, 16
          %v2455 = vrot.slane %v2453, 4
          %v2456 = vshll.u32 %v2436, 16
          %v2458 = vrot.slane %v2456, 5
          %v2459 = vor.u32 %v2455, %v2458
          %v2460 = vrot.slane %v2459, 4
          %v2462 = vshll.u32 %v2437, 16
          %v2464 = vrot.slane %v2462, 5
          %v2465 = vsel %vm1535, %v2460, %v2464
          %s2466 = scalar_lea.vmem [#allocation4], 448
          %v2467 = vld [vmem:[%s2466] sm:$0xf]
          %v2468 = vld [vmem:[%s2466 + $0x4] sm:$0xf]
          %v2469 = vld [vmem:[%s2466 + $0x8] sm:$0xf]
          %v2470 = vld [vmem:[%s2466 + $0xc] sm:$0xf]
          %v2471 = vld [vmem:[%s2466 + $0x10] sm:$0xf]
          %v2472 = vld [vmem:[%s2466 + $0x14] sm:$0xf]
          %v2473 = vld [vmem:[%s2466 + $0x18] sm:$0xf]
          %v2474 = vld [vmem:[%s2466 + $0x1c] sm:$0xf]
          %v2475 = vld [vmem:[%s2466 + $0x20] sm:$0xf]
          %v2476 = vld [vmem:[%s2466 + $0x24] sm:$0xf]
          %v2477 = vld [vmem:[%s2466 + $0x28] sm:$0xf]
          %v2478 = vld [vmem:[%s2466 + $0x2c] sm:$0xf]
          %v2479 = vld [vmem:[%s2466 + $0x30] sm:$0xf]
          %v2480 = vld [vmem:[%s2466 + $0x34] sm:$0xf]
          %v2481 = vld [vmem:[%s2466 + $0x38] sm:$0xf]
          %v2482 = vld [vmem:[%s2466 + $0x3c] sm:$0xf]
          %v2483 = vunpack.c.l.b16 %v2451
          %v2484 = vunpack.c.l.b16 %v2465
          %v2485 = vpack.c.b16 %v2484, %v2483
          %v2503 = vunpack.c.l.b16 %v2467
          %v2504 = vunpack.c.l.b16 %v2468
          %v2505 = vunpack.c.l.b16 %v2469
          %v2506 = vunpack.c.l.b16 %v2470
          %v2507 = vunpack.c.l.b16 %v2471
          %v2508 = vunpack.c.l.b16 %v2472
          %v2509 = vunpack.c.l.b16 %v2473
          %v2510 = vunpack.c.l.b16 %v2474
          %v2511 = vunpack.c.l.b16 %v2475
          %v2512 = vunpack.c.l.b16 %v2476
          %v2513 = vunpack.c.l.b16 %v2477
          %v2514 = vunpack.c.l.b16 %v2478
          %v2515 = vunpack.c.l.b16 %v2479
          %v2516 = vunpack.c.l.b16 %v2480
          %v2517 = vunpack.c.l.b16 %v2481
          %v2518 = vunpack.c.l.b16 %v2482
          %v2519 = vpack.c.b16 %v2504, %v2503
          %v2520 = vpack.c.b16 %v2506, %v2505
          %v2521 = vpack.c.b16 %v2508, %v2507
          %v2522 = vpack.c.b16 %v2510, %v2509
          %v2523 = vpack.c.b16 %v2512, %v2511
          %v2524 = vpack.c.b16 %v2514, %v2513
          %v2525 = vpack.c.b16 %v2516, %v2515
          %v2526 = vpack.c.b16 %v2518, %v2517
          %2535 = vmatprep.subr.bf16.mxu0 0
          %2536 = vmatpush1.bf16.msra.mxu0 %v2519
          %2537 = vmatprep.subr.bf16.mxu0 0
          %2538 = vmatpush1.bf16.msra.mxu0 %v2520
          %2539 = vmatprep.subr.bf16.mxu0 0
          %2540 = vmatpush1.bf16.msra.mxu0 %v2521
          %2541 = vmatprep.subr.bf16.mxu0 0
          %2542 = vmatpush1.bf16.msra.mxu0 %v2522
          %2543 = vmatprep.subr.bf16.mxu0 0
          %2544 = vmatpush1.bf16.msra.mxu0 %v2523
          %2545 = vmatprep.subr.bf16.mxu0 0
          %2546 = vmatpush1.bf16.msra.mxu0 %v2524
          %2547 = vmatprep.subr.bf16.mxu0 0
          %2548 = vmatpush1.bf16.msra.mxu0 %v2525
          %2549 = vmatprep.subr.bf16.mxu0 0
          %2550 = vmatpush1.bf16.msra.mxu0 %v2526
          %2551 = vmatprep.subr.bf16.mxu0 0
          %2552 = vmatpush1.bf16.msra.mxu0 0
          %2553 = vmatprep.subr.bf16.mxu0 0
          %2554 = vmatpush1.bf16.msra.mxu0 0
          %2555 = vmatprep.subr.bf16.mxu0 0
          %2556 = vmatpush1.bf16.msra.mxu0 0
          %2557 = vmatprep.subr.bf16.mxu0 0
          %2558 = vmatpush1.bf16.msra.mxu0 0
          %2559 = vmatprep.subr.bf16.mxu0 0
          %2560 = vmatpush1.bf16.msra.mxu0 0
          %2561 = vmatprep.subr.bf16.mxu0 0
          %2562 = vmatpush1.bf16.msra.mxu0 0
          %2563 = vmatprep.subr.bf16.mxu0 0
          %2564 = vmatpush1.bf16.msra.mxu0 0
          %2565 = vmatprep.subr.bf16.mxu0 0
          %2566 = vmatpush1.bf16.msra.mxu0 0
          %2567 = vmatprep.mubr.bf16.mxu0 0
          %2568 = vmatmul.mubr.bf16.gmra.mrb[0].mxu0 %v2485
          %v2569 = vpop.f32.mrb[0].mxu0
          %v2570 = vadd.f32 0.0, %v2569
          %v2571 = vpop.f32.mrb[0].mxu0
          %v2572 = vpop.f32.mrb[0].mxu0
          %v2573 = vadd.f32 0.0, %v2572
          %v2574 = vpop.f32.mrb[0].mxu0
          %2575 = vdwg.mxu0
          %v2576 = vadd.f32 %v2424, %v2570
          %v2577 = vadd.f32 %v2425, %v2573
          %v2578 = vld [vmem:[%s2309] sm:$0x1e]
          %v2579 = vld [vmem:[%s2309 + $0x8] sm:$0x1e]
          %v2582 = vunpack.c.l.b16 %v2578
          %v2583 = vunpack.c.h.b16 %v2578
          %v2584 = vunpack.c.l.b16 %v2579
          %v2585 = vunpack.c.h.b16 %v2579
          %v2586 = vpack.c.b16 %v2582, %v2582
          %v2587 = vpack.c.b16 %v2583, %v2583
          %v2588 = vpack.c.b16 %v2584, %v2584
          %v2589 = vpack.c.b16 %v2585, %v2585
          %v2590 = vrot.slane %v2586, 5
          %v2591 = vrot.slane %v2590, 4
          %v2592 = vrot.slane %v2587, 5
          %v2593 = vsel %vm1783, %v2591, %v2592
          %v2594 = vrot.slane %v2588, 5
          %v2595 = vrot.slane %v2594, 4
          %v2596 = vrot.slane %v2589, 5
          %v2597 = vsel %vm1783, %v2595, %v2596
          %s2598 = scalar_lea.vmem [#allocation4], 512
          %v2599 = vld [vmem:[%s2598] sm:$0xf]
          %v2600 = vld [vmem:[%s2598 + $0x4] sm:$0xf]
          %v2601 = vld [vmem:[%s2598 + $0x8] sm:$0xf]
          %v2602 = vld [vmem:[%s2598 + $0xc] sm:$0xf]
          %v2603 = vld [vmem:[%s2598 + $0x10] sm:$0xf]
          %v2604 = vld [vmem:[%s2598 + $0x14] sm:$0xf]
          %v2605 = vld [vmem:[%s2598 + $0x18] sm:$0xf]
          %v2606 = vld [vmem:[%s2598 + $0x1c] sm:$0xf]
          %v2607 = vld [vmem:[%s2598 + $0x20] sm:$0xf]
          %v2608 = vld [vmem:[%s2598 + $0x24] sm:$0xf]
          %v2609 = vld [vmem:[%s2598 + $0x28] sm:$0xf]
          %v2610 = vld [vmem:[%s2598 + $0x2c] sm:$0xf]
          %v2611 = vld [vmem:[%s2598 + $0x30] sm:$0xf]
          %v2612 = vld [vmem:[%s2598 + $0x34] sm:$0xf]
          %v2613 = vld [vmem:[%s2598 + $0x38] sm:$0xf]
          %v2614 = vld [vmem:[%s2598 + $0x3c] sm:$0xf]
          %v2615 = vunpack.c.l.b16 %v2593
          %v2616 = vunpack.c.l.b16 %v2597
          %v2617 = vpack.c.b16 %v2616, %v2615
          %v2635 = vunpack.c.l.b16 %v2599
          %v2636 = vunpack.c.l.b16 %v2600
          %v2637 = vunpack.c.l.b16 %v2601
          %v2638 = vunpack.c.l.b16 %v2602
          %v2639 = vunpack.c.l.b16 %v2603
          %v2640 = vunpack.c.l.b16 %v2604
          %v2641 = vunpack.c.l.b16 %v2605
          %v2642 = vunpack.c.l.b16 %v2606
          %v2643 = vunpack.c.l.b16 %v2607
          %v2644 = vunpack.c.l.b16 %v2608
          %v2645 = vunpack.c.l.b16 %v2609
          %v2646 = vunpack.c.l.b16 %v2610
          %v2647 = vunpack.c.l.b16 %v2611
          %v2648 = vunpack.c.l.b16 %v2612
          %v2649 = vunpack.c.l.b16 %v2613
          %v2650 = vunpack.c.l.b16 %v2614
          %v2651 = vpack.c.b16 %v2636, %v2635
          %v2652 = vpack.c.b16 %v2638, %v2637
          %v2653 = vpack.c.b16 %v2640, %v2639
          %v2654 = vpack.c.b16 %v2642, %v2641
          %v2655 = vpack.c.b16 %v2644, %v2643
          %v2656 = vpack.c.b16 %v2646, %v2645
          %v2657 = vpack.c.b16 %v2648, %v2647
          %v2658 = vpack.c.b16 %v2650, %v2649
          %2667 = vmatprep.subr.bf16.mxu0 0
          %2668 = vmatpush1.bf16.msra.mxu0 %v2651
          %2669 = vmatprep.subr.bf16.mxu0 0
          %2670 = vmatpush1.bf16.msra.mxu0 %v2652
          %2671 = vmatprep.subr.bf16.mxu0 0
          %2672 = vmatpush1.bf16.msra.mxu0 %v2653
          %2673 = vmatprep.subr.bf16.mxu0 0
          %2674 = vmatpush1.bf16.msra.mxu0 %v2654
          %2675 = vmatprep.subr.bf16.mxu0 0
          %2676 = vmatpush1.bf16.msra.mxu0 %v2655
          %2677 = vmatprep.subr.bf16.mxu0 0
          %2678 = vmatpush1.bf16.msra.mxu0 %v2656
          %2679 = vmatprep.subr.bf16.mxu0 0
          %2680 = vmatpush1.bf16.msra.mxu0 %v2657
          %2681 = vmatprep.subr.bf16.mxu0 0
          %2682 = vmatpush1.bf16.msra.mxu0 %v2658
          %2683 = vmatprep.subr.bf16.mxu0 0
          %2684 = vmatpush1.bf16.msra.mxu0 0
          %2685 = vmatprep.subr.bf16.mxu0 0
          %2686 = vmatpush1.bf16.msra.mxu0 0
          %2687 = vmatprep.subr.bf16.mxu0 0
          %2688 = vmatpush1.bf16.msra.mxu0 0
          %2689 = vmatprep.subr.bf16.mxu0 0
          %2690 = vmatpush1.bf16.msra.mxu0 0
          %2691 = vmatprep.subr.bf16.mxu0 0
          %2692 = vmatpush1.bf16.msra.mxu0 0
          %2693 = vmatprep.subr.bf16.mxu0 0
          %2694 = vmatpush1.bf16.msra.mxu0 0
          %2695 = vmatprep.subr.bf16.mxu0 0
          %2696 = vmatpush1.bf16.msra.mxu0 0
          %2697 = vmatprep.subr.bf16.mxu0 0
          %2698 = vmatpush1.bf16.msra.mxu0 0
          %2699 = vmatprep.mubr.bf16.mxu0 0
          %2700 = vmatmul.mubr.bf16.gmra.mrb[0].mxu0 %v2617
          %v2701 = vpop.f32.mrb[0].mxu0
          %v2702 = vadd.f32 0.0, %v2701
          %v2703 = vpop.f32.mrb[0].mxu0
          %v2704 = vpop.f32.mrb[0].mxu0
          %v2705 = vadd.f32 0.0, %v2704
          %v2706 = vpop.f32.mrb[0].mxu0
          %2707 = vdwg.mxu0
          %v2708 = vadd.f32 %v2576, %v2702
          %v2709 = vadd.f32 %v2577, %v2705
          %v2710 = vld [vmem:[%s4] sm:$0x1]
          %v2712 = vlaneseq
          %v2713 = vshrl.u32 %v2712, 7
          %v2714 = vsub.s32 0, %v2713
          %v2715 = vrot.slane %v2710, %v2714
          %v2717 = vadd.f32 %v2708, %v2715
          %v2718 = vadd.f32 %v2709, %v2715
          %v2719 = vmax.f32 %v2717, %v2718
          %v2721 = vcombine.high %v2719, %v2719
          %v2723 = vunpack.c.l.s4 1983009808
          %v2724 = vunpack.c.0.s8 %v2723
          %v2725 = vlaneseq
          %v2726 = vshrl.u32 %v2725, 7
          %v2727 = vsub.s32 %v2724, %v2726
          %v2728 = vrot.slane %v2719, %v2727
          %v2730 = vunpack.c.l.s4 1983009808
          %v2731 = vunpack.c.0.s8 %v2730
          %v2732 = vlaneseq
          %v2733 = vshrl.u32 %v2732, 7
          %v2734 = vsub.s32 %v2731, %v2733
          %v2735 = vrot.slane %v2721, %v2734
          %v2736 = vcombine.high %v2728, %v2728
          %v2737 = vcombine.high %v2735, %v2735
          %vm2742 = vcmask 1041408
          %v2743 = vsel %vm2742, %v2728, -inf
          %v2744 = vrot.slane %v2743, 4
          %v2745 = vmax.f32 %v2743, %v2744
          %v2746 = vrot.slane %v2745, 2
          %v2747 = vmax.f32 %v2745, %v2746
          %v2748 = vrot.slane %v2747, 1
          %v2749 = vmax.f32 %v2747, %v2748
          %v2750 = vsel %vm2742, %v2736, -inf
          %v2751 = vrot.slane %v2750, 4
          %v2752 = vmax.f32 %v2750, %v2751
          %v2753 = vrot.slane %v2752, 2
          %v2754 = vmax.f32 %v2752, %v2753
          %v2755 = vrot.slane %v2754, 1
          %v2756 = vmax.f32 %v2754, %v2755
          %v2757 = vsel %vm2742, %v2735, -inf
          %v2758 = vrot.slane %v2757, 4
          %v2759 = vmax.f32 %v2757, %v2758
          %v2760 = vrot.slane %v2759, 2
          %v2761 = vmax.f32 %v2759, %v2760
          %v2762 = vrot.slane %v2761, 1
          %v2763 = vmax.f32 %v2761, %v2762
          %v2764 = vsel %vm2742, %v2737, -inf
          %v2765 = vrot.slane %v2764, 4
          %v2766 = vmax.f32 %v2764, %v2765
          %v2767 = vrot.slane %v2766, 2
          %v2768 = vmax.f32 %v2766, %v2767
          %v2769 = vrot.slane %v2768, 1
          %v2770 = vmax.f32 %v2768, %v2769
          %v2771 = vmax.f32 %v2749, 0.0
          %v2772 = vmax.f32 %v2756, 0.0
          %v2773 = vmax.f32 %v2763, 0.0
          %v2774 = vmax.f32 %v2770, 0.0
          %v2775 = vlaneseq
          %v2776 = vshrl.u32 %v2775, 7
          %vm2777 = vcmp.lt.s32.totalorder %v2776, 4
          %vm2782 = vcmask 1041409
          %v2783 = vsel %vm2782, %v2772, %v2771
          %vm2784 = vcmask 1042434
          %v2785 = vsel %vm2784, %v2773, %v2783
          %vm2786 = vcmask 1043459
          %v2787 = vsel %vm2786, %v2774, %v2785
          %v2789 = vsel %vm2777, %v2787, 0.0
          %v2790 = vpack.c.bf16 %v2789, %v2789
          %s2791 = smul.addr %s1495, 2
          %s2792 = scalar_lea.vmem %s261, %s2791
          %2793 = vst [vmem:[%s2792] sm:$0x3] %v2790
        $region60: #{musiclass_forward.4} parent=39 // loop_footer
          %s1499 = sadd.s32 1, %s1495
        $region61: #{musiclass_forward.4} parent=39 // loop_footer_branch
          %1494 = sbr.rel target = $region57
        $region62: #{musiclass_forward.4} parent=39 // loop_exit
          _
        %s2794 = smul.u32 4, %s22
        %p2795 = scmp.lt.s32.totalorder %s21, 1
        %s2796 = scalar_select %p2795, %s21, 1
        %p2797 = scmp.lt.s32.totalorder %s2794, 3
        %s2798 = scalar_select %p2797, %s2794, 3
        %s2799 = smul.addr %s2796, 4
        %s2800 = sadd.s32 %s2798, %s2799
        %s2801 = smul.addr %s2800, 2
        %s2802 = scalar_lea.vmem %s5, %s2801
        // Predicated region
        $region63: #{musiclass_forward.4} parent=39 // pred_check
          %p2803 = pneg %p159
        $region64: #{musiclass_forward.4} parent=39 // pred_check_branch
          %2805 = sbr.rel (%p2803) target = $region66
        $region65: #{musiclass_forward.4} parent=39 // pred_region
          %s2806 = smul.u32 4, %s22
        $region66: #{musiclass_forward.4} parent=39 // pred_fallthru
          _
      $region40: #{musiclass_forward.4} parent=5 // pred_fallthru
        _
      %p2807 = scmp.le.s32.totalorder 2, %s12
      // Predicated region
      $region67: #{musiclass_forward.4} parent=5 // pred_check
        %p2808 = pneg %p2807
      $region68: #{musiclass_forward.4} parent=5 // pred_check_branch
        %2810 = sbr.rel (%p2808) target = $region70
      $region69: #{musiclass_forward.4} parent=5 // pred_region
        %s2811 = ssub.s32 %s12, 2
        // Predicated region
        $region71: #{musiclass_forward.4} parent=69 // pred_check
          %p2812 = pneg %p165
        $region72: #{musiclass_forward.4} parent=69 // pred_check_branch
          %2814 = sbr.rel (%p2812) target = $region74
        $region73: #{musiclass_forward.4} parent=69 // pred_region
          %s2815 = smul.u32 4, %s24
          %p2816 = scmp.lt.s32.totalorder %s23, 1
          %s2817 = scalar_select %p2816, %s23, 1
          %p2818 = scmp.lt.s32.totalorder %s2815, 3
          %s2819 = scalar_select %p2818, %s2815, 3
          %s2820 = smul.addr %s2817, 4
          %s2821 = sadd.s32 %s2819, %s2820
          %s2822 = smul.addr %s2821, 2
          %s2823 = scalar_lea.vmem %s5, %s2822
        $region74: #{musiclass_forward.4} parent=69 // pred_fallthru
          _
      $region70: #{musiclass_forward.4} parent=5 // pred_fallthru
        _
    $region6: #{musiclass_forward.4} parent=1 // loop_footer
      %s16 = sadd.s32 1, %s12
    $region7: #{musiclass_forward.4} parent=1 // loop_footer_branch
      %11 = sbr.rel target = $region3
    $region8: #{musiclass_forward.4} parent=1 // loop_exit
      _
    %2824 = vsyncpa [#allocation5], 1
    %s2825 = scalar_lea.sflag [#allocation5], 1
    %2826 = vsyncpa %s2825, 1

</llo_original>
